<compile_context>
chip_gen: v5e
topology: v5e:2x2
jax: 0.10.0
libtpu: 0.0.40
codegen_flags: <defaults>
</compile_context>

<pallas_src>
import functools

import jax
import jax.numpy as jnp
from jax.experimental import pallas as pl
from jax.experimental.pallas import tpu as pltpu


# VMEM working-set budget used to size tiles.  24 MiB stays under default
# scoped limits on v5e/v6e and well inside v7x's 64 MiB physical VMEM; the
# explicit limit below leaves headroom for Mosaic-internal scratch.
_VMEM_BUDGET = 24 * 1024 * 1024
_VMEM_LIMIT = 48 * 1024 * 1024


# ----------------------------------------------------------------------------
# Bidirectional GRU kernel.
# Grid = (n_chunks,); each grid step consumes one (N, Lb, 3H) slab of
# precomputed (bf16) input projections per direction and carries the hidden
# state in VMEM scratch across the sequential chunk axis.
# ----------------------------------------------------------------------------
def _pick_gru_chunk(L, N, H):
    """Time-chunk length Lb (and padded L) sized from the VMEM budget."""
    # Double-buffered per-chunk footprint:
    #   2 dirs * 2 buffers * N * Lb * (3H bf16 gx in + H f32 out) bytes.
    per_step = 2 * 2 * N * (3 * H * 2 + H * 4)
    lb_max = max(1, _VMEM_BUDGET // per_step)
    lb_max = min(lb_max, 32)              # cap the unrolled loop (vreg pressure)
    if L <= lb_max:
        return L, L                       # single chunk covers the whole length
    lb = max(16, (lb_max // 16) * 16)     # multiple of 16: aligned bf16 sublanes
    l_pad = ((L + lb - 1) // lb) * lb     # pad instead of degrading Lb to 1
    return lb, l_pad


def _bigru_kernel(H, Lb, nc,
                  gxf_ref, gxb_ref, len_ref, whh_ref, bhn_f_ref, bhn_b_ref,
                  out_f_ref, out_b_ref,
                  h_f_scr, h_b_scr):
    c = pl.program_id(0)

    @pl.when(c == 0)
    def _():
        h_f_scr[...] = jnp.zeros_like(h_f_scr)
        h_b_scr[...] = jnp.zeros_like(h_b_scr)

    Ns = h_f_scr.shape[0]
    lens = len_ref[...]                                   # (Ns, 1) int32
    whh = whh_ref[...]                                    # (2H, 6H) f32 blockdiag
    # Loop-invariant broadcasts hoisted once (JAX does not CSE broadcast_in_dim).
    bhn_f = jnp.broadcast_to(bhn_f_ref[...], (Ns, H))
    bhn_b = jnp.broadcast_to(bhn_b_ref[...], (Ns, H))
    # Precompute all Lb validity masks for both directions.
    iota = jax.lax.broadcasted_iota(jnp.int32, (Ns, Lb), 1)
    mask_f = (c * Lb + iota) < lens                       # forward chunk  = c
    mask_b = ((nc - 1 - c) * Lb + iota) < lens            # backward chunk = nc-1-c

    def gates(gx, gh, bhn, h, mask):
        # PyTorch GRU cell, gate order (r, z, n); b_hn applied before r-scaling
        # (b_hr / b_hz were folded into gx in the hoisted projection).
        r = jax.nn.sigmoid(gx[:, :H] + gh[:, :H])
        z = jax.nn.sigmoid(gx[:, H:2 * H] + gh[:, H:2 * H])
        n = jnp.tanh(gx[:, 2 * H:] + r * (gh[:, 2 * H:] + bhn))
        h_new = (1.0 - z) * n + z * h
        h_new = jnp.where(mask, h_new, h)                 # freeze hidden past len
        return h_new, jnp.where(mask, h_new, 0.0)         # zero outputs past len

    hf = h_f_scr[...]
    hb = h_b_scr[...]
    for i in range(Lb):                                   # fully unrolled chunk
        ib = Lb - 1 - i                                   # backward local index
        gx_f = gxf_ref[:, pl.ds(i, 1), :][:, 0, :].astype(jnp.float32)
        gx_b = gxb_ref[:, pl.ds(ib, 1), :][:, 0, :].astype(jnp.float32)
        # Fused fwd+bwd recurrent matmul: one MXU push per time step.
        h_cat = jnp.concatenate([hf, hb], axis=-1)        # (Ns, 2H)
        gh = jnp.dot(h_cat, whh, preferred_element_type=jnp.float32)  # (Ns, 6H)
        hf, of = gates(gx_f, gh[:, :3 * H], bhn_f, hf, mask_f[:, i:i + 1])
        hb, ob = gates(gx_b, gh[:, 3 * H:], bhn_b, hb, mask_b[:, ib:ib + 1])
        out_f_ref[:, pl.ds(i, 1), :] = of[:, None, :]
        out_b_ref[:, pl.ds(ib, 1), :] = ob[:, None, :]

    h_f_scr[...] = hf
    h_b_scr[...] = hb


def bigru(x, lengths, params):
    """x: (N, L, E) f32, lengths: (N,) int32  ->  (N, L, 2H) f32."""
    N, L, _ = x.shape
    H = params["whh_f"].shape[0]                 # weights stored pre-transposed
    Lb, L_pad = _pick_gru_chunk(L, N, H)
    nc = L_pad // Lb

    # ---- hoisted input projections (one big f32 matmul per direction) -------
    # r/z recurrent biases are folded in here; only b_hn stays in the kernel
    # (it is scaled by the reset gate).  gx is stored in bf16 to halve the
    # HBM->VMEM traffic of the dominant streamed operand.
    def make_gx(w_ih, b_ih, b_hh):
        bias = b_ih + jnp.concatenate(
            [b_hh[:, :2 * H], jnp.zeros((1, H), jnp.float32)], axis=1)
        g = jnp.einsum("nle,eg->nlg", x, w_ih,
                       preferred_element_type=jnp.float32) + bias
        g = g.astype(jnp.bfloat16)
        if L_pad != L:
            g = jnp.pad(g, ((0, 0), (0, L_pad - L), (0, 0)))
        return g

    gx_f = make_gx(params["wih_f"], params["bih_f"], params["bhh_f"])
    gx_b = make_gx(params["wih_b"], params["bih_b"], params["bhh_b"])
    bhn_f = params["bhh_f"][:, 2 * H:]
    bhn_b = params["bhh_b"][:, 2 * H:]

    # Block-diagonal recurrent weight: one (2H, 6H) MXU operand for both dirs.
    whh_bd = jnp.zeros((2 * H, 6 * H), jnp.float32)
    whh_bd = whh_bd.at[:H, :3 * H].set(params["whh_f"])
    whh_bd = whh_bd.at[H:, 3 * H:].set(params["whh_b"])

    lens2d = lengths.reshape(N, 1).astype(jnp.int32)
    const = lambda c: (0, 0)

    out_f, out_b = pl.pallas_call(
        functools.partial(_bigru_kernel, H, Lb, nc),
        grid=(nc,),
        in_specs=[
            pl.BlockSpec((N, Lb, 3 * H), lambda c: (0, c, 0)),           # gx fwd
            pl.BlockSpec((N, Lb, 3 * H), lambda c: (0, nc - 1 - c, 0)),  # gx bwd
            pl.BlockSpec((N, 1), const),                                 # lengths
            pl.BlockSpec((2 * H, 6 * H), const),                         # W_hh blkdiag
            pl.BlockSpec((1, H), const),                                 # b_hn fwd
            pl.BlockSpec((1, H), const),                                 # b_hn bwd
        ],
        out_specs=[
            pl.BlockSpec((N, Lb, H), lambda c: (0, c, 0)),               # batch-major
            pl.BlockSpec((N, Lb, H), lambda c: (0, nc - 1 - c, 0)),
        ],
        out_shape=[jax.ShapeDtypeStruct((N, L_pad, H), jnp.float32),
                   jax.ShapeDtypeStruct((N, L_pad, H), jnp.float32)],
        scratch_shapes=[pltpu.VMEM((N, H), jnp.float32),
                        pltpu.VMEM((N, H), jnp.float32)],
        compiler_params=pltpu.CompilerParams(
            dimension_semantics=("arbitrary",),
            vmem_limit_bytes=_VMEM_LIMIT),
    )(gx_f, gx_b, lens2d, whh_bd, bhn_f, bhn_b)

    out = jnp.concatenate([out_f, out_b], axis=-1)        # (N, L_pad, 2H) fwd||bwd
    return out[:, :L, :] if L_pad != L else out


# ----------------------------------------------------------------------------
# Co-attention kernel: A = tanh(Gi @ M @ Gu^T), softmax-of-max pooling,
# attention-weighted sums.  A block of Bb batch elements per grid step.
# ----------------------------------------------------------------------------
def _pick_attn_block(B, T, D):
    # f32 footprint per batch row: double-buffered gu+gi inputs, the in-kernel
    # Gi@M and tanh(A) temps, and the four (narrow) outputs.
    per_b = 4 * (2 * 2 * T * D + T * T + T * D + 2 * (T + D))
    bb_max = max(1, _VMEM_BUDGET // per_b)
    if B <= bb_max:
        return B, B                      # one grid step often takes the whole batch
    bb = max(8, (bb_max // 8) * 8)       # keep the sublane dim 8-aligned
    b_pad = ((B + bb - 1) // bb) * bb
    return bb, b_pad


def _attn_kernel(gu_ref, gi_ref, m_ref,
                 soft_u_ref, soft_i_ref, atte_u_ref, atte_i_ref):
    gu = gu_ref[...]                              # (Bb, T, D) f32
    gi = gi_ref[...]
    m = m_ref[...]                                # (D, D) f32

    # tmp = Gi @ M   (f32 operands, f32 accumulation on the MXU)
    tmp = jax.lax.dot_general(gi, m, dimension_numbers=(((2,), (0,)), ((), ())),
                              preferred_element_type=jnp.float32)   # (Bb, T, D)
    # A = tanh(tmp @ Gu^T): contract the last dims directly (no explicit Gu^T).
    a = jnp.tanh(jax.lax.dot_general(
        tmp, gu, dimension_numbers=(((2,), (2,)), ((0,), (0,))),
        preferred_element_type=jnp.float32))      # (Bb, Ti, Tu)

    def softmax_rows(x):                          # exact softmax over last dim
        x = x - jnp.max(x, axis=-1, keepdims=True)
        e = jnp.exp(x)
        return e / jnp.sum(e, axis=-1, keepdims=True)

    soft_u = softmax_rows(jnp.max(a, axis=1))     # max over item tokens (Bb, Tu)
    soft_i = softmax_rows(jnp.max(a, axis=2))     # max over user tokens (Bb, Ti)
    soft_u_ref[...] = soft_u
    soft_i_ref[...] = soft_i

    # Attention-weighted sums as MXU contractions (not VPU broadcast + reduce).
    def weighted_sum(w, g):                       # (Bb, T), (Bb, T, D) -> (Bb, D)
        return jax.lax.dot_general(
            w[:, None, :], g, dimension_numbers=(((2,), (1,)), ((0,), (0,))),
            preferred_element_type=jnp.float32)[:, 0, :]

    atte_u_ref[...] = weighted_sum(soft_u, gu)
    atte_i_ref[...] = weighted_sum(soft_i, gi)


def attention(gru_u, gru_i, M):
    B, T, D = gru_u.shape
    Bb, B_pad = _pick_attn_block(B, T, D)
    if B_pad != B:
        pad = ((0, B_pad - B), (0, 0), (0, 0))
        gru_u = jnp.pad(gru_u, pad)
        gru_i = jnp.pad(gru_i, pad)
    const = lambda b: (0, 0)
    soft_u, soft_i, atte_u, atte_i = pl.pallas_call(
        _attn_kernel,
        grid=(B_pad // Bb,),
        in_specs=[
            pl.BlockSpec((Bb, T, D), lambda b: (b, 0, 0)),
            pl.BlockSpec((Bb, T, D), lambda b: (b, 0, 0)),
            pl.BlockSpec((D, D), const),
        ],
        out_specs=[
            pl.BlockSpec((Bb, T), lambda b: (b, 0)),
            pl.BlockSpec((Bb, T), lambda b: (b, 0)),
            pl.BlockSpec((Bb, D), lambda b: (b, 0)),
            pl.BlockSpec((Bb, D), lambda b: (b, 0)),
        ],
        out_shape=[
            jax.ShapeDtypeStruct((B_pad, T), jnp.float32),
            jax.ShapeDtypeStruct((B_pad, T), jnp.float32),
            jax.ShapeDtypeStruct((B_pad, D), jnp.float32),
            jax.ShapeDtypeStruct((B_pad, D), jnp.float32),
        ],
        compiler_params=pltpu.CompilerParams(
            dimension_semantics=("parallel",),
            vmem_limit_bytes=_VMEM_LIMIT),
    )(gru_u, gru_i, M)
    if B_pad != B:
        soft_u, soft_i = soft_u[:B], soft_i[:B]
        atte_u, atte_i = atte_u[:B], atte_i[:B]
    return soft_u, soft_i, atte_u, atte_i


# ----------------------------------------------------------------------------
# RNet forward (matches the PyTorch module's return tuple)
# ----------------------------------------------------------------------------
def rnet_forward(params, user_emb, item_emb, u_lengths, i_lengths):
    B, S, L, E = user_emb.shape
    Np = B * S
    u = user_emb.reshape(Np, L, E)
    it = item_emb.reshape(Np, L, E)
    # Merge user/item encoders into ONE sequential GRU pass (half the grid steps).
    x_all = jnp.concatenate([u, it], axis=0)                 # (2*Np, L, E)
    len_all = jnp.concatenate(
        [u_lengths.reshape(Np), i_lengths.reshape(Np)], axis=0).astype(jnp.int32)

    gru_all = bigru(x_all, len_all, params)                  # (2*Np, L, 2H)
    D = gru_all.shape[-1]
    gru_u = gru_all[:Np].reshape(B, S * L, D)
    gru_i = gru_all[Np:].reshape(B, S * L, D)

    soft_u, soft_i, atte_u, atte_i = attention(gru_u, gru_i, params["M"])
    return gru_u, gru_i, soft_u, soft_i, atte_u, atte_i


def init_params(key, gru_in, gru_out):
    H = gru_out
    k = 1.0 / (H ** 0.5)
    ks = jax.random.split(key, 9)

    def u(kk, shape):
        return jax.random.uniform(kk, shape, jnp.float32, -k, k)

    # GRU weights stored pre-transposed for the kernel: W^T, biases as (1, 3H).
    return dict(
        wih_f=u(ks[0], (gru_in, 3 * H)),
        whh_f=u(ks[1], (H, 3 * H)),
        bih_f=u(ks[2], (1, 3 * H)),
        bhh_f=u(ks[3], (1, 3 * H)),
        wih_b=u(ks[4], (gru_in, 3 * H)),
        whh_b=u(ks[5], (H, 3 * H)),
        bih_b=u(ks[6], (1, 3 * H)),
        bhh_b=u(ks[7], (1, 3 * H)),
        M=jax.random.normal(ks[8], (2 * H, 2 * H), jnp.float32),
    )


if __name__ == "__main__":
    key = jax.random.PRNGKey(0)
    kp, ku, ki, klu, kli = jax.random.split(key, 5)

    gru_in, gru_out = 32, 32
    batch, sent_count, sent_length = 2, 2, 8

    params = init_params(kp, gru_in, gru_out)
    user_emb = jax.random.normal(
        ku, (batch, sent_count, sent_length, gru_in), jnp.float32)
    item_emb = jax.random.normal(
        ki, (batch, sent_count, sent_length, gru_in), jnp.float32)
    u_lengths = jax.random.randint(
        klu, (batch, sent_count), 1, sent_length + 1, jnp.int32)
    i_lengths = jax.random.randint(
        kli, (batch, sent_count), 1, sent_length + 1, jnp.int32)

    outs = jax.jit(rnet_forward)(params, user_emb, item_emb, u_lengths, i_lengths)
    jax.block_until_ready(outs)

    gru_u, gru_i, soft_u, soft_i, atte_u, atte_i = outs
    assert gru_u.shape == (batch, sent_count * sent_length, 2 * gru_out)
    assert gru_i.shape == (batch, sent_count * sent_length, 2 * gru_out)
    assert soft_u.shape == (batch, sent_count * sent_length)
    assert soft_i.shape == (batch, sent_count * sent_length)
    assert atte_u.shape == (batch, 2 * gru_out)
    assert atte_i.shape == (batch, 2 * gru_out)
    print("KERNEL_OK")
</pallas_src>

<mosaic_0001>
module attributes {stable_mosaic.version = 11 : i64} {
  func.func @_attn_kernel(%arg0: i32, %arg1: memref<2x16x64xf32, #tpu.memory_space<vmem>>, %arg2: memref<2x16x64xf32, #tpu.memory_space<vmem>>, %arg3: memref<64x64xf32, #tpu.memory_space<vmem>>, %arg4: memref<2x16xf32, #tpu.memory_space<vmem>>, %arg5: memref<2x16xf32, #tpu.memory_space<vmem>>, %arg6: memref<2x64xf32, #tpu.memory_space<vmem>>, %arg7: memref<2x64xf32, #tpu.memory_space<vmem>>) attributes {dimension_semantics = [#tpu.dimension_semantics<parallel>], iteration_bounds = array<i64: 1>, scalar_prefetch = 0 : i64, scratch_operands = 0 : i64, tpu.core_type = #tpu.core_type<tc>, window_params = [{transform_indices = @transform_0, window_bounds = array<i64: 2, 16, 64>}, {transform_indices = @transform_1, window_bounds = array<i64: 2, 16, 64>}, {pipeline_mode = #tpu.pipeline_mode<synchronous>, transform_indices = @transform_2, window_bounds = array<i64: 64, 64>}, {transform_indices = @transform_3, window_bounds = array<i64: 2, 16>}, {transform_indices = @transform_4, window_bounds = array<i64: 2, 16>}, {transform_indices = @transform_5, window_bounds = array<i64: 2, 64>}, {transform_indices = @transform_6, window_bounds = array<i64: 2, 64>}]} {
    %c0 = arith.constant 0 : index
    %c0_0 = arith.constant 0 : index
    %c0_1 = arith.constant 0 : index
    %0 = vector.load %arg1[%c0, %c0_0, %c0_1] : memref<2x16x64xf32, #tpu.memory_space<vmem>>, vector<2x16x64xf32>
    %c0_2 = arith.constant 0 : index
    %c0_3 = arith.constant 0 : index
    %c0_4 = arith.constant 0 : index
    %1 = vector.load %arg2[%c0_2, %c0_3, %c0_4] : memref<2x16x64xf32, #tpu.memory_space<vmem>>, vector<2x16x64xf32>
    %c0_5 = arith.constant 0 : index
    %c0_6 = arith.constant 0 : index
    %2 = vector.load %arg3[%c0_5, %c0_6] : memref<64x64xf32, #tpu.memory_space<vmem>>, vector<64x64xf32>
    %cst = arith.constant dense<0.000000e+00> : vector<2x16x64xf32>
    %3 = tpu.matmul %1, %2, %cst {dimension_numbers = #tpu.dot_dimension_numbers<[2], [0], [0, 1], [1], [0, 0, 0, 1, 1, 1], [], []>} : vector<2x16x64xf32>, vector<64x64xf32>, vector<2x16x64xf32> -> vector<2x16x64xf32>
    %cst_7 = arith.constant dense<0.000000e+00> : vector<2x16x16xf32>
    %4 = tpu.matmul %3, %0, %cst_7 {dimension_numbers = #tpu.dot_dimension_numbers<[2], [2], [1], [1], [0, 0, 0, 1, 1, 1], [0], [0]>} : vector<2x16x64xf32>, vector<2x16x64xf32>, vector<2x16x16xf32> -> vector<2x16x16xf32>
    %5 = math.tanh %4 : vector<2x16x16xf32>
    %cst_8 = arith.constant dense<0xFF800000> : vector<2x16xf32>
    %6 = vector.multi_reduction <maximumf>, %5, %cst_8 [1] : vector<2x16x16xf32> to vector<2x16xf32>
    %cst_9 = arith.constant dense<0xFF800000> : vector<2xf32>
    %7 = vector.multi_reduction <maximumf>, %6, %cst_9 [1] : vector<2x16xf32> to vector<2xf32>
    %8 = vector.shape_cast %7 : vector<2xf32> to vector<2x1xf32>
    %9 = vector.broadcast %8 : vector<2x1xf32> to vector<2x16xf32>
    %10 = arith.subf %6, %9 : vector<2x16xf32>
    %11 = math.exp %10 : vector<2x16xf32>
    %cst_10 = arith.constant dense<0.000000e+00> : vector<2xf32>
    %12 = vector.multi_reduction <add>, %11, %cst_10 [1] : vector<2x16xf32> to vector<2xf32>
    %13 = vector.shape_cast %12 : vector<2xf32> to vector<2x1xf32>
    %14 = vector.broadcast %13 : vector<2x1xf32> to vector<2x16xf32>
    %15 = arith.divf %11, %14 : vector<2x16xf32>
    %cst_11 = arith.constant dense<0xFF800000> : vector<2x16xf32>
    %16 = vector.multi_reduction <maximumf>, %5, %cst_11 [2] : vector<2x16x16xf32> to vector<2x16xf32>
    %cst_12 = arith.constant dense<0xFF800000> : vector<2xf32>
    %17 = vector.multi_reduction <maximumf>, %16, %cst_12 [1] : vector<2x16xf32> to vector<2xf32>
    %18 = vector.shape_cast %17 : vector<2xf32> to vector<2x1xf32>
    %19 = vector.broadcast %18 : vector<2x1xf32> to vector<2x16xf32>
    %20 = arith.subf %16, %19 : vector<2x16xf32>
    %21 = math.exp %20 : vector<2x16xf32>
    %cst_13 = arith.constant dense<0.000000e+00> : vector<2xf32>
    %22 = vector.multi_reduction <add>, %21, %cst_13 [1] : vector<2x16xf32> to vector<2xf32>
    %23 = vector.shape_cast %22 : vector<2xf32> to vector<2x1xf32>
    %24 = vector.broadcast %23 : vector<2x1xf32> to vector<2x16xf32>
    %25 = arith.divf %21, %24 : vector<2x16xf32>
    %c0_14 = arith.constant 0 : index
    %c0_15 = arith.constant 0 : index
    %26 = vector.load %arg4[%c0_14, %c0_15] : memref<2x16xf32, #tpu.memory_space<vmem>>, vector<2x16xf32>
    tpu.vector_store %arg4[%c0_14, %c0_15], %15 {strides = array<i32>} : memref<2x16xf32, #tpu.memory_space<vmem>>, vector<2x16xf32>,
    %c0_16 = arith.constant 0 : index
    %c0_17 = arith.constant 0 : index
    %27 = vector.load %arg5[%c0_16, %c0_17] : memref<2x16xf32, #tpu.memory_space<vmem>>, vector<2x16xf32>
    tpu.vector_store %arg5[%c0_16, %c0_17], %25 {strides = array<i32>} : memref<2x16xf32, #tpu.memory_space<vmem>>, vector<2x16xf32>,
    %28 = vector.shape_cast %15 : vector<2x16xf32> to vector<2x1x16xf32>
    %cst_18 = arith.constant dense<0.000000e+00> : vector<2x1x64xf32>
    %29 = tpu.matmul %28, %0, %cst_18 {dimension_numbers = #tpu.dot_dimension_numbers<[2], [1], [1], [2], [0, 0, 0, 1, 1, 2], [0], [0]>} : vector<2x1x16xf32>, vector<2x16x64xf32>, vector<2x1x64xf32> -> vector<2x1x64xf32>
    %30 = vector.shape_cast %29 : vector<2x1x64xf32> to vector<2x64xf32>
    %c0_19 = arith.constant 0 : index
    %c0_20 = arith.constant 0 : index
    %31 = vector.load %arg6[%c0_19, %c0_20] : memref<2x64xf32, #tpu.memory_space<vmem>>, vector<2x64xf32>
    tpu.vector_store %arg6[%c0_19, %c0_20], %30 {strides = array<i32>} : memref<2x64xf32, #tpu.memory_space<vmem>>, vector<2x64xf32>,
    %32 = vector.shape_cast %25 : vector<2x16xf32> to vector<2x1x16xf32>
    %cst_21 = arith.constant dense<0.000000e+00> : vector<2x1x64xf32>
    %33 = tpu.matmul %32, %1, %cst_21 {dimension_numbers = #tpu.dot_dimension_numbers<[2], [1], [1], [2], [0, 0, 0, 1, 1, 2], [0], [0]>} : vector<2x1x16xf32>, vector<2x16x64xf32>, vector<2x1x64xf32> -> vector<2x1x64xf32>
    %34 = vector.shape_cast %33 : vector<2x1x64xf32> to vector<2x64xf32>
    %c0_22 = arith.constant 0 : index
    %c0_23 = arith.constant 0 : index
    %35 = vector.load %arg7[%c0_22, %c0_23] : memref<2x64xf32, #tpu.memory_space<vmem>>, vector<2x64xf32>
    tpu.vector_store %arg7[%c0_22, %c0_23], %34 {strides = array<i32>} : memref<2x64xf32, #tpu.memory_space<vmem>>, vector<2x64xf32>,
    return
  }
  func.func @transform_0(%arg0: i32) -> (i32, i32, i32) {
    %c0_i32 = arith.constant 0 : i32
    %c0_i32_0 = arith.constant 0 : i32
    %c0_i32_1 = arith.constant 0 : i32
    return %arg0, %c0_i32, %c0_i32_0 : i32, i32, i32
  }
  func.func @transform_1(%arg0: i32) -> (i32, i32, i32) {
    %c0_i32 = arith.constant 0 : i32
    %c0_i32_0 = arith.constant 0 : i32
    %c0_i32_1 = arith.constant 0 : i32
    return %arg0, %c0_i32, %c0_i32_0 : i32, i32, i32
  }
  func.func @transform_2(%arg0: i32) -> (i32, i32) {
    %c0_i32 = arith.constant 0 : i32
    %c0_i32_0 = arith.constant 0 : i32
    %c0_i32_1 = arith.constant 0 : i32
    return %c0_i32, %c0_i32_0 : i32, i32
  }
  func.func @transform_3(%arg0: i32) -> (i32, i32) {
    %c0_i32 = arith.constant 0 : i32
    %c0_i32_0 = arith.constant 0 : i32
    return %arg0, %c0_i32 : i32, i32
  }
  func.func @transform_4(%arg0: i32) -> (i32, i32) {
    %c0_i32 = arith.constant 0 : i32
    %c0_i32_0 = arith.constant 0 : i32
    return %arg0, %c0_i32 : i32, i32
  }
  func.func @transform_5(%arg0: i32) -> (i32, i32) {
    %c0_i32 = arith.constant 0 : i32
    %c0_i32_0 = arith.constant 0 : i32
    return %arg0, %c0_i32 : i32, i32
  }
  func.func @transform_6(%arg0: i32) -> (i32, i32) {
    %c0_i32 = arith.constant 0 : i32
    %c0_i32_0 = arith.constant 0 : i32
    return %arg0, %c0_i32 : i32, i32
  }
}

module attributes {stable_mosaic.version = 11 : i64} {
  func.func @_bigru_kernel(%arg0: i32, %arg1: memref<8x8x96xbf16, #tpu.memory_space<vmem>>, %arg2: memref<8x8x96xbf16, #tpu.memory_space<vmem>>, %arg3: memref<8x1xi32, #tpu.memory_space<vmem>>, %arg4: memref<64x192xf32, #tpu.memory_space<vmem>>, %arg5: memref<1x32xf32, #tpu.memory_space<vmem>>, %arg6: memref<1x32xf32, #tpu.memory_space<vmem>>, %arg7: memref<8x8x32xf32, #tpu.memory_space<vmem>>, %arg8: memref<8x8x32xf32, #tpu.memory_space<vmem>>, %arg9: memref<8x32xf32, #tpu.memory_space<vmem>>, %arg10: memref<8x32xf32, #tpu.memory_space<vmem>>) attributes {dimension_semantics = [#tpu.dimension_semantics<arbitrary>], iteration_bounds = array<i64: 1>, scalar_prefetch = 0 : i64, scratch_operands = 2 : i64, tpu.core_type = #tpu.core_type<tc>, window_params = [{transform_indices = @transform_0, window_bounds = array<i64: 8, 8, 96>}, {transform_indices = @transform_1, window_bounds = array<i64: 8, 8, 96>}, {pipeline_mode = #tpu.pipeline_mode<synchronous>, transform_indices = @transform_2, window_bounds = array<i64: 8, 1>}, {pipeline_mode = #tpu.pipeline_mode<synchronous>, transform_indices = @transform_3, window_bounds = array<i64: 64, 192>}, {pipeline_mode = #tpu.pipeline_mode<synchronous>, transform_indices = @transform_4, window_bounds = array<i64: 1, 32>}, {pipeline_mode = #tpu.pipeline_mode<synchronous>, transform_indices = @transform_5, window_bounds = array<i64: 1, 32>}, {transform_indices = @transform_6, window_bounds = array<i64: 8, 8, 32>}, {transform_indices = @transform_7, window_bounds = array<i64: 8, 8, 32>}]} {
    %c0_i32 = arith.constant 0 : i32
    %0 = arith.cmpi eq, %arg0, %c0_i32 : i32
    %1 = arith.extui %0 : i1 to i32
    %c0_i32_0 = arith.constant 0 : i32
    %2 = arith.cmpi ne, %1, %c0_i32_0 : i32
    scf.if %2 {
      %cst_178 = arith.constant 0.000000e+00 : f32
      %699 = vector.broadcast %cst_178 : f32 to vector<8x32xf32>
      %c0_179 = arith.constant 0 : index
      %c0_180 = arith.constant 0 : index
      %700 = vector.load %arg9[%c0_179, %c0_180] : memref<8x32xf32, #tpu.memory_space<vmem>>, vector<8x32xf32>
      tpu.vector_store %arg9[%c0_179, %c0_180], %699 {strides = array<i32>} : memref<8x32xf32, #tpu.memory_space<vmem>>, vector<8x32xf32>,
      %cst_181 = arith.constant 0.000000e+00 : f32
      %701 = vector.broadcast %cst_181 : f32 to vector<8x32xf32>
      %c0_182 = arith.constant 0 : index
      %c0_183 = arith.constant 0 : index
      %702 = vector.load %arg10[%c0_182, %c0_183] : memref<8x32xf32, #tpu.memory_space<vmem>>, vector<8x32xf32>
      tpu.vector_store %arg10[%c0_182, %c0_183], %701 {strides = array<i32>} : memref<8x32xf32, #tpu.memory_space<vmem>>, vector<8x32xf32>,
    } else {
    }
    %c0 = arith.constant 0 : index
    %c0_1 = arith.constant 0 : index
    %3 = vector.load %arg3[%c0, %c0_1] : memref<8x1xi32, #tpu.memory_space<vmem>>, vector<8x1xi32>
    %c0_2 = arith.constant 0 : index
    %c0_3 = arith.constant 0 : index
    %4 = vector.load %arg4[%c0_2, %c0_3] : memref<64x192xf32, #tpu.memory_space<vmem>>, vector<64x192xf32>
    %c0_4 = arith.constant 0 : index
    %c0_5 = arith.constant 0 : index
    %5 = vector.load %arg5[%c0_4, %c0_5] : memref<1x32xf32, #tpu.memory_space<vmem>>, vector<1x32xf32>
    %6 = vector.shape_cast %5 : vector<1x32xf32> to vector<1x32xf32>
    %7 = vector.broadcast %6 : vector<1x32xf32> to vector<8x32xf32>
    %c0_6 = arith.constant 0 : index
    %c0_7 = arith.constant 0 : index
    %8 = vector.load %arg6[%c0_6, %c0_7] : memref<1x32xf32, #tpu.memory_space<vmem>>, vector<1x32xf32>
    %9 = vector.shape_cast %8 : vector<1x32xf32> to vector<1x32xf32>
    %10 = vector.broadcast %9 : vector<1x32xf32> to vector<8x32xf32>
    %11 = tpu.iota {dimensions = array<i32: 1>} : vector<8x8xi32>
    %c8_i32 = arith.constant 8 : i32
    %12 = arith.muli %arg0, %c8_i32 : i32
    %13 = vector.broadcast %12 : i32 to vector<8x8xi32>
    %14 = arith.addi %13, %11 : vector<8x8xi32>
    %15 = vector.broadcast %3 : vector<8x1xi32> to vector<8x8xi32>
    %16 = arith.cmpi slt, %14, %15 : vector<8x8xi32>
    %c0_i32_8 = arith.constant 0 : i32
    %17 = arith.subi %c0_i32_8, %arg0 : i32
    %c8_i32_9 = arith.constant 8 : i32
    %18 = arith.muli %17, %c8_i32_9 : i32
    %19 = vector.broadcast %18 : i32 to vector<8x8xi32>
    %20 = arith.addi %19, %11 : vector<8x8xi32>
    %21 = vector.broadcast %3 : vector<8x1xi32> to vector<8x8xi32>
    %22 = arith.cmpi slt, %20, %21 : vector<8x8xi32>
    %c0_10 = arith.constant 0 : index
    %c0_11 = arith.constant 0 : index
    %23 = vector.load %arg9[%c0_10, %c0_11] : memref<8x32xf32, #tpu.memory_space<vmem>>, vector<8x32xf32>
    %c0_12 = arith.constant 0 : index
    %c0_13 = arith.constant 0 : index
    %24 = vector.load %arg10[%c0_12, %c0_13] : memref<8x32xf32, #tpu.memory_space<vmem>>, vector<8x32xf32>
    %c0_14 = arith.constant 0 : index
    %c0_15 = arith.constant 0 : index
    %c0_16 = arith.constant 0 : index
    %25 = vector.load %arg1[%c0_14, %c0_15, %c0_16] : memref<8x8x96xbf16, #tpu.memory_space<vmem>>, vector<8x1x96xbf16>
    %26 = vector.shape_cast %25 : vector<8x1x96xbf16> to vector<8x96xbf16>
    %27 = arith.extf %26 : vector<8x96xbf16> to vector<8x96xf32>
    %c0_17 = arith.constant 0 : index
    %c7 = arith.constant 7 : index
    %c0_18 = arith.constant 0 : index
    %28 = vector.load %arg2[%c0_17, %c7, %c0_18] : memref<8x8x96xbf16, #tpu.memory_space<vmem>>, vector<8x1x96xbf16>
    %29 = vector.shape_cast %28 : vector<8x1x96xbf16> to vector<8x96xbf16>
    %30 = arith.extf %29 : vector<8x96xbf16> to vector<8x96xf32>
    %31 = tpu.concatenate %23, %24 in 1 : vector<8x32xf32>, vector<8x32xf32> -> vector<8x64xf32>
    %cst = arith.constant dense<0.000000e+00> : vector<8x192xf32>
    %32 = tpu.matmul %31, %4, %cst {dimension_numbers = #tpu.dot_dimension_numbers<[1], [0], [0], [1], [0, 0, 1, 1], [], []>} : vector<8x64xf32>, vector<64x192xf32>, vector<8x192xf32> -> vector<8x192xf32>
    %33 = vector.extract_strided_slice %32 {offsets = [0, 0], sizes = [8, 96], strides = [1, 1]} : vector<8x192xf32> to vector<8x96xf32>
    %34 = vector.extract_strided_slice %16 {offsets = [0, 0], sizes = [8, 1], strides = [1, 1]} : vector<8x8xi1> to vector<8x1xi1>
    %35 = vector.extract_strided_slice %27 {offsets = [0, 0], sizes = [8, 32], strides = [1, 1]} : vector<8x96xf32> to vector<8x32xf32>
    %36 = vector.extract_strided_slice %33 {offsets = [0, 0], sizes = [8, 32], strides = [1, 1]} : vector<8x96xf32> to vector<8x32xf32>
    %37 = arith.addf %35, %36 : vector<8x32xf32>
    %38 = arith.negf %37 : vector<8x32xf32>
    %39 = math.exp %38 : vector<8x32xf32>
    %cst_19 = arith.constant 1.000000e+00 : f32
    %40 = vector.broadcast %cst_19 : f32 to vector<8x32xf32>
    %41 = arith.addf %40, %39 : vector<8x32xf32>
    %42 = arith.divf %40, %41 : vector<8x32xf32>
    %43 = vector.extract_strided_slice %27 {offsets = [0, 32], sizes = [8, 32], strides = [1, 1]} : vector<8x96xf32> to vector<8x32xf32>
    %44 = vector.extract_strided_slice %33 {offsets = [0, 32], sizes = [8, 32], strides = [1, 1]} : vector<8x96xf32> to vector<8x32xf32>
    %45 = arith.addf %43, %44 : vector<8x32xf32>
    %46 = arith.negf %45 : vector<8x32xf32>
    %47 = math.exp %46 : vector<8x32xf32>
    %cst_20 = arith.constant 1.000000e+00 : f32
    %48 = vector.broadcast %cst_20 : f32 to vector<8x32xf32>
    %49 = arith.addf %48, %47 : vector<8x32xf32>
    %50 = arith.divf %48, %49 : vector<8x32xf32>
    %51 = vector.extract_strided_slice %27 {offsets = [0, 64], sizes = [8, 32], strides = [1, 1]} : vector<8x96xf32> to vector<8x32xf32>
    %52 = vector.extract_strided_slice %33 {offsets = [0, 64], sizes = [8, 32], strides = [1, 1]} : vector<8x96xf32> to vector<8x32xf32>
    %53 = arith.addf %52, %7 : vector<8x32xf32>
    %54 = arith.mulf %42, %53 : vector<8x32xf32>
    %55 = arith.addf %51, %54 : vector<8x32xf32>
    %56 = math.tanh %55 : vector<8x32xf32>
    %cst_21 = arith.constant 1.000000e+00 : f32
    %57 = vector.broadcast %cst_21 : f32 to vector<8x32xf32>
    %58 = arith.subf %57, %50 : vector<8x32xf32>
    %59 = arith.mulf %58, %56 : vector<8x32xf32>
    %60 = arith.mulf %50, %23 : vector<8x32xf32>
    %61 = arith.addf %59, %60 : vector<8x32xf32>
    %62 = vector.shape_cast %34 : vector<8x1xi1> to vector<8x1xi1>
    %63 = vector.broadcast %62 : vector<8x1xi1> to vector<8x32xi1>
    %64 = arith.select %63, %61, %23 : vector<8x32xi1>, vector<8x32xf32>
    %cst_22 = arith.constant 0.000000e+00 : f32
    %65 = vector.shape_cast %34 : vector<8x1xi1> to vector<8x1xi1>
    %66 = vector.broadcast %65 : vector<8x1xi1> to vector<8x32xi1>
    %67 = vector.broadcast %cst_22 : f32 to vector<8x32xf32>
    %68 = arith.select %66, %64, %67 : vector<8x32xi1>, vector<8x32xf32>
    %69 = vector.extract_strided_slice %32 {offsets = [0, 96], sizes = [8, 96], strides = [1, 1]} : vector<8x192xf32> to vector<8x96xf32>
    %70 = vector.extract_strided_slice %22 {offsets = [0, 7], sizes = [8, 1], strides = [1, 1]} : vector<8x8xi1> to vector<8x1xi1>
    %71 = vector.extract_strided_slice %30 {offsets = [0, 0], sizes = [8, 32], strides = [1, 1]} : vector<8x96xf32> to vector<8x32xf32>
    %72 = vector.extract_strided_slice %69 {offsets = [0, 0], sizes = [8, 32], strides = [1, 1]} : vector<8x96xf32> to vector<8x32xf32>
    %73 = arith.addf %71, %72 : vector<8x32xf32>
    %74 = arith.negf %73 : vector<8x32xf32>
    %75 = math.exp %74 : vector<8x32xf32>
    %cst_23 = arith.constant 1.000000e+00 : f32
    %76 = vector.broadcast %cst_23 : f32 to vector<8x32xf32>
    %77 = arith.addf %76, %75 : vector<8x32xf32>
    %78 = arith.divf %76, %77 : vector<8x32xf32>
    %79 = vector.extract_strided_slice %30 {offsets = [0, 32], sizes = [8, 32], strides = [1, 1]} : vector<8x96xf32> to vector<8x32xf32>
    %80 = vector.extract_strided_slice %69 {offsets = [0, 32], sizes = [8, 32], strides = [1, 1]} : vector<8x96xf32> to vector<8x32xf32>
    %81 = arith.addf %79, %80 : vector<8x32xf32>
    %82 = arith.negf %81 : vector<8x32xf32>
    %83 = math.exp %82 : vector<8x32xf32>
    %cst_24 = arith.constant 1.000000e+00 : f32
    %84 = vector.broadcast %cst_24 : f32 to vector<8x32xf32>
    %85 = arith.addf %84, %83 : vector<8x32xf32>
    %86 = arith.divf %84, %85 : vector<8x32xf32>
    %87 = vector.extract_strided_slice %30 {offsets = [0, 64], sizes = [8, 32], strides = [1, 1]} : vector<8x96xf32> to vector<8x32xf32>
    %88 = vector.extract_strided_slice %69 {offsets = [0, 64], sizes = [8, 32], strides = [1, 1]} : vector<8x96xf32> to vector<8x32xf32>
    %89 = arith.addf %88, %10 : vector<8x32xf32>
    %90 = arith.mulf %78, %89 : vector<8x32xf32>
    %91 = arith.addf %87, %90 : vector<8x32xf32>
    %92 = math.tanh %91 : vector<8x32xf32>
    %cst_25 = arith.constant 1.000000e+00 : f32
    %93 = vector.broadcast %cst_25 : f32 to vector<8x32xf32>
    %94 = arith.subf %93, %86 : vector<8x32xf32>
    %95 = arith.mulf %94, %92 : vector<8x32xf32>
    %96 = arith.mulf %86, %24 : vector<8x32xf32>
    %97 = arith.addf %95, %96 : vector<8x32xf32>
    %98 = vector.shape_cast %70 : vector<8x1xi1> to vector<8x1xi1>
    %99 = vector.broadcast %98 : vector<8x1xi1> to vector<8x32xi1>
    %100 = arith.select %99, %97, %24 : vector<8x32xi1>, vector<8x32xf32>
    %cst_26 = arith.constant 0.000000e+00 : f32
    %101 = vector.shape_cast %70 : vector<8x1xi1> to vector<8x1xi1>
    %102 = vector.broadcast %101 : vector<8x1xi1> to vector<8x32xi1>
    %103 = vector.broadcast %cst_26 : f32 to vector<8x32xf32>
    %104 = arith.select %102, %100, %103 : vector<8x32xi1>, vector<8x32xf32>
    %105 = vector.shape_cast %68 : vector<8x32xf32> to vector<8x1x32xf32>
    %c0_27 = arith.constant 0 : index
    %c0_28 = arith.constant 0 : index
    %c0_29 = arith.constant 0 : index
    %106 = vector.load %arg7[%c0_27, %c0_28, %c0_29] : memref<8x8x32xf32, #tpu.memory_space<vmem>>, vector<8x1x32xf32>
    tpu.vector_store %arg7[%c0_27, %c0_28, %c0_29], %105 {strides = array<i32>} : memref<8x8x32xf32, #tpu.memory_space<vmem>>, vector<8x1x32xf32>,
    %107 = vector.shape_cast %104 : vector<8x32xf32> to vector<8x1x32xf32>
    %c0_30 = arith.constant 0 : index
    %c7_31 = arith.constant 7 : index
    %c0_32 = arith.constant 0 : index
    %108 = vector.load %arg8[%c0_30, %c7_31, %c0_32] : memref<8x8x32xf32, #tpu.memory_space<vmem>>, vector<8x1x32xf32>
    tpu.vector_store %arg8[%c0_30, %c7_31, %c0_32], %107 {strides = array<i32>} : memref<8x8x32xf32, #tpu.memory_space<vmem>>, vector<8x1x32xf32>,
    %c0_33 = arith.constant 0 : index
    %c1 = arith.constant 1 : index
    %c0_34 = arith.constant 0 : index
    %109 = vector.load %arg1[%c0_33, %c1, %c0_34] : memref<8x8x96xbf16, #tpu.memory_space<vmem>>, vector<8x1x96xbf16>
    %110 = vector.shape_cast %109 : vector<8x1x96xbf16> to vector<8x96xbf16>
    %111 = arith.extf %110 : vector<8x96xbf16> to vector<8x96xf32>
    %c0_35 = arith.constant 0 : index
    %c6 = arith.constant 6 : index
    %c0_36 = arith.constant 0 : index
    %112 = vector.load %arg2[%c0_35, %c6, %c0_36] : memref<8x8x96xbf16, #tpu.memory_space<vmem>>, vector<8x1x96xbf16>
    %113 = vector.shape_cast %112 : vector<8x1x96xbf16> to vector<8x96xbf16>
    %114 = arith.extf %113 : vector<8x96xbf16> to vector<8x96xf32>
    %115 = tpu.concatenate %64, %100 in 1 : vector<8x32xf32>, vector<8x32xf32> -> vector<8x64xf32>
    %cst_37 = arith.constant dense<0.000000e+00> : vector<8x192xf32>
    %116 = tpu.matmul %115, %4, %cst_37 {dimension_numbers = #tpu.dot_dimension_numbers<[1], [0], [0], [1], [0, 0, 1, 1], [], []>} : vector<8x64xf32>, vector<64x192xf32>, vector<8x192xf32> -> vector<8x192xf32>
    %117 = vector.extract_strided_slice %116 {offsets = [0, 0], sizes = [8, 96], strides = [1, 1]} : vector<8x192xf32> to vector<8x96xf32>
    %118 = vector.extract_strided_slice %16 {offsets = [0, 1], sizes = [8, 1], strides = [1, 1]} : vector<8x8xi1> to vector<8x1xi1>
    %119 = vector.extract_strided_slice %111 {offsets = [0, 0], sizes = [8, 32], strides = [1, 1]} : vector<8x96xf32> to vector<8x32xf32>
    %120 = vector.extract_strided_slice %117 {offsets = [0, 0], sizes = [8, 32], strides = [1, 1]} : vector<8x96xf32> to vector<8x32xf32>
    %121 = arith.addf %119, %120 : vector<8x32xf32>
    %122 = arith.negf %121 : vector<8x32xf32>
    %123 = math.exp %122 : vector<8x32xf32>
    %cst_38 = arith.constant 1.000000e+00 : f32
    %124 = vector.broadcast %cst_38 : f32 to vector<8x32xf32>
    %125 = arith.addf %124, %123 : vector<8x32xf32>
    %126 = arith.divf %124, %125 : vector<8x32xf32>
    %127 = vector.extract_strided_slice %111 {offsets = [0, 32], sizes = [8, 32], strides = [1, 1]} : vector<8x96xf32> to vector<8x32xf32>
    %128 = vector.extract_strided_slice %117 {offsets = [0, 32], sizes = [8, 32], strides = [1, 1]} : vector<8x96xf32> to vector<8x32xf32>
    %129 = arith.addf %127, %128 : vector<8x32xf32>
    %130 = arith.negf %129 : vector<8x32xf32>
    %131 = math.exp %130 : vector<8x32xf32>
    %cst_39 = arith.constant 1.000000e+00 : f32
    %132 = vector.broadcast %cst_39 : f32 to vector<8x32xf32>
    %133 = arith.addf %132, %131 : vector<8x32xf32>
    %134 = arith.divf %132, %133 : vector<8x32xf32>
    %135 = vector.extract_strided_slice %111 {offsets = [0, 64], sizes = [8, 32], strides = [1, 1]} : vector<8x96xf32> to vector<8x32xf32>
    %136 = vector.extract_strided_slice %117 {offsets = [0, 64], sizes = [8, 32], strides = [1, 1]} : vector<8x96xf32> to vector<8x32xf32>
    %137 = arith.addf %136, %7 : vector<8x32xf32>
    %138 = arith.mulf %126, %137 : vector<8x32xf32>
    %139 = arith.addf %135, %138 : vector<8x32xf32>
    %140 = math.tanh %139 : vector<8x32xf32>
    %cst_40 = arith.constant 1.000000e+00 : f32
    %141 = vector.broadcast %cst_40 : f32 to vector<8x32xf32>
    %142 = arith.subf %141, %134 : vector<8x32xf32>
    %143 = arith.mulf %142, %140 : vector<8x32xf32>
    %144 = arith.mulf %134, %64 : vector<8x32xf32>
    %145 = arith.addf %143, %144 : vector<8x32xf32>
    %146 = vector.shape_cast %118 : vector<8x1xi1> to vector<8x1xi1>
    %147 = vector.broadcast %146 : vector<8x1xi1> to vector<8x32xi1>
    %148 = arith.select %147, %145, %64 : vector<8x32xi1>, vector<8x32xf32>
    %cst_41 = arith.constant 0.000000e+00 : f32
    %149 = vector.shape_cast %118 : vector<8x1xi1> to vector<8x1xi1>
    %150 = vector.broadcast %149 : vector<8x1xi1> to vector<8x32xi1>
    %151 = vector.broadcast %cst_41 : f32 to vector<8x32xf32>
    %152 = arith.select %150, %148, %151 : vector<8x32xi1>, vector<8x32xf32>
    %153 = vector.extract_strided_slice %116 {offsets = [0, 96], sizes = [8, 96], strides = [1, 1]} : vector<8x192xf32> to vector<8x96xf32>
    %154 = vector.extract_strided_slice %22 {offsets = [0, 6], sizes = [8, 1], strides = [1, 1]} : vector<8x8xi1> to vector<8x1xi1>
    %155 = vector.extract_strided_slice %114 {offsets = [0, 0], sizes = [8, 32], strides = [1, 1]} : vector<8x96xf32> to vector<8x32xf32>
    %156 = vector.extract_strided_slice %153 {offsets = [0, 0], sizes = [8, 32], strides = [1, 1]} : vector<8x96xf32> to vector<8x32xf32>
    %157 = arith.addf %155, %156 : vector<8x32xf32>
    %158 = arith.negf %157 : vector<8x32xf32>
    %159 = math.exp %158 : vector<8x32xf32>
    %cst_42 = arith.constant 1.000000e+00 : f32
    %160 = vector.broadcast %cst_42 : f32 to vector<8x32xf32>
    %161 = arith.addf %160, %159 : vector<8x32xf32>
    %162 = arith.divf %160, %161 : vector<8x32xf32>
    %163 = vector.extract_strided_slice %114 {offsets = [0, 32], sizes = [8, 32], strides = [1, 1]} : vector<8x96xf32> to vector<8x32xf32>
    %164 = vector.extract_strided_slice %153 {offsets = [0, 32], sizes = [8, 32], strides = [1, 1]} : vector<8x96xf32> to vector<8x32xf32>
    %165 = arith.addf %163, %164 : vector<8x32xf32>
    %166 = arith.negf %165 : vector<8x32xf32>
    %167 = math.exp %166 : vector<8x32xf32>
    %cst_43 = arith.constant 1.000000e+00 : f32
    %168 = vector.broadcast %cst_43 : f32 to vector<8x32xf32>
    %169 = arith.addf %168, %167 : vector<8x32xf32>
    %170 = arith.divf %168, %169 : vector<8x32xf32>
    %171 = vector.extract_strided_slice %114 {offsets = [0, 64], sizes = [8, 32], strides = [1, 1]} : vector<8x96xf32> to vector<8x32xf32>
    %172 = vector.extract_strided_slice %153 {offsets = [0, 64], sizes = [8, 32], strides = [1, 1]} : vector<8x96xf32> to vector<8x32xf32>
    %173 = arith.addf %172, %10 : vector<8x32xf32>
    %174 = arith.mulf %162, %173 : vector<8x32xf32>
    %175 = arith.addf %171, %174 : vector<8x32xf32>
    %176 = math.tanh %175 : vector<8x32xf32>
    %cst_44 = arith.constant 1.000000e+00 : f32
    %177 = vector.broadcast %cst_44 : f32 to vector<8x32xf32>
    %178 = arith.subf %177, %170 : vector<8x32xf32>
    %179 = arith.mulf %178, %176 : vector<8x32xf32>
    %180 = arith.mulf %170, %100 : vector<8x32xf32>
    %181 = arith.addf %179, %180 : vector<8x32xf32>
    %182 = vector.shape_cast %154 : vector<8x1xi1> to vector<8x1xi1>
    %183 = vector.broadcast %182 : vector<8x1xi1> to vector<8x32xi1>
    %184 = arith.select %183, %181, %100 : vector<8x32xi1>, vector<8x32xf32>
    %cst_45 = arith.constant 0.000000e+00 : f32
    %185 = vector.shape_cast %154 : vector<8x1xi1> to vector<8x1xi1>
    %186 = vector.broadcast %185 : vector<8x1xi1> to vector<8x32xi1>
    %187 = vector.broadcast %cst_45 : f32 to vector<8x32xf32>
    %188 = arith.select %186, %184, %187 : vector<8x32xi1>, vector<8x32xf32>
    %189 = vector.shape_cast %152 : vector<8x32xf32> to vector<8x1x32xf32>
    %c0_46 = arith.constant 0 : index
    %c1_47 = arith.constant 1 : index
    %c0_48 = arith.constant 0 : index
    %190 = vector.load %arg7[%c0_46, %c1_47, %c0_48] : memref<8x8x32xf32, #tpu.memory_space<vmem>>, vector<8x1x32xf32>
    tpu.vector_store %arg7[%c0_46, %c1_47, %c0_48], %189 {strides = array<i32>} : memref<8x8x32xf32, #tpu.memory_space<vmem>>, vector<8x1x32xf32>,
    %191 = vector.shape_cast %188 : vector<8x32xf32> to vector<8x1x32xf32>
    %c0_49 = arith.constant 0 : index
    %c6_50 = arith.constant 6 : index
    %c0_51 = arith.constant 0 : index
    %192 = vector.load %arg8[%c0_49, %c6_50, %c0_51] : memref<8x8x32xf32, #tpu.memory_space<vmem>>, vector<8x1x32xf32>
    tpu.vector_store %arg8[%c0_49, %c6_50, %c0_51], %191 {strides = array<i32>} : memref<8x8x32xf32, #tpu.memory_space<vmem>>, vector<8x1x32xf32>,
    %c0_52 = arith.constant 0 : index
    %c2 = arith.constant 2 : index
    %c0_53 = arith.constant 0 : index
    %193 = vector.load %arg1[%c0_52, %c2, %c0_53] : memref<8x8x96xbf16, #tpu.memory_space<vmem>>, vector<8x1x96xbf16>
    %194 = vector.shape_cast %193 : vector<8x1x96xbf16> to vector<8x96xbf16>
    %195 = arith.extf %194 : vector<8x96xbf16> to vector<8x96xf32>
    %c0_54 = arith.constant 0 : index
    %c5 = arith.constant 5 : index
    %c0_55 = arith.constant 0 : index
    %196 = vector.load %arg2[%c0_54, %c5, %c0_55] : memref<8x8x96xbf16, #tpu.memory_space<vmem>>, vector<8x1x96xbf16>
    %197 = vector.shape_cast %196 : vector<8x1x96xbf16> to vector<8x96xbf16>
    %198 = arith.extf %197 : vector<8x96xbf16> to vector<8x96xf32>
    %199 = tpu.concatenate %148, %184 in 1 : vector<8x32xf32>, vector<8x32xf32> -> vector<8x64xf32>
    %cst_56 = arith.constant dense<0.000000e+00> : vector<8x192xf32>
    %200 = tpu.matmul %199, %4, %cst_56 {dimension_numbers = #tpu.dot_dimension_numbers<[1], [0], [0], [1], [0, 0, 1, 1], [], []>} : vector<8x64xf32>, vector<64x192xf32>, vector<8x192xf32> -> vector<8x192xf32>
    %201 = vector.extract_strided_slice %200 {offsets = [0, 0], sizes = [8, 96], strides = [1, 1]} : vector<8x192xf32> to vector<8x96xf32>
    %202 = vector.extract_strided_slice %16 {offsets = [0, 2], sizes = [8, 1], strides = [1, 1]} : vector<8x8xi1> to vector<8x1xi1>
    %203 = vector.extract_strided_slice %195 {offsets = [0, 0], sizes = [8, 32], strides = [1, 1]} : vector<8x96xf32> to vector<8x32xf32>
    %204 = vector.extract_strided_slice %201 {offsets = [0, 0], sizes = [8, 32], strides = [1, 1]} : vector<8x96xf32> to vector<8x32xf32>
    %205 = arith.addf %203, %204 : vector<8x32xf32>
    %206 = arith.negf %205 : vector<8x32xf32>
    %207 = math.exp %206 : vector<8x32xf32>
    %cst_57 = arith.constant 1.000000e+00 : f32
    %208 = vector.broadcast %cst_57 : f32 to vector<8x32xf32>
    %209 = arith.addf %208, %207 : vector<8x32xf32>
    %210 = arith.divf %208, %209 : vector<8x32xf32>
    %211 = vector.extract_strided_slice %195 {offsets = [0, 32], sizes = [8, 32], strides = [1, 1]} : vector<8x96xf32> to vector<8x32xf32>
    %212 = vector.extract_strided_slice %201 {offsets = [0, 32], sizes = [8, 32], strides = [1, 1]} : vector<8x96xf32> to vector<8x32xf32>
    %213 = arith.addf %211, %212 : vector<8x32xf32>
    %214 = arith.negf %213 : vector<8x32xf32>
    %215 = math.exp %214 : vector<8x32xf32>
    %cst_58 = arith.constant 1.000000e+00 : f32
    %216 = vector.broadcast %cst_58 : f32 to vector<8x32xf32>
    %217 = arith.addf %216, %215 : vector<8x32xf32>
    %218 = arith.divf %216, %217 : vector<8x32xf32>
    %219 = vector.extract_strided_slice %195 {offsets = [0, 64], sizes = [8, 32], strides = [1, 1]} : vector<8x96xf32> to vector<8x32xf32>
    %220 = vector.extract_strided_slice %201 {offsets = [0, 64], sizes = [8, 32], strides = [1, 1]} : vector<8x96xf32> to vector<8x32xf32>
    %221 = arith.addf %220, %7 : vector<8x32xf32>
    %222 = arith.mulf %210, %221 : vector<8x32xf32>
    %223 = arith.addf %219, %222 : vector<8x32xf32>
    %224 = math.tanh %223 : vector<8x32xf32>
    %cst_59 = arith.constant 1.000000e+00 : f32
    %225 = vector.broadcast %cst_59 : f32 to vector<8x32xf32>
    %226 = arith.subf %225, %218 : vector<8x32xf32>
    %227 = arith.mulf %226, %224 : vector<8x32xf32>
    %228 = arith.mulf %218, %148 : vector<8x32xf32>
    %229 = arith.addf %227, %228 : vector<8x32xf32>
    %230 = vector.shape_cast %202 : vector<8x1xi1> to vector<8x1xi1>
    %231 = vector.broadcast %230 : vector<8x1xi1> to vector<8x32xi1>
    %232 = arith.select %231, %229, %148 : vector<8x32xi1>, vector<8x32xf32>
    %cst_60 = arith.constant 0.000000e+00 : f32
    %233 = vector.shape_cast %202 : vector<8x1xi1> to vector<8x1xi1>
    %234 = vector.broadcast %233 : vector<8x1xi1> to vector<8x32xi1>
    %235 = vector.broadcast %cst_60 : f32 to vector<8x32xf32>
    %236 = arith.select %234, %232, %235 : vector<8x32xi1>, vector<8x32xf32>
    %237 = vector.extract_strided_slice %200 {offsets = [0, 96], sizes = [8, 96], strides = [1, 1]} : vector<8x192xf32> to vector<8x96xf32>
    %238 = vector.extract_strided_slice %22 {offsets = [0, 5], sizes = [8, 1], strides = [1, 1]} : vector<8x8xi1> to vector<8x1xi1>
    %239 = vector.extract_strided_slice %198 {offsets = [0, 0], sizes = [8, 32], strides = [1, 1]} : vector<8x96xf32> to vector<8x32xf32>
    %240 = vector.extract_strided_slice %237 {offsets = [0, 0], sizes = [8, 32], strides = [1, 1]} : vector<8x96xf32> to vector<8x32xf32>
    %241 = arith.addf %239, %240 : vector<8x32xf32>
    %242 = arith.negf %241 : vector<8x32xf32>
    %243 = math.exp %242 : vector<8x32xf32>
    %cst_61 = arith.constant 1.000000e+00 : f32
    %244 = vector.broadcast %cst_61 : f32 to vector<8x32xf32>
    %245 = arith.addf %244, %243 : vector<8x32xf32>
    %246 = arith.divf %244, %245 : vector<8x32xf32>
    %247 = vector.extract_strided_slice %198 {offsets = [0, 32], sizes = [8, 32], strides = [1, 1]} : vector<8x96xf32> to vector<8x32xf32>
    %248 = vector.extract_strided_slice %237 {offsets = [0, 32], sizes = [8, 32], strides = [1, 1]} : vector<8x96xf32> to vector<8x32xf32>
    %249 = arith.addf %247, %248 : vector<8x32xf32>
    %250 = arith.negf %249 : vector<8x32xf32>
    %251 = math.exp %250 : vector<8x32xf32>
    %cst_62 = arith.constant 1.000000e+00 : f32
    %252 = vector.broadcast %cst_62 : f32 to vector<8x32xf32>
    %253 = arith.addf %252, %251 : vector<8x32xf32>
    %254 = arith.divf %252, %253 : vector<8x32xf32>
    %255 = vector.extract_strided_slice %198 {offsets = [0, 64], sizes = [8, 32], strides = [1, 1]} : vector<8x96xf32> to vector<8x32xf32>
    %256 = vector.extract_strided_slice %237 {offsets = [0, 64], sizes = [8, 32], strides = [1, 1]} : vector<8x96xf32> to vector<8x32xf32>
    %257 = arith.addf %256, %10 : vector<8x32xf32>
    %258 = arith.mulf %246, %257 : vector<8x32xf32>
    %259 = arith.addf %255, %258 : vector<8x32xf32>
    %260 = math.tanh %259 : vector<8x32xf32>
    %cst_63 = arith.constant 1.000000e+00 : f32
    %261 = vector.broadcast %cst_63 : f32 to vector<8x32xf32>
    %262 = arith.subf %261, %254 : vector<8x32xf32>
    %263 = arith.mulf %262, %260 : vector<8x32xf32>
    %264 = arith.mulf %254, %184 : vector<8x32xf32>
    %265 = arith.addf %263, %264 : vector<8x32xf32>
    %266 = vector.shape_cast %238 : vector<8x1xi1> to vector<8x1xi1>
    %267 = vector.broadcast %266 : vector<8x1xi1> to vector<8x32xi1>
    %268 = arith.select %267, %265, %184 : vector<8x32xi1>, vector<8x32xf32>
    %cst_64 = arith.constant 0.000000e+00 : f32
    %269 = vector.shape_cast %238 : vector<8x1xi1> to vector<8x1xi1>
    %270 = vector.broadcast %269 : vector<8x1xi1> to vector<8x32xi1>
    %271 = vector.broadcast %cst_64 : f32 to vector<8x32xf32>
    %272 = arith.select %270, %268, %271 : vector<8x32xi1>, vector<8x32xf32>
    %273 = vector.shape_cast %236 : vector<8x32xf32> to vector<8x1x32xf32>
    %c0_65 = arith.constant 0 : index
    %c2_66 = arith.constant 2 : index
    %c0_67 = arith.constant 0 : index
    %274 = vector.load %arg7[%c0_65, %c2_66, %c0_67] : memref<8x8x32xf32, #tpu.memory_space<vmem>>, vector<8x1x32xf32>
    tpu.vector_store %arg7[%c0_65, %c2_66, %c0_67], %273 {strides = array<i32>} : memref<8x8x32xf32, #tpu.memory_space<vmem>>, vector<8x1x32xf32>,
    %275 = vector.shape_cast %272 : vector<8x32xf32> to vector<8x1x32xf32>
    %c0_68 = arith.constant 0 : index
    %c5_69 = arith.constant 5 : index
    %c0_70 = arith.constant 0 : index
    %276 = vector.load %arg8[%c0_68, %c5_69, %c0_70] : memref<8x8x32xf32, #tpu.memory_space<vmem>>, vector<8x1x32xf32>
    tpu.vector_store %arg8[%c0_68, %c5_69, %c0_70], %275 {strides = array<i32>} : memref<8x8x32xf32, #tpu.memory_space<vmem>>, vector<8x1x32xf32>,
    %c0_71 = arith.constant 0 : index
    %c3 = arith.constant 3 : index
    %c0_72 = arith.constant 0 : index
    %277 = vector.load %arg1[%c0_71, %c3, %c0_72] : memref<8x8x96xbf16, #tpu.memory_space<vmem>>, vector<8x1x96xbf16>
    %278 = vector.shape_cast %277 : vector<8x1x96xbf16> to vector<8x96xbf16>
    %279 = arith.extf %278 : vector<8x96xbf16> to vector<8x96xf32>
    %c0_73 = arith.constant 0 : index
    %c4 = arith.constant 4 : index
    %c0_74 = arith.constant 0 : index
    %280 = vector.load %arg2[%c0_73, %c4, %c0_74] : memref<8x8x96xbf16, #tpu.memory_space<vmem>>, vector<8x1x96xbf16>
    %281 = vector.shape_cast %280 : vector<8x1x96xbf16> to vector<8x96xbf16>
    %282 = arith.extf %281 : vector<8x96xbf16> to vector<8x96xf32>
    %283 = tpu.concatenate %232, %268 in 1 : vector<8x32xf32>, vector<8x32xf32> -> vector<8x64xf32>
    %cst_75 = arith.constant dense<0.000000e+00> : vector<8x192xf32>
    %284 = tpu.matmul %283, %4, %cst_75 {dimension_numbers = #tpu.dot_dimension_numbers<[1], [0], [0], [1], [0, 0, 1, 1], [], []>} : vector<8x64xf32>, vector<64x192xf32>, vector<8x192xf32> -> vector<8x192xf32>
    %285 = vector.extract_strided_slice %284 {offsets = [0, 0], sizes = [8, 96], strides = [1, 1]} : vector<8x192xf32> to vector<8x96xf32>
    %286 = vector.extract_strided_slice %16 {offsets = [0, 3], sizes = [8, 1], strides = [1, 1]} : vector<8x8xi1> to vector<8x1xi1>
    %287 = vector.extract_strided_slice %279 {offsets = [0, 0], sizes = [8, 32], strides = [1, 1]} : vector<8x96xf32> to vector<8x32xf32>
    %288 = vector.extract_strided_slice %285 {offsets = [0, 0], sizes = [8, 32], strides = [1, 1]} : vector<8x96xf32> to vector<8x32xf32>
    %289 = arith.addf %287, %288 : vector<8x32xf32>
    %290 = arith.negf %289 : vector<8x32xf32>
    %291 = math.exp %290 : vector<8x32xf32>
    %cst_76 = arith.constant 1.000000e+00 : f32
    %292 = vector.broadcast %cst_76 : f32 to vector<8x32xf32>
    %293 = arith.addf %292, %291 : vector<8x32xf32>
    %294 = arith.divf %292, %293 : vector<8x32xf32>
    %295 = vector.extract_strided_slice %279 {offsets = [0, 32], sizes = [8, 32], strides = [1, 1]} : vector<8x96xf32> to vector<8x32xf32>
    %296 = vector.extract_strided_slice %285 {offsets = [0, 32], sizes = [8, 32], strides = [1, 1]} : vector<8x96xf32> to vector<8x32xf32>
    %297 = arith.addf %295, %296 : vector<8x32xf32>
    %298 = arith.negf %297 : vector<8x32xf32>
    %299 = math.exp %298 : vector<8x32xf32>
    %cst_77 = arith.constant 1.000000e+00 : f32
    %300 = vector.broadcast %cst_77 : f32 to vector<8x32xf32>
    %301 = arith.addf %300, %299 : vector<8x32xf32>
    %302 = arith.divf %300, %301 : vector<8x32xf32>
    %303 = vector.extract_strided_slice %279 {offsets = [0, 64], sizes = [8, 32], strides = [1, 1]} : vector<8x96xf32> to vector<8x32xf32>
    %304 = vector.extract_strided_slice %285 {offsets = [0, 64], sizes = [8, 32], strides = [1, 1]} : vector<8x96xf32> to vector<8x32xf32>
    %305 = arith.addf %304, %7 : vector<8x32xf32>
    %306 = arith.mulf %294, %305 : vector<8x32xf32>
    %307 = arith.addf %303, %306 : vector<8x32xf32>
    %308 = math.tanh %307 : vector<8x32xf32>
    %cst_78 = arith.constant 1.000000e+00 : f32
    %309 = vector.broadcast %cst_78 : f32 to vector<8x32xf32>
    %310 = arith.subf %309, %302 : vector<8x32xf32>
    %311 = arith.mulf %310, %308 : vector<8x32xf32>
    %312 = arith.mulf %302, %232 : vector<8x32xf32>
    %313 = arith.addf %311, %312 : vector<8x32xf32>
    %314 = vector.shape_cast %286 : vector<8x1xi1> to vector<8x1xi1>
    %315 = vector.broadcast %314 : vector<8x1xi1> to vector<8x32xi1>
    %316 = arith.select %315, %313, %232 : vector<8x32xi1>, vector<8x32xf32>
    %cst_79 = arith.constant 0.000000e+00 : f32
    %317 = vector.shape_cast %286 : vector<8x1xi1> to vector<8x1xi1>
    %318 = vector.broadcast %317 : vector<8x1xi1> to vector<8x32xi1>
    %319 = vector.broadcast %cst_79 : f32 to vector<8x32xf32>
    %320 = arith.select %318, %316, %319 : vector<8x32xi1>, vector<8x32xf32>
    %321 = vector.extract_strided_slice %284 {offsets = [0, 96], sizes = [8, 96], strides = [1, 1]} : vector<8x192xf32> to vector<8x96xf32>
    %322 = vector.extract_strided_slice %22 {offsets = [0, 4], sizes = [8, 1], strides = [1, 1]} : vector<8x8xi1> to vector<8x1xi1>
    %323 = vector.extract_strided_slice %282 {offsets = [0, 0], sizes = [8, 32], strides = [1, 1]} : vector<8x96xf32> to vector<8x32xf32>
    %324 = vector.extract_strided_slice %321 {offsets = [0, 0], sizes = [8, 32], strides = [1, 1]} : vector<8x96xf32> to vector<8x32xf32>
    %325 = arith.addf %323, %324 : vector<8x32xf32>
    %326 = arith.negf %325 : vector<8x32xf32>
    %327 = math.exp %326 : vector<8x32xf32>
    %cst_80 = arith.constant 1.000000e+00 : f32
    %328 = vector.broadcast %cst_80 : f32 to vector<8x32xf32>
    %329 = arith.addf %328, %327 : vector<8x32xf32>
    %330 = arith.divf %328, %329 : vector<8x32xf32>
    %331 = vector.extract_strided_slice %282 {offsets = [0, 32], sizes = [8, 32], strides = [1, 1]} : vector<8x96xf32> to vector<8x32xf32>
    %332 = vector.extract_strided_slice %321 {offsets = [0, 32], sizes = [8, 32], strides = [1, 1]} : vector<8x96xf32> to vector<8x32xf32>
    %333 = arith.addf %331, %332 : vector<8x32xf32>
    %334 = arith.negf %333 : vector<8x32xf32>
    %335 = math.exp %334 : vector<8x32xf32>
    %cst_81 = arith.constant 1.000000e+00 : f32
    %336 = vector.broadcast %cst_81 : f32 to vector<8x32xf32>
    %337 = arith.addf %336, %335 : vector<8x32xf32>
    %338 = arith.divf %336, %337 : vector<8x32xf32>
    %339 = vector.extract_strided_slice %282 {offsets = [0, 64], sizes = [8, 32], strides = [1, 1]} : vector<8x96xf32> to vector<8x32xf32>
    %340 = vector.extract_strided_slice %321 {offsets = [0, 64], sizes = [8, 32], strides = [1, 1]} : vector<8x96xf32> to vector<8x32xf32>
    %341 = arith.addf %340, %10 : vector<8x32xf32>
    %342 = arith.mulf %330, %341 : vector<8x32xf32>
    %343 = arith.addf %339, %342 : vector<8x32xf32>
    %344 = math.tanh %343 : vector<8x32xf32>
    %cst_82 = arith.constant 1.000000e+00 : f32
    %345 = vector.broadcast %cst_82 : f32 to vector<8x32xf32>
    %346 = arith.subf %345, %338 : vector<8x32xf32>
    %347 = arith.mulf %346, %344 : vector<8x32xf32>
    %348 = arith.mulf %338, %268 : vector<8x32xf32>
    %349 = arith.addf %347, %348 : vector<8x32xf32>
    %350 = vector.shape_cast %322 : vector<8x1xi1> to vector<8x1xi1>
    %351 = vector.broadcast %350 : vector<8x1xi1> to vector<8x32xi1>
    %352 = arith.select %351, %349, %268 : vector<8x32xi1>, vector<8x32xf32>
    %cst_83 = arith.constant 0.000000e+00 : f32
    %353 = vector.shape_cast %322 : vector<8x1xi1> to vector<8x1xi1>
    %354 = vector.broadcast %353 : vector<8x1xi1> to vector<8x32xi1>
    %355 = vector.broadcast %cst_83 : f32 to vector<8x32xf32>
    %356 = arith.select %354, %352, %355 : vector<8x32xi1>, vector<8x32xf32>
    %357 = vector.shape_cast %320 : vector<8x32xf32> to vector<8x1x32xf32>
    %c0_84 = arith.constant 0 : index
    %c3_85 = arith.constant 3 : index
    %c0_86 = arith.constant 0 : index
    %358 = vector.load %arg7[%c0_84, %c3_85, %c0_86] : memref<8x8x32xf32, #tpu.memory_space<vmem>>, vector<8x1x32xf32>
    tpu.vector_store %arg7[%c0_84, %c3_85, %c0_86], %357 {strides = array<i32>} : memref<8x8x32xf32, #tpu.memory_space<vmem>>, vector<8x1x32xf32>,
    %359 = vector.shape_cast %356 : vector<8x32xf32> to vector<8x1x32xf32>
    %c0_87 = arith.constant 0 : index
    %c4_88 = arith.constant 4 : index
    %c0_89 = arith.constant 0 : index
    %360 = vector.load %arg8[%c0_87, %c4_88, %c0_89] : memref<8x8x32xf32, #tpu.memory_space<vmem>>, vector<8x1x32xf32>
    tpu.vector_store %arg8[%c0_87, %c4_88, %c0_89], %359 {strides = array<i32>} : memref<8x8x32xf32, #tpu.memory_space<vmem>>, vector<8x1x32xf32>,
    %c0_90 = arith.constant 0 : index
    %c4_91 = arith.constant 4 : index
    %c0_92 = arith.constant 0 : index
    %361 = vector.load %arg1[%c0_90, %c4_91, %c0_92] : memref<8x8x96xbf16, #tpu.memory_space<vmem>>, vector<8x1x96xbf16>
    %362 = vector.shape_cast %361 : vector<8x1x96xbf16> to vector<8x96xbf16>
    %363 = arith.extf %362 : vector<8x96xbf16> to vector<8x96xf32>
    %c0_93 = arith.constant 0 : index
    %c3_94 = arith.constant 3 : index
    %c0_95 = arith.constant 0 : index
    %364 = vector.load %arg2[%c0_93, %c3_94, %c0_95] : memref<8x8x96xbf16, #tpu.memory_space<vmem>>, vector<8x1x96xbf16>
    %365 = vector.shape_cast %364 : vector<8x1x96xbf16> to vector<8x96xbf16>
    %366 = arith.extf %365 : vector<8x96xbf16> to vector<8x96xf32>
    %367 = tpu.concatenate %316, %352 in 1 : vector<8x32xf32>, vector<8x32xf32> -> vector<8x64xf32>
    %cst_96 = arith.constant dense<0.000000e+00> : vector<8x192xf32>
    %368 = tpu.matmul %367, %4, %cst_96 {dimension_numbers = #tpu.dot_dimension_numbers<[1], [0], [0], [1], [0, 0, 1, 1], [], []>} : vector<8x64xf32>, vector<64x192xf32>, vector<8x192xf32> -> vector<8x192xf32>
    %369 = vector.extract_strided_slice %368 {offsets = [0, 0], sizes = [8, 96], strides = [1, 1]} : vector<8x192xf32> to vector<8x96xf32>
    %370 = vector.extract_strided_slice %16 {offsets = [0, 4], sizes = [8, 1], strides = [1, 1]} : vector<8x8xi1> to vector<8x1xi1>
    %371 = vector.extract_strided_slice %363 {offsets = [0, 0], sizes = [8, 32], strides = [1, 1]} : vector<8x96xf32> to vector<8x32xf32>
    %372 = vector.extract_strided_slice %369 {offsets = [0, 0], sizes = [8, 32], strides = [1, 1]} : vector<8x96xf32> to vector<8x32xf32>
    %373 = arith.addf %371, %372 : vector<8x32xf32>
    %374 = arith.negf %373 : vector<8x32xf32>
    %375 = math.exp %374 : vector<8x32xf32>
    %cst_97 = arith.constant 1.000000e+00 : f32
    %376 = vector.broadcast %cst_97 : f32 to vector<8x32xf32>
    %377 = arith.addf %376, %375 : vector<8x32xf32>
    %378 = arith.divf %376, %377 : vector<8x32xf32>
    %379 = vector.extract_strided_slice %363 {offsets = [0, 32], sizes = [8, 32], strides = [1, 1]} : vector<8x96xf32> to vector<8x32xf32>
    %380 = vector.extract_strided_slice %369 {offsets = [0, 32], sizes = [8, 32], strides = [1, 1]} : vector<8x96xf32> to vector<8x32xf32>
    %381 = arith.addf %379, %380 : vector<8x32xf32>
    %382 = arith.negf %381 : vector<8x32xf32>
    %383 = math.exp %382 : vector<8x32xf32>
    %cst_98 = arith.constant 1.000000e+00 : f32
    %384 = vector.broadcast %cst_98 : f32 to vector<8x32xf32>
    %385 = arith.addf %384, %383 : vector<8x32xf32>
    %386 = arith.divf %384, %385 : vector<8x32xf32>
    %387 = vector.extract_strided_slice %363 {offsets = [0, 64], sizes = [8, 32], strides = [1, 1]} : vector<8x96xf32> to vector<8x32xf32>
    %388 = vector.extract_strided_slice %369 {offsets = [0, 64], sizes = [8, 32], strides = [1, 1]} : vector<8x96xf32> to vector<8x32xf32>
    %389 = arith.addf %388, %7 : vector<8x32xf32>
    %390 = arith.mulf %378, %389 : vector<8x32xf32>
    %391 = arith.addf %387, %390 : vector<8x32xf32>
    %392 = math.tanh %391 : vector<8x32xf32>
    %cst_99 = arith.constant 1.000000e+00 : f32
    %393 = vector.broadcast %cst_99 : f32 to vector<8x32xf32>
    %394 = arith.subf %393, %386 : vector<8x32xf32>
    %395 = arith.mulf %394, %392 : vector<8x32xf32>
    %396 = arith.mulf %386, %316 : vector<8x32xf32>
    %397 = arith.addf %395, %396 : vector<8x32xf32>
    %398 = vector.shape_cast %370 : vector<8x1xi1> to vector<8x1xi1>
    %399 = vector.broadcast %398 : vector<8x1xi1> to vector<8x32xi1>
    %400 = arith.select %399, %397, %316 : vector<8x32xi1>, vector<8x32xf32>
    %cst_100 = arith.constant 0.000000e+00 : f32
    %401 = vector.shape_cast %370 : vector<8x1xi1> to vector<8x1xi1>
    %402 = vector.broadcast %401 : vector<8x1xi1> to vector<8x32xi1>
    %403 = vector.broadcast %cst_100 : f32 to vector<8x32xf32>
    %404 = arith.select %402, %400, %403 : vector<8x32xi1>, vector<8x32xf32>
    %405 = vector.extract_strided_slice %368 {offsets = [0, 96], sizes = [8, 96], strides = [1, 1]} : vector<8x192xf32> to vector<8x96xf32>
    %406 = vector.extract_strided_slice %22 {offsets = [0, 3], sizes = [8, 1], strides = [1, 1]} : vector<8x8xi1> to vector<8x1xi1>
    %407 = vector.extract_strided_slice %366 {offsets = [0, 0], sizes = [8, 32], strides = [1, 1]} : vector<8x96xf32> to vector<8x32xf32>
    %408 = vector.extract_strided_slice %405 {offsets = [0, 0], sizes = [8, 32], strides = [1, 1]} : vector<8x96xf32> to vector<8x32xf32>
    %409 = arith.addf %407, %408 : vector<8x32xf32>
    %410 = arith.negf %409 : vector<8x32xf32>
    %411 = math.exp %410 : vector<8x32xf32>
    %cst_101 = arith.constant 1.000000e+00 : f32
    %412 = vector.broadcast %cst_101 : f32 to vector<8x32xf32>
    %413 = arith.addf %412, %411 : vector<8x32xf32>
    %414 = arith.divf %412, %413 : vector<8x32xf32>
    %415 = vector.extract_strided_slice %366 {offsets = [0, 32], sizes = [8, 32], strides = [1, 1]} : vector<8x96xf32> to vector<8x32xf32>
    %416 = vector.extract_strided_slice %405 {offsets = [0, 32], sizes = [8, 32], strides = [1, 1]} : vector<8x96xf32> to vector<8x32xf32>
    %417 = arith.addf %415, %416 : vector<8x32xf32>
    %418 = arith.negf %417 : vector<8x32xf32>
    %419 = math.exp %418 : vector<8x32xf32>
    %cst_102 = arith.constant 1.000000e+00 : f32
    %420 = vector.broadcast %cst_102 : f32 to vector<8x32xf32>
    %421 = arith.addf %420, %419 : vector<8x32xf32>
    %422 = arith.divf %420, %421 : vector<8x32xf32>
    %423 = vector.extract_strided_slice %366 {offsets = [0, 64], sizes = [8, 32], strides = [1, 1]} : vector<8x96xf32> to vector<8x32xf32>
    %424 = vector.extract_strided_slice %405 {offsets = [0, 64], sizes = [8, 32], strides = [1, 1]} : vector<8x96xf32> to vector<8x32xf32>
    %425 = arith.addf %424, %10 : vector<8x32xf32>
    %426 = arith.mulf %414, %425 : vector<8x32xf32>
    %427 = arith.addf %423, %426 : vector<8x32xf32>
    %428 = math.tanh %427 : vector<8x32xf32>
    %cst_103 = arith.constant 1.000000e+00 : f32
    %429 = vector.broadcast %cst_103 : f32 to vector<8x32xf32>
    %430 = arith.subf %429, %422 : vector<8x32xf32>
    %431 = arith.mulf %430, %428 : vector<8x32xf32>
    %432 = arith.mulf %422, %352 : vector<8x32xf32>
    %433 = arith.addf %431, %432 : vector<8x32xf32>
    %434 = vector.shape_cast %406 : vector<8x1xi1> to vector<8x1xi1>
    %435 = vector.broadcast %434 : vector<8x1xi1> to vector<8x32xi1>
    %436 = arith.select %435, %433, %352 : vector<8x32xi1>, vector<8x32xf32>
    %cst_104 = arith.constant 0.000000e+00 : f32
    %437 = vector.shape_cast %406 : vector<8x1xi1> to vector<8x1xi1>
    %438 = vector.broadcast %437 : vector<8x1xi1> to vector<8x32xi1>
    %439 = vector.broadcast %cst_104 : f32 to vector<8x32xf32>
    %440 = arith.select %438, %436, %439 : vector<8x32xi1>, vector<8x32xf32>
    %441 = vector.shape_cast %404 : vector<8x32xf32> to vector<8x1x32xf32>
    %c0_105 = arith.constant 0 : index
    %c4_106 = arith.constant 4 : index
    %c0_107 = arith.constant 0 : index
    %442 = vector.load %arg7[%c0_105, %c4_106, %c0_107] : memref<8x8x32xf32, #tpu.memory_space<vmem>>, vector<8x1x32xf32>
    tpu.vector_store %arg7[%c0_105, %c4_106, %c0_107], %441 {strides = array<i32>} : memref<8x8x32xf32, #tpu.memory_space<vmem>>, vector<8x1x32xf32>,
    %443 = vector.shape_cast %440 : vector<8x32xf32> to vector<8x1x32xf32>
    %c0_108 = arith.constant 0 : index
    %c3_109 = arith.constant 3 : index
    %c0_110 = arith.constant 0 : index
    %444 = vector.load %arg8[%c0_108, %c3_109, %c0_110] : memref<8x8x32xf32, #tpu.memory_space<vmem>>, vector<8x1x32xf32>
    tpu.vector_store %arg8[%c0_108, %c3_109, %c0_110], %443 {strides = array<i32>} : memref<8x8x32xf32, #tpu.memory_space<vmem>>, vector<8x1x32xf32>,
    %c0_111 = arith.constant 0 : index
    %c5_112 = arith.constant 5 : index
    %c0_113 = arith.constant 0 : index
    %445 = vector.load %arg1[%c0_111, %c5_112, %c0_113] : memref<8x8x96xbf16, #tpu.memory_space<vmem>>, vector<8x1x96xbf16>
    %446 = vector.shape_cast %445 : vector<8x1x96xbf16> to vector<8x96xbf16>
    %447 = arith.extf %446 : vector<8x96xbf16> to vector<8x96xf32>
    %c0_114 = arith.constant 0 : index
    %c2_115 = arith.constant 2 : index
    %c0_116 = arith.constant 0 : index
    %448 = vector.load %arg2[%c0_114, %c2_115, %c0_116] : memref<8x8x96xbf16, #tpu.memory_space<vmem>>, vector<8x1x96xbf16>
    %449 = vector.shape_cast %448 : vector<8x1x96xbf16> to vector<8x96xbf16>
    %450 = arith.extf %449 : vector<8x96xbf16> to vector<8x96xf32>
    %451 = tpu.concatenate %400, %436 in 1 : vector<8x32xf32>, vector<8x32xf32> -> vector<8x64xf32>
    %cst_117 = arith.constant dense<0.000000e+00> : vector<8x192xf32>
    %452 = tpu.matmul %451, %4, %cst_117 {dimension_numbers = #tpu.dot_dimension_numbers<[1], [0], [0], [1], [0, 0, 1, 1], [], []>} : vector<8x64xf32>, vector<64x192xf32>, vector<8x192xf32> -> vector<8x192xf32>
    %453 = vector.extract_strided_slice %452 {offsets = [0, 0], sizes = [8, 96], strides = [1, 1]} : vector<8x192xf32> to vector<8x96xf32>
    %454 = vector.extract_strided_slice %16 {offsets = [0, 5], sizes = [8, 1], strides = [1, 1]} : vector<8x8xi1> to vector<8x1xi1>
    %455 = vector.extract_strided_slice %447 {offsets = [0, 0], sizes = [8, 32], strides = [1, 1]} : vector<8x96xf32> to vector<8x32xf32>
    %456 = vector.extract_strided_slice %453 {offsets = [0, 0], sizes = [8, 32], strides = [1, 1]} : vector<8x96xf32> to vector<8x32xf32>
    %457 = arith.addf %455, %456 : vector<8x32xf32>
    %458 = arith.negf %457 : vector<8x32xf32>
    %459 = math.exp %458 : vector<8x32xf32>
    %cst_118 = arith.constant 1.000000e+00 : f32
    %460 = vector.broadcast %cst_118 : f32 to vector<8x32xf32>
    %461 = arith.addf %460, %459 : vector<8x32xf32>
    %462 = arith.divf %460, %461 : vector<8x32xf32>
    %463 = vector.extract_strided_slice %447 {offsets = [0, 32], sizes = [8, 32], strides = [1, 1]} : vector<8x96xf32> to vector<8x32xf32>
    %464 = vector.extract_strided_slice %453 {offsets = [0, 32], sizes = [8, 32], strides = [1, 1]} : vector<8x96xf32> to vector<8x32xf32>
    %465 = arith.addf %463, %464 : vector<8x32xf32>
    %466 = arith.negf %465 : vector<8x32xf32>
    %467 = math.exp %466 : vector<8x32xf32>
    %cst_119 = arith.constant 1.000000e+00 : f32
    %468 = vector.broadcast %cst_119 : f32 to vector<8x32xf32>
    %469 = arith.addf %468, %467 : vector<8x32xf32>
    %470 = arith.divf %468, %469 : vector<8x32xf32>
    %471 = vector.extract_strided_slice %447 {offsets = [0, 64], sizes = [8, 32], strides = [1, 1]} : vector<8x96xf32> to vector<8x32xf32>
    %472 = vector.extract_strided_slice %453 {offsets = [0, 64], sizes = [8, 32], strides = [1, 1]} : vector<8x96xf32> to vector<8x32xf32>
    %473 = arith.addf %472, %7 : vector<8x32xf32>
    %474 = arith.mulf %462, %473 : vector<8x32xf32>
    %475 = arith.addf %471, %474 : vector<8x32xf32>
    %476 = math.tanh %475 : vector<8x32xf32>
    %cst_120 = arith.constant 1.000000e+00 : f32
    %477 = vector.broadcast %cst_120 : f32 to vector<8x32xf32>
    %478 = arith.subf %477, %470 : vector<8x32xf32>
    %479 = arith.mulf %478, %476 : vector<8x32xf32>
    %480 = arith.mulf %470, %400 : vector<8x32xf32>
    %481 = arith.addf %479, %480 : vector<8x32xf32>
    %482 = vector.shape_cast %454 : vector<8x1xi1> to vector<8x1xi1>
    %483 = vector.broadcast %482 : vector<8x1xi1> to vector<8x32xi1>
    %484 = arith.select %483, %481, %400 : vector<8x32xi1>, vector<8x32xf32>
    %cst_121 = arith.constant 0.000000e+00 : f32
    %485 = vector.shape_cast %454 : vector<8x1xi1> to vector<8x1xi1>
    %486 = vector.broadcast %485 : vector<8x1xi1> to vector<8x32xi1>
    %487 = vector.broadcast %cst_121 : f32 to vector<8x32xf32>
    %488 = arith.select %486, %484, %487 : vector<8x32xi1>, vector<8x32xf32>
    %489 = vector.extract_strided_slice %452 {offsets = [0, 96], sizes = [8, 96], strides = [1, 1]} : vector<8x192xf32> to vector<8x96xf32>
    %490 = vector.extract_strided_slice %22 {offsets = [0, 2], sizes = [8, 1], strides = [1, 1]} : vector<8x8xi1> to vector<8x1xi1>
    %491 = vector.extract_strided_slice %450 {offsets = [0, 0], sizes = [8, 32], strides = [1, 1]} : vector<8x96xf32> to vector<8x32xf32>
    %492 = vector.extract_strided_slice %489 {offsets = [0, 0], sizes = [8, 32], strides = [1, 1]} : vector<8x96xf32> to vector<8x32xf32>
    %493 = arith.addf %491, %492 : vector<8x32xf32>
    %494 = arith.negf %493 : vector<8x32xf32>
    %495 = math.exp %494 : vector<8x32xf32>
    %cst_122 = arith.constant 1.000000e+00 : f32
    %496 = vector.broadcast %cst_122 : f32 to vector<8x32xf32>
    %497 = arith.addf %496, %495 : vector<8x32xf32>
    %498 = arith.divf %496, %497 : vector<8x32xf32>
    %499 = vector.extract_strided_slice %450 {offsets = [0, 32], sizes = [8, 32], strides = [1, 1]} : vector<8x96xf32> to vector<8x32xf32>
    %500 = vector.extract_strided_slice %489 {offsets = [0, 32], sizes = [8, 32], strides = [1, 1]} : vector<8x96xf32> to vector<8x32xf32>
    %501 = arith.addf %499, %500 : vector<8x32xf32>
    %502 = arith.negf %501 : vector<8x32xf32>
    %503 = math.exp %502 : vector<8x32xf32>
    %cst_123 = arith.constant 1.000000e+00 : f32
    %504 = vector.broadcast %cst_123 : f32 to vector<8x32xf32>
    %505 = arith.addf %504, %503 : vector<8x32xf32>
    %506 = arith.divf %504, %505 : vector<8x32xf32>
    %507 = vector.extract_strided_slice %450 {offsets = [0, 64], sizes = [8, 32], strides = [1, 1]} : vector<8x96xf32> to vector<8x32xf32>
    %508 = vector.extract_strided_slice %489 {offsets = [0, 64], sizes = [8, 32], strides = [1, 1]} : vector<8x96xf32> to vector<8x32xf32>
    %509 = arith.addf %508, %10 : vector<8x32xf32>
    %510 = arith.mulf %498, %509 : vector<8x32xf32>
    %511 = arith.addf %507, %510 : vector<8x32xf32>
    %512 = math.tanh %511 : vector<8x32xf32>
    %cst_124 = arith.constant 1.000000e+00 : f32
    %513 = vector.broadcast %cst_124 : f32 to vector<8x32xf32>
    %514 = arith.subf %513, %506 : vector<8x32xf32>
    %515 = arith.mulf %514, %512 : vector<8x32xf32>
    %516 = arith.mulf %506, %436 : vector<8x32xf32>
    %517 = arith.addf %515, %516 : vector<8x32xf32>
    %518 = vector.shape_cast %490 : vector<8x1xi1> to vector<8x1xi1>
    %519 = vector.broadcast %518 : vector<8x1xi1> to vector<8x32xi1>
    %520 = arith.select %519, %517, %436 : vector<8x32xi1>, vector<8x32xf32>
    %cst_125 = arith.constant 0.000000e+00 : f32
    %521 = vector.shape_cast %490 : vector<8x1xi1> to vector<8x1xi1>
    %522 = vector.broadcast %521 : vector<8x1xi1> to vector<8x32xi1>
    %523 = vector.broadcast %cst_125 : f32 to vector<8x32xf32>
    %524 = arith.select %522, %520, %523 : vector<8x32xi1>, vector<8x32xf32>
    %525 = vector.shape_cast %488 : vector<8x32xf32> to vector<8x1x32xf32>
    %c0_126 = arith.constant 0 : index
    %c5_127 = arith.constant 5 : index
    %c0_128 = arith.constant 0 : index
    %526 = vector.load %arg7[%c0_126, %c5_127, %c0_128] : memref<8x8x32xf32, #tpu.memory_space<vmem>>, vector<8x1x32xf32>
    tpu.vector_store %arg7[%c0_126, %c5_127, %c0_128], %525 {strides = array<i32>} : memref<8x8x32xf32, #tpu.memory_space<vmem>>, vector<8x1x32xf32>,
    %527 = vector.shape_cast %524 : vector<8x32xf32> to vector<8x1x32xf32>
    %c0_129 = arith.constant 0 : index
    %c2_130 = arith.constant 2 : index
    %c0_131 = arith.constant 0 : index
    %528 = vector.load %arg8[%c0_129, %c2_130, %c0_131] : memref<8x8x32xf32, #tpu.memory_space<vmem>>, vector<8x1x32xf32>
    tpu.vector_store %arg8[%c0_129, %c2_130, %c0_131], %527 {strides = array<i32>} : memref<8x8x32xf32, #tpu.memory_space<vmem>>, vector<8x1x32xf32>,
    %c0_132 = arith.constant 0 : index
    %c6_133 = arith.constant 6 : index
    %c0_134 = arith.constant 0 : index
    %529 = vector.load %arg1[%c0_132, %c6_133, %c0_134] : memref<8x8x96xbf16, #tpu.memory_space<vmem>>, vector<8x1x96xbf16>
    %530 = vector.shape_cast %529 : vector<8x1x96xbf16> to vector<8x96xbf16>
    %531 = arith.extf %530 : vector<8x96xbf16> to vector<8x96xf32>
    %c0_135 = arith.constant 0 : index
    %c1_136 = arith.constant 1 : index
    %c0_137 = arith.constant 0 : index
    %532 = vector.load %arg2[%c0_135, %c1_136, %c0_137] : memref<8x8x96xbf16, #tpu.memory_space<vmem>>, vector<8x1x96xbf16>
    %533 = vector.shape_cast %532 : vector<8x1x96xbf16> to vector<8x96xbf16>
    %534 = arith.extf %533 : vector<8x96xbf16> to vector<8x96xf32>
    %535 = tpu.concatenate %484, %520 in 1 : vector<8x32xf32>, vector<8x32xf32> -> vector<8x64xf32>
    %cst_138 = arith.constant dense<0.000000e+00> : vector<8x192xf32>
    %536 = tpu.matmul %535, %4, %cst_138 {dimension_numbers = #tpu.dot_dimension_numbers<[1], [0], [0], [1], [0, 0, 1, 1], [], []>} : vector<8x64xf32>, vector<64x192xf32>, vector<8x192xf32> -> vector<8x192xf32>
    %537 = vector.extract_strided_slice %536 {offsets = [0, 0], sizes = [8, 96], strides = [1, 1]} : vector<8x192xf32> to vector<8x96xf32>
    %538 = vector.extract_strided_slice %16 {offsets = [0, 6], sizes = [8, 1], strides = [1, 1]} : vector<8x8xi1> to vector<8x1xi1>
    %539 = vector.extract_strided_slice %531 {offsets = [0, 0], sizes = [8, 32], strides = [1, 1]} : vector<8x96xf32> to vector<8x32xf32>
    %540 = vector.extract_strided_slice %537 {offsets = [0, 0], sizes = [8, 32], strides = [1, 1]} : vector<8x96xf32> to vector<8x32xf32>
    %541 = arith.addf %539, %540 : vector<8x32xf32>
    %542 = arith.negf %541 : vector<8x32xf32>
    %543 = math.exp %542 : vector<8x32xf32>
    %cst_139 = arith.constant 1.000000e+00 : f32
    %544 = vector.broadcast %cst_139 : f32 to vector<8x32xf32>
    %545 = arith.addf %544, %543 : vector<8x32xf32>
    %546 = arith.divf %544, %545 : vector<8x32xf32>
    %547 = vector.extract_strided_slice %531 {offsets = [0, 32], sizes = [8, 32], strides = [1, 1]} : vector<8x96xf32> to vector<8x32xf32>
    %548 = vector.extract_strided_slice %537 {offsets = [0, 32], sizes = [8, 32], strides = [1, 1]} : vector<8x96xf32> to vector<8x32xf32>
    %549 = arith.addf %547, %548 : vector<8x32xf32>
    %550 = arith.negf %549 : vector<8x32xf32>
    %551 = math.exp %550 : vector<8x32xf32>
    %cst_140 = arith.constant 1.000000e+00 : f32
    %552 = vector.broadcast %cst_140 : f32 to vector<8x32xf32>
    %553 = arith.addf %552, %551 : vector<8x32xf32>
    %554 = arith.divf %552, %553 : vector<8x32xf32>
    %555 = vector.extract_strided_slice %531 {offsets = [0, 64], sizes = [8, 32], strides = [1, 1]} : vector<8x96xf32> to vector<8x32xf32>
    %556 = vector.extract_strided_slice %537 {offsets = [0, 64], sizes = [8, 32], strides = [1, 1]} : vector<8x96xf32> to vector<8x32xf32>
    %557 = arith.addf %556, %7 : vector<8x32xf32>
    %558 = arith.mulf %546, %557 : vector<8x32xf32>
    %559 = arith.addf %555, %558 : vector<8x32xf32>
    %560 = math.tanh %559 : vector<8x32xf32>
    %cst_141 = arith.constant 1.000000e+00 : f32
    %561 = vector.broadcast %cst_141 : f32 to vector<8x32xf32>
    %562 = arith.subf %561, %554 : vector<8x32xf32>
    %563 = arith.mulf %562, %560 : vector<8x32xf32>
    %564 = arith.mulf %554, %484 : vector<8x32xf32>
    %565 = arith.addf %563, %564 : vector<8x32xf32>
    %566 = vector.shape_cast %538 : vector<8x1xi1> to vector<8x1xi1>
    %567 = vector.broadcast %566 : vector<8x1xi1> to vector<8x32xi1>
    %568 = arith.select %567, %565, %484 : vector<8x32xi1>, vector<8x32xf32>
    %cst_142 = arith.constant 0.000000e+00 : f32
    %569 = vector.shape_cast %538 : vector<8x1xi1> to vector<8x1xi1>
    %570 = vector.broadcast %569 : vector<8x1xi1> to vector<8x32xi1>
    %571 = vector.broadcast %cst_142 : f32 to vector<8x32xf32>
    %572 = arith.select %570, %568, %571 : vector<8x32xi1>, vector<8x32xf32>
    %573 = vector.extract_strided_slice %536 {offsets = [0, 96], sizes = [8, 96], strides = [1, 1]} : vector<8x192xf32> to vector<8x96xf32>
    %574 = vector.extract_strided_slice %22 {offsets = [0, 1], sizes = [8, 1], strides = [1, 1]} : vector<8x8xi1> to vector<8x1xi1>
    %575 = vector.extract_strided_slice %534 {offsets = [0, 0], sizes = [8, 32], strides = [1, 1]} : vector<8x96xf32> to vector<8x32xf32>
    %576 = vector.extract_strided_slice %573 {offsets = [0, 0], sizes = [8, 32], strides = [1, 1]} : vector<8x96xf32> to vector<8x32xf32>
    %577 = arith.addf %575, %576 : vector<8x32xf32>
    %578 = arith.negf %577 : vector<8x32xf32>
    %579 = math.exp %578 : vector<8x32xf32>
    %cst_143 = arith.constant 1.000000e+00 : f32
    %580 = vector.broadcast %cst_143 : f32 to vector<8x32xf32>
    %581 = arith.addf %580, %579 : vector<8x32xf32>
    %582 = arith.divf %580, %581 : vector<8x32xf32>
    %583 = vector.extract_strided_slice %534 {offsets = [0, 32], sizes = [8, 32], strides = [1, 1]} : vector<8x96xf32> to vector<8x32xf32>
    %584 = vector.extract_strided_slice %573 {offsets = [0, 32], sizes = [8, 32], strides = [1, 1]} : vector<8x96xf32> to vector<8x32xf32>
    %585 = arith.addf %583, %584 : vector<8x32xf32>
    %586 = arith.negf %585 : vector<8x32xf32>
    %587 = math.exp %586 : vector<8x32xf32>
    %cst_144 = arith.constant 1.000000e+00 : f32
    %588 = vector.broadcast %cst_144 : f32 to vector<8x32xf32>
    %589 = arith.addf %588, %587 : vector<8x32xf32>
    %590 = arith.divf %588, %589 : vector<8x32xf32>
    %591 = vector.extract_strided_slice %534 {offsets = [0, 64], sizes = [8, 32], strides = [1, 1]} : vector<8x96xf32> to vector<8x32xf32>
    %592 = vector.extract_strided_slice %573 {offsets = [0, 64], sizes = [8, 32], strides = [1, 1]} : vector<8x96xf32> to vector<8x32xf32>
    %593 = arith.addf %592, %10 : vector<8x32xf32>
    %594 = arith.mulf %582, %593 : vector<8x32xf32>
    %595 = arith.addf %591, %594 : vector<8x32xf32>
    %596 = math.tanh %595 : vector<8x32xf32>
    %cst_145 = arith.constant 1.000000e+00 : f32
    %597 = vector.broadcast %cst_145 : f32 to vector<8x32xf32>
    %598 = arith.subf %597, %590 : vector<8x32xf32>
    %599 = arith.mulf %598, %596 : vector<8x32xf32>
    %600 = arith.mulf %590, %520 : vector<8x32xf32>
    %601 = arith.addf %599, %600 : vector<8x32xf32>
    %602 = vector.shape_cast %574 : vector<8x1xi1> to vector<8x1xi1>
    %603 = vector.broadcast %602 : vector<8x1xi1> to vector<8x32xi1>
    %604 = arith.select %603, %601, %520 : vector<8x32xi1>, vector<8x32xf32>
    %cst_146 = arith.constant 0.000000e+00 : f32
    %605 = vector.shape_cast %574 : vector<8x1xi1> to vector<8x1xi1>
    %606 = vector.broadcast %605 : vector<8x1xi1> to vector<8x32xi1>
    %607 = vector.broadcast %cst_146 : f32 to vector<8x32xf32>
    %608 = arith.select %606, %604, %607 : vector<8x32xi1>, vector<8x32xf32>
    %609 = vector.shape_cast %572 : vector<8x32xf32> to vector<8x1x32xf32>
    %c0_147 = arith.constant 0 : index
    %c6_148 = arith.constant 6 : index
    %c0_149 = arith.constant 0 : index
    %610 = vector.load %arg7[%c0_147, %c6_148, %c0_149] : memref<8x8x32xf32, #tpu.memory_space<vmem>>, vector<8x1x32xf32>
    tpu.vector_store %arg7[%c0_147, %c6_148, %c0_149], %609 {strides = array<i32>} : memref<8x8x32xf32, #tpu.memory_space<vmem>>, vector<8x1x32xf32>,
    %611 = vector.shape_cast %608 : vector<8x32xf32> to vector<8x1x32xf32>
    %c0_150 = arith.constant 0 : index
    %c1_151 = arith.constant 1 : index
    %c0_152 = arith.constant 0 : index
    %612 = vector.load %arg8[%c0_150, %c1_151, %c0_152] : memref<8x8x32xf32, #tpu.memory_space<vmem>>, vector<8x1x32xf32>
    tpu.vector_store %arg8[%c0_150, %c1_151, %c0_152], %611 {strides = array<i32>} : memref<8x8x32xf32, #tpu.memory_space<vmem>>, vector<8x1x32xf32>,
    %c0_153 = arith.constant 0 : index
    %c7_154 = arith.constant 7 : index
    %c0_155 = arith.constant 0 : index
    %613 = vector.load %arg1[%c0_153, %c7_154, %c0_155] : memref<8x8x96xbf16, #tpu.memory_space<vmem>>, vector<8x1x96xbf16>
    %614 = vector.shape_cast %613 : vector<8x1x96xbf16> to vector<8x96xbf16>
    %615 = arith.extf %614 : vector<8x96xbf16> to vector<8x96xf32>
    %c0_156 = arith.constant 0 : index
    %c0_157 = arith.constant 0 : index
    %c0_158 = arith.constant 0 : index
    %616 = vector.load %arg2[%c0_156, %c0_157, %c0_158] : memref<8x8x96xbf16, #tpu.memory_space<vmem>>, vector<8x1x96xbf16>
    %617 = vector.shape_cast %616 : vector<8x1x96xbf16> to vector<8x96xbf16>
    %618 = arith.extf %617 : vector<8x96xbf16> to vector<8x96xf32>
    %619 = tpu.concatenate %568, %604 in 1 : vector<8x32xf32>, vector<8x32xf32> -> vector<8x64xf32>
    %cst_159 = arith.constant dense<0.000000e+00> : vector<8x192xf32>
    %620 = tpu.matmul %619, %4, %cst_159 {dimension_numbers = #tpu.dot_dimension_numbers<[1], [0], [0], [1], [0, 0, 1, 1], [], []>} : vector<8x64xf32>, vector<64x192xf32>, vector<8x192xf32> -> vector<8x192xf32>
    %621 = vector.extract_strided_slice %620 {offsets = [0, 0], sizes = [8, 96], strides = [1, 1]} : vector<8x192xf32> to vector<8x96xf32>
    %622 = vector.extract_strided_slice %16 {offsets = [0, 7], sizes = [8, 1], strides = [1, 1]} : vector<8x8xi1> to vector<8x1xi1>
    %623 = vector.extract_strided_slice %615 {offsets = [0, 0], sizes = [8, 32], strides = [1, 1]} : vector<8x96xf32> to vector<8x32xf32>
    %624 = vector.extract_strided_slice %621 {offsets = [0, 0], sizes = [8, 32], strides = [1, 1]} : vector<8x96xf32> to vector<8x32xf32>
    %625 = arith.addf %623, %624 : vector<8x32xf32>
    %626 = arith.negf %625 : vector<8x32xf32>
    %627 = math.exp %626 : vector<8x32xf32>
    %cst_160 = arith.constant 1.000000e+00 : f32
    %628 = vector.broadcast %cst_160 : f32 to vector<8x32xf32>
    %629 = arith.addf %628, %627 : vector<8x32xf32>
    %630 = arith.divf %628, %629 : vector<8x32xf32>
    %631 = vector.extract_strided_slice %615 {offsets = [0, 32], sizes = [8, 32], strides = [1, 1]} : vector<8x96xf32> to vector<8x32xf32>
    %632 = vector.extract_strided_slice %621 {offsets = [0, 32], sizes = [8, 32], strides = [1, 1]} : vector<8x96xf32> to vector<8x32xf32>
    %633 = arith.addf %631, %632 : vector<8x32xf32>
    %634 = arith.negf %633 : vector<8x32xf32>
    %635 = math.exp %634 : vector<8x32xf32>
    %cst_161 = arith.constant 1.000000e+00 : f32
    %636 = vector.broadcast %cst_161 : f32 to vector<8x32xf32>
    %637 = arith.addf %636, %635 : vector<8x32xf32>
    %638 = arith.divf %636, %637 : vector<8x32xf32>
    %639 = vector.extract_strided_slice %615 {offsets = [0, 64], sizes = [8, 32], strides = [1, 1]} : vector<8x96xf32> to vector<8x32xf32>
    %640 = vector.extract_strided_slice %621 {offsets = [0, 64], sizes = [8, 32], strides = [1, 1]} : vector<8x96xf32> to vector<8x32xf32>
    %641 = arith.addf %640, %7 : vector<8x32xf32>
    %642 = arith.mulf %630, %641 : vector<8x32xf32>
    %643 = arith.addf %639, %642 : vector<8x32xf32>
    %644 = math.tanh %643 : vector<8x32xf32>
    %cst_162 = arith.constant 1.000000e+00 : f32
    %645 = vector.broadcast %cst_162 : f32 to vector<8x32xf32>
    %646 = arith.subf %645, %638 : vector<8x32xf32>
    %647 = arith.mulf %646, %644 : vector<8x32xf32>
    %648 = arith.mulf %638, %568 : vector<8x32xf32>
    %649 = arith.addf %647, %648 : vector<8x32xf32>
    %650 = vector.shape_cast %622 : vector<8x1xi1> to vector<8x1xi1>
    %651 = vector.broadcast %650 : vector<8x1xi1> to vector<8x32xi1>
    %652 = arith.select %651, %649, %568 : vector<8x32xi1>, vector<8x32xf32>
    %cst_163 = arith.constant 0.000000e+00 : f32
    %653 = vector.shape_cast %622 : vector<8x1xi1> to vector<8x1xi1>
    %654 = vector.broadcast %653 : vector<8x1xi1> to vector<8x32xi1>
    %655 = vector.broadcast %cst_163 : f32 to vector<8x32xf32>
    %656 = arith.select %654, %652, %655 : vector<8x32xi1>, vector<8x32xf32>
    %657 = vector.extract_strided_slice %620 {offsets = [0, 96], sizes = [8, 96], strides = [1, 1]} : vector<8x192xf32> to vector<8x96xf32>
    %658 = vector.extract_strided_slice %22 {offsets = [0, 0], sizes = [8, 1], strides = [1, 1]} : vector<8x8xi1> to vector<8x1xi1>
    %659 = vector.extract_strided_slice %618 {offsets = [0, 0], sizes = [8, 32], strides = [1, 1]} : vector<8x96xf32> to vector<8x32xf32>
    %660 = vector.extract_strided_slice %657 {offsets = [0, 0], sizes = [8, 32], strides = [1, 1]} : vector<8x96xf32> to vector<8x32xf32>
    %661 = arith.addf %659, %660 : vector<8x32xf32>
    %662 = arith.negf %661 : vector<8x32xf32>
    %663 = math.exp %662 : vector<8x32xf32>
    %cst_164 = arith.constant 1.000000e+00 : f32
    %664 = vector.broadcast %cst_164 : f32 to vector<8x32xf32>
    %665 = arith.addf %664, %663 : vector<8x32xf32>
    %666 = arith.divf %664, %665 : vector<8x32xf32>
    %667 = vector.extract_strided_slice %618 {offsets = [0, 32], sizes = [8, 32], strides = [1, 1]} : vector<8x96xf32> to vector<8x32xf32>
    %668 = vector.extract_strided_slice %657 {offsets = [0, 32], sizes = [8, 32], strides = [1, 1]} : vector<8x96xf32> to vector<8x32xf32>
    %669 = arith.addf %667, %668 : vector<8x32xf32>
    %670 = arith.negf %669 : vector<8x32xf32>
    %671 = math.exp %670 : vector<8x32xf32>
    %cst_165 = arith.constant 1.000000e+00 : f32
    %672 = vector.broadcast %cst_165 : f32 to vector<8x32xf32>
    %673 = arith.addf %672, %671 : vector<8x32xf32>
    %674 = arith.divf %672, %673 : vector<8x32xf32>
    %675 = vector.extract_strided_slice %618 {offsets = [0, 64], sizes = [8, 32], strides = [1, 1]} : vector<8x96xf32> to vector<8x32xf32>
    %676 = vector.extract_strided_slice %657 {offsets = [0, 64], sizes = [8, 32], strides = [1, 1]} : vector<8x96xf32> to vector<8x32xf32>
    %677 = arith.addf %676, %10 : vector<8x32xf32>
    %678 = arith.mulf %666, %677 : vector<8x32xf32>
    %679 = arith.addf %675, %678 : vector<8x32xf32>
    %680 = math.tanh %679 : vector<8x32xf32>
    %cst_166 = arith.constant 1.000000e+00 : f32
    %681 = vector.broadcast %cst_166 : f32 to vector<8x32xf32>
    %682 = arith.subf %681, %674 : vector<8x32xf32>
    %683 = arith.mulf %682, %680 : vector<8x32xf32>
    %684 = arith.mulf %674, %604 : vector<8x32xf32>
    %685 = arith.addf %683, %684 : vector<8x32xf32>
    %686 = vector.shape_cast %658 : vector<8x1xi1> to vector<8x1xi1>
    %687 = vector.broadcast %686 : vector<8x1xi1> to vector<8x32xi1>
    %688 = arith.select %687, %685, %604 : vector<8x32xi1>, vector<8x32xf32>
    %cst_167 = arith.constant 0.000000e+00 : f32
    %689 = vector.shape_cast %658 : vector<8x1xi1> to vector<8x1xi1>
    %690 = vector.broadcast %689 : vector<8x1xi1> to vector<8x32xi1>
    %691 = vector.broadcast %cst_167 : f32 to vector<8x32xf32>
    %692 = arith.select %690, %688, %691 : vector<8x32xi1>, vector<8x32xf32>
    %693 = vector.shape_cast %656 : vector<8x32xf32> to vector<8x1x32xf32>
    %c0_168 = arith.constant 0 : index
    %c7_169 = arith.constant 7 : index
    %c0_170 = arith.constant 0 : index
    %694 = vector.load %arg7[%c0_168, %c7_169, %c0_170] : memref<8x8x32xf32, #tpu.memory_space<vmem>>, vector<8x1x32xf32>
    tpu.vector_store %arg7[%c0_168, %c7_169, %c0_170], %693 {strides = array<i32>} : memref<8x8x32xf32, #tpu.memory_space<vmem>>, vector<8x1x32xf32>,
    %695 = vector.shape_cast %692 : vector<8x32xf32> to vector<8x1x32xf32>
    %c0_171 = arith.constant 0 : index
    %c0_172 = arith.constant 0 : index
    %c0_173 = arith.constant 0 : index
    %696 = vector.load %arg8[%c0_171, %c0_172, %c0_173] : memref<8x8x32xf32, #tpu.memory_space<vmem>>, vector<8x1x32xf32>
    tpu.vector_store %arg8[%c0_171, %c0_172, %c0_173], %695 {strides = array<i32>} : memref<8x8x32xf32, #tpu.memory_space<vmem>>, vector<8x1x32xf32>,
    %c0_174 = arith.constant 0 : index
    %c0_175 = arith.constant 0 : index
    %697 = vector.load %arg9[%c0_174, %c0_175] : memref<8x32xf32, #tpu.memory_space<vmem>>, vector<8x32xf32>
    tpu.vector_store %arg9[%c0_174, %c0_175], %652 {strides = array<i32>} : memref<8x32xf32, #tpu.memory_space<vmem>>, vector<8x32xf32>,
    %c0_176 = arith.constant 0 : index
    %c0_177 = arith.constant 0 : index
    %698 = vector.load %arg10[%c0_176, %c0_177] : memref<8x32xf32, #tpu.memory_space<vmem>>, vector<8x32xf32>
    tpu.vector_store %arg10[%c0_176, %c0_177], %688 {strides = array<i32>} : memref<8x32xf32, #tpu.memory_space<vmem>>, vector<8x32xf32>,
    return
  }
  func.func @transform_0(%arg0: i32) -> (i32, i32, i32) {
    %c0_i32 = arith.constant 0 : i32
    %c0_i32_0 = arith.constant 0 : i32
    %c0_i32_1 = arith.constant 0 : i32
    return %c0_i32, %arg0, %c0_i32_0 : i32, i32, i32
  }
  func.func @transform_1(%arg0: i32) -> (i32, i32, i32) {
    %c0_i32 = arith.constant 0 : i32
    %0 = arith.subi %c0_i32, %arg0 : i32
    %c0_i32_0 = arith.constant 0 : i32
    %c0_i32_1 = arith.constant 0 : i32
    %c0_i32_2 = arith.constant 0 : i32
    return %c0_i32_0, %0, %c0_i32_1 : i32, i32, i32
  }
  func.func @transform_2(%arg0: i32) -> (i32, i32) {
    %c0_i32 = arith.constant 0 : i32
    %c0_i32_0 = arith.constant 0 : i32
    %c0_i32_1 = arith.constant 0 : i32
    return %c0_i32, %c0_i32_0 : i32, i32
  }
  func.func @transform_3(%arg0: i32) -> (i32, i32) {
    %c0_i32 = arith.constant 0 : i32
    %c0_i32_0 = arith.constant 0 : i32
    %c0_i32_1 = arith.constant 0 : i32
    return %c0_i32, %c0_i32_0 : i32, i32
  }
  func.func @transform_4(%arg0: i32) -> (i32, i32) {
    %c0_i32 = arith.constant 0 : i32
    %c0_i32_0 = arith.constant 0 : i32
    %c0_i32_1 = arith.constant 0 : i32
    return %c0_i32, %c0_i32_0 : i32, i32
  }
  func.func @transform_5(%arg0: i32) -> (i32, i32) {
    %c0_i32 = arith.constant 0 : i32
    %c0_i32_0 = arith.constant 0 : i32
    %c0_i32_1 = arith.constant 0 : i32
    return %c0_i32, %c0_i32_0 : i32, i32
  }
  func.func @transform_6(%arg0: i32) -> (i32, i32, i32) {
    %c0_i32 = arith.constant 0 : i32
    %c0_i32_0 = arith.constant 0 : i32
    %c0_i32_1 = arith.constant 0 : i32
    return %c0_i32, %arg0, %c0_i32_0 : i32, i32, i32
  }
  func.func @transform_7(%arg0: i32) -> (i32, i32, i32) {
    %c0_i32 = arith.constant 0 : i32
    %0 = arith.subi %c0_i32, %arg0 : i32
    %c0_i32_0 = arith.constant 0 : i32
    %c0_i32_1 = arith.constant 0 : i32
    %c0_i32_2 = arith.constant 0 : i32
    return %c0_i32_0, %0, %c0_i32_1 : i32, i32, i32
  }
}

</mosaic_0001>

<llo_original>
// kernel: rnet_forward.3
$region0: #{rnet_forward.3}
  #allocation0 [shape = 'u32[]', space=smem, size = 0x4, offset = 0x4, fixed_abs, tag = 'smem constant byte address 0x4 - core index']
  #allocation1 [shape = 'u32[72,128]{1,0:T(1,128)}', space=vmem, size = 0x9000, scoped, tag = 'internal scratch']
  %s0 = inlined_call_operand.vmem [shape: f32[2,16,64], index: 0, kind: input, shape index: {}]
  %s1 = inlined_call_operand.vmem [shape: f32[2,16,64], index: 1, kind: input, shape index: {}]
  %s2 = inlined_call_operand.vmem [shape: f32[64,64], index: 2, kind: input, shape index: {}]
  %s3 = inlined_call_operand.hbm [shape: f32[2,16], index: 3, kind: output, shape index: {0}]
  %s4 = inlined_call_operand.hbm [shape: f32[2,16], index: 4, kind: output, shape index: {1}]
  %s5 = inlined_call_operand.hbm [shape: f32[2,64], index: 5, kind: output, shape index: {2}]
  %s6 = inlined_call_operand.hbm [shape: f32[2,64], index: 6, kind: output, shape index: {3}]
  %7 = xla_tuple %s3, %s4, %s5, %s6
  %s8 = sld [smem:[#allocation0]]
  $region46: #{rnet_forward.3} parent=0
    _
  %s10 = ssub.s32 1, %s8
  %s11 = scalar_select 0, %s10, %s8
  $region1: #{rnet_forward.3} parent=0
    #allocation2 [shape = 'u8[1024]{0}', space=vmem, size = 0x400, scoped, tag = 'output window, operand 0, single buffered']
    #allocation3 [shape = 's32[1]{0}', space=sflag, size = 0x4, scoped, tag = 'scoped memory for rnet_forward.3']
    #allocation4 [shape = 'u8[1024]{0}', space=vmem, size = 0x400, scoped, tag = 'output window, operand 1, single buffered']
    #allocation5 [shape = 's32[1]{0}', space=sflag, size = 0x4, scoped, tag = 'scoped memory for rnet_forward.3']
    #allocation6 [shape = 'u8[1024]{0}', space=vmem, size = 0x400, scoped, tag = 'output window, operand 2, single buffered']
    #allocation7 [shape = 'u8[1024]{0}', space=vmem, size = 0x400, scoped, tag = 'output window, operand 3, single buffered']
    #allocation8 [shape = 's32[1]{0}', space=sflag, size = 0x4, scoped, tag = 'scoped memory for rnet_forward.3']
    %12 = vsyncpa [#allocation3], 0
    %13 = vsyncpa [#allocation5], 0
    %14 = vsyncpa [#allocation8], 0
    // Predicated region
    $region2: #{rnet_forward.3} parent=1 // pred_check
      _
    $region3: #{rnet_forward.3} parent=1 // pred_check_branch
      %16 = sbr.rel (0) target = $region5
    $region4: #{rnet_forward.3} parent=1 // pred_region
      _
    $region5: #{rnet_forward.3} parent=1 // pred_fallthru
      _
    // Predicated region
    $region6: #{rnet_forward.3} parent=1 // pred_check
      _
    $region7: #{rnet_forward.3} parent=1 // pred_check_branch
      %18 = sbr.rel (0) target = $region9
    $region8: #{rnet_forward.3} parent=1 // pred_region
      _
    $region9: #{rnet_forward.3} parent=1 // pred_fallthru
      _
    // Predicated region
    $region10: #{rnet_forward.3} parent=1 // pred_check
      _
    $region11: #{rnet_forward.3} parent=1 // pred_check_branch
      %20 = sbr.rel (0) target = $region13
    $region12: #{rnet_forward.3} parent=1 // pred_region
      _
    $region13: #{rnet_forward.3} parent=1 // pred_fallthru
      _
    %v21 = vld [vmem:[%s0] sm:$0xff]
    %v22 = vld [vmem:[%s0 + $0x8] sm:$0xff]
    %v23 = vld [vmem:[%s0 + $0x10] sm:$0xff]
    %v24 = vld [vmem:[%s0 + $0x18] sm:$0xff]
    %v25 = vld [vmem:[%s1] sm:$0xff]
    %v26 = vld [vmem:[%s1 + $0x8] sm:$0xff]
    %v27 = vld [vmem:[%s1 + $0x10] sm:$0xff]
    %v28 = vld [vmem:[%s1 + $0x18] sm:$0xff]
    %v29 = vld [vmem:[%s2] sm:$0xff]
    %v30 = vld [vmem:[%s2 + $0x8] sm:$0xff]
    %v31 = vld [vmem:[%s2 + $0x10] sm:$0xff]
    %v32 = vld [vmem:[%s2 + $0x18] sm:$0xff]
    %v33 = vld [vmem:[%s2 + $0x20] sm:$0xff]
    %v34 = vld [vmem:[%s2 + $0x28] sm:$0xff]
    %v35 = vld [vmem:[%s2 + $0x30] sm:$0xff]
    %v36 = vld [vmem:[%s2 + $0x38] sm:$0xff]
    %vm37 = vcmask 523264
    %v39 = vsel %vm37, %v25, 0
    %v42 = vsel %vm37, %v26, 0
    %v45 = vsel %vm37, %v27, 0
    %v48 = vsel %vm37, %v28, 0
    %50 = vmatpush.msra.mxu0 0.0
    %51 = vmatpush.msra.mxu0 0.0
    %52 = vmatpush.msra.mxu0 0.0
    %53 = vmatpush.msra.mxu0 0.0
    %54 = vmatpush.msra.mxu0 0.0
    %55 = vmatpush.msra.mxu0 0.0
    %56 = vmatpush.msra.mxu0 0.0
    %57 = vmatpush.msra.mxu0 0.0
    %58 = vmatpush.msra.mxu0 %v36
    %59 = vmatpush.msra.mxu0 %v35
    %60 = vmatpush.msra.mxu0 %v34
    %61 = vmatpush.msra.mxu0 %v33
    %62 = vmatpush.msra.mxu0 %v32
    %63 = vmatpush.msra.mxu0 %v31
    %64 = vmatpush.msra.mxu0 %v30
    %65 = vmatpush.msra.mxu0 %v29
    %66 = vmatmul.f32.gmra.mxu0 %v39
    %v67 = vpop.f32.mrf.mxu0
    %v68 = vadd.f32 0.0, %v67
    %69 = vmatmul.f32.gmra.mxu0 %v42
    %v70 = vpop.f32.mrf.mxu0
    %v71 = vadd.f32 0.0, %v70
    %72 = vmatmul.f32.gmra.mxu0 %v45
    %v73 = vpop.f32.mrf.mxu0
    %v74 = vadd.f32 0.0, %v73
    %75 = vmatmul.f32.gmra.mxu0 %v48
    %v76 = vpop.f32.mrf.mxu0
    %v77 = vadd.f32 0.0, %v76
    %78 = vdwg.mxu0
    %v80 = vsel %vm37, %v68, 0
    %v83 = vsel %vm37, %v71, 0
    %v86 = vsel %vm37, %v21, 0
    %v89 = vsel %vm37, %v22, 0
    %91 = vmatpush.xpose.msra.mxu0 0.0
    %92 = vmatpush.xpose.msra.mxu0 0.0
    %93 = vmatpush.xpose.msra.mxu0 0.0
    %94 = vmatpush.xpose.msra.mxu0 0.0
    %95 = vmatpush.xpose.msra.mxu0 0.0
    %96 = vmatpush.xpose.msra.mxu0 0.0
    %97 = vmatpush.xpose.msra.mxu0 0.0
    %98 = vmatpush.xpose.msra.mxu0 0.0
    %99 = vmatpush.xpose.msra.mxu0 0.0
    %100 = vmatpush.xpose.msra.mxu0 0.0
    %101 = vmatpush.xpose.msra.mxu0 0.0
    %102 = vmatpush.xpose.msra.mxu0 0.0
    %103 = vmatpush.xpose.msra.mxu0 0.0
    %104 = vmatpush.xpose.msra.mxu0 0.0
    %105 = vmatpush.xpose.msra.mxu0 %v89
    %106 = vmatpush.xpose.msra.mxu0 %v86
    %107 = vmatmul.f32.gmra.mxu0 %v80
    %v108 = vpop.f32.mrf.mxu0
    %v109 = vadd.f32 0.0, %v108
    %110 = vmatmul.f32.gmra.mxu0 %v83
    %v111 = vpop.f32.mrf.mxu0
    %v112 = vadd.f32 0.0, %v111
    %113 = vdwg.mxu0
    %v115 = vsel %vm37, %v74, 0
    %v118 = vsel %vm37, %v77, 0
    %v121 = vsel %vm37, %v23, 0
    %v124 = vsel %vm37, %v24, 0
    %126 = vmatpush.xpose.msra.mxu0 0.0
    %127 = vmatpush.xpose.msra.mxu0 0.0
    %128 = vmatpush.xpose.msra.mxu0 0.0
    %129 = vmatpush.xpose.msra.mxu0 0.0
    %130 = vmatpush.xpose.msra.mxu0 0.0
    %131 = vmatpush.xpose.msra.mxu0 0.0
    %132 = vmatpush.xpose.msra.mxu0 0.0
    %133 = vmatpush.xpose.msra.mxu0 0.0
    %134 = vmatpush.xpose.msra.mxu0 0.0
    %135 = vmatpush.xpose.msra.mxu0 0.0
    %136 = vmatpush.xpose.msra.mxu0 0.0
    %137 = vmatpush.xpose.msra.mxu0 0.0
    %138 = vmatpush.xpose.msra.mxu0 0.0
    %139 = vmatpush.xpose.msra.mxu0 0.0
    %140 = vmatpush.xpose.msra.mxu0 %v124
    %141 = vmatpush.xpose.msra.mxu0 %v121
    %142 = vmatmul.f32.gmra.mxu0 %v115
    %v143 = vpop.f32.mrf.mxu0
    %v144 = vadd.f32 0.0, %v143
    %145 = vmatmul.f32.gmra.mxu0 %v118
    %v146 = vpop.f32.mrf.mxu0
    %v147 = vadd.f32 0.0, %v146
    %148 = vdwg.mxu0
    %v149 = vtanh.pop %v109
    %v150 = vtanh.pop %v112
    %v151 = vtanh.pop %v144
    %v152 = vtanh.pop %v147
    %vm153 = vcmask 130048
    %v154 = vsel %vm153, %v149, -inf
    %v155 = vsel %vm153, %v150, -inf
    %v156 = vmax.f32 %v154, %v155
    %v157 = vrot.slane %v156, 4
    %v158 = vmax.f32 %v156, %v157
    %v159 = vrot.slane %v158, 2
    %v160 = vmax.f32 %v158, %v159
    %v161 = vrot.slane %v160, 1
    %v162 = vmax.f32 %v160, %v161
    %v163 = vsel %vm153, %v151, -inf
    %v164 = vsel %vm153, %v152, -inf
    %v165 = vmax.f32 %v163, %v164
    %v166 = vrot.slane %v165, 4
    %v167 = vmax.f32 %v165, %v166
    %v168 = vrot.slane %v167, 2
    %v169 = vmax.f32 %v167, %v168
    %v170 = vrot.slane %v169, 1
    %v171 = vmax.f32 %v169, %v170
    %vm174 = vcmask 1041409
    %v175 = vsel %vm174, %v171, %v162
    %vm177 = vcmask 123904
    %v178 = vsel %vm177, %v175, -inf
    %179 = vmax.xlane.f32.xlu0 %v178
    %v180 = vpop.xlane.xlu0 %179
    %v182 = vrot.slane %v180, 1
    %v185 = vsub.f32 %v162, %v180
    %v186 = vsub.f32 %v171, %v182
    %v187 = vmul.f32 %v185, 1.442695
    %v188 = vpow.pop %v187
    %v189 = vmul.f32 %v186, 1.442695
    %v190 = vpow.pop %v189
    %v193 = vrot.slane %v190, 7
    %v194 = vsel %vm174, %v193, %v188
    %v196 = vsel %vm177, %v194, 0.0
    %197 = vadd.xlane.f32.xlu0 %v196
    %v198 = vpop.xlane.xlu0 %197
    %v200 = vrot.slane %v198, 1
    %v203 = vrcp.pop %v198
    %v204 = vmul.f32 %v198, %v203
    %v205 = vsub.f32 1.0, %v204
    %v206 = vmul.f32 %v203, %v205
    %v207 = vadd.f32 %v203, %v206
    %vm208 = vweird.f32 %v198
    %vm209 = vweird.f32 %v203
    %vm210 = vmor %vm208, %vm209
    %v211 = vsel %vm210, %v203, %v207
    %v212 = vand.u32 2147483647, %v198
    %vm213 = vcmp.eq.f32.partialorder %v212, 8.507059e+37
    %v214 = vand.u32 %v198, 2147483648
    %v215 = vor.u32 1.1754944e-38, %v214
    %v216 = vsel %vm213, %v215, %v211
    %v217 = vmul.f32 %v188, %v216
    %v218 = vrcp.pop %v200
    %v219 = vmul.f32 %v200, %v218
    %v220 = vsub.f32 1.0, %v219
    %v221 = vmul.f32 %v218, %v220
    %v222 = vadd.f32 %v218, %v221
    %vm223 = vweird.f32 %v200
    %vm224 = vweird.f32 %v218
    %vm225 = vmor %vm223, %vm224
    %v226 = vsel %vm225, %v218, %v222
    %v227 = vand.u32 2147483647, %v200
    %vm228 = vcmp.eq.f32.partialorder %v227, 8.507059e+37
    %v229 = vand.u32 %v200, 2147483648
    %v230 = vor.u32 1.1754944e-38, %v229
    %v231 = vsel %vm228, %v230, %v226
    %v232 = vmul.f32 %v190, %v231
    %233 = vmax.xlane.f32.xlu0 %v154
    %v234 = vpop.xlane.xlu0 %233
    %235 = vmax.xlane.f32.xlu0 %v155
    %v236 = vpop.xlane.xlu0 %235
    %237 = vmax.xlane.f32.xlu0 %v163
    %v238 = vpop.xlane.xlu0 %237
    %239 = vmax.xlane.f32.xlu0 %v164
    %v240 = vpop.xlane.xlu0 %239
    %v245 = vlaneseq
    %v246 = vand.u32 %v245, 127
    %v247 = vperm.slane %v234, %v246
    %v248 = vadd.s32 %v246, 4294967288
    %v249 = vperm.slane %v236, %v248
    %vm250 = vcmask 130112
    %v251 = vsel %vm250, %v249, %v247
    %v252 = vperm.slane %v238, %v246
    %v253 = vperm.slane %v240, %v248
    %v254 = vsel %vm250, %v253, %v252
    %v255 = vsel %vm174, %v254, %v251
    %v257 = vsel %vm177, %v255, -inf
    %258 = vmax.xlane.f32.xlu0 %v257
    %v259 = vpop.xlane.xlu0 %258
    %v261 = vperm.slane %v259, 0
    %v262 = vperm.slane %v259, 1
    %v265 = vsub.f32 %v234, %v261
    %v266 = vsub.f32 %v236, %v261
    %v267 = vsub.f32 %v238, %v262
    %v268 = vsub.f32 %v240, %v262
    %v269 = vmul.f32 %v265, 1.442695
    %v270 = vpow.pop %v269
    %v271 = vmul.f32 %v266, 1.442695
    %v272 = vpow.pop %v271
    %v273 = vmul.f32 %v267, 1.442695
    %v274 = vpow.pop %v273
    %v275 = vmul.f32 %v268, 1.442695
    %v276 = vpow.pop %v275
    %281 = vset.pattern.permute.xlu0 0
    %282 = vperm.xlu0 %281, %v270
    %v283 = vpop.permute.xlu0 %282
    %284 = vset.pattern.permute.xlu0 0
    %285 = vperm.xlu0 %284, %v272
    %v286 = vpop.permute.xlu0 %285
    %287 = vset.pattern.permute.xlu0 0
    %288 = vperm.xlu0 %287, %v274
    %v289 = vpop.permute.xlu0 %288
    %290 = vset.pattern.permute.xlu0 0
    %291 = vperm.xlu0 %290, %v276
    %v292 = vpop.permute.xlu0 %291
    %v293 = vperm.slane %v283, %v246
    %v294 = vperm.slane %v286, %v248
    %v295 = vsel %vm250, %v294, %v293
    %v296 = vperm.slane %v289, %v246
    %v297 = vperm.slane %v292, %v248
    %v298 = vsel %vm250, %v297, %v296
    %v299 = vsel %vm174, %v298, %v295
    %v301 = vsel %vm177, %v299, 0.0
    %302 = vadd.xlane.f32.xlu0 %v301
    %v303 = vpop.xlane.xlu0 %302
    %v305 = vperm.slane %v303, 0
    %v306 = vperm.slane %v303, 1
    %v309 = vrcp.pop %v305
    %v310 = vmul.f32 %v305, %v309
    %v311 = vsub.f32 1.0, %v310
    %v312 = vmul.f32 %v309, %v311
    %v313 = vadd.f32 %v309, %v312
    %vm314 = vweird.f32 %v305
    %vm315 = vweird.f32 %v309
    %vm316 = vmor %vm314, %vm315
    %v317 = vsel %vm316, %v309, %v313
    %v318 = vand.u32 2147483647, %v305
    %vm319 = vcmp.eq.f32.partialorder %v318, 8.507059e+37
    %v320 = vand.u32 %v305, 2147483648
    %v321 = vor.u32 1.1754944e-38, %v320
    %v322 = vsel %vm319, %v321, %v317
    %v323 = vmul.f32 %v270, %v322
    %v324 = vmul.f32 %v272, %v322
    %v325 = vrcp.pop %v306
    %v326 = vmul.f32 %v306, %v325
    %v327 = vsub.f32 1.0, %v326
    %v328 = vmul.f32 %v325, %v327
    %v329 = vadd.f32 %v325, %v328
    %vm330 = vweird.f32 %v306
    %vm331 = vweird.f32 %v325
    %vm332 = vmor %vm330, %vm331
    %v333 = vsel %vm332, %v325, %v329
    %v334 = vand.u32 2147483647, %v306
    %vm335 = vcmp.eq.f32.partialorder %v334, 8.507059e+37
    %v336 = vand.u32 %v306, 2147483648
    %v337 = vor.u32 1.1754944e-38, %v336
    %v338 = vsel %vm335, %v337, %v333
    %v339 = vmul.f32 %v274, %v338
    %v340 = vmul.f32 %v276, %v338
    %v343 = vrot.slane %v232, 7
    %v344 = vsel %vm174, %v343, %v217
    %346 = vst.msk [vmem:[#allocation2] sm:$0x3] %vm177, %v344
    %351 = vset.pattern.permute.xlu0 0
    %352 = vperm.xlu0 %351, %v323
    %v353 = vpop.permute.xlu0 %352
    %354 = vset.pattern.permute.xlu0 0
    %355 = vperm.xlu0 %354, %v324
    %v356 = vpop.permute.xlu0 %355
    %357 = vset.pattern.permute.xlu0 0
    %358 = vperm.xlu0 %357, %v339
    %v359 = vpop.permute.xlu0 %358
    %360 = vset.pattern.permute.xlu0 0
    %361 = vperm.xlu0 %360, %v340
    %v362 = vpop.permute.xlu0 %361
    %v363 = vperm.slane %v353, %v246
    %v364 = vperm.slane %v356, %v248
    %v365 = vsel %vm250, %v364, %v363
    %v366 = vperm.slane %v359, %v246
    %v367 = vperm.slane %v362, %v248
    %v368 = vsel %vm250, %v367, %v366
    %v369 = vsel %vm174, %v368, %v365
    %371 = vst.msk [vmem:[#allocation4] sm:$0x3] %vm177, %v369
    %v372 = vsel %vm153, %v217, 0
    %374 = vmatpush.msra.mxu0 0.0
    %375 = vmatpush.msra.mxu0 0.0
    %376 = vmatpush.msra.mxu0 0.0
    %377 = vmatpush.msra.mxu0 0.0
    %378 = vmatpush.msra.mxu0 0.0
    %379 = vmatpush.msra.mxu0 0.0
    %380 = vmatpush.msra.mxu0 0.0
    %381 = vmatpush.msra.mxu0 0.0
    %382 = vmatpush.msra.mxu0 0.0
    %383 = vmatpush.msra.mxu0 0.0
    %384 = vmatpush.msra.mxu0 0.0
    %385 = vmatpush.msra.mxu0 0.0
    %386 = vmatpush.msra.mxu0 0.0
    %387 = vmatpush.msra.mxu0 0.0
    %388 = vmatpush.msra.mxu0 %v22
    %389 = vmatpush.msra.mxu0 %v21
    %390 = vmatmul.f32.gmra.mxu0 %v372
    %v391 = vpop.f32.mrf.mxu0
    %v392 = vadd.f32 0.0, %v391
    %393 = vdwg.mxu0
    %v394 = vsel %vm153, %v232, 0
    %396 = vmatpush.msra.mxu0 0.0
    %397 = vmatpush.msra.mxu0 0.0
    %398 = vmatpush.msra.mxu0 0.0
    %399 = vmatpush.msra.mxu0 0.0
    %400 = vmatpush.msra.mxu0 0.0
    %401 = vmatpush.msra.mxu0 0.0
    %402 = vmatpush.msra.mxu0 0.0
    %403 = vmatpush.msra.mxu0 0.0
    %404 = vmatpush.msra.mxu0 0.0
    %405 = vmatpush.msra.mxu0 0.0
    %406 = vmatpush.msra.mxu0 0.0
    %407 = vmatpush.msra.mxu0 0.0
    %408 = vmatpush.msra.mxu0 0.0
    %409 = vmatpush.msra.mxu0 0.0
    %410 = vmatpush.msra.mxu0 %v24
    %411 = vmatpush.msra.mxu0 %v23
    %412 = vmatmul.f32.gmra.mxu0 %v394
    %v413 = vpop.f32.mrf.mxu0
    %v414 = vadd.f32 0.0, %v413
    %415 = vdwg.mxu0
    %v418 = vrot.slane %v414, 7
    %v419 = vsel %vm174, %v418, %v392
    %vm421 = vcmask 517120
    %422 = vst.msk [vmem:[#allocation6] sm:$0x3] %vm421, %v419
    %v423 = vsel %vm153, %v365, 0
    %425 = vmatpush.msra.mxu0 0.0
    %426 = vmatpush.msra.mxu0 0.0
    %427 = vmatpush.msra.mxu0 0.0
    %428 = vmatpush.msra.mxu0 0.0
    %429 = vmatpush.msra.mxu0 0.0
    %430 = vmatpush.msra.mxu0 0.0
    %431 = vmatpush.msra.mxu0 0.0
    %432 = vmatpush.msra.mxu0 0.0
    %433 = vmatpush.msra.mxu0 0.0
    %434 = vmatpush.msra.mxu0 0.0
    %435 = vmatpush.msra.mxu0 0.0
    %436 = vmatpush.msra.mxu0 0.0
    %437 = vmatpush.msra.mxu0 0.0
    %438 = vmatpush.msra.mxu0 0.0
    %439 = vmatpush.msra.mxu0 %v26
    %440 = vmatpush.msra.mxu0 %v25
    %441 = vmatmul.f32.gmra.mxu0 %v423
    %v442 = vpop.f32.mrf.mxu0
    %v443 = vadd.f32 0.0, %v442
    %444 = vdwg.mxu0
    %v445 = vsel %vm153, %v368, 0
    %447 = vmatpush.msra.mxu0 0.0
    %448 = vmatpush.msra.mxu0 0.0
    %449 = vmatpush.msra.mxu0 0.0
    %450 = vmatpush.msra.mxu0 0.0
    %451 = vmatpush.msra.mxu0 0.0
    %452 = vmatpush.msra.mxu0 0.0
    %453 = vmatpush.msra.mxu0 0.0
    %454 = vmatpush.msra.mxu0 0.0
    %455 = vmatpush.msra.mxu0 0.0
    %456 = vmatpush.msra.mxu0 0.0
    %457 = vmatpush.msra.mxu0 0.0
    %458 = vmatpush.msra.mxu0 0.0
    %459 = vmatpush.msra.mxu0 0.0
    %460 = vmatpush.msra.mxu0 0.0
    %461 = vmatpush.msra.mxu0 %v28
    %462 = vmatpush.msra.mxu0 %v27
    %463 = vmatmul.f32.gmra.mxu0 %v445
    %v464 = vpop.f32.mrf.mxu0
    %v465 = vadd.f32 0.0, %v464
    %466 = vdwg.mxu0
    %v469 = vrot.slane %v465, 7
    %v470 = vsel %vm174, %v469, %v443
    %472 = vst.msk [vmem:[#allocation7] sm:$0x3] %vm421, %v470
    // Predicated region
    $region14: #{rnet_forward.3} parent=1 // pred_check
      _
    $region15: #{rnet_forward.3} parent=1 // pred_check_branch
      %474 = sbr.rel (0) target = $region17
    $region16: #{rnet_forward.3} parent=1 // pred_region
      %476 = vsyncadd [#allocation3], 0
      %s478 = sshll.u32 [#allocation2], 4
      %s479 = int_to_ptr.vmem [resolvable:$true] %s478
      %s480 = sshll.u32 %s3, 4
      %s481 = int_to_ptr.hbm [resolvable:$true] %s480
      %483 = dma.vmem_to_hbm [thread:$0]  %s479, 32, %s481, [#allocation3]
    $region17: #{rnet_forward.3} parent=1 // pred_fallthru
      _
    // Predicated region
    $region18: #{rnet_forward.3} parent=1 // pred_check
      _
    $region19: #{rnet_forward.3} parent=1 // pred_check_branch
      %485 = sbr.rel (0) target = $region21
    $region20: #{rnet_forward.3} parent=1 // pred_region
      %487 = vsyncadd [#allocation5], 0
      %s489 = sshll.u32 [#allocation4], 4
      %s490 = int_to_ptr.vmem [resolvable:$true] %s489
      %s491 = sshll.u32 %s4, 4
      %s492 = int_to_ptr.hbm [resolvable:$true] %s491
      %494 = dma.vmem_to_hbm [thread:$0]  %s490, 32, %s492, [#allocation5]
    $region21: #{rnet_forward.3} parent=1 // pred_fallthru
      _
    // Predicated region
    $region22: #{rnet_forward.3} parent=1 // pred_check
      _
    $region23: #{rnet_forward.3} parent=1 // pred_check_branch
      %496 = sbr.rel (0) target = $region25
    $region24: #{rnet_forward.3} parent=1 // pred_region
      %498 = vsyncadd [#allocation5], 0
      %s500 = sshll.u32 [#allocation6], 4
      %s501 = int_to_ptr.vmem [resolvable:$true] %s500
      %s502 = sshll.u32 %s5, 4
      %s503 = int_to_ptr.hbm [resolvable:$true] %s502
      %505 = dma.vmem_to_hbm [thread:$0]  %s501, 32, %s503, [#allocation5]
    $region25: #{rnet_forward.3} parent=1 // pred_fallthru
      _
    // Predicated region
    $region26: #{rnet_forward.3} parent=1 // pred_check
      _
    $region27: #{rnet_forward.3} parent=1 // pred_check_branch
      %507 = sbr.rel (0) target = $region29
    $region28: #{rnet_forward.3} parent=1 // pred_region
      %509 = vsyncadd [#allocation8], 0
      %s511 = sshll.u32 [#allocation7], 4
      %s512 = int_to_ptr.vmem [resolvable:$true] %s511
      %s513 = sshll.u32 %s6, 4
      %s514 = int_to_ptr.hbm [resolvable:$true] %s513
      %516 = dma.vmem_to_hbm [thread:$0]  %s512, 32, %s514, [#allocation8]
    $region29: #{rnet_forward.3} parent=1 // pred_fallthru
      _
    // Predicated region
    $region30: #{rnet_forward.3} parent=1 // pred_check
      _
    $region31: #{rnet_forward.3} parent=1 // pred_check_branch
      %518 = sbr.rel (0) target = $region33
    $region32: #{rnet_forward.3} parent=1 // pred_region
      %520 = dma.done [#allocation3], 32
    $region33: #{rnet_forward.3} parent=1 // pred_fallthru
      _
    // Predicated region
    $region34: #{rnet_forward.3} parent=1 // pred_check
      _
    $region35: #{rnet_forward.3} parent=1 // pred_check_branch
      %522 = sbr.rel (0) target = $region37
    $region36: #{rnet_forward.3} parent=1 // pred_region
      %524 = dma.done [#allocation5], 32
    $region37: #{rnet_forward.3} parent=1 // pred_fallthru
      _
    // Predicated region
    $region38: #{rnet_forward.3} parent=1 // pred_check
      _
    $region39: #{rnet_forward.3} parent=1 // pred_check_branch
      %526 = sbr.rel (0) target = $region41
    $region40: #{rnet_forward.3} parent=1 // pred_region
      %528 = dma.done [#allocation5], 32
    $region41: #{rnet_forward.3} parent=1 // pred_fallthru
      _
    // Predicated region
    $region42: #{rnet_forward.3} parent=1 // pred_check
      _
    $region43: #{rnet_forward.3} parent=1 // pred_check_branch
      %530 = sbr.rel (0) target = $region45
    $region44: #{rnet_forward.3} parent=1 // pred_region
      %532 = dma.done [#allocation8], 32
    $region45: #{rnet_forward.3} parent=1 // pred_fallthru
      _
    %533 = vsyncpa [#allocation3], 1
    %534 = vsyncpa [#allocation5], 1
    %535 = vsyncpa [#allocation8], 1

// kernel: rnet_forward.2
$region0: #{rnet_forward.2}
  #allocation0 [shape = 'u32[]', space=smem, size = 0x4, offset = 0x4, fixed_abs, tag = 'smem constant byte address 0x4 - core index']
  #allocation1 [shape = 'u32[72,128]{1,0:T(1,128)}', space=vmem, size = 0x9000, scoped, tag = 'internal scratch']
  #allocation2 [shape = 'f32[8,32]{1,0:T(8,128)}', space=vmem, size = 0x1000, scoped, tag = 'scratch operand']
  #allocation3 [shape = 'f32[8,32]{1,0:T(8,128)}', space=vmem, size = 0x1000, scoped, tag = 'scratch operand']
  %s0 = inlined_call_operand.vmem [shape: bf16[8,8,96], index: 0, kind: input, shape index: {}]
  %s1 = inlined_call_operand.vmem [shape: bf16[8,8,96], index: 1, kind: input, shape index: {}]
  %s2 = inlined_call_operand.vmem [shape: s32[8,1], index: 2, kind: input, shape index: {}]
  %s3 = inlined_call_operand.vmem [shape: f32[64,192], index: 3, kind: input, shape index: {}]
  %s4 = inlined_call_operand.vmem [shape: f32[1,32], index: 4, kind: input, shape index: {}]
  %s5 = inlined_call_operand.vmem [shape: f32[1,32], index: 5, kind: input, shape index: {}]
  %s6 = inlined_call_operand.vmem [shape: f32[8,8,32], index: 6, kind: output, shape index: {0}]
  %s7 = inlined_call_operand.vmem [shape: f32[8,8,32], index: 7, kind: output, shape index: {1}]
  %8 = xla_tuple %s6, %s7
  %s9 = sld [smem:[#allocation0]]
  $region46: #{rnet_forward.2} parent=0
    _
  %s11 = ssub.s32 1, %s9
  %s12 = scalar_select 0, %s11, %s9
  // Predicated region
  $region2: #{rnet_forward.2} parent=0 // pred_check
    _
  $region3: #{rnet_forward.2} parent=0 // pred_check_branch
    %14 = sbr.rel (0) target = $region5
  $region4: #{rnet_forward.2} parent=0 // pred_region
    _
  $region5: #{rnet_forward.2} parent=0 // pred_fallthru
    _
  // Predicated region
  $region6: #{rnet_forward.2} parent=0 // pred_check
    _
  $region7: #{rnet_forward.2} parent=0 // pred_check_branch
    %16 = sbr.rel (0) target = $region9
  $region8: #{rnet_forward.2} parent=0 // pred_region
    %s17 = ssub.s32 0, 0
    %p18 = scmp.lt.s32.totalorder %s17, 0
    %s19 = scalar_select %p18, %s17, 0
    %s20 = smul.addr %s19, 4
    %s21 = scalar_lea.vmem %s1, %s20
    %s22 = ssub.s32 0, 0
  $region9: #{rnet_forward.2} parent=0 // pred_fallthru
    _
  // Predicated region
  $region10: #{rnet_forward.2} parent=0 // pred_check
    _
  $region11: #{rnet_forward.2} parent=0 // pred_check_branch
    %24 = sbr.rel (0) target = $region13
  $region12: #{rnet_forward.2} parent=0 // pred_region
    _
  $region13: #{rnet_forward.2} parent=0 // pred_fallthru
    _
  // Predicated region
  $region14: #{rnet_forward.2} parent=0 // pred_check
    _
  $region15: #{rnet_forward.2} parent=0 // pred_check_branch
    %26 = sbr.rel (0) target = $region17
  $region16: #{rnet_forward.2} parent=0 // pred_region
    _
  $region17: #{rnet_forward.2} parent=0 // pred_fallthru
    _
  // Predicated region
  $region18: #{rnet_forward.2} parent=0 // pred_check
    _
  $region19: #{rnet_forward.2} parent=0 // pred_check_branch
    %28 = sbr.rel (0) target = $region21
  $region20: #{rnet_forward.2} parent=0 // pred_region
    _
  $region21: #{rnet_forward.2} parent=0 // pred_fallthru
    _
  // Predicated region
  $region22: #{rnet_forward.2} parent=0 // pred_check
    _
  $region23: #{rnet_forward.2} parent=0 // pred_check_branch
    %30 = sbr.rel (0) target = $region25
  $region24: #{rnet_forward.2} parent=0 // pred_region
    _
  $region25: #{rnet_forward.2} parent=0 // pred_fallthru
    _
  %s31 = ssub.s32 0, 0
  %p32 = scmp.lt.s32.totalorder %s31, 0
  %s33 = scalar_select %p32, %s31, 0
  %s34 = smul.addr %s33, 4
  %s35 = scalar_lea.vmem %s1, %s34
  %s36 = ssub.s32 0, 0
  %p37 = scmp.lt.s32.totalorder %s36, 0
  %s38 = scalar_select %p37, %s36, 0
  %s39 = smul.addr %s38, 8
  %s40 = scalar_lea.vmem %s7, %s39
  %s41 = ssub.s32 0, 0
  %p42 = scmp.lt.s32.totalorder %s41, 0
  %s43 = scalar_select %p42, %s41, 0
  %s44 = smul.addr %s43, 4
  %s45 = scalar_lea.vmem %s1, %s44
  %s46 = ssub.s32 0, 0
  %s47 = ssub.s32 0, 0
  %p48 = scmp.lt.s32.totalorder %s47, 0
  %s49 = scalar_select %p48, %s47, 0
  %s50 = smul.addr %s49, 8
  %s51 = scalar_lea.vmem %s7, %s50
  %s52 = ssub.s32 0, 0
  %p53 = scmp.eq.s32.totalorder 0, 0
  // Predicated region
  $region26: #{rnet_forward.2} parent=0 // pred_check
    %p54 = pneg %p53
  $region27: #{rnet_forward.2} parent=0 // pred_check_branch
    %56 = sbr.rel (%p54) target = $region29
  $region28: #{rnet_forward.2} parent=0 // pred_region
    %vm57 = vcmask 261120
    %58 = vst.msk [vmem:[#allocation2] sm:$0xff] %vm57, 0.0
    %59 = vst.msk [vmem:[#allocation3] sm:$0xff] %vm57, 0.0
  $region29: #{rnet_forward.2} parent=0 // pred_fallthru
    _
  %v60 = vld [vmem:[%s2] sm:$0xff]
  %v61 = vld [vmem:[%s3] sm:$0xff]
  %v62 = vld [vmem:[%s3 + $0x8] sm:$0xff]
  %v63 = vld [vmem:[%s3 + $0x10] sm:$0xff]
  %v64 = vld [vmem:[%s3 + $0x18] sm:$0xff]
  %v65 = vld [vmem:[%s3 + $0x20] sm:$0xff]
  %v66 = vld [vmem:[%s3 + $0x28] sm:$0xff]
  %v67 = vld [vmem:[%s3 + $0x30] sm:$0xff]
  %v68 = vld [vmem:[%s3 + $0x38] sm:$0xff]
  %v69 = vld [vmem:[%s3 + $0x40] sm:$0xff]
  %v70 = vld [vmem:[%s3 + $0x48] sm:$0xff]
  %v71 = vld [vmem:[%s3 + $0x50] sm:$0xff]
  %v72 = vld [vmem:[%s3 + $0x58] sm:$0xff]
  %v73 = vld [vmem:[%s3 + $0x60] sm:$0xff]
  %v74 = vld [vmem:[%s3 + $0x68] sm:$0xff]
  %v75 = vld [vmem:[%s3 + $0x70] sm:$0xff]
  %v76 = vld [vmem:[%s3 + $0x78] sm:$0xff]
  %v77 = vld [vmem:[%s4] sm:$0x1]
  %v79 = vperm.slane %v77, 0
  %v80 = vld [vmem:[%s5] sm:$0x1]
  %v82 = vperm.slane %v80, 0
  %v83 = vlaneseq
  %v84 = vand.u32 %v83, 127
  %s85 = smul.u32 0, 8
  %v86 = vstv %s85
  %v87 = vadd.s32 %v86, %v84
  %88 = vset.pattern.permute.xlu0 0
  %89 = vperm.xlu0 %88, %v60
  %v90 = vpop.permute.xlu0 %89
  %vm91 = vcmp.lt.s32.totalorder %v87, %v90
  %s92 = ssub.s32 0, 0
  %s93 = smul.u32 %s92, 8
  %v94 = vstv %s93
  %v95 = vadd.s32 %v94, %v84
  %vm96 = vcmp.lt.s32.totalorder %v95, %v90
  %v97 = vld [vmem:[#allocation2] sm:$0xff]
  %v98 = vld [vmem:[#allocation3] sm:$0xff]
  %v99 = vld [vmem:[%s0] sm:$0x1]
  %v100 = vld [vmem:[%s0 + $0x4] sm:$0x1]
  %v101 = vld [vmem:[%s0 + $0x8] sm:$0x1]
  %v102 = vld [vmem:[%s0 + $0xc] sm:$0x1]
  %v103 = vld [vmem:[%s0 + $0x10] sm:$0x1]
  %v104 = vld [vmem:[%s0 + $0x14] sm:$0x1]
  %v105 = vld [vmem:[%s0 + $0x18] sm:$0x1]
  %v106 = vld [vmem:[%s0 + $0x1c] sm:$0x1]
  %v107 = vunpack.c.l.bf16 %v99
  %v108 = vunpack.c.l.bf16 %v100
  %v109 = vunpack.c.l.bf16 %v101
  %v110 = vunpack.c.l.bf16 %v102
  %v111 = vunpack.c.l.bf16 %v103
  %v112 = vunpack.c.l.bf16 %v104
  %v113 = vunpack.c.l.bf16 %v105
  %v114 = vunpack.c.l.bf16 %v106
  %v115 = vld [vmem:[%s45] sm:$0x8]
  %v116 = vld [vmem:[%s45 + $0x4] sm:$0x8]
  %v117 = vld [vmem:[%s45 + $0x8] sm:$0x8]
  %v118 = vld [vmem:[%s45 + $0xc] sm:$0x8]
  %v119 = vld [vmem:[%s45 + $0x10] sm:$0x8]
  %v120 = vld [vmem:[%s45 + $0x14] sm:$0x8]
  %v121 = vld [vmem:[%s45 + $0x18] sm:$0x8]
  %v122 = vld [vmem:[%s45 + $0x1c] sm:$0x8]
  %v123 = vunpack.c.l.bf16 %v115
  %v124 = vunpack.c.l.bf16 %v116
  %v125 = vunpack.c.l.bf16 %v117
  %v126 = vunpack.c.l.bf16 %v118
  %v127 = vunpack.c.l.bf16 %v119
  %v128 = vunpack.c.l.bf16 %v120
  %v129 = vunpack.c.l.bf16 %v121
  %v130 = vunpack.c.l.bf16 %v122
  %132 = vrot.lane.b32.xlu0 %v98, 32
  %v133 = vpop.permute.xlu0 %132
  %vm135 = vcmask 261120
  %v136 = vsel %vm135, %v97, %v133
  %vm137 = vcmask 523264
  %v139 = vsel %vm137, %v136, 0
  %141 = vmatpush.msra.mxu0 0.0
  %142 = vmatpush.msra.mxu0 0.0
  %143 = vmatpush.msra.mxu0 0.0
  %144 = vmatpush.msra.mxu0 0.0
  %145 = vmatpush.msra.mxu0 0.0
  %146 = vmatpush.msra.mxu0 0.0
  %147 = vmatpush.msra.mxu0 0.0
  %148 = vmatpush.msra.mxu0 0.0
  %149 = vmatpush.msra.mxu0 %v75
  %150 = vmatpush.msra.mxu0 %v73
  %151 = vmatpush.msra.mxu0 %v71
  %152 = vmatpush.msra.mxu0 %v69
  %153 = vmatpush.msra.mxu0 %v67
  %154 = vmatpush.msra.mxu0 %v65
  %155 = vmatpush.msra.mxu0 %v63
  %156 = vmatpush.msra.mxu0 %v61
  %157 = vmatmul.f32.gmra.mxu0 %v139
  %v158 = vpop.f32.mrf.mxu0
  %v159 = vadd.f32 0.0, %v158
  %160 = vdwg.mxu0
  %161 = vmatpush.msra.mxu0 0.0
  %162 = vmatpush.msra.mxu0 0.0
  %163 = vmatpush.msra.mxu0 0.0
  %164 = vmatpush.msra.mxu0 0.0
  %165 = vmatpush.msra.mxu0 0.0
  %166 = vmatpush.msra.mxu0 0.0
  %167 = vmatpush.msra.mxu0 0.0
  %168 = vmatpush.msra.mxu0 0.0
  %169 = vmatpush.msra.mxu0 %v76
  %170 = vmatpush.msra.mxu0 %v74
  %171 = vmatpush.msra.mxu0 %v72
  %172 = vmatpush.msra.mxu0 %v70
  %173 = vmatpush.msra.mxu0 %v68
  %174 = vmatpush.msra.mxu0 %v66
  %175 = vmatpush.msra.mxu0 %v64
  %176 = vmatpush.msra.mxu0 %v62
  %177 = vmatmul.f32.gmra.mxu0 %v139
  %v178 = vpop.f32.mrf.mxu0
  %v179 = vadd.f32 0.0, %v178
  %180 = vdwg.mxu0
  %v182 = vrot.slane %v159, 1
  %v183 = vrot.slane %v159, 2
  %v184 = vrot.slane %v159, 3
  %v185 = vrot.slane %v159, 4
  %v186 = vrot.slane %v159, 5
  %v187 = vrot.slane %v159, 6
  %v188 = vrot.slane %v159, 7
  %v197 = vadd.f32 %v107, %v159
  %v198 = vadd.f32 %v108, %v182
  %v199 = vadd.f32 %v109, %v183
  %v200 = vadd.f32 %v110, %v184
  %v201 = vadd.f32 %v111, %v185
  %v202 = vadd.f32 %v112, %v186
  %v203 = vadd.f32 %v113, %v187
  %v204 = vadd.f32 %v114, %v188
  %v205 = vxor.u32 %v197, 2147483648
  %v206 = vxor.u32 %v198, 2147483648
  %v207 = vxor.u32 %v199, 2147483648
  %v208 = vxor.u32 %v200, 2147483648
  %v209 = vxor.u32 %v201, 2147483648
  %v210 = vxor.u32 %v202, 2147483648
  %v211 = vxor.u32 %v203, 2147483648
  %v212 = vxor.u32 %v204, 2147483648
  %v213 = vmul.f32 %v205, 1.442695
  %v214 = vpow.pop %v213
  %v215 = vmul.f32 %v206, 1.442695
  %v216 = vpow.pop %v215
  %v217 = vmul.f32 %v207, 1.442695
  %v218 = vpow.pop %v217
  %v219 = vmul.f32 %v208, 1.442695
  %v220 = vpow.pop %v219
  %v221 = vmul.f32 %v209, 1.442695
  %v222 = vpow.pop %v221
  %v223 = vmul.f32 %v210, 1.442695
  %v224 = vpow.pop %v223
  %v225 = vmul.f32 %v211, 1.442695
  %v226 = vpow.pop %v225
  %v227 = vmul.f32 %v212, 1.442695
  %v228 = vpow.pop %v227
  %v229 = vadd.f32 %v214, 1.0
  %v230 = vadd.f32 %v216, 1.0
  %v231 = vadd.f32 %v218, 1.0
  %v232 = vadd.f32 %v220, 1.0
  %v233 = vadd.f32 %v222, 1.0
  %v234 = vadd.f32 %v224, 1.0
  %v235 = vadd.f32 %v226, 1.0
  %v236 = vadd.f32 %v228, 1.0
  %v237 = vrcp.pop %v229
  %v238 = vmul.f32 %v229, %v237
  %v239 = vsub.f32 1.0, %v238
  %v240 = vmul.f32 %v237, %v239
  %v241 = vadd.f32 %v237, %v240
  %vm242 = vweird.f32 %v229
  %vm243 = vweird.f32 %v237
  %vm244 = vmor %vm242, %vm243
  %v245 = vsel %vm244, %v237, %v241
  %v246 = vand.u32 2147483647, %v229
  %vm247 = vcmp.eq.f32.partialorder %v246, 8.507059e+37
  %v248 = vand.u32 %v229, 2147483648
  %v249 = vor.u32 1.1754944e-38, %v248
  %v250 = vsel %vm247, %v249, %v245
  %v251 = vmul.f32 1.0, %v250
  %v252 = vrcp.pop %v230
  %v253 = vmul.f32 %v230, %v252
  %v254 = vsub.f32 1.0, %v253
  %v255 = vmul.f32 %v252, %v254
  %v256 = vadd.f32 %v252, %v255
  %vm257 = vweird.f32 %v230
  %vm258 = vweird.f32 %v252
  %vm259 = vmor %vm257, %vm258
  %v260 = vsel %vm259, %v252, %v256
  %v261 = vand.u32 2147483647, %v230
  %vm262 = vcmp.eq.f32.partialorder %v261, 8.507059e+37
  %v263 = vand.u32 %v230, 2147483648
  %v264 = vor.u32 1.1754944e-38, %v263
  %v265 = vsel %vm262, %v264, %v260
  %v266 = vmul.f32 1.0, %v265
  %v267 = vrcp.pop %v231
  %v268 = vmul.f32 %v231, %v267
  %v269 = vsub.f32 1.0, %v268
  %v270 = vmul.f32 %v267, %v269
  %v271 = vadd.f32 %v267, %v270
  %vm272 = vweird.f32 %v231
  %vm273 = vweird.f32 %v267
  %vm274 = vmor %vm272, %vm273
  %v275 = vsel %vm274, %v267, %v271
  %v276 = vand.u32 2147483647, %v231
  %vm277 = vcmp.eq.f32.partialorder %v276, 8.507059e+37
  %v278 = vand.u32 %v231, 2147483648
  %v279 = vor.u32 1.1754944e-38, %v278
  %v280 = vsel %vm277, %v279, %v275
  %v281 = vmul.f32 1.0, %v280
  %v282 = vrcp.pop %v232
  %v283 = vmul.f32 %v232, %v282
  %v284 = vsub.f32 1.0, %v283
  %v285 = vmul.f32 %v282, %v284
  %v286 = vadd.f32 %v282, %v285
  %vm287 = vweird.f32 %v232
  %vm288 = vweird.f32 %v282
  %vm289 = vmor %vm287, %vm288
  %v290 = vsel %vm289, %v282, %v286
  %v291 = vand.u32 2147483647, %v232
  %vm292 = vcmp.eq.f32.partialorder %v291, 8.507059e+37
  %v293 = vand.u32 %v232, 2147483648
  %v294 = vor.u32 1.1754944e-38, %v293
  %v295 = vsel %vm292, %v294, %v290
  %v296 = vmul.f32 1.0, %v295
  %v297 = vrcp.pop %v233
  %v298 = vmul.f32 %v233, %v297
  %v299 = vsub.f32 1.0, %v298
  %v300 = vmul.f32 %v297, %v299
  %v301 = vadd.f32 %v297, %v300
  %vm302 = vweird.f32 %v233
  %vm303 = vweird.f32 %v297
  %vm304 = vmor %vm302, %vm303
  %v305 = vsel %vm304, %v297, %v301
  %v306 = vand.u32 2147483647, %v233
  %vm307 = vcmp.eq.f32.partialorder %v306, 8.507059e+37
  %v308 = vand.u32 %v233, 2147483648
  %v309 = vor.u32 1.1754944e-38, %v308
  %v310 = vsel %vm307, %v309, %v305
  %v311 = vmul.f32 1.0, %v310
  %v312 = vrcp.pop %v234
  %v313 = vmul.f32 %v234, %v312
  %v314 = vsub.f32 1.0, %v313
  %v315 = vmul.f32 %v312, %v314
  %v316 = vadd.f32 %v312, %v315
  %vm317 = vweird.f32 %v234
  %vm318 = vweird.f32 %v312
  %vm319 = vmor %vm317, %vm318
  %v320 = vsel %vm319, %v312, %v316
  %v321 = vand.u32 2147483647, %v234
  %vm322 = vcmp.eq.f32.partialorder %v321, 8.507059e+37
  %v323 = vand.u32 %v234, 2147483648
  %v324 = vor.u32 1.1754944e-38, %v323
  %v325 = vsel %vm322, %v324, %v320
  %v326 = vmul.f32 1.0, %v325
  %v327 = vrcp.pop %v235
  %v328 = vmul.f32 %v235, %v327
  %v329 = vsub.f32 1.0, %v328
  %v330 = vmul.f32 %v327, %v329
  %v331 = vadd.f32 %v327, %v330
  %vm332 = vweird.f32 %v235
  %vm333 = vweird.f32 %v327
  %vm334 = vmor %vm332, %vm333
  %v335 = vsel %vm334, %v327, %v331
  %v336 = vand.u32 2147483647, %v235
  %vm337 = vcmp.eq.f32.partialorder %v336, 8.507059e+37
  %v338 = vand.u32 %v235, 2147483648
  %v339 = vor.u32 1.1754944e-38, %v338
  %v340 = vsel %vm337, %v339, %v335
  %v341 = vmul.f32 1.0, %v340
  %v342 = vrcp.pop %v236
  %v343 = vmul.f32 %v236, %v342
  %v344 = vsub.f32 1.0, %v343
  %v345 = vmul.f32 %v342, %v344
  %v346 = vadd.f32 %v342, %v345
  %vm347 = vweird.f32 %v236
  %vm348 = vweird.f32 %v342
  %vm349 = vmor %vm347, %vm348
  %v350 = vsel %vm349, %v342, %v346
  %v351 = vand.u32 2147483647, %v236
  %vm352 = vcmp.eq.f32.partialorder %v351, 8.507059e+37
  %v353 = vand.u32 %v236, 2147483648
  %v354 = vor.u32 1.1754944e-38, %v353
  %v355 = vsel %vm352, %v354, %v350
  %v356 = vmul.f32 1.0, %v355
  %357 = vrot.lane.b32.xlu0 %v79, 64
  %v358 = vpop.permute.xlu0 %357
  %v360 = vadd.f32 %v159, %v358
  %v362 = vrot.slane %v360, 1
  %v363 = vrot.slane %v360, 2
  %v364 = vrot.slane %v360, 3
  %v365 = vrot.slane %v360, 4
  %v366 = vrot.slane %v360, 5
  %v367 = vrot.slane %v360, 6
  %v368 = vrot.slane %v360, 7
  %369 = vrot.lane.b32.xlu0 %v360, 64
  %v370 = vpop.permute.xlu0 %369
  %371 = vrot.lane.b32.xlu0 %v362, 64
  %v372 = vpop.permute.xlu0 %371
  %373 = vrot.lane.b32.xlu0 %v363, 64
  %v374 = vpop.permute.xlu0 %373
  %375 = vrot.lane.b32.xlu0 %v364, 64
  %v376 = vpop.permute.xlu0 %375
  %377 = vrot.lane.b32.xlu0 %v365, 64
  %v378 = vpop.permute.xlu0 %377
  %379 = vrot.lane.b32.xlu0 %v366, 64
  %v380 = vpop.permute.xlu0 %379
  %381 = vrot.lane.b32.xlu0 %v367, 64
  %v382 = vpop.permute.xlu0 %381
  %383 = vrot.lane.b32.xlu0 %v368, 64
  %v384 = vpop.permute.xlu0 %383
  %v393 = vmul.f32 %v251, %v370
  %v394 = vmul.f32 %v266, %v372
  %v395 = vmul.f32 %v281, %v374
  %v396 = vmul.f32 %v296, %v376
  %v397 = vmul.f32 %v311, %v378
  %v398 = vmul.f32 %v326, %v380
  %v399 = vmul.f32 %v341, %v382
  %v400 = vmul.f32 %v356, %v384
  %409 = vrot.lane.b32.xlu0 %v393, 64
  %v410 = vpop.permute.xlu0 %409
  %411 = vrot.lane.b32.xlu0 %v394, 64
  %v412 = vpop.permute.xlu0 %411
  %413 = vrot.lane.b32.xlu0 %v395, 64
  %v414 = vpop.permute.xlu0 %413
  %415 = vrot.lane.b32.xlu0 %v396, 64
  %v416 = vpop.permute.xlu0 %415
  %417 = vrot.lane.b32.xlu0 %v397, 64
  %v418 = vpop.permute.xlu0 %417
  %419 = vrot.lane.b32.xlu0 %v398, 64
  %v420 = vpop.permute.xlu0 %419
  %421 = vrot.lane.b32.xlu0 %v399, 64
  %v422 = vpop.permute.xlu0 %421
  %423 = vrot.lane.b32.xlu0 %v400, 64
  %v424 = vpop.permute.xlu0 %423
  %v433 = vadd.f32 %v107, %v410
  %v434 = vadd.f32 %v108, %v412
  %v435 = vadd.f32 %v109, %v414
  %v436 = vadd.f32 %v110, %v416
  %v437 = vadd.f32 %v111, %v418
  %v438 = vadd.f32 %v112, %v420
  %v439 = vadd.f32 %v113, %v422
  %v440 = vadd.f32 %v114, %v424
  %v441 = vtanh.pop %v433
  %v442 = vtanh.pop %v434
  %v443 = vtanh.pop %v435
  %v444 = vtanh.pop %v436
  %v445 = vtanh.pop %v437
  %v446 = vtanh.pop %v438
  %v447 = vtanh.pop %v439
  %v448 = vtanh.pop %v440
  %v449 = vsub.f32 1.0, %v251
  %v450 = vsub.f32 1.0, %v266
  %v451 = vsub.f32 1.0, %v281
  %v452 = vsub.f32 1.0, %v296
  %v453 = vsub.f32 1.0, %v311
  %v454 = vsub.f32 1.0, %v326
  %v455 = vsub.f32 1.0, %v341
  %v456 = vsub.f32 1.0, %v356
  %465 = vrot.lane.b32.xlu0 %v441, 96
  %v466 = vpop.permute.xlu0 %465
  %467 = vrot.lane.b32.xlu0 %v442, 96
  %v468 = vpop.permute.xlu0 %467
  %469 = vrot.lane.b32.xlu0 %v443, 96
  %v470 = vpop.permute.xlu0 %469
  %471 = vrot.lane.b32.xlu0 %v444, 96
  %v472 = vpop.permute.xlu0 %471
  %473 = vrot.lane.b32.xlu0 %v445, 96
  %v474 = vpop.permute.xlu0 %473
  %475 = vrot.lane.b32.xlu0 %v446, 96
  %v476 = vpop.permute.xlu0 %475
  %477 = vrot.lane.b32.xlu0 %v447, 96
  %v478 = vpop.permute.xlu0 %477
  %479 = vrot.lane.b32.xlu0 %v448, 96
  %v480 = vpop.permute.xlu0 %479
  %v489 = vmul.f32 %v449, %v466
  %v490 = vmul.f32 %v450, %v468
  %v491 = vmul.f32 %v451, %v470
  %v492 = vmul.f32 %v452, %v472
  %v493 = vmul.f32 %v453, %v474
  %v494 = vmul.f32 %v454, %v476
  %v495 = vmul.f32 %v455, %v478
  %v496 = vmul.f32 %v456, %v480
  %v498 = vrot.slane %v97, 1
  %v499 = vrot.slane %v97, 2
  %v500 = vrot.slane %v97, 3
  %v501 = vrot.slane %v97, 4
  %v502 = vrot.slane %v97, 5
  %v503 = vrot.slane %v97, 6
  %v504 = vrot.slane %v97, 7
  %505 = vrot.lane.b32.xlu0 %v97, 32
  %v506 = vpop.permute.xlu0 %505
  %507 = vrot.lane.b32.xlu0 %v498, 32
  %v508 = vpop.permute.xlu0 %507
  %509 = vrot.lane.b32.xlu0 %v499, 32
  %v510 = vpop.permute.xlu0 %509
  %511 = vrot.lane.b32.xlu0 %v500, 32
  %v512 = vpop.permute.xlu0 %511
  %513 = vrot.lane.b32.xlu0 %v501, 32
  %v514 = vpop.permute.xlu0 %513
  %515 = vrot.lane.b32.xlu0 %v502, 32
  %v516 = vpop.permute.xlu0 %515
  %517 = vrot.lane.b32.xlu0 %v503, 32
  %v518 = vpop.permute.xlu0 %517
  %519 = vrot.lane.b32.xlu0 %v504, 32
  %v520 = vpop.permute.xlu0 %519
  %v529 = vmul.f32 %v251, %v506
  %v530 = vmul.f32 %v266, %v508
  %v531 = vmul.f32 %v281, %v510
  %v532 = vmul.f32 %v296, %v512
  %v533 = vmul.f32 %v311, %v514
  %v534 = vmul.f32 %v326, %v516
  %v535 = vmul.f32 %v341, %v518
  %v536 = vmul.f32 %v356, %v520
  %v537 = vadd.f32 %v489, %v529
  %v538 = vadd.f32 %v490, %v530
  %v539 = vadd.f32 %v491, %v531
  %v540 = vadd.f32 %v492, %v532
  %v541 = vadd.f32 %v493, %v533
  %v542 = vadd.f32 %v494, %v534
  %v543 = vadd.f32 %v495, %v535
  %v544 = vadd.f32 %v496, %v536
  %v545 = vsel %vm91, 1, 0
  %546 = vset.pattern.permute.xlu0 0
  %547 = vperm.xlu0 %546, %v545
  %v548 = vpop.permute.xlu0 %547
  %vm549 = vcmp.eq.s32.totalorder %v548, 1
  %v558 = vrot.slane %v538, 7
  %vm559 = vcmask 1041409
  %v560 = vsel %vm559, %v558, %v537
  %v561 = vrot.slane %v539, 6
  %vm562 = vcmask 1042434
  %v563 = vsel %vm562, %v561, %v560
  %v564 = vrot.slane %v540, 5
  %vm565 = vcmask 1043459
  %v566 = vsel %vm565, %v564, %v563
  %v567 = vrot.slane %v541, 4
  %vm568 = vcmask 1044484
  %v569 = vsel %vm568, %v567, %v566
  %v570 = vrot.slane %v542, 3
  %vm571 = vcmask 1045509
  %v572 = vsel %vm571, %v570, %v569
  %v573 = vrot.slane %v543, 2
  %vm574 = vcmask 1046534
  %v575 = vsel %vm574, %v573, %v572
  %v576 = vrot.slane %v544, 1
  %vm577 = vcmask 1047559
  %v578 = vsel %vm577, %v576, %v575
  %579 = vrot.lane.b32.xlu0 %v578, 96
  %v580 = vpop.permute.xlu0 %579
  %v582 = vsel %vm549, %v580, %v97
  %v583 = vsel %vm549, %v580, 0.0
  %584 = vrot.lane.b32.xlu0 %v182, 32
  %v585 = vpop.permute.xlu0 %584
  %586 = vrot.lane.b32.xlu0 %v183, 32
  %v587 = vpop.permute.xlu0 %586
  %588 = vrot.lane.b32.xlu0 %v184, 32
  %v589 = vpop.permute.xlu0 %588
  %590 = vrot.lane.b32.xlu0 %v185, 32
  %v591 = vpop.permute.xlu0 %590
  %592 = vrot.lane.b32.xlu0 %v186, 32
  %v593 = vpop.permute.xlu0 %592
  %594 = vrot.lane.b32.xlu0 %v187, 32
  %v595 = vpop.permute.xlu0 %594
  %596 = vrot.lane.b32.xlu0 %v188, 32
  %v597 = vpop.permute.xlu0 %596
  %598 = vrot.lane.b32.xlu0 %v159, 32
  %v599 = vpop.permute.xlu0 %598
  %v608 = vadd.f32 %v123, %v585
  %v609 = vadd.f32 %v124, %v587
  %v610 = vadd.f32 %v125, %v589
  %v611 = vadd.f32 %v126, %v591
  %v612 = vadd.f32 %v127, %v593
  %v613 = vadd.f32 %v128, %v595
  %v614 = vadd.f32 %v129, %v597
  %v615 = vadd.f32 %v130, %v599
  %v616 = vxor.u32 %v608, 2147483648
  %v617 = vxor.u32 %v609, 2147483648
  %v618 = vxor.u32 %v610, 2147483648
  %v619 = vxor.u32 %v611, 2147483648
  %v620 = vxor.u32 %v612, 2147483648
  %v621 = vxor.u32 %v613, 2147483648
  %v622 = vxor.u32 %v614, 2147483648
  %v623 = vxor.u32 %v615, 2147483648
  %v624 = vmul.f32 %v616, 1.442695
  %v625 = vpow.pop %v624
  %v626 = vmul.f32 %v617, 1.442695
  %v627 = vpow.pop %v626
  %v628 = vmul.f32 %v618, 1.442695
  %v629 = vpow.pop %v628
  %v630 = vmul.f32 %v619, 1.442695
  %v631 = vpow.pop %v630
  %v632 = vmul.f32 %v620, 1.442695
  %v633 = vpow.pop %v632
  %v634 = vmul.f32 %v621, 1.442695
  %v635 = vpow.pop %v634
  %v636 = vmul.f32 %v622, 1.442695
  %v637 = vpow.pop %v636
  %v638 = vmul.f32 %v623, 1.442695
  %v639 = vpow.pop %v638
  %v640 = vadd.f32 %v625, 1.0
  %v641 = vadd.f32 %v627, 1.0
  %v642 = vadd.f32 %v629, 1.0
  %v643 = vadd.f32 %v631, 1.0
  %v644 = vadd.f32 %v633, 1.0
  %v645 = vadd.f32 %v635, 1.0
  %v646 = vadd.f32 %v637, 1.0
  %v647 = vadd.f32 %v639, 1.0
  %v648 = vrcp.pop %v640
  %v649 = vmul.f32 %v640, %v648
  %v650 = vsub.f32 1.0, %v649
  %v651 = vmul.f32 %v648, %v650
  %v652 = vadd.f32 %v648, %v651
  %vm653 = vweird.f32 %v640
  %vm654 = vweird.f32 %v648
  %vm655 = vmor %vm653, %vm654
  %v656 = vsel %vm655, %v648, %v652
  %v657 = vand.u32 2147483647, %v640
  %vm658 = vcmp.eq.f32.partialorder %v657, 8.507059e+37
  %v659 = vand.u32 %v640, 2147483648
  %v660 = vor.u32 1.1754944e-38, %v659
  %v661 = vsel %vm658, %v660, %v656
  %v662 = vmul.f32 1.0, %v661
  %v663 = vrcp.pop %v641
  %v664 = vmul.f32 %v641, %v663
  %v665 = vsub.f32 1.0, %v664
  %v666 = vmul.f32 %v663, %v665
  %v667 = vadd.f32 %v663, %v666
  %vm668 = vweird.f32 %v641
  %vm669 = vweird.f32 %v663
  %vm670 = vmor %vm668, %vm669
  %v671 = vsel %vm670, %v663, %v667
  %v672 = vand.u32 2147483647, %v641
  %vm673 = vcmp.eq.f32.partialorder %v672, 8.507059e+37
  %v674 = vand.u32 %v641, 2147483648
  %v675 = vor.u32 1.1754944e-38, %v674
  %v676 = vsel %vm673, %v675, %v671
  %v677 = vmul.f32 1.0, %v676
  %v678 = vrcp.pop %v642
  %v679 = vmul.f32 %v642, %v678
  %v680 = vsub.f32 1.0, %v679
  %v681 = vmul.f32 %v678, %v680
  %v682 = vadd.f32 %v678, %v681
  %vm683 = vweird.f32 %v642
  %vm684 = vweird.f32 %v678
  %vm685 = vmor %vm683, %vm684
  %v686 = vsel %vm685, %v678, %v682
  %v687 = vand.u32 2147483647, %v642
  %vm688 = vcmp.eq.f32.partialorder %v687, 8.507059e+37
  %v689 = vand.u32 %v642, 2147483648
  %v690 = vor.u32 1.1754944e-38, %v689
  %v691 = vsel %vm688, %v690, %v686
  %v692 = vmul.f32 1.0, %v691
  %v693 = vrcp.pop %v643
  %v694 = vmul.f32 %v643, %v693
  %v695 = vsub.f32 1.0, %v694
  %v696 = vmul.f32 %v693, %v695
  %v697 = vadd.f32 %v693, %v696
  %vm698 = vweird.f32 %v643
  %vm699 = vweird.f32 %v693
  %vm700 = vmor %vm698, %vm699
  %v701 = vsel %vm700, %v693, %v697
  %v702 = vand.u32 2147483647, %v643
  %vm703 = vcmp.eq.f32.partialorder %v702, 8.507059e+37
  %v704 = vand.u32 %v643, 2147483648
  %v705 = vor.u32 1.1754944e-38, %v704
  %v706 = vsel %vm703, %v705, %v701
  %v707 = vmul.f32 1.0, %v706
  %v708 = vrcp.pop %v644
  %v709 = vmul.f32 %v644, %v708
  %v710 = vsub.f32 1.0, %v709
  %v711 = vmul.f32 %v708, %v710
  %v712 = vadd.f32 %v708, %v711
  %vm713 = vweird.f32 %v644
  %vm714 = vweird.f32 %v708
  %vm715 = vmor %vm713, %vm714
  %v716 = vsel %vm715, %v708, %v712
  %v717 = vand.u32 2147483647, %v644
  %vm718 = vcmp.eq.f32.partialorder %v717, 8.507059e+37
  %v719 = vand.u32 %v644, 2147483648
  %v720 = vor.u32 1.1754944e-38, %v719
  %v721 = vsel %vm718, %v720, %v716
  %v722 = vmul.f32 1.0, %v721
  %v723 = vrcp.pop %v645
  %v724 = vmul.f32 %v645, %v723
  %v725 = vsub.f32 1.0, %v724
  %v726 = vmul.f32 %v723, %v725
  %v727 = vadd.f32 %v723, %v726
  %vm728 = vweird.f32 %v645
  %vm729 = vweird.f32 %v723
  %vm730 = vmor %vm728, %vm729
  %v731 = vsel %vm730, %v723, %v727
  %v732 = vand.u32 2147483647, %v645
  %vm733 = vcmp.eq.f32.partialorder %v732, 8.507059e+37
  %v734 = vand.u32 %v645, 2147483648
  %v735 = vor.u32 1.1754944e-38, %v734
  %v736 = vsel %vm733, %v735, %v731
  %v737 = vmul.f32 1.0, %v736
  %v738 = vrcp.pop %v646
  %v739 = vmul.f32 %v646, %v738
  %v740 = vsub.f32 1.0, %v739
  %v741 = vmul.f32 %v738, %v740
  %v742 = vadd.f32 %v738, %v741
  %vm743 = vweird.f32 %v646
  %vm744 = vweird.f32 %v738
  %vm745 = vmor %vm743, %vm744
  %v746 = vsel %vm745, %v738, %v742
  %v747 = vand.u32 2147483647, %v646
  %vm748 = vcmp.eq.f32.partialorder %v747, 8.507059e+37
  %v749 = vand.u32 %v646, 2147483648
  %v750 = vor.u32 1.1754944e-38, %v749
  %v751 = vsel %vm748, %v750, %v746
  %v752 = vmul.f32 1.0, %v751
  %v753 = vrcp.pop %v647
  %v754 = vmul.f32 %v647, %v753
  %v755 = vsub.f32 1.0, %v754
  %v756 = vmul.f32 %v753, %v755
  %v757 = vadd.f32 %v753, %v756
  %vm758 = vweird.f32 %v647
  %vm759 = vweird.f32 %v753
  %vm760 = vmor %vm758, %vm759
  %v761 = vsel %vm760, %v753, %v757
  %v762 = vand.u32 2147483647, %v647
  %vm763 = vcmp.eq.f32.partialorder %v762, 8.507059e+37
  %v764 = vand.u32 %v647, 2147483648
  %v765 = vor.u32 1.1754944e-38, %v764
  %v766 = vsel %vm763, %v765, %v761
  %v767 = vmul.f32 1.0, %v766
  %v769 = vrot.slane %v179, 1
  %v770 = vrot.slane %v179, 2
  %v771 = vrot.slane %v179, 3
  %v772 = vrot.slane %v179, 4
  %v773 = vrot.slane %v179, 5
  %v774 = vrot.slane %v179, 6
  %v775 = vrot.slane %v179, 7
  %776 = vrot.lane.b32.xlu0 %v769, 32
  %v777 = vpop.permute.xlu0 %776
  %778 = vrot.lane.b32.xlu0 %v770, 32
  %v779 = vpop.permute.xlu0 %778
  %780 = vrot.lane.b32.xlu0 %v771, 32
  %v781 = vpop.permute.xlu0 %780
  %782 = vrot.lane.b32.xlu0 %v772, 32
  %v783 = vpop.permute.xlu0 %782
  %784 = vrot.lane.b32.xlu0 %v773, 32
  %v785 = vpop.permute.xlu0 %784
  %786 = vrot.lane.b32.xlu0 %v774, 32
  %v787 = vpop.permute.xlu0 %786
  %788 = vrot.lane.b32.xlu0 %v775, 32
  %v789 = vpop.permute.xlu0 %788
  %790 = vrot.lane.b32.xlu0 %v179, 32
  %v791 = vpop.permute.xlu0 %790
  %v800 = vadd.f32 %v123, %v777
  %v801 = vadd.f32 %v124, %v779
  %v802 = vadd.f32 %v125, %v781
  %v803 = vadd.f32 %v126, %v783
  %v804 = vadd.f32 %v127, %v785
  %v805 = vadd.f32 %v128, %v787
  %v806 = vadd.f32 %v129, %v789
  %v807 = vadd.f32 %v130, %v791
  %v808 = vxor.u32 %v800, 2147483648
  %v809 = vxor.u32 %v801, 2147483648
  %v810 = vxor.u32 %v802, 2147483648
  %v811 = vxor.u32 %v803, 2147483648
  %v812 = vxor.u32 %v804, 2147483648
  %v813 = vxor.u32 %v805, 2147483648
  %v814 = vxor.u32 %v806, 2147483648
  %v815 = vxor.u32 %v807, 2147483648
  %v816 = vmul.f32 %v808, 1.442695
  %v817 = vpow.pop %v816
  %v818 = vmul.f32 %v809, 1.442695
  %v819 = vpow.pop %v818
  %v820 = vmul.f32 %v810, 1.442695
  %v821 = vpow.pop %v820
  %v822 = vmul.f32 %v811, 1.442695
  %v823 = vpow.pop %v822
  %v824 = vmul.f32 %v812, 1.442695
  %v825 = vpow.pop %v824
  %v826 = vmul.f32 %v813, 1.442695
  %v827 = vpow.pop %v826
  %v828 = vmul.f32 %v814, 1.442695
  %v829 = vpow.pop %v828
  %v830 = vmul.f32 %v815, 1.442695
  %v831 = vpow.pop %v830
  %v832 = vadd.f32 %v817, 1.0
  %v833 = vadd.f32 %v819, 1.0
  %v834 = vadd.f32 %v821, 1.0
  %v835 = vadd.f32 %v823, 1.0
  %v836 = vadd.f32 %v825, 1.0
  %v837 = vadd.f32 %v827, 1.0
  %v838 = vadd.f32 %v829, 1.0
  %v839 = vadd.f32 %v831, 1.0
  %v840 = vrcp.pop %v832
  %v841 = vmul.f32 %v832, %v840
  %v842 = vsub.f32 1.0, %v841
  %v843 = vmul.f32 %v840, %v842
  %v844 = vadd.f32 %v840, %v843
  %vm845 = vweird.f32 %v832
  %vm846 = vweird.f32 %v840
  %vm847 = vmor %vm845, %vm846
  %v848 = vsel %vm847, %v840, %v844
  %v849 = vand.u32 2147483647, %v832
  %vm850 = vcmp.eq.f32.partialorder %v849, 8.507059e+37
  %v851 = vand.u32 %v832, 2147483648
  %v852 = vor.u32 1.1754944e-38, %v851
  %v853 = vsel %vm850, %v852, %v848
  %v854 = vmul.f32 1.0, %v853
  %v855 = vrcp.pop %v833
  %v856 = vmul.f32 %v833, %v855
  %v857 = vsub.f32 1.0, %v856
  %v858 = vmul.f32 %v855, %v857
  %v859 = vadd.f32 %v855, %v858
  %vm860 = vweird.f32 %v833
  %vm861 = vweird.f32 %v855
  %vm862 = vmor %vm860, %vm861
  %v863 = vsel %vm862, %v855, %v859
  %v864 = vand.u32 2147483647, %v833
  %vm865 = vcmp.eq.f32.partialorder %v864, 8.507059e+37
  %v866 = vand.u32 %v833, 2147483648
  %v867 = vor.u32 1.1754944e-38, %v866
  %v868 = vsel %vm865, %v867, %v863
  %v869 = vmul.f32 1.0, %v868
  %v870 = vrcp.pop %v834
  %v871 = vmul.f32 %v834, %v870
  %v872 = vsub.f32 1.0, %v871
  %v873 = vmul.f32 %v870, %v872
  %v874 = vadd.f32 %v870, %v873
  %vm875 = vweird.f32 %v834
  %vm876 = vweird.f32 %v870
  %vm877 = vmor %vm875, %vm876
  %v878 = vsel %vm877, %v870, %v874
  %v879 = vand.u32 2147483647, %v834
  %vm880 = vcmp.eq.f32.partialorder %v879, 8.507059e+37
  %v881 = vand.u32 %v834, 2147483648
  %v882 = vor.u32 1.1754944e-38, %v881
  %v883 = vsel %vm880, %v882, %v878
  %v884 = vmul.f32 1.0, %v883
  %v885 = vrcp.pop %v835
  %v886 = vmul.f32 %v835, %v885
  %v887 = vsub.f32 1.0, %v886
  %v888 = vmul.f32 %v885, %v887
  %v889 = vadd.f32 %v885, %v888
  %vm890 = vweird.f32 %v835
  %vm891 = vweird.f32 %v885
  %vm892 = vmor %vm890, %vm891
  %v893 = vsel %vm892, %v885, %v889
  %v894 = vand.u32 2147483647, %v835
  %vm895 = vcmp.eq.f32.partialorder %v894, 8.507059e+37
  %v896 = vand.u32 %v835, 2147483648
  %v897 = vor.u32 1.1754944e-38, %v896
  %v898 = vsel %vm895, %v897, %v893
  %v899 = vmul.f32 1.0, %v898
  %v900 = vrcp.pop %v836
  %v901 = vmul.f32 %v836, %v900
  %v902 = vsub.f32 1.0, %v901
  %v903 = vmul.f32 %v900, %v902
  %v904 = vadd.f32 %v900, %v903
  %vm905 = vweird.f32 %v836
  %vm906 = vweird.f32 %v900
  %vm907 = vmor %vm905, %vm906
  %v908 = vsel %vm907, %v900, %v904
  %v909 = vand.u32 2147483647, %v836
  %vm910 = vcmp.eq.f32.partialorder %v909, 8.507059e+37
  %v911 = vand.u32 %v836, 2147483648
  %v912 = vor.u32 1.1754944e-38, %v911
  %v913 = vsel %vm910, %v912, %v908
  %v914 = vmul.f32 1.0, %v913
  %v915 = vrcp.pop %v837
  %v916 = vmul.f32 %v837, %v915
  %v917 = vsub.f32 1.0, %v916
  %v918 = vmul.f32 %v915, %v917
  %v919 = vadd.f32 %v915, %v918
  %vm920 = vweird.f32 %v837
  %vm921 = vweird.f32 %v915
  %vm922 = vmor %vm920, %vm921
  %v923 = vsel %vm922, %v915, %v919
  %v924 = vand.u32 2147483647, %v837
  %vm925 = vcmp.eq.f32.partialorder %v924, 8.507059e+37
  %v926 = vand.u32 %v837, 2147483648
  %v927 = vor.u32 1.1754944e-38, %v926
  %v928 = vsel %vm925, %v927, %v923
  %v929 = vmul.f32 1.0, %v928
  %v930 = vrcp.pop %v838
  %v931 = vmul.f32 %v838, %v930
  %v932 = vsub.f32 1.0, %v931
  %v933 = vmul.f32 %v930, %v932
  %v934 = vadd.f32 %v930, %v933
  %vm935 = vweird.f32 %v838
  %vm936 = vweird.f32 %v930
  %vm937 = vmor %vm935, %vm936
  %v938 = vsel %vm937, %v930, %v934
  %v939 = vand.u32 2147483647, %v838
  %vm940 = vcmp.eq.f32.partialorder %v939, 8.507059e+37
  %v941 = vand.u32 %v838, 2147483648
  %v942 = vor.u32 1.1754944e-38, %v941
  %v943 = vsel %vm940, %v942, %v938
  %v944 = vmul.f32 1.0, %v943
  %v945 = vrcp.pop %v839
  %v946 = vmul.f32 %v839, %v945
  %v947 = vsub.f32 1.0, %v946
  %v948 = vmul.f32 %v945, %v947
  %v949 = vadd.f32 %v945, %v948
  %vm950 = vweird.f32 %v839
  %vm951 = vweird.f32 %v945
  %vm952 = vmor %vm950, %vm951
  %v953 = vsel %vm952, %v945, %v949
  %v954 = vand.u32 2147483647, %v839
  %vm955 = vcmp.eq.f32.partialorder %v954, 8.507059e+37
  %v956 = vand.u32 %v839, 2147483648
  %v957 = vor.u32 1.1754944e-38, %v956
  %v958 = vsel %vm955, %v957, %v953
  %v959 = vmul.f32 1.0, %v958
  %960 = vrot.lane.b32.xlu0 %v82, 32
  %v961 = vpop.permute.xlu0 %960
  %v963 = vadd.f32 %v179, %v961
  %v965 = vrot.slane %v963, 1
  %v966 = vrot.slane %v963, 2
  %v967 = vrot.slane %v963, 3
  %v968 = vrot.slane %v963, 4
  %v969 = vrot.slane %v963, 5
  %v970 = vrot.slane %v963, 6
  %v971 = vrot.slane %v963, 7
  %972 = vrot.lane.b32.xlu0 %v965, 96
  %v973 = vpop.permute.xlu0 %972
  %974 = vrot.lane.b32.xlu0 %v966, 96
  %v975 = vpop.permute.xlu0 %974
  %976 = vrot.lane.b32.xlu0 %v967, 96
  %v977 = vpop.permute.xlu0 %976
  %978 = vrot.lane.b32.xlu0 %v968, 96
  %v979 = vpop.permute.xlu0 %978
  %980 = vrot.lane.b32.xlu0 %v969, 96
  %v981 = vpop.permute.xlu0 %980
  %982 = vrot.lane.b32.xlu0 %v970, 96
  %v983 = vpop.permute.xlu0 %982
  %984 = vrot.lane.b32.xlu0 %v971, 96
  %v985 = vpop.permute.xlu0 %984
  %986 = vrot.lane.b32.xlu0 %v963, 96
  %v987 = vpop.permute.xlu0 %986
  %v996 = vmul.f32 %v662, %v973
  %v997 = vmul.f32 %v677, %v975
  %v998 = vmul.f32 %v692, %v977
  %v999 = vmul.f32 %v707, %v979
  %v1000 = vmul.f32 %v722, %v981
  %v1001 = vmul.f32 %v737, %v983
  %v1002 = vmul.f32 %v752, %v985
  %v1003 = vmul.f32 %v767, %v987
  %1012 = vrot.lane.b32.xlu0 %v996, 64
  %v1013 = vpop.permute.xlu0 %1012
  %1014 = vrot.lane.b32.xlu0 %v997, 64
  %v1015 = vpop.permute.xlu0 %1014
  %1016 = vrot.lane.b32.xlu0 %v998, 64
  %v1017 = vpop.permute.xlu0 %1016
  %1018 = vrot.lane.b32.xlu0 %v999, 64
  %v1019 = vpop.permute.xlu0 %1018
  %1020 = vrot.lane.b32.xlu0 %v1000, 64
  %v1021 = vpop.permute.xlu0 %1020
  %1022 = vrot.lane.b32.xlu0 %v1001, 64
  %v1023 = vpop.permute.xlu0 %1022
  %1024 = vrot.lane.b32.xlu0 %v1002, 64
  %v1025 = vpop.permute.xlu0 %1024
  %1026 = vrot.lane.b32.xlu0 %v1003, 64
  %v1027 = vpop.permute.xlu0 %1026
  %v1036 = vadd.f32 %v123, %v1013
  %v1037 = vadd.f32 %v124, %v1015
  %v1038 = vadd.f32 %v125, %v1017
  %v1039 = vadd.f32 %v126, %v1019
  %v1040 = vadd.f32 %v127, %v1021
  %v1041 = vadd.f32 %v128, %v1023
  %v1042 = vadd.f32 %v129, %v1025
  %v1043 = vadd.f32 %v130, %v1027
  %v1044 = vtanh.pop %v1036
  %v1045 = vtanh.pop %v1037
  %v1046 = vtanh.pop %v1038
  %v1047 = vtanh.pop %v1039
  %v1048 = vtanh.pop %v1040
  %v1049 = vtanh.pop %v1041
  %v1050 = vtanh.pop %v1042
  %v1051 = vtanh.pop %v1043
  %v1052 = vsub.f32 1.0, %v854
  %v1053 = vsub.f32 1.0, %v869
  %v1054 = vsub.f32 1.0, %v884
  %v1055 = vsub.f32 1.0, %v899
  %v1056 = vsub.f32 1.0, %v914
  %v1057 = vsub.f32 1.0, %v929
  %v1058 = vsub.f32 1.0, %v944
  %v1059 = vsub.f32 1.0, %v959
  %1068 = vrot.lane.b32.xlu0 %v1044, 96
  %v1069 = vpop.permute.xlu0 %1068
  %1070 = vrot.lane.b32.xlu0 %v1045, 96
  %v1071 = vpop.permute.xlu0 %1070
  %1072 = vrot.lane.b32.xlu0 %v1046, 96
  %v1073 = vpop.permute.xlu0 %1072
  %1074 = vrot.lane.b32.xlu0 %v1047, 96
  %v1075 = vpop.permute.xlu0 %1074
  %1076 = vrot.lane.b32.xlu0 %v1048, 96
  %v1077 = vpop.permute.xlu0 %1076
  %1078 = vrot.lane.b32.xlu0 %v1049, 96
  %v1079 = vpop.permute.xlu0 %1078
  %1080 = vrot.lane.b32.xlu0 %v1050, 96
  %v1081 = vpop.permute.xlu0 %1080
  %1082 = vrot.lane.b32.xlu0 %v1051, 96
  %v1083 = vpop.permute.xlu0 %1082
  %v1092 = vmul.f32 %v1052, %v1069
  %v1093 = vmul.f32 %v1053, %v1071
  %v1094 = vmul.f32 %v1054, %v1073
  %v1095 = vmul.f32 %v1055, %v1075
  %v1096 = vmul.f32 %v1056, %v1077
  %v1097 = vmul.f32 %v1057, %v1079
  %v1098 = vmul.f32 %v1058, %v1081
  %v1099 = vmul.f32 %v1059, %v1083
  %v1100 = vrot.slane %v98, 1
  %v1101 = vrot.slane %v98, 2
  %v1102 = vrot.slane %v98, 3
  %v1103 = vrot.slane %v98, 4
  %v1104 = vrot.slane %v98, 5
  %v1105 = vrot.slane %v98, 6
  %v1106 = vrot.slane %v98, 7
  %1107 = vrot.lane.b32.xlu0 %v1100, 32
  %v1108 = vpop.permute.xlu0 %1107
  %1109 = vrot.lane.b32.xlu0 %v1101, 32
  %v1110 = vpop.permute.xlu0 %1109
  %1111 = vrot.lane.b32.xlu0 %v1102, 32
  %v1112 = vpop.permute.xlu0 %1111
  %1113 = vrot.lane.b32.xlu0 %v1103, 32
  %v1114 = vpop.permute.xlu0 %1113
  %1115 = vrot.lane.b32.xlu0 %v1104, 32
  %v1116 = vpop.permute.xlu0 %1115
  %1117 = vrot.lane.b32.xlu0 %v1105, 32
  %v1118 = vpop.permute.xlu0 %1117
  %1119 = vrot.lane.b32.xlu0 %v1106, 32
  %v1120 = vpop.permute.xlu0 %1119
  %v1128 = vmul.f32 %v854, %v1108
  %v1129 = vmul.f32 %v869, %v1110
  %v1130 = vmul.f32 %v884, %v1112
  %v1131 = vmul.f32 %v899, %v1114
  %v1132 = vmul.f32 %v914, %v1116
  %v1133 = vmul.f32 %v929, %v1118
  %v1134 = vmul.f32 %v944, %v1120
  %v1135 = vmul.f32 %v959, %v133
  %v1136 = vadd.f32 %v1092, %v1128
  %v1137 = vadd.f32 %v1093, %v1129
  %v1138 = vadd.f32 %v1094, %v1130
  %v1139 = vadd.f32 %v1095, %v1131
  %v1140 = vadd.f32 %v1096, %v1132
  %v1141 = vadd.f32 %v1097, %v1133
  %v1142 = vadd.f32 %v1098, %v1134
  %v1143 = vadd.f32 %v1099, %v1135
  %v1144 = vsel %vm96, 1, 0
  %1145 = vset.pattern.permute.xlu0 7
  %1146 = vperm.xlu0 %1145, %v1144
  %v1147 = vpop.permute.xlu0 %1146
  %vm1148 = vcmp.eq.s32.totalorder %v1147, 1
  %v1157 = vrot.slane %v1136, 7
  %v1158 = vrot.slane %v1137, 6
  %v1159 = vsel %vm559, %v1158, %v1157
  %v1160 = vrot.slane %v1138, 5
  %v1161 = vsel %vm562, %v1160, %v1159
  %v1162 = vrot.slane %v1139, 4
  %v1163 = vsel %vm565, %v1162, %v1161
  %v1164 = vrot.slane %v1140, 3
  %v1165 = vsel %vm568, %v1164, %v1163
  %v1166 = vrot.slane %v1141, 2
  %v1167 = vsel %vm571, %v1166, %v1165
  %v1168 = vrot.slane %v1142, 1
  %v1169 = vsel %vm574, %v1168, %v1167
  %v1170 = vsel %vm577, %v1143, %v1169
  %1171 = vrot.lane.b32.xlu0 %v1170, 96
  %v1172 = vpop.permute.xlu0 %1171
  %v1174 = vsel %vm1148, %v1172, %v98
  %v1175 = vsel %vm1148, %v1172, 0.0
  %v1177 = vrot.slane %v583, 1
  %v1178 = vrot.slane %v583, 2
  %v1179 = vrot.slane %v583, 3
  %v1180 = vrot.slane %v583, 4
  %v1181 = vrot.slane %v583, 5
  %v1182 = vrot.slane %v583, 6
  %v1183 = vrot.slane %v583, 7
  %vm1191 = vcmask 253952
  %1192 = vst.msk [vmem:[%s6] sm:$0x1] %vm1191, %v583
  %1193 = vst.msk [vmem:[%s6 + $0x8] sm:$0x1] %vm1191, %v1177
  %1194 = vst.msk [vmem:[%s6 + $0x10] sm:$0x1] %vm1191, %v1178
  %1195 = vst.msk [vmem:[%s6 + $0x18] sm:$0x1] %vm1191, %v1179
  %1196 = vst.msk [vmem:[%s6 + $0x20] sm:$0x1] %vm1191, %v1180
  %1197 = vst.msk [vmem:[%s6 + $0x28] sm:$0x1] %vm1191, %v1181
  %1198 = vst.msk [vmem:[%s6 + $0x30] sm:$0x1] %vm1191, %v1182
  %1199 = vst.msk [vmem:[%s6 + $0x38] sm:$0x1] %vm1191, %v1183
  %v1201 = vrot.slane %v1175, 1
  %v1202 = vrot.slane %v1175, 2
  %v1203 = vrot.slane %v1175, 3
  %v1204 = vrot.slane %v1175, 4
  %v1205 = vrot.slane %v1175, 5
  %v1206 = vrot.slane %v1175, 6
  %v1207 = vrot.slane %v1175, 7
  %1215 = vst.msk [vmem:[%s51 + $0x7] sm:$0x1] %vm1191, %v1175
  %1216 = vst.msk [vmem:[%s51 + $0xf] sm:$0x1] %vm1191, %v1201
  %1217 = vst.msk [vmem:[%s51 + $0x17] sm:$0x1] %vm1191, %v1202
  %1218 = vst.msk [vmem:[%s51 + $0x1f] sm:$0x1] %vm1191, %v1203
  %1219 = vst.msk [vmem:[%s51 + $0x27] sm:$0x1] %vm1191, %v1204
  %1220 = vst.msk [vmem:[%s51 + $0x2f] sm:$0x1] %vm1191, %v1205
  %1221 = vst.msk [vmem:[%s51 + $0x37] sm:$0x1] %vm1191, %v1206
  %1222 = vst.msk [vmem:[%s51 + $0x3f] sm:$0x1] %vm1191, %v1207
  %v1223 = vld [vmem:[%s0] sm:$0x1]
  %v1224 = vld [vmem:[%s0 + $0x4] sm:$0x1]
  %v1225 = vld [vmem:[%s0 + $0x8] sm:$0x1]
  %v1226 = vld [vmem:[%s0 + $0xc] sm:$0x1]
  %v1227 = vld [vmem:[%s0 + $0x10] sm:$0x1]
  %v1228 = vld [vmem:[%s0 + $0x14] sm:$0x1]
  %v1229 = vld [vmem:[%s0 + $0x18] sm:$0x1]
  %v1230 = vld [vmem:[%s0 + $0x1c] sm:$0x1]
  %v1231 = vunpack.c.l.bf16 %v1223
  %v1232 = vunpack.c.l.bf16 %v1224
  %v1233 = vunpack.c.l.bf16 %v1225
  %v1234 = vunpack.c.l.bf16 %v1226
  %v1235 = vunpack.c.l.bf16 %v1227
  %v1236 = vunpack.c.l.bf16 %v1228
  %v1237 = vunpack.c.l.bf16 %v1229
  %v1238 = vunpack.c.l.bf16 %v1230
  %v1239 = vld [vmem:[%s45] sm:$0x8]
  %v1240 = vld [vmem:[%s45 + $0x4] sm:$0x8]
  %v1241 = vld [vmem:[%s45 + $0x8] sm:$0x8]
  %v1242 = vld [vmem:[%s45 + $0xc] sm:$0x8]
  %v1243 = vld [vmem:[%s45 + $0x10] sm:$0x8]
  %v1244 = vld [vmem:[%s45 + $0x14] sm:$0x8]
  %v1245 = vld [vmem:[%s45 + $0x18] sm:$0x8]
  %v1246 = vld [vmem:[%s45 + $0x1c] sm:$0x8]
  %v1247 = vunpack.c.l.bf16 %v1239
  %v1248 = vunpack.c.l.bf16 %v1240
  %v1249 = vunpack.c.l.bf16 %v1241
  %v1250 = vunpack.c.l.bf16 %v1242
  %v1251 = vunpack.c.l.bf16 %v1243
  %v1252 = vunpack.c.l.bf16 %v1244
  %v1253 = vunpack.c.l.bf16 %v1245
  %v1254 = vunpack.c.l.bf16 %v1246
  %1256 = vrot.lane.b32.xlu0 %v1174, 32
  %v1257 = vpop.permute.xlu0 %1256
  %v1259 = vsel %vm135, %v582, %v1257
  %v1261 = vsel %vm137, %v1259, 0
  %1263 = vmatpush.msra.mxu0 0.0
  %1264 = vmatpush.msra.mxu0 0.0
  %1265 = vmatpush.msra.mxu0 0.0
  %1266 = vmatpush.msra.mxu0 0.0
  %1267 = vmatpush.msra.mxu0 0.0
  %1268 = vmatpush.msra.mxu0 0.0
  %1269 = vmatpush.msra.mxu0 0.0
  %1270 = vmatpush.msra.mxu0 0.0
  %1271 = vmatpush.msra.mxu0 %v75
  %1272 = vmatpush.msra.mxu0 %v73
  %1273 = vmatpush.msra.mxu0 %v71
  %1274 = vmatpush.msra.mxu0 %v69
  %1275 = vmatpush.msra.mxu0 %v67
  %1276 = vmatpush.msra.mxu0 %v65
  %1277 = vmatpush.msra.mxu0 %v63
  %1278 = vmatpush.msra.mxu0 %v61
  %1279 = vmatmul.f32.gmra.mxu0 %v1261
  %v1280 = vpop.f32.mrf.mxu0
  %v1281 = vadd.f32 0.0, %v1280
  %1282 = vdwg.mxu0
  %1283 = vmatpush.msra.mxu0 0.0
  %1284 = vmatpush.msra.mxu0 0.0
  %1285 = vmatpush.msra.mxu0 0.0
  %1286 = vmatpush.msra.mxu0 0.0
  %1287 = vmatpush.msra.mxu0 0.0
  %1288 = vmatpush.msra.mxu0 0.0
  %1289 = vmatpush.msra.mxu0 0.0
  %1290 = vmatpush.msra.mxu0 0.0
  %1291 = vmatpush.msra.mxu0 %v76
  %1292 = vmatpush.msra.mxu0 %v74
  %1293 = vmatpush.msra.mxu0 %v72
  %1294 = vmatpush.msra.mxu0 %v70
  %1295 = vmatpush.msra.mxu0 %v68
  %1296 = vmatpush.msra.mxu0 %v66
  %1297 = vmatpush.msra.mxu0 %v64
  %1298 = vmatpush.msra.mxu0 %v62
  %1299 = vmatmul.f32.gmra.mxu0 %v1261
  %v1300 = vpop.f32.mrf.mxu0
  %v1301 = vadd.f32 0.0, %v1300
  %1302 = vdwg.mxu0
  %v1304 = vrot.slane %v1281, 7
  %v1305 = vrot.slane %v1281, 1
  %v1306 = vrot.slane %v1281, 2
  %v1307 = vrot.slane %v1281, 3
  %v1308 = vrot.slane %v1281, 4
  %v1309 = vrot.slane %v1281, 5
  %v1310 = vrot.slane %v1281, 6
  %v1319 = vadd.f32 %v1231, %v1304
  %v1320 = vadd.f32 %v1232, %v1281
  %v1321 = vadd.f32 %v1233, %v1305
  %v1322 = vadd.f32 %v1234, %v1306
  %v1323 = vadd.f32 %v1235, %v1307
  %v1324 = vadd.f32 %v1236, %v1308
  %v1325 = vadd.f32 %v1237, %v1309
  %v1326 = vadd.f32 %v1238, %v1310
  %v1327 = vxor.u32 %v1319, 2147483648
  %v1328 = vxor.u32 %v1320, 2147483648
  %v1329 = vxor.u32 %v1321, 2147483648
  %v1330 = vxor.u32 %v1322, 2147483648
  %v1331 = vxor.u32 %v1323, 2147483648
  %v1332 = vxor.u32 %v1324, 2147483648
  %v1333 = vxor.u32 %v1325, 2147483648
  %v1334 = vxor.u32 %v1326, 2147483648
  %v1335 = vmul.f32 %v1327, 1.442695
  %v1336 = vpow.pop %v1335
  %v1337 = vmul.f32 %v1328, 1.442695
  %v1338 = vpow.pop %v1337
  %v1339 = vmul.f32 %v1329, 1.442695
  %v1340 = vpow.pop %v1339
  %v1341 = vmul.f32 %v1330, 1.442695
  %v1342 = vpow.pop %v1341
  %v1343 = vmul.f32 %v1331, 1.442695
  %v1344 = vpow.pop %v1343
  %v1345 = vmul.f32 %v1332, 1.442695
  %v1346 = vpow.pop %v1345
  %v1347 = vmul.f32 %v1333, 1.442695
  %v1348 = vpow.pop %v1347
  %v1349 = vmul.f32 %v1334, 1.442695
  %v1350 = vpow.pop %v1349
  %v1351 = vadd.f32 %v1336, 1.0
  %v1352 = vadd.f32 %v1338, 1.0
  %v1353 = vadd.f32 %v1340, 1.0
  %v1354 = vadd.f32 %v1342, 1.0
  %v1355 = vadd.f32 %v1344, 1.0
  %v1356 = vadd.f32 %v1346, 1.0
  %v1357 = vadd.f32 %v1348, 1.0
  %v1358 = vadd.f32 %v1350, 1.0
  %v1359 = vrcp.pop %v1351
  %v1360 = vmul.f32 %v1351, %v1359
  %v1361 = vsub.f32 1.0, %v1360
  %v1362 = vmul.f32 %v1359, %v1361
  %v1363 = vadd.f32 %v1359, %v1362
  %vm1364 = vweird.f32 %v1351
  %vm1365 = vweird.f32 %v1359
  %vm1366 = vmor %vm1364, %vm1365
  %v1367 = vsel %vm1366, %v1359, %v1363
  %v1368 = vand.u32 2147483647, %v1351
  %vm1369 = vcmp.eq.f32.partialorder %v1368, 8.507059e+37
  %v1370 = vand.u32 %v1351, 2147483648
  %v1371 = vor.u32 1.1754944e-38, %v1370
  %v1372 = vsel %vm1369, %v1371, %v1367
  %v1373 = vmul.f32 1.0, %v1372
  %v1374 = vrcp.pop %v1352
  %v1375 = vmul.f32 %v1352, %v1374
  %v1376 = vsub.f32 1.0, %v1375
  %v1377 = vmul.f32 %v1374, %v1376
  %v1378 = vadd.f32 %v1374, %v1377
  %vm1379 = vweird.f32 %v1352
  %vm1380 = vweird.f32 %v1374
  %vm1381 = vmor %vm1379, %vm1380
  %v1382 = vsel %vm1381, %v1374, %v1378
  %v1383 = vand.u32 2147483647, %v1352
  %vm1384 = vcmp.eq.f32.partialorder %v1383, 8.507059e+37
  %v1385 = vand.u32 %v1352, 2147483648
  %v1386 = vor.u32 1.1754944e-38, %v1385
  %v1387 = vsel %vm1384, %v1386, %v1382
  %v1388 = vmul.f32 1.0, %v1387
  %v1389 = vrcp.pop %v1353
  %v1390 = vmul.f32 %v1353, %v1389
  %v1391 = vsub.f32 1.0, %v1390
  %v1392 = vmul.f32 %v1389, %v1391
  %v1393 = vadd.f32 %v1389, %v1392
  %vm1394 = vweird.f32 %v1353
  %vm1395 = vweird.f32 %v1389
  %vm1396 = vmor %vm1394, %vm1395
  %v1397 = vsel %vm1396, %v1389, %v1393
  %v1398 = vand.u32 2147483647, %v1353
  %vm1399 = vcmp.eq.f32.partialorder %v1398, 8.507059e+37
  %v1400 = vand.u32 %v1353, 2147483648
  %v1401 = vor.u32 1.1754944e-38, %v1400
  %v1402 = vsel %vm1399, %v1401, %v1397
  %v1403 = vmul.f32 1.0, %v1402
  %v1404 = vrcp.pop %v1354
  %v1405 = vmul.f32 %v1354, %v1404
  %v1406 = vsub.f32 1.0, %v1405
  %v1407 = vmul.f32 %v1404, %v1406
  %v1408 = vadd.f32 %v1404, %v1407
  %vm1409 = vweird.f32 %v1354
  %vm1410 = vweird.f32 %v1404
  %vm1411 = vmor %vm1409, %vm1410
  %v1412 = vsel %vm1411, %v1404, %v1408
  %v1413 = vand.u32 2147483647, %v1354
  %vm1414 = vcmp.eq.f32.partialorder %v1413, 8.507059e+37
  %v1415 = vand.u32 %v1354, 2147483648
  %v1416 = vor.u32 1.1754944e-38, %v1415
  %v1417 = vsel %vm1414, %v1416, %v1412
  %v1418 = vmul.f32 1.0, %v1417
  %v1419 = vrcp.pop %v1355
  %v1420 = vmul.f32 %v1355, %v1419
  %v1421 = vsub.f32 1.0, %v1420
  %v1422 = vmul.f32 %v1419, %v1421
  %v1423 = vadd.f32 %v1419, %v1422
  %vm1424 = vweird.f32 %v1355
  %vm1425 = vweird.f32 %v1419
  %vm1426 = vmor %vm1424, %vm1425
  %v1427 = vsel %vm1426, %v1419, %v1423
  %v1428 = vand.u32 2147483647, %v1355
  %vm1429 = vcmp.eq.f32.partialorder %v1428, 8.507059e+37
  %v1430 = vand.u32 %v1355, 2147483648
  %v1431 = vor.u32 1.1754944e-38, %v1430
  %v1432 = vsel %vm1429, %v1431, %v1427
  %v1433 = vmul.f32 1.0, %v1432
  %v1434 = vrcp.pop %v1356
  %v1435 = vmul.f32 %v1356, %v1434
  %v1436 = vsub.f32 1.0, %v1435
  %v1437 = vmul.f32 %v1434, %v1436
  %v1438 = vadd.f32 %v1434, %v1437
  %vm1439 = vweird.f32 %v1356
  %vm1440 = vweird.f32 %v1434
  %vm1441 = vmor %vm1439, %vm1440
  %v1442 = vsel %vm1441, %v1434, %v1438
  %v1443 = vand.u32 2147483647, %v1356
  %vm1444 = vcmp.eq.f32.partialorder %v1443, 8.507059e+37
  %v1445 = vand.u32 %v1356, 2147483648
  %v1446 = vor.u32 1.1754944e-38, %v1445
  %v1447 = vsel %vm1444, %v1446, %v1442
  %v1448 = vmul.f32 1.0, %v1447
  %v1449 = vrcp.pop %v1357
  %v1450 = vmul.f32 %v1357, %v1449
  %v1451 = vsub.f32 1.0, %v1450
  %v1452 = vmul.f32 %v1449, %v1451
  %v1453 = vadd.f32 %v1449, %v1452
  %vm1454 = vweird.f32 %v1357
  %vm1455 = vweird.f32 %v1449
  %vm1456 = vmor %vm1454, %vm1455
  %v1457 = vsel %vm1456, %v1449, %v1453
  %v1458 = vand.u32 2147483647, %v1357
  %vm1459 = vcmp.eq.f32.partialorder %v1458, 8.507059e+37
  %v1460 = vand.u32 %v1357, 2147483648
  %v1461 = vor.u32 1.1754944e-38, %v1460
  %v1462 = vsel %vm1459, %v1461, %v1457
  %v1463 = vmul.f32 1.0, %v1462
  %v1464 = vrcp.pop %v1358
  %v1465 = vmul.f32 %v1358, %v1464
  %v1466 = vsub.f32 1.0, %v1465
  %v1467 = vmul.f32 %v1464, %v1466
  %v1468 = vadd.f32 %v1464, %v1467
  %vm1469 = vweird.f32 %v1358
  %vm1470 = vweird.f32 %v1464
  %vm1471 = vmor %vm1469, %vm1470
  %v1472 = vsel %vm1471, %v1464, %v1468
  %v1473 = vand.u32 2147483647, %v1358
  %vm1474 = vcmp.eq.f32.partialorder %v1473, 8.507059e+37
  %v1475 = vand.u32 %v1358, 2147483648
  %v1476 = vor.u32 1.1754944e-38, %v1475
  %v1477 = vsel %vm1474, %v1476, %v1472
  %v1478 = vmul.f32 1.0, %v1477
  %v1479 = vadd.f32 %v1281, %v358
  %v1481 = vrot.slane %v1479, 7
  %v1482 = vrot.slane %v1479, 1
  %v1483 = vrot.slane %v1479, 2
  %v1484 = vrot.slane %v1479, 3
  %v1485 = vrot.slane %v1479, 4
  %v1486 = vrot.slane %v1479, 5
  %v1487 = vrot.slane %v1479, 6
  %1488 = vrot.lane.b32.xlu0 %v1481, 64
  %v1489 = vpop.permute.xlu0 %1488
  %1490 = vrot.lane.b32.xlu0 %v1479, 64
  %v1491 = vpop.permute.xlu0 %1490
  %1492 = vrot.lane.b32.xlu0 %v1482, 64
  %v1493 = vpop.permute.xlu0 %1492
  %1494 = vrot.lane.b32.xlu0 %v1483, 64
  %v1495 = vpop.permute.xlu0 %1494
  %1496 = vrot.lane.b32.xlu0 %v1484, 64
  %v1497 = vpop.permute.xlu0 %1496
  %1498 = vrot.lane.b32.xlu0 %v1485, 64
  %v1499 = vpop.permute.xlu0 %1498
  %1500 = vrot.lane.b32.xlu0 %v1486, 64
  %v1501 = vpop.permute.xlu0 %1500
  %1502 = vrot.lane.b32.xlu0 %v1487, 64
  %v1503 = vpop.permute.xlu0 %1502
  %v1512 = vmul.f32 %v1373, %v1489
  %v1513 = vmul.f32 %v1388, %v1491
  %v1514 = vmul.f32 %v1403, %v1493
  %v1515 = vmul.f32 %v1418, %v1495
  %v1516 = vmul.f32 %v1433, %v1497
  %v1517 = vmul.f32 %v1448, %v1499
  %v1518 = vmul.f32 %v1463, %v1501
  %v1519 = vmul.f32 %v1478, %v1503
  %1528 = vrot.lane.b32.xlu0 %v1512, 64
  %v1529 = vpop.permute.xlu0 %1528
  %1530 = vrot.lane.b32.xlu0 %v1513, 64
  %v1531 = vpop.permute.xlu0 %1530
  %1532 = vrot.lane.b32.xlu0 %v1514, 64
  %v1533 = vpop.permute.xlu0 %1532
  %1534 = vrot.lane.b32.xlu0 %v1515, 64
  %v1535 = vpop.permute.xlu0 %1534
  %1536 = vrot.lane.b32.xlu0 %v1516, 64
  %v1537 = vpop.permute.xlu0 %1536
  %1538 = vrot.lane.b32.xlu0 %v1517, 64
  %v1539 = vpop.permute.xlu0 %1538
  %1540 = vrot.lane.b32.xlu0 %v1518, 64
  %v1541 = vpop.permute.xlu0 %1540
  %1542 = vrot.lane.b32.xlu0 %v1519, 64
  %v1543 = vpop.permute.xlu0 %1542
  %v1552 = vadd.f32 %v1231, %v1529
  %v1553 = vadd.f32 %v1232, %v1531
  %v1554 = vadd.f32 %v1233, %v1533
  %v1555 = vadd.f32 %v1234, %v1535
  %v1556 = vadd.f32 %v1235, %v1537
  %v1557 = vadd.f32 %v1236, %v1539
  %v1558 = vadd.f32 %v1237, %v1541
  %v1559 = vadd.f32 %v1238, %v1543
  %v1560 = vtanh.pop %v1552
  %v1561 = vtanh.pop %v1553
  %v1562 = vtanh.pop %v1554
  %v1563 = vtanh.pop %v1555
  %v1564 = vtanh.pop %v1556
  %v1565 = vtanh.pop %v1557
  %v1566 = vtanh.pop %v1558
  %v1567 = vtanh.pop %v1559
  %v1568 = vsub.f32 1.0, %v1373
  %v1569 = vsub.f32 1.0, %v1388
  %v1570 = vsub.f32 1.0, %v1403
  %v1571 = vsub.f32 1.0, %v1418
  %v1572 = vsub.f32 1.0, %v1433
  %v1573 = vsub.f32 1.0, %v1448
  %v1574 = vsub.f32 1.0, %v1463
  %v1575 = vsub.f32 1.0, %v1478
  %1584 = vrot.lane.b32.xlu0 %v1560, 96
  %v1585 = vpop.permute.xlu0 %1584
  %1586 = vrot.lane.b32.xlu0 %v1561, 96
  %v1587 = vpop.permute.xlu0 %1586
  %1588 = vrot.lane.b32.xlu0 %v1562, 96
  %v1589 = vpop.permute.xlu0 %1588
  %1590 = vrot.lane.b32.xlu0 %v1563, 96
  %v1591 = vpop.permute.xlu0 %1590
  %1592 = vrot.lane.b32.xlu0 %v1564, 96
  %v1593 = vpop.permute.xlu0 %1592
  %1594 = vrot.lane.b32.xlu0 %v1565, 96
  %v1595 = vpop.permute.xlu0 %1594
  %1596 = vrot.lane.b32.xlu0 %v1566, 96
  %v1597 = vpop.permute.xlu0 %1596
  %1598 = vrot.lane.b32.xlu0 %v1567, 96
  %v1599 = vpop.permute.xlu0 %1598
  %v1608 = vmul.f32 %v1568, %v1585
  %v1609 = vmul.f32 %v1569, %v1587
  %v1610 = vmul.f32 %v1570, %v1589
  %v1611 = vmul.f32 %v1571, %v1591
  %v1612 = vmul.f32 %v1572, %v1593
  %v1613 = vmul.f32 %v1573, %v1595
  %v1614 = vmul.f32 %v1574, %v1597
  %v1615 = vmul.f32 %v1575, %v1599
  %v1617 = vrot.slane %v582, 7
  %v1618 = vrot.slane %v582, 1
  %v1619 = vrot.slane %v582, 2
  %v1620 = vrot.slane %v582, 3
  %v1621 = vrot.slane %v582, 4
  %v1622 = vrot.slane %v582, 5
  %v1623 = vrot.slane %v582, 6
  %1624 = vrot.lane.b32.xlu0 %v1617, 32
  %v1625 = vpop.permute.xlu0 %1624
  %1626 = vrot.lane.b32.xlu0 %v582, 32
  %v1627 = vpop.permute.xlu0 %1626
  %1628 = vrot.lane.b32.xlu0 %v1618, 32
  %v1629 = vpop.permute.xlu0 %1628
  %1630 = vrot.lane.b32.xlu0 %v1619, 32
  %v1631 = vpop.permute.xlu0 %1630
  %1632 = vrot.lane.b32.xlu0 %v1620, 32
  %v1633 = vpop.permute.xlu0 %1632
  %1634 = vrot.lane.b32.xlu0 %v1621, 32
  %v1635 = vpop.permute.xlu0 %1634
  %1636 = vrot.lane.b32.xlu0 %v1622, 32
  %v1637 = vpop.permute.xlu0 %1636
  %1638 = vrot.lane.b32.xlu0 %v1623, 32
  %v1639 = vpop.permute.xlu0 %1638
  %v1648 = vmul.f32 %v1373, %v1625
  %v1649 = vmul.f32 %v1388, %v1627
  %v1650 = vmul.f32 %v1403, %v1629
  %v1651 = vmul.f32 %v1418, %v1631
  %v1652 = vmul.f32 %v1433, %v1633
  %v1653 = vmul.f32 %v1448, %v1635
  %v1654 = vmul.f32 %v1463, %v1637
  %v1655 = vmul.f32 %v1478, %v1639
  %v1656 = vadd.f32 %v1608, %v1648
  %v1657 = vadd.f32 %v1609, %v1649
  %v1658 = vadd.f32 %v1610, %v1650
  %v1659 = vadd.f32 %v1611, %v1651
  %v1660 = vadd.f32 %v1612, %v1652
  %v1661 = vadd.f32 %v1613, %v1653
  %v1662 = vadd.f32 %v1614, %v1654
  %v1663 = vadd.f32 %v1615, %v1655
  %1664 = vset.pattern.permute.xlu0 1
  %1665 = vperm.xlu0 %1664, %v545
  %v1666 = vpop.permute.xlu0 %1665
  %vm1667 = vcmp.eq.s32.totalorder %v1666, 1
  %v1676 = vrot.slane %v1656, 1
  %v1677 = vsel %vm559, %v1657, %v1676
  %v1678 = vrot.slane %v1658, 7
  %v1679 = vsel %vm562, %v1678, %v1677
  %v1680 = vrot.slane %v1659, 6
  %v1681 = vsel %vm565, %v1680, %v1679
  %v1682 = vrot.slane %v1660, 5
  %v1683 = vsel %vm568, %v1682, %v1681
  %v1684 = vrot.slane %v1661, 4
  %v1685 = vsel %vm571, %v1684, %v1683
  %v1686 = vrot.slane %v1662, 3
  %v1687 = vsel %vm574, %v1686, %v1685
  %v1688 = vrot.slane %v1663, 2
  %v1689 = vsel %vm577, %v1688, %v1687
  %1690 = vrot.lane.b32.xlu0 %v1689, 96
  %v1691 = vpop.permute.xlu0 %1690
  %v1693 = vsel %vm1667, %v1691, %v582
  %v1694 = vsel %vm1667, %v1691, 0.0
  %1695 = vrot.lane.b32.xlu0 %v1306, 32
  %v1696 = vpop.permute.xlu0 %1695
  %1697 = vrot.lane.b32.xlu0 %v1307, 32
  %v1698 = vpop.permute.xlu0 %1697
  %1699 = vrot.lane.b32.xlu0 %v1308, 32
  %v1700 = vpop.permute.xlu0 %1699
  %1701 = vrot.lane.b32.xlu0 %v1309, 32
  %v1702 = vpop.permute.xlu0 %1701
  %1703 = vrot.lane.b32.xlu0 %v1310, 32
  %v1704 = vpop.permute.xlu0 %1703
  %1705 = vrot.lane.b32.xlu0 %v1304, 32
  %v1706 = vpop.permute.xlu0 %1705
  %1707 = vrot.lane.b32.xlu0 %v1281, 32
  %v1708 = vpop.permute.xlu0 %1707
  %1709 = vrot.lane.b32.xlu0 %v1305, 32
  %v1710 = vpop.permute.xlu0 %1709
  %v1719 = vadd.f32 %v1247, %v1696
  %v1720 = vadd.f32 %v1248, %v1698
  %v1721 = vadd.f32 %v1249, %v1700
  %v1722 = vadd.f32 %v1250, %v1702
  %v1723 = vadd.f32 %v1251, %v1704
  %v1724 = vadd.f32 %v1252, %v1706
  %v1725 = vadd.f32 %v1253, %v1708
  %v1726 = vadd.f32 %v1254, %v1710
  %v1727 = vxor.u32 %v1719, 2147483648
  %v1728 = vxor.u32 %v1720, 2147483648
  %v1729 = vxor.u32 %v1721, 2147483648
  %v1730 = vxor.u32 %v1722, 2147483648
  %v1731 = vxor.u32 %v1723, 2147483648
  %v1732 = vxor.u32 %v1724, 2147483648
  %v1733 = vxor.u32 %v1725, 2147483648
  %v1734 = vxor.u32 %v1726, 2147483648
  %v1735 = vmul.f32 %v1727, 1.442695
  %v1736 = vpow.pop %v1735
  %v1737 = vmul.f32 %v1728, 1.442695
  %v1738 = vpow.pop %v1737
  %v1739 = vmul.f32 %v1729, 1.442695
  %v1740 = vpow.pop %v1739
  %v1741 = vmul.f32 %v1730, 1.442695
  %v1742 = vpow.pop %v1741
  %v1743 = vmul.f32 %v1731, 1.442695
  %v1744 = vpow.pop %v1743
  %v1745 = vmul.f32 %v1732, 1.442695
  %v1746 = vpow.pop %v1745
  %v1747 = vmul.f32 %v1733, 1.442695
  %v1748 = vpow.pop %v1747
  %v1749 = vmul.f32 %v1734, 1.442695
  %v1750 = vpow.pop %v1749
  %v1751 = vadd.f32 %v1736, 1.0
  %v1752 = vadd.f32 %v1738, 1.0
  %v1753 = vadd.f32 %v1740, 1.0
  %v1754 = vadd.f32 %v1742, 1.0
  %v1755 = vadd.f32 %v1744, 1.0
  %v1756 = vadd.f32 %v1746, 1.0
  %v1757 = vadd.f32 %v1748, 1.0
  %v1758 = vadd.f32 %v1750, 1.0
  %v1759 = vrcp.pop %v1751
  %v1760 = vmul.f32 %v1751, %v1759
  %v1761 = vsub.f32 1.0, %v1760
  %v1762 = vmul.f32 %v1759, %v1761
  %v1763 = vadd.f32 %v1759, %v1762
  %vm1764 = vweird.f32 %v1751
  %vm1765 = vweird.f32 %v1759
  %vm1766 = vmor %vm1764, %vm1765
  %v1767 = vsel %vm1766, %v1759, %v1763
  %v1768 = vand.u32 2147483647, %v1751
  %vm1769 = vcmp.eq.f32.partialorder %v1768, 8.507059e+37
  %v1770 = vand.u32 %v1751, 2147483648
  %v1771 = vor.u32 1.1754944e-38, %v1770
  %v1772 = vsel %vm1769, %v1771, %v1767
  %v1773 = vmul.f32 1.0, %v1772
  %v1774 = vrcp.pop %v1752
  %v1775 = vmul.f32 %v1752, %v1774
  %v1776 = vsub.f32 1.0, %v1775
  %v1777 = vmul.f32 %v1774, %v1776
  %v1778 = vadd.f32 %v1774, %v1777
  %vm1779 = vweird.f32 %v1752
  %vm1780 = vweird.f32 %v1774
  %vm1781 = vmor %vm1779, %vm1780
  %v1782 = vsel %vm1781, %v1774, %v1778
  %v1783 = vand.u32 2147483647, %v1752
  %vm1784 = vcmp.eq.f32.partialorder %v1783, 8.507059e+37
  %v1785 = vand.u32 %v1752, 2147483648
  %v1786 = vor.u32 1.1754944e-38, %v1785
  %v1787 = vsel %vm1784, %v1786, %v1782
  %v1788 = vmul.f32 1.0, %v1787
  %v1789 = vrcp.pop %v1753
  %v1790 = vmul.f32 %v1753, %v1789
  %v1791 = vsub.f32 1.0, %v1790
  %v1792 = vmul.f32 %v1789, %v1791
  %v1793 = vadd.f32 %v1789, %v1792
  %vm1794 = vweird.f32 %v1753
  %vm1795 = vweird.f32 %v1789
  %vm1796 = vmor %vm1794, %vm1795
  %v1797 = vsel %vm1796, %v1789, %v1793
  %v1798 = vand.u32 2147483647, %v1753
  %vm1799 = vcmp.eq.f32.partialorder %v1798, 8.507059e+37
  %v1800 = vand.u32 %v1753, 2147483648
  %v1801 = vor.u32 1.1754944e-38, %v1800
  %v1802 = vsel %vm1799, %v1801, %v1797
  %v1803 = vmul.f32 1.0, %v1802
  %v1804 = vrcp.pop %v1754
  %v1805 = vmul.f32 %v1754, %v1804
  %v1806 = vsub.f32 1.0, %v1805
  %v1807 = vmul.f32 %v1804, %v1806
  %v1808 = vadd.f32 %v1804, %v1807
  %vm1809 = vweird.f32 %v1754
  %vm1810 = vweird.f32 %v1804
  %vm1811 = vmor %vm1809, %vm1810
  %v1812 = vsel %vm1811, %v1804, %v1808
  %v1813 = vand.u32 2147483647, %v1754
  %vm1814 = vcmp.eq.f32.partialorder %v1813, 8.507059e+37
  %v1815 = vand.u32 %v1754, 2147483648
  %v1816 = vor.u32 1.1754944e-38, %v1815
  %v1817 = vsel %vm1814, %v1816, %v1812
  %v1818 = vmul.f32 1.0, %v1817
  %v1819 = vrcp.pop %v1755
  %v1820 = vmul.f32 %v1755, %v1819
  %v1821 = vsub.f32 1.0, %v1820
  %v1822 = vmul.f32 %v1819, %v1821
  %v1823 = vadd.f32 %v1819, %v1822
  %vm1824 = vweird.f32 %v1755
  %vm1825 = vweird.f32 %v1819
  %vm1826 = vmor %vm1824, %vm1825
  %v1827 = vsel %vm1826, %v1819, %v1823
  %v1828 = vand.u32 2147483647, %v1755
  %vm1829 = vcmp.eq.f32.partialorder %v1828, 8.507059e+37
  %v1830 = vand.u32 %v1755, 2147483648
  %v1831 = vor.u32 1.1754944e-38, %v1830
  %v1832 = vsel %vm1829, %v1831, %v1827
  %v1833 = vmul.f32 1.0, %v1832
  %v1834 = vrcp.pop %v1756
  %v1835 = vmul.f32 %v1756, %v1834
  %v1836 = vsub.f32 1.0, %v1835
  %v1837 = vmul.f32 %v1834, %v1836
  %v1838 = vadd.f32 %v1834, %v1837
  %vm1839 = vweird.f32 %v1756
  %vm1840 = vweird.f32 %v1834
  %vm1841 = vmor %vm1839, %vm1840
  %v1842 = vsel %vm1841, %v1834, %v1838
  %v1843 = vand.u32 2147483647, %v1756
  %vm1844 = vcmp.eq.f32.partialorder %v1843, 8.507059e+37
  %v1845 = vand.u32 %v1756, 2147483648
  %v1846 = vor.u32 1.1754944e-38, %v1845
  %v1847 = vsel %vm1844, %v1846, %v1842
  %v1848 = vmul.f32 1.0, %v1847
  %v1849 = vrcp.pop %v1757
  %v1850 = vmul.f32 %v1757, %v1849
  %v1851 = vsub.f32 1.0, %v1850
  %v1852 = vmul.f32 %v1849, %v1851
  %v1853 = vadd.f32 %v1849, %v1852
  %vm1854 = vweird.f32 %v1757
  %vm1855 = vweird.f32 %v1849
  %vm1856 = vmor %vm1854, %vm1855
  %v1857 = vsel %vm1856, %v1849, %v1853
  %v1858 = vand.u32 2147483647, %v1757
  %vm1859 = vcmp.eq.f32.partialorder %v1858, 8.507059e+37
  %v1860 = vand.u32 %v1757, 2147483648
  %v1861 = vor.u32 1.1754944e-38, %v1860
  %v1862 = vsel %vm1859, %v1861, %v1857
  %v1863 = vmul.f32 1.0, %v1862
  %v1864 = vrcp.pop %v1758
  %v1865 = vmul.f32 %v1758, %v1864
  %v1866 = vsub.f32 1.0, %v1865
  %v1867 = vmul.f32 %v1864, %v1866
  %v1868 = vadd.f32 %v1864, %v1867
  %vm1869 = vweird.f32 %v1758
  %vm1870 = vweird.f32 %v1864
  %vm1871 = vmor %vm1869, %vm1870
  %v1872 = vsel %vm1871, %v1864, %v1868
  %v1873 = vand.u32 2147483647, %v1758
  %vm1874 = vcmp.eq.f32.partialorder %v1873, 8.507059e+37
  %v1875 = vand.u32 %v1758, 2147483648
  %v1876 = vor.u32 1.1754944e-38, %v1875
  %v1877 = vsel %vm1874, %v1876, %v1872
  %v1878 = vmul.f32 1.0, %v1877
  %v1880 = vrot.slane %v1301, 2
  %v1881 = vrot.slane %v1301, 3
  %v1882 = vrot.slane %v1301, 4
  %v1883 = vrot.slane %v1301, 5
  %v1884 = vrot.slane %v1301, 6
  %v1885 = vrot.slane %v1301, 7
  %v1886 = vrot.slane %v1301, 1
  %1887 = vrot.lane.b32.xlu0 %v1880, 32
  %v1888 = vpop.permute.xlu0 %1887
  %1889 = vrot.lane.b32.xlu0 %v1881, 32
  %v1890 = vpop.permute.xlu0 %1889
  %1891 = vrot.lane.b32.xlu0 %v1882, 32
  %v1892 = vpop.permute.xlu0 %1891
  %1893 = vrot.lane.b32.xlu0 %v1883, 32
  %v1894 = vpop.permute.xlu0 %1893
  %1895 = vrot.lane.b32.xlu0 %v1884, 32
  %v1896 = vpop.permute.xlu0 %1895
  %1897 = vrot.lane.b32.xlu0 %v1885, 32
  %v1898 = vpop.permute.xlu0 %1897
  %1899 = vrot.lane.b32.xlu0 %v1301, 32
  %v1900 = vpop.permute.xlu0 %1899
  %1901 = vrot.lane.b32.xlu0 %v1886, 32
  %v1902 = vpop.permute.xlu0 %1901
  %v1911 = vadd.f32 %v1247, %v1888
  %v1912 = vadd.f32 %v1248, %v1890
  %v1913 = vadd.f32 %v1249, %v1892
  %v1914 = vadd.f32 %v1250, %v1894
  %v1915 = vadd.f32 %v1251, %v1896
  %v1916 = vadd.f32 %v1252, %v1898
  %v1917 = vadd.f32 %v1253, %v1900
  %v1918 = vadd.f32 %v1254, %v1902
  %v1919 = vxor.u32 %v1911, 2147483648
  %v1920 = vxor.u32 %v1912, 2147483648
  %v1921 = vxor.u32 %v1913, 2147483648
  %v1922 = vxor.u32 %v1914, 2147483648
  %v1923 = vxor.u32 %v1915, 2147483648
  %v1924 = vxor.u32 %v1916, 2147483648
  %v1925 = vxor.u32 %v1917, 2147483648
  %v1926 = vxor.u32 %v1918, 2147483648
  %v1927 = vmul.f32 %v1919, 1.442695
  %v1928 = vpow.pop %v1927
  %v1929 = vmul.f32 %v1920, 1.442695
  %v1930 = vpow.pop %v1929
  %v1931 = vmul.f32 %v1921, 1.442695
  %v1932 = vpow.pop %v1931
  %v1933 = vmul.f32 %v1922, 1.442695
  %v1934 = vpow.pop %v1933
  %v1935 = vmul.f32 %v1923, 1.442695
  %v1936 = vpow.pop %v1935
  %v1937 = vmul.f32 %v1924, 1.442695
  %v1938 = vpow.pop %v1937
  %v1939 = vmul.f32 %v1925, 1.442695
  %v1940 = vpow.pop %v1939
  %v1941 = vmul.f32 %v1926, 1.442695
  %v1942 = vpow.pop %v1941
  %v1943 = vadd.f32 %v1928, 1.0
  %v1944 = vadd.f32 %v1930, 1.0
  %v1945 = vadd.f32 %v1932, 1.0
  %v1946 = vadd.f32 %v1934, 1.0
  %v1947 = vadd.f32 %v1936, 1.0
  %v1948 = vadd.f32 %v1938, 1.0
  %v1949 = vadd.f32 %v1940, 1.0
  %v1950 = vadd.f32 %v1942, 1.0
  %v1951 = vrcp.pop %v1943
  %v1952 = vmul.f32 %v1943, %v1951
  %v1953 = vsub.f32 1.0, %v1952
  %v1954 = vmul.f32 %v1951, %v1953
  %v1955 = vadd.f32 %v1951, %v1954
  %vm1956 = vweird.f32 %v1943
  %vm1957 = vweird.f32 %v1951
  %vm1958 = vmor %vm1956, %vm1957
  %v1959 = vsel %vm1958, %v1951, %v1955
  %v1960 = vand.u32 2147483647, %v1943
  %vm1961 = vcmp.eq.f32.partialorder %v1960, 8.507059e+37
  %v1962 = vand.u32 %v1943, 2147483648
  %v1963 = vor.u32 1.1754944e-38, %v1962
  %v1964 = vsel %vm1961, %v1963, %v1959
  %v1965 = vmul.f32 1.0, %v1964
  %v1966 = vrcp.pop %v1944
  %v1967 = vmul.f32 %v1944, %v1966
  %v1968 = vsub.f32 1.0, %v1967
  %v1969 = vmul.f32 %v1966, %v1968
  %v1970 = vadd.f32 %v1966, %v1969
  %vm1971 = vweird.f32 %v1944
  %vm1972 = vweird.f32 %v1966
  %vm1973 = vmor %vm1971, %vm1972
  %v1974 = vsel %vm1973, %v1966, %v1970
  %v1975 = vand.u32 2147483647, %v1944
  %vm1976 = vcmp.eq.f32.partialorder %v1975, 8.507059e+37
  %v1977 = vand.u32 %v1944, 2147483648
  %v1978 = vor.u32 1.1754944e-38, %v1977
  %v1979 = vsel %vm1976, %v1978, %v1974
  %v1980 = vmul.f32 1.0, %v1979
  %v1981 = vrcp.pop %v1945
  %v1982 = vmul.f32 %v1945, %v1981
  %v1983 = vsub.f32 1.0, %v1982
  %v1984 = vmul.f32 %v1981, %v1983
  %v1985 = vadd.f32 %v1981, %v1984
  %vm1986 = vweird.f32 %v1945
  %vm1987 = vweird.f32 %v1981
  %vm1988 = vmor %vm1986, %vm1987
  %v1989 = vsel %vm1988, %v1981, %v1985
  %v1990 = vand.u32 2147483647, %v1945
  %vm1991 = vcmp.eq.f32.partialorder %v1990, 8.507059e+37
  %v1992 = vand.u32 %v1945, 2147483648
  %v1993 = vor.u32 1.1754944e-38, %v1992
  %v1994 = vsel %vm1991, %v1993, %v1989
  %v1995 = vmul.f32 1.0, %v1994
  %v1996 = vrcp.pop %v1946
  %v1997 = vmul.f32 %v1946, %v1996
  %v1998 = vsub.f32 1.0, %v1997
  %v1999 = vmul.f32 %v1996, %v1998
  %v2000 = vadd.f32 %v1996, %v1999
  %vm2001 = vweird.f32 %v1946
  %vm2002 = vweird.f32 %v1996
  %vm2003 = vmor %vm2001, %vm2002
  %v2004 = vsel %vm2003, %v1996, %v2000
  %v2005 = vand.u32 2147483647, %v1946
  %vm2006 = vcmp.eq.f32.partialorder %v2005, 8.507059e+37
  %v2007 = vand.u32 %v1946, 2147483648
  %v2008 = vor.u32 1.1754944e-38, %v2007
  %v2009 = vsel %vm2006, %v2008, %v2004
  %v2010 = vmul.f32 1.0, %v2009
  %v2011 = vrcp.pop %v1947
  %v2012 = vmul.f32 %v1947, %v2011
  %v2013 = vsub.f32 1.0, %v2012
  %v2014 = vmul.f32 %v2011, %v2013
  %v2015 = vadd.f32 %v2011, %v2014
  %vm2016 = vweird.f32 %v1947
  %vm2017 = vweird.f32 %v2011
  %vm2018 = vmor %vm2016, %vm2017
  %v2019 = vsel %vm2018, %v2011, %v2015
  %v2020 = vand.u32 2147483647, %v1947
  %vm2021 = vcmp.eq.f32.partialorder %v2020, 8.507059e+37
  %v2022 = vand.u32 %v1947, 2147483648
  %v2023 = vor.u32 1.1754944e-38, %v2022
  %v2024 = vsel %vm2021, %v2023, %v2019
  %v2025 = vmul.f32 1.0, %v2024
  %v2026 = vrcp.pop %v1948
  %v2027 = vmul.f32 %v1948, %v2026
  %v2028 = vsub.f32 1.0, %v2027
  %v2029 = vmul.f32 %v2026, %v2028
  %v2030 = vadd.f32 %v2026, %v2029
  %vm2031 = vweird.f32 %v1948
  %vm2032 = vweird.f32 %v2026
  %vm2033 = vmor %vm2031, %vm2032
  %v2034 = vsel %vm2033, %v2026, %v2030
  %v2035 = vand.u32 2147483647, %v1948
  %vm2036 = vcmp.eq.f32.partialorder %v2035, 8.507059e+37
  %v2037 = vand.u32 %v1948, 2147483648
  %v2038 = vor.u32 1.1754944e-38, %v2037
  %v2039 = vsel %vm2036, %v2038, %v2034
  %v2040 = vmul.f32 1.0, %v2039
  %v2041 = vrcp.pop %v1949
  %v2042 = vmul.f32 %v1949, %v2041
  %v2043 = vsub.f32 1.0, %v2042
  %v2044 = vmul.f32 %v2041, %v2043
  %v2045 = vadd.f32 %v2041, %v2044
  %vm2046 = vweird.f32 %v1949
  %vm2047 = vweird.f32 %v2041
  %vm2048 = vmor %vm2046, %vm2047
  %v2049 = vsel %vm2048, %v2041, %v2045
  %v2050 = vand.u32 2147483647, %v1949
  %vm2051 = vcmp.eq.f32.partialorder %v2050, 8.507059e+37
  %v2052 = vand.u32 %v1949, 2147483648
  %v2053 = vor.u32 1.1754944e-38, %v2052
  %v2054 = vsel %vm2051, %v2053, %v2049
  %v2055 = vmul.f32 1.0, %v2054
  %v2056 = vrcp.pop %v1950
  %v2057 = vmul.f32 %v1950, %v2056
  %v2058 = vsub.f32 1.0, %v2057
  %v2059 = vmul.f32 %v2056, %v2058
  %v2060 = vadd.f32 %v2056, %v2059
  %vm2061 = vweird.f32 %v1950
  %vm2062 = vweird.f32 %v2056
  %vm2063 = vmor %vm2061, %vm2062
  %v2064 = vsel %vm2063, %v2056, %v2060
  %v2065 = vand.u32 2147483647, %v1950
  %vm2066 = vcmp.eq.f32.partialorder %v2065, 8.507059e+37
  %v2067 = vand.u32 %v1950, 2147483648
  %v2068 = vor.u32 1.1754944e-38, %v2067
  %v2069 = vsel %vm2066, %v2068, %v2064
  %v2070 = vmul.f32 1.0, %v2069
  %v2071 = vadd.f32 %v1301, %v961
  %v2073 = vrot.slane %v2071, 2
  %v2074 = vrot.slane %v2071, 3
  %v2075 = vrot.slane %v2071, 4
  %v2076 = vrot.slane %v2071, 5
  %v2077 = vrot.slane %v2071, 6
  %v2078 = vrot.slane %v2071, 7
  %v2079 = vrot.slane %v2071, 1
  %2080 = vrot.lane.b32.xlu0 %v2073, 96
  %v2081 = vpop.permute.xlu0 %2080
  %2082 = vrot.lane.b32.xlu0 %v2074, 96
  %v2083 = vpop.permute.xlu0 %2082
  %2084 = vrot.lane.b32.xlu0 %v2075, 96
  %v2085 = vpop.permute.xlu0 %2084
  %2086 = vrot.lane.b32.xlu0 %v2076, 96
  %v2087 = vpop.permute.xlu0 %2086
  %2088 = vrot.lane.b32.xlu0 %v2077, 96
  %v2089 = vpop.permute.xlu0 %2088
  %2090 = vrot.lane.b32.xlu0 %v2078, 96
  %v2091 = vpop.permute.xlu0 %2090
  %2092 = vrot.lane.b32.xlu0 %v2071, 96
  %v2093 = vpop.permute.xlu0 %2092
  %2094 = vrot.lane.b32.xlu0 %v2079, 96
  %v2095 = vpop.permute.xlu0 %2094
  %v2104 = vmul.f32 %v1773, %v2081
  %v2105 = vmul.f32 %v1788, %v2083
  %v2106 = vmul.f32 %v1803, %v2085
  %v2107 = vmul.f32 %v1818, %v2087
  %v2108 = vmul.f32 %v1833, %v2089
  %v2109 = vmul.f32 %v1848, %v2091
  %v2110 = vmul.f32 %v1863, %v2093
  %v2111 = vmul.f32 %v1878, %v2095
  %2120 = vrot.lane.b32.xlu0 %v2104, 64
  %v2121 = vpop.permute.xlu0 %2120
  %2122 = vrot.lane.b32.xlu0 %v2105, 64
  %v2123 = vpop.permute.xlu0 %2122
  %2124 = vrot.lane.b32.xlu0 %v2106, 64
  %v2125 = vpop.permute.xlu0 %2124
  %2126 = vrot.lane.b32.xlu0 %v2107, 64
  %v2127 = vpop.permute.xlu0 %2126
  %2128 = vrot.lane.b32.xlu0 %v2108, 64
  %v2129 = vpop.permute.xlu0 %2128
  %2130 = vrot.lane.b32.xlu0 %v2109, 64
  %v2131 = vpop.permute.xlu0 %2130
  %2132 = vrot.lane.b32.xlu0 %v2110, 64
  %v2133 = vpop.permute.xlu0 %2132
  %2134 = vrot.lane.b32.xlu0 %v2111, 64
  %v2135 = vpop.permute.xlu0 %2134
  %v2144 = vadd.f32 %v1247, %v2121
  %v2145 = vadd.f32 %v1248, %v2123
  %v2146 = vadd.f32 %v1249, %v2125
  %v2147 = vadd.f32 %v1250, %v2127
  %v2148 = vadd.f32 %v1251, %v2129
  %v2149 = vadd.f32 %v1252, %v2131
  %v2150 = vadd.f32 %v1253, %v2133
  %v2151 = vadd.f32 %v1254, %v2135
  %v2152 = vtanh.pop %v2144
  %v2153 = vtanh.pop %v2145
  %v2154 = vtanh.pop %v2146
  %v2155 = vtanh.pop %v2147
  %v2156 = vtanh.pop %v2148
  %v2157 = vtanh.pop %v2149
  %v2158 = vtanh.pop %v2150
  %v2159 = vtanh.pop %v2151
  %v2160 = vsub.f32 1.0, %v1965
  %v2161 = vsub.f32 1.0, %v1980
  %v2162 = vsub.f32 1.0, %v1995
  %v2163 = vsub.f32 1.0, %v2010
  %v2164 = vsub.f32 1.0, %v2025
  %v2165 = vsub.f32 1.0, %v2040
  %v2166 = vsub.f32 1.0, %v2055
  %v2167 = vsub.f32 1.0, %v2070
  %2176 = vrot.lane.b32.xlu0 %v2152, 96
  %v2177 = vpop.permute.xlu0 %2176
  %2178 = vrot.lane.b32.xlu0 %v2153, 96
  %v2179 = vpop.permute.xlu0 %2178
  %2180 = vrot.lane.b32.xlu0 %v2154, 96
  %v2181 = vpop.permute.xlu0 %2180
  %2182 = vrot.lane.b32.xlu0 %v2155, 96
  %v2183 = vpop.permute.xlu0 %2182
  %2184 = vrot.lane.b32.xlu0 %v2156, 96
  %v2185 = vpop.permute.xlu0 %2184
  %2186 = vrot.lane.b32.xlu0 %v2157, 96
  %v2187 = vpop.permute.xlu0 %2186
  %2188 = vrot.lane.b32.xlu0 %v2158, 96
  %v2189 = vpop.permute.xlu0 %2188
  %2190 = vrot.lane.b32.xlu0 %v2159, 96
  %v2191 = vpop.permute.xlu0 %2190
  %v2200 = vmul.f32 %v2160, %v2177
  %v2201 = vmul.f32 %v2161, %v2179
  %v2202 = vmul.f32 %v2162, %v2181
  %v2203 = vmul.f32 %v2163, %v2183
  %v2204 = vmul.f32 %v2164, %v2185
  %v2205 = vmul.f32 %v2165, %v2187
  %v2206 = vmul.f32 %v2166, %v2189
  %v2207 = vmul.f32 %v2167, %v2191
  %v2208 = vrot.slane %v1174, 2
  %v2209 = vrot.slane %v1174, 3
  %v2210 = vrot.slane %v1174, 4
  %v2211 = vrot.slane %v1174, 5
  %v2212 = vrot.slane %v1174, 6
  %v2213 = vrot.slane %v1174, 7
  %v2214 = vrot.slane %v1174, 1
  %2215 = vrot.lane.b32.xlu0 %v2208, 32
  %v2216 = vpop.permute.xlu0 %2215
  %2217 = vrot.lane.b32.xlu0 %v2209, 32
  %v2218 = vpop.permute.xlu0 %2217
  %2219 = vrot.lane.b32.xlu0 %v2210, 32
  %v2220 = vpop.permute.xlu0 %2219
  %2221 = vrot.lane.b32.xlu0 %v2211, 32
  %v2222 = vpop.permute.xlu0 %2221
  %2223 = vrot.lane.b32.xlu0 %v2212, 32
  %v2224 = vpop.permute.xlu0 %2223
  %2225 = vrot.lane.b32.xlu0 %v2213, 32
  %v2226 = vpop.permute.xlu0 %2225
  %2227 = vrot.lane.b32.xlu0 %v2214, 32
  %v2228 = vpop.permute.xlu0 %2227
  %v2236 = vmul.f32 %v1965, %v2216
  %v2237 = vmul.f32 %v1980, %v2218
  %v2238 = vmul.f32 %v1995, %v2220
  %v2239 = vmul.f32 %v2010, %v2222
  %v2240 = vmul.f32 %v2025, %v2224
  %v2241 = vmul.f32 %v2040, %v2226
  %v2242 = vmul.f32 %v2055, %v1257
  %v2243 = vmul.f32 %v2070, %v2228
  %v2244 = vadd.f32 %v2200, %v2236
  %v2245 = vadd.f32 %v2201, %v2237
  %v2246 = vadd.f32 %v2202, %v2238
  %v2247 = vadd.f32 %v2203, %v2239
  %v2248 = vadd.f32 %v2204, %v2240
  %v2249 = vadd.f32 %v2205, %v2241
  %v2250 = vadd.f32 %v2206, %v2242
  %v2251 = vadd.f32 %v2207, %v2243
  %2252 = vset.pattern.permute.xlu0 6
  %2253 = vperm.xlu0 %2252, %v1144
  %v2254 = vpop.permute.xlu0 %2253
  %vm2255 = vcmp.eq.s32.totalorder %v2254, 1
  %v2264 = vrot.slane %v2244, 6
  %v2265 = vrot.slane %v2245, 5
  %v2266 = vsel %vm559, %v2265, %v2264
  %v2267 = vrot.slane %v2246, 4
  %v2268 = vsel %vm562, %v2267, %v2266
  %v2269 = vrot.slane %v2247, 3
  %v2270 = vsel %vm565, %v2269, %v2268
  %v2271 = vrot.slane %v2248, 2
  %v2272 = vsel %vm568, %v2271, %v2270
  %v2273 = vrot.slane %v2249, 1
  %v2274 = vsel %vm571, %v2273, %v2272
  %v2275 = vsel %vm574, %v2250, %v2274
  %v2276 = vrot.slane %v2251, 7
  %v2277 = vsel %vm577, %v2276, %v2275
  %2278 = vrot.lane.b32.xlu0 %v2277, 96
  %v2279 = vpop.permute.xlu0 %2278
  %v2281 = vsel %vm2255, %v2279, %v1174
  %v2282 = vsel %vm2255, %v2279, 0.0
  %v2284 = vrot.slane %v1694, 1
  %v2285 = vrot.slane %v1694, 2
  %v2286 = vrot.slane %v1694, 3
  %v2287 = vrot.slane %v1694, 4
  %v2288 = vrot.slane %v1694, 5
  %v2289 = vrot.slane %v1694, 6
  %v2290 = vrot.slane %v1694, 7
  %2298 = vst.msk [vmem:[%s6 + $0x1] sm:$0x1] %vm1191, %v1694
  %2299 = vst.msk [vmem:[%s6 + $0x9] sm:$0x1] %vm1191, %v2284
  %2300 = vst.msk [vmem:[%s6 + $0x11] sm:$0x1] %vm1191, %v2285
  %2301 = vst.msk [vmem:[%s6 + $0x19] sm:$0x1] %vm1191, %v2286
  %2302 = vst.msk [vmem:[%s6 + $0x21] sm:$0x1] %vm1191, %v2287
  %2303 = vst.msk [vmem:[%s6 + $0x29] sm:$0x1] %vm1191, %v2288
  %2304 = vst.msk [vmem:[%s6 + $0x31] sm:$0x1] %vm1191, %v2289
  %2305 = vst.msk [vmem:[%s6 + $0x39] sm:$0x1] %vm1191, %v2290
  %v2307 = vrot.slane %v2282, 1
  %v2308 = vrot.slane %v2282, 2
  %v2309 = vrot.slane %v2282, 3
  %v2310 = vrot.slane %v2282, 4
  %v2311 = vrot.slane %v2282, 5
  %v2312 = vrot.slane %v2282, 6
  %v2313 = vrot.slane %v2282, 7
  %2321 = vst.msk [vmem:[%s51 + $0x6] sm:$0x1] %vm1191, %v2282
  %2322 = vst.msk [vmem:[%s51 + $0xe] sm:$0x1] %vm1191, %v2307
  %2323 = vst.msk [vmem:[%s51 + $0x16] sm:$0x1] %vm1191, %v2308
  %2324 = vst.msk [vmem:[%s51 + $0x1e] sm:$0x1] %vm1191, %v2309
  %2325 = vst.msk [vmem:[%s51 + $0x26] sm:$0x1] %vm1191, %v2310
  %2326 = vst.msk [vmem:[%s51 + $0x2e] sm:$0x1] %vm1191, %v2311
  %2327 = vst.msk [vmem:[%s51 + $0x36] sm:$0x1] %vm1191, %v2312
  %2328 = vst.msk [vmem:[%s51 + $0x3e] sm:$0x1] %vm1191, %v2313
  %v2329 = vld [vmem:[%s0] sm:$0x2]
  %v2330 = vld [vmem:[%s0 + $0x4] sm:$0x2]
  %v2331 = vld [vmem:[%s0 + $0x8] sm:$0x2]
  %v2332 = vld [vmem:[%s0 + $0xc] sm:$0x2]
  %v2333 = vld [vmem:[%s0 + $0x10] sm:$0x2]
  %v2334 = vld [vmem:[%s0 + $0x14] sm:$0x2]
  %v2335 = vld [vmem:[%s0 + $0x18] sm:$0x2]
  %v2336 = vld [vmem:[%s0 + $0x1c] sm:$0x2]
  %v2337 = vunpack.c.l.bf16 %v2329
  %v2338 = vunpack.c.l.bf16 %v2330
  %v2339 = vunpack.c.l.bf16 %v2331
  %v2340 = vunpack.c.l.bf16 %v2332
  %v2341 = vunpack.c.l.bf16 %v2333
  %v2342 = vunpack.c.l.bf16 %v2334
  %v2343 = vunpack.c.l.bf16 %v2335
  %v2344 = vunpack.c.l.bf16 %v2336
  %v2345 = vld [vmem:[%s45] sm:$0x4]
  %v2346 = vld [vmem:[%s45 + $0x4] sm:$0x4]
  %v2347 = vld [vmem:[%s45 + $0x8] sm:$0x4]
  %v2348 = vld [vmem:[%s45 + $0xc] sm:$0x4]
  %v2349 = vld [vmem:[%s45 + $0x10] sm:$0x4]
  %v2350 = vld [vmem:[%s45 + $0x14] sm:$0x4]
  %v2351 = vld [vmem:[%s45 + $0x18] sm:$0x4]
  %v2352 = vld [vmem:[%s45 + $0x1c] sm:$0x4]
  %v2353 = vunpack.c.l.bf16 %v2345
  %v2354 = vunpack.c.l.bf16 %v2346
  %v2355 = vunpack.c.l.bf16 %v2347
  %v2356 = vunpack.c.l.bf16 %v2348
  %v2357 = vunpack.c.l.bf16 %v2349
  %v2358 = vunpack.c.l.bf16 %v2350
  %v2359 = vunpack.c.l.bf16 %v2351
  %v2360 = vunpack.c.l.bf16 %v2352
  %2362 = vrot.lane.b32.xlu0 %v2281, 32
  %v2363 = vpop.permute.xlu0 %2362
  %v2365 = vsel %vm135, %v1693, %v2363
  %v2367 = vsel %vm137, %v2365, 0
  %2369 = vmatpush.msra.mxu0 0.0
  %2370 = vmatpush.msra.mxu0 0.0
  %2371 = vmatpush.msra.mxu0 0.0
  %2372 = vmatpush.msra.mxu0 0.0
  %2373 = vmatpush.msra.mxu0 0.0
  %2374 = vmatpush.msra.mxu0 0.0
  %2375 = vmatpush.msra.mxu0 0.0
  %2376 = vmatpush.msra.mxu0 0.0
  %2377 = vmatpush.msra.mxu0 %v75
  %2378 = vmatpush.msra.mxu0 %v73
  %2379 = vmatpush.msra.mxu0 %v71
  %2380 = vmatpush.msra.mxu0 %v69
  %2381 = vmatpush.msra.mxu0 %v67
  %2382 = vmatpush.msra.mxu0 %v65
  %2383 = vmatpush.msra.mxu0 %v63
  %2384 = vmatpush.msra.mxu0 %v61
  %2385 = vmatmul.f32.gmra.mxu0 %v2367
  %v2386 = vpop.f32.mrf.mxu0
  %v2387 = vadd.f32 0.0, %v2386
  %2388 = vdwg.mxu0
  %2389 = vmatpush.msra.mxu0 0.0
  %2390 = vmatpush.msra.mxu0 0.0
  %2391 = vmatpush.msra.mxu0 0.0
  %2392 = vmatpush.msra.mxu0 0.0
  %2393 = vmatpush.msra.mxu0 0.0
  %2394 = vmatpush.msra.mxu0 0.0
  %2395 = vmatpush.msra.mxu0 0.0
  %2396 = vmatpush.msra.mxu0 0.0
  %2397 = vmatpush.msra.mxu0 %v76
  %2398 = vmatpush.msra.mxu0 %v74
  %2399 = vmatpush.msra.mxu0 %v72
  %2400 = vmatpush.msra.mxu0 %v70
  %2401 = vmatpush.msra.mxu0 %v68
  %2402 = vmatpush.msra.mxu0 %v66
  %2403 = vmatpush.msra.mxu0 %v64
  %2404 = vmatpush.msra.mxu0 %v62
  %2405 = vmatmul.f32.gmra.mxu0 %v2367
  %v2406 = vpop.f32.mrf.mxu0
  %v2407 = vadd.f32 0.0, %v2406
  %2408 = vdwg.mxu0
  %v2410 = vrot.slane %v2387, 6
  %v2411 = vrot.slane %v2387, 7
  %v2412 = vrot.slane %v2387, 1
  %v2413 = vrot.slane %v2387, 2
  %v2414 = vrot.slane %v2387, 3
  %v2415 = vrot.slane %v2387, 4
  %v2416 = vrot.slane %v2387, 5
  %v2425 = vadd.f32 %v2337, %v2410
  %v2426 = vadd.f32 %v2338, %v2411
  %v2427 = vadd.f32 %v2339, %v2387
  %v2428 = vadd.f32 %v2340, %v2412
  %v2429 = vadd.f32 %v2341, %v2413
  %v2430 = vadd.f32 %v2342, %v2414
  %v2431 = vadd.f32 %v2343, %v2415
  %v2432 = vadd.f32 %v2344, %v2416
  %v2433 = vxor.u32 %v2425, 2147483648
  %v2434 = vxor.u32 %v2426, 2147483648
  %v2435 = vxor.u32 %v2427, 2147483648
  %v2436 = vxor.u32 %v2428, 2147483648
  %v2437 = vxor.u32 %v2429, 2147483648
  %v2438 = vxor.u32 %v2430, 2147483648
  %v2439 = vxor.u32 %v2431, 2147483648
  %v2440 = vxor.u32 %v2432, 2147483648
  %v2441 = vmul.f32 %v2433, 1.442695
  %v2442 = vpow.pop %v2441
  %v2443 = vmul.f32 %v2434, 1.442695
  %v2444 = vpow.pop %v2443
  %v2445 = vmul.f32 %v2435, 1.442695
  %v2446 = vpow.pop %v2445
  %v2447 = vmul.f32 %v2436, 1.442695
  %v2448 = vpow.pop %v2447
  %v2449 = vmul.f32 %v2437, 1.442695
  %v2450 = vpow.pop %v2449
  %v2451 = vmul.f32 %v2438, 1.442695
  %v2452 = vpow.pop %v2451
  %v2453 = vmul.f32 %v2439, 1.442695
  %v2454 = vpow.pop %v2453
  %v2455 = vmul.f32 %v2440, 1.442695
  %v2456 = vpow.pop %v2455
  %v2457 = vadd.f32 %v2442, 1.0
  %v2458 = vadd.f32 %v2444, 1.0
  %v2459 = vadd.f32 %v2446, 1.0
  %v2460 = vadd.f32 %v2448, 1.0
  %v2461 = vadd.f32 %v2450, 1.0
  %v2462 = vadd.f32 %v2452, 1.0
  %v2463 = vadd.f32 %v2454, 1.0
  %v2464 = vadd.f32 %v2456, 1.0
  %v2465 = vrcp.pop %v2457
  %v2466 = vmul.f32 %v2457, %v2465
  %v2467 = vsub.f32 1.0, %v2466
  %v2468 = vmul.f32 %v2465, %v2467
  %v2469 = vadd.f32 %v2465, %v2468
  %vm2470 = vweird.f32 %v2457
  %vm2471 = vweird.f32 %v2465
  %vm2472 = vmor %vm2470, %vm2471
  %v2473 = vsel %vm2472, %v2465, %v2469
  %v2474 = vand.u32 2147483647, %v2457
  %vm2475 = vcmp.eq.f32.partialorder %v2474, 8.507059e+37
  %v2476 = vand.u32 %v2457, 2147483648
  %v2477 = vor.u32 1.1754944e-38, %v2476
  %v2478 = vsel %vm2475, %v2477, %v2473
  %v2479 = vmul.f32 1.0, %v2478
  %v2480 = vrcp.pop %v2458
  %v2481 = vmul.f32 %v2458, %v2480
  %v2482 = vsub.f32 1.0, %v2481
  %v2483 = vmul.f32 %v2480, %v2482
  %v2484 = vadd.f32 %v2480, %v2483
  %vm2485 = vweird.f32 %v2458
  %vm2486 = vweird.f32 %v2480
  %vm2487 = vmor %vm2485, %vm2486
  %v2488 = vsel %vm2487, %v2480, %v2484
  %v2489 = vand.u32 2147483647, %v2458
  %vm2490 = vcmp.eq.f32.partialorder %v2489, 8.507059e+37
  %v2491 = vand.u32 %v2458, 2147483648
  %v2492 = vor.u32 1.1754944e-38, %v2491
  %v2493 = vsel %vm2490, %v2492, %v2488
  %v2494 = vmul.f32 1.0, %v2493
  %v2495 = vrcp.pop %v2459
  %v2496 = vmul.f32 %v2459, %v2495
  %v2497 = vsub.f32 1.0, %v2496
  %v2498 = vmul.f32 %v2495, %v2497
  %v2499 = vadd.f32 %v2495, %v2498
  %vm2500 = vweird.f32 %v2459
  %vm2501 = vweird.f32 %v2495
  %vm2502 = vmor %vm2500, %vm2501
  %v2503 = vsel %vm2502, %v2495, %v2499
  %v2504 = vand.u32 2147483647, %v2459
  %vm2505 = vcmp.eq.f32.partialorder %v2504, 8.507059e+37
  %v2506 = vand.u32 %v2459, 2147483648
  %v2507 = vor.u32 1.1754944e-38, %v2506
  %v2508 = vsel %vm2505, %v2507, %v2503
  %v2509 = vmul.f32 1.0, %v2508
  %v2510 = vrcp.pop %v2460
  %v2511 = vmul.f32 %v2460, %v2510
  %v2512 = vsub.f32 1.0, %v2511
  %v2513 = vmul.f32 %v2510, %v2512
  %v2514 = vadd.f32 %v2510, %v2513
  %vm2515 = vweird.f32 %v2460
  %vm2516 = vweird.f32 %v2510
  %vm2517 = vmor %vm2515, %vm2516
  %v2518 = vsel %vm2517, %v2510, %v2514
  %v2519 = vand.u32 2147483647, %v2460
  %vm2520 = vcmp.eq.f32.partialorder %v2519, 8.507059e+37
  %v2521 = vand.u32 %v2460, 2147483648
  %v2522 = vor.u32 1.1754944e-38, %v2521
  %v2523 = vsel %vm2520, %v2522, %v2518
  %v2524 = vmul.f32 1.0, %v2523
  %v2525 = vrcp.pop %v2461
  %v2526 = vmul.f32 %v2461, %v2525
  %v2527 = vsub.f32 1.0, %v2526
  %v2528 = vmul.f32 %v2525, %v2527
  %v2529 = vadd.f32 %v2525, %v2528
  %vm2530 = vweird.f32 %v2461
  %vm2531 = vweird.f32 %v2525
  %vm2532 = vmor %vm2530, %vm2531
  %v2533 = vsel %vm2532, %v2525, %v2529
  %v2534 = vand.u32 2147483647, %v2461
  %vm2535 = vcmp.eq.f32.partialorder %v2534, 8.507059e+37
  %v2536 = vand.u32 %v2461, 2147483648
  %v2537 = vor.u32 1.1754944e-38, %v2536
  %v2538 = vsel %vm2535, %v2537, %v2533
  %v2539 = vmul.f32 1.0, %v2538
  %v2540 = vrcp.pop %v2462
  %v2541 = vmul.f32 %v2462, %v2540
  %v2542 = vsub.f32 1.0, %v2541
  %v2543 = vmul.f32 %v2540, %v2542
  %v2544 = vadd.f32 %v2540, %v2543
  %vm2545 = vweird.f32 %v2462
  %vm2546 = vweird.f32 %v2540
  %vm2547 = vmor %vm2545, %vm2546
  %v2548 = vsel %vm2547, %v2540, %v2544
  %v2549 = vand.u32 2147483647, %v2462
  %vm2550 = vcmp.eq.f32.partialorder %v2549, 8.507059e+37
  %v2551 = vand.u32 %v2462, 2147483648
  %v2552 = vor.u32 1.1754944e-38, %v2551
  %v2553 = vsel %vm2550, %v2552, %v2548
  %v2554 = vmul.f32 1.0, %v2553
  %v2555 = vrcp.pop %v2463
  %v2556 = vmul.f32 %v2463, %v2555
  %v2557 = vsub.f32 1.0, %v2556
  %v2558 = vmul.f32 %v2555, %v2557
  %v2559 = vadd.f32 %v2555, %v2558
  %vm2560 = vweird.f32 %v2463
  %vm2561 = vweird.f32 %v2555
  %vm2562 = vmor %vm2560, %vm2561
  %v2563 = vsel %vm2562, %v2555, %v2559
  %v2564 = vand.u32 2147483647, %v2463
  %vm2565 = vcmp.eq.f32.partialorder %v2564, 8.507059e+37
  %v2566 = vand.u32 %v2463, 2147483648
  %v2567 = vor.u32 1.1754944e-38, %v2566
  %v2568 = vsel %vm2565, %v2567, %v2563
  %v2569 = vmul.f32 1.0, %v2568
  %v2570 = vrcp.pop %v2464
  %v2571 = vmul.f32 %v2464, %v2570
  %v2572 = vsub.f32 1.0, %v2571
  %v2573 = vmul.f32 %v2570, %v2572
  %v2574 = vadd.f32 %v2570, %v2573
  %vm2575 = vweird.f32 %v2464
  %vm2576 = vweird.f32 %v2570
  %vm2577 = vmor %vm2575, %vm2576
  %v2578 = vsel %vm2577, %v2570, %v2574
  %v2579 = vand.u32 2147483647, %v2464
  %vm2580 = vcmp.eq.f32.partialorder %v2579, 8.507059e+37
  %v2581 = vand.u32 %v2464, 2147483648
  %v2582 = vor.u32 1.1754944e-38, %v2581
  %v2583 = vsel %vm2580, %v2582, %v2578
  %v2584 = vmul.f32 1.0, %v2583
  %v2585 = vadd.f32 %v2387, %v358
  %v2587 = vrot.slane %v2585, 6
  %v2588 = vrot.slane %v2585, 7
  %v2589 = vrot.slane %v2585, 1
  %v2590 = vrot.slane %v2585, 2
  %v2591 = vrot.slane %v2585, 3
  %v2592 = vrot.slane %v2585, 4
  %v2593 = vrot.slane %v2585, 5
  %2594 = vrot.lane.b32.xlu0 %v2587, 64
  %v2595 = vpop.permute.xlu0 %2594
  %2596 = vrot.lane.b32.xlu0 %v2588, 64
  %v2597 = vpop.permute.xlu0 %2596
  %2598 = vrot.lane.b32.xlu0 %v2585, 64
  %v2599 = vpop.permute.xlu0 %2598
  %2600 = vrot.lane.b32.xlu0 %v2589, 64
  %v2601 = vpop.permute.xlu0 %2600
  %2602 = vrot.lane.b32.xlu0 %v2590, 64
  %v2603 = vpop.permute.xlu0 %2602
  %2604 = vrot.lane.b32.xlu0 %v2591, 64
  %v2605 = vpop.permute.xlu0 %2604
  %2606 = vrot.lane.b32.xlu0 %v2592, 64
  %v2607 = vpop.permute.xlu0 %2606
  %2608 = vrot.lane.b32.xlu0 %v2593, 64
  %v2609 = vpop.permute.xlu0 %2608
  %v2618 = vmul.f32 %v2479, %v2595
  %v2619 = vmul.f32 %v2494, %v2597
  %v2620 = vmul.f32 %v2509, %v2599
  %v2621 = vmul.f32 %v2524, %v2601
  %v2622 = vmul.f32 %v2539, %v2603
  %v2623 = vmul.f32 %v2554, %v2605
  %v2624 = vmul.f32 %v2569, %v2607
  %v2625 = vmul.f32 %v2584, %v2609
  %2634 = vrot.lane.b32.xlu0 %v2618, 64
  %v2635 = vpop.permute.xlu0 %2634
  %2636 = vrot.lane.b32.xlu0 %v2619, 64
  %v2637 = vpop.permute.xlu0 %2636
  %2638 = vrot.lane.b32.xlu0 %v2620, 64
  %v2639 = vpop.permute.xlu0 %2638
  %2640 = vrot.lane.b32.xlu0 %v2621, 64
  %v2641 = vpop.permute.xlu0 %2640
  %2642 = vrot.lane.b32.xlu0 %v2622, 64
  %v2643 = vpop.permute.xlu0 %2642
  %2644 = vrot.lane.b32.xlu0 %v2623, 64
  %v2645 = vpop.permute.xlu0 %2644
  %2646 = vrot.lane.b32.xlu0 %v2624, 64
  %v2647 = vpop.permute.xlu0 %2646
  %2648 = vrot.lane.b32.xlu0 %v2625, 64
  %v2649 = vpop.permute.xlu0 %2648
  %v2658 = vadd.f32 %v2337, %v2635
  %v2659 = vadd.f32 %v2338, %v2637
  %v2660 = vadd.f32 %v2339, %v2639
  %v2661 = vadd.f32 %v2340, %v2641
  %v2662 = vadd.f32 %v2341, %v2643
  %v2663 = vadd.f32 %v2342, %v2645
  %v2664 = vadd.f32 %v2343, %v2647
  %v2665 = vadd.f32 %v2344, %v2649
  %v2666 = vtanh.pop %v2658
  %v2667 = vtanh.pop %v2659
  %v2668 = vtanh.pop %v2660
  %v2669 = vtanh.pop %v2661
  %v2670 = vtanh.pop %v2662
  %v2671 = vtanh.pop %v2663
  %v2672 = vtanh.pop %v2664
  %v2673 = vtanh.pop %v2665
  %v2674 = vsub.f32 1.0, %v2479
  %v2675 = vsub.f32 1.0, %v2494
  %v2676 = vsub.f32 1.0, %v2509
  %v2677 = vsub.f32 1.0, %v2524
  %v2678 = vsub.f32 1.0, %v2539
  %v2679 = vsub.f32 1.0, %v2554
  %v2680 = vsub.f32 1.0, %v2569
  %v2681 = vsub.f32 1.0, %v2584
  %2690 = vrot.lane.b32.xlu0 %v2666, 96
  %v2691 = vpop.permute.xlu0 %2690
  %2692 = vrot.lane.b32.xlu0 %v2667, 96
  %v2693 = vpop.permute.xlu0 %2692
  %2694 = vrot.lane.b32.xlu0 %v2668, 96
  %v2695 = vpop.permute.xlu0 %2694
  %2696 = vrot.lane.b32.xlu0 %v2669, 96
  %v2697 = vpop.permute.xlu0 %2696
  %2698 = vrot.lane.b32.xlu0 %v2670, 96
  %v2699 = vpop.permute.xlu0 %2698
  %2700 = vrot.lane.b32.xlu0 %v2671, 96
  %v2701 = vpop.permute.xlu0 %2700
  %2702 = vrot.lane.b32.xlu0 %v2672, 96
  %v2703 = vpop.permute.xlu0 %2702
  %2704 = vrot.lane.b32.xlu0 %v2673, 96
  %v2705 = vpop.permute.xlu0 %2704
  %v2714 = vmul.f32 %v2674, %v2691
  %v2715 = vmul.f32 %v2675, %v2693
  %v2716 = vmul.f32 %v2676, %v2695
  %v2717 = vmul.f32 %v2677, %v2697
  %v2718 = vmul.f32 %v2678, %v2699
  %v2719 = vmul.f32 %v2679, %v2701
  %v2720 = vmul.f32 %v2680, %v2703
  %v2721 = vmul.f32 %v2681, %v2705
  %v2723 = vrot.slane %v1693, 6
  %v2724 = vrot.slane %v1693, 7
  %v2725 = vrot.slane %v1693, 1
  %v2726 = vrot.slane %v1693, 2
  %v2727 = vrot.slane %v1693, 3
  %v2728 = vrot.slane %v1693, 4
  %v2729 = vrot.slane %v1693, 5
  %2730 = vrot.lane.b32.xlu0 %v2723, 32
  %v2731 = vpop.permute.xlu0 %2730
  %2732 = vrot.lane.b32.xlu0 %v2724, 32
  %v2733 = vpop.permute.xlu0 %2732
  %2734 = vrot.lane.b32.xlu0 %v1693, 32
  %v2735 = vpop.permute.xlu0 %2734
  %2736 = vrot.lane.b32.xlu0 %v2725, 32
  %v2737 = vpop.permute.xlu0 %2736
  %2738 = vrot.lane.b32.xlu0 %v2726, 32
  %v2739 = vpop.permute.xlu0 %2738
  %2740 = vrot.lane.b32.xlu0 %v2727, 32
  %v2741 = vpop.permute.xlu0 %2740
  %2742 = vrot.lane.b32.xlu0 %v2728, 32
  %v2743 = vpop.permute.xlu0 %2742
  %2744 = vrot.lane.b32.xlu0 %v2729, 32
  %v2745 = vpop.permute.xlu0 %2744
  %v2754 = vmul.f32 %v2479, %v2731
  %v2755 = vmul.f32 %v2494, %v2733
  %v2756 = vmul.f32 %v2509, %v2735
  %v2757 = vmul.f32 %v2524, %v2737
  %v2758 = vmul.f32 %v2539, %v2739
  %v2759 = vmul.f32 %v2554, %v2741
  %v2760 = vmul.f32 %v2569, %v2743
  %v2761 = vmul.f32 %v2584, %v2745
  %v2762 = vadd.f32 %v2714, %v2754
  %v2763 = vadd.f32 %v2715, %v2755
  %v2764 = vadd.f32 %v2716, %v2756
  %v2765 = vadd.f32 %v2717, %v2757
  %v2766 = vadd.f32 %v2718, %v2758
  %v2767 = vadd.f32 %v2719, %v2759
  %v2768 = vadd.f32 %v2720, %v2760
  %v2769 = vadd.f32 %v2721, %v2761
  %2770 = vset.pattern.permute.xlu0 2
  %2771 = vperm.xlu0 %2770, %v545
  %v2772 = vpop.permute.xlu0 %2771
  %vm2773 = vcmp.eq.s32.totalorder %v2772, 1
  %v2782 = vrot.slane %v2762, 2
  %v2783 = vrot.slane %v2763, 1
  %v2784 = vsel %vm559, %v2783, %v2782
  %v2785 = vsel %vm562, %v2764, %v2784
  %v2786 = vrot.slane %v2765, 7
  %v2787 = vsel %vm565, %v2786, %v2785
  %v2788 = vrot.slane %v2766, 6
  %v2789 = vsel %vm568, %v2788, %v2787
  %v2790 = vrot.slane %v2767, 5
  %v2791 = vsel %vm571, %v2790, %v2789
  %v2792 = vrot.slane %v2768, 4
  %v2793 = vsel %vm574, %v2792, %v2791
  %v2794 = vrot.slane %v2769, 3
  %v2795 = vsel %vm577, %v2794, %v2793
  %2796 = vrot.lane.b32.xlu0 %v2795, 96
  %v2797 = vpop.permute.xlu0 %2796
  %v2799 = vsel %vm2773, %v2797, %v1693
  %v2800 = vsel %vm2773, %v2797, 0.0
  %2801 = vrot.lane.b32.xlu0 %v2414, 32
  %v2802 = vpop.permute.xlu0 %2801
  %2803 = vrot.lane.b32.xlu0 %v2415, 32
  %v2804 = vpop.permute.xlu0 %2803
  %2805 = vrot.lane.b32.xlu0 %v2416, 32
  %v2806 = vpop.permute.xlu0 %2805
  %2807 = vrot.lane.b32.xlu0 %v2410, 32
  %v2808 = vpop.permute.xlu0 %2807
  %2809 = vrot.lane.b32.xlu0 %v2411, 32
  %v2810 = vpop.permute.xlu0 %2809
  %2811 = vrot.lane.b32.xlu0 %v2387, 32
  %v2812 = vpop.permute.xlu0 %2811
  %2813 = vrot.lane.b32.xlu0 %v2412, 32
  %v2814 = vpop.permute.xlu0 %2813
  %2815 = vrot.lane.b32.xlu0 %v2413, 32
  %v2816 = vpop.permute.xlu0 %2815
  %v2825 = vadd.f32 %v2353, %v2802
  %v2826 = vadd.f32 %v2354, %v2804
  %v2827 = vadd.f32 %v2355, %v2806
  %v2828 = vadd.f32 %v2356, %v2808
  %v2829 = vadd.f32 %v2357, %v2810
  %v2830 = vadd.f32 %v2358, %v2812
  %v2831 = vadd.f32 %v2359, %v2814
  %v2832 = vadd.f32 %v2360, %v2816
  %v2833 = vxor.u32 %v2825, 2147483648
  %v2834 = vxor.u32 %v2826, 2147483648
  %v2835 = vxor.u32 %v2827, 2147483648
  %v2836 = vxor.u32 %v2828, 2147483648
  %v2837 = vxor.u32 %v2829, 2147483648
  %v2838 = vxor.u32 %v2830, 2147483648
  %v2839 = vxor.u32 %v2831, 2147483648
  %v2840 = vxor.u32 %v2832, 2147483648
  %v2841 = vmul.f32 %v2833, 1.442695
  %v2842 = vpow.pop %v2841
  %v2843 = vmul.f32 %v2834, 1.442695
  %v2844 = vpow.pop %v2843
  %v2845 = vmul.f32 %v2835, 1.442695
  %v2846 = vpow.pop %v2845
  %v2847 = vmul.f32 %v2836, 1.442695
  %v2848 = vpow.pop %v2847
  %v2849 = vmul.f32 %v2837, 1.442695
  %v2850 = vpow.pop %v2849
  %v2851 = vmul.f32 %v2838, 1.442695
  %v2852 = vpow.pop %v2851
  %v2853 = vmul.f32 %v2839, 1.442695
  %v2854 = vpow.pop %v2853
  %v2855 = vmul.f32 %v2840, 1.442695
  %v2856 = vpow.pop %v2855
  %v2857 = vadd.f32 %v2842, 1.0
  %v2858 = vadd.f32 %v2844, 1.0
  %v2859 = vadd.f32 %v2846, 1.0
  %v2860 = vadd.f32 %v2848, 1.0
  %v2861 = vadd.f32 %v2850, 1.0
  %v2862 = vadd.f32 %v2852, 1.0
  %v2863 = vadd.f32 %v2854, 1.0
  %v2864 = vadd.f32 %v2856, 1.0
  %v2865 = vrcp.pop %v2857
  %v2866 = vmul.f32 %v2857, %v2865
  %v2867 = vsub.f32 1.0, %v2866
  %v2868 = vmul.f32 %v2865, %v2867
  %v2869 = vadd.f32 %v2865, %v2868
  %vm2870 = vweird.f32 %v2857
  %vm2871 = vweird.f32 %v2865
  %vm2872 = vmor %vm2870, %vm2871
  %v2873 = vsel %vm2872, %v2865, %v2869
  %v2874 = vand.u32 2147483647, %v2857
  %vm2875 = vcmp.eq.f32.partialorder %v2874, 8.507059e+37
  %v2876 = vand.u32 %v2857, 2147483648
  %v2877 = vor.u32 1.1754944e-38, %v2876
  %v2878 = vsel %vm2875, %v2877, %v2873
  %v2879 = vmul.f32 1.0, %v2878
  %v2880 = vrcp.pop %v2858
  %v2881 = vmul.f32 %v2858, %v2880
  %v2882 = vsub.f32 1.0, %v2881
  %v2883 = vmul.f32 %v2880, %v2882
  %v2884 = vadd.f32 %v2880, %v2883
  %vm2885 = vweird.f32 %v2858
  %vm2886 = vweird.f32 %v2880
  %vm2887 = vmor %vm2885, %vm2886
  %v2888 = vsel %vm2887, %v2880, %v2884
  %v2889 = vand.u32 2147483647, %v2858
  %vm2890 = vcmp.eq.f32.partialorder %v2889, 8.507059e+37
  %v2891 = vand.u32 %v2858, 2147483648
  %v2892 = vor.u32 1.1754944e-38, %v2891
  %v2893 = vsel %vm2890, %v2892, %v2888
  %v2894 = vmul.f32 1.0, %v2893
  %v2895 = vrcp.pop %v2859
  %v2896 = vmul.f32 %v2859, %v2895
  %v2897 = vsub.f32 1.0, %v2896
  %v2898 = vmul.f32 %v2895, %v2897
  %v2899 = vadd.f32 %v2895, %v2898
  %vm2900 = vweird.f32 %v2859
  %vm2901 = vweird.f32 %v2895
  %vm2902 = vmor %vm2900, %vm2901
  %v2903 = vsel %vm2902, %v2895, %v2899
  %v2904 = vand.u32 2147483647, %v2859
  %vm2905 = vcmp.eq.f32.partialorder %v2904, 8.507059e+37
  %v2906 = vand.u32 %v2859, 2147483648
  %v2907 = vor.u32 1.1754944e-38, %v2906
  %v2908 = vsel %vm2905, %v2907, %v2903
  %v2909 = vmul.f32 1.0, %v2908
  %v2910 = vrcp.pop %v2860
  %v2911 = vmul.f32 %v2860, %v2910
  %v2912 = vsub.f32 1.0, %v2911
  %v2913 = vmul.f32 %v2910, %v2912
  %v2914 = vadd.f32 %v2910, %v2913
  %vm2915 = vweird.f32 %v2860
  %vm2916 = vweird.f32 %v2910
  %vm2917 = vmor %vm2915, %vm2916
  %v2918 = vsel %vm2917, %v2910, %v2914
  %v2919 = vand.u32 2147483647, %v2860
  %vm2920 = vcmp.eq.f32.partialorder %v2919, 8.507059e+37
  %v2921 = vand.u32 %v2860, 2147483648
  %v2922 = vor.u32 1.1754944e-38, %v2921
  %v2923 = vsel %vm2920, %v2922, %v2918
  %v2924 = vmul.f32 1.0, %v2923
  %v2925 = vrcp.pop %v2861
  %v2926 = vmul.f32 %v2861, %v2925
  %v2927 = vsub.f32 1.0, %v2926
  %v2928 = vmul.f32 %v2925, %v2927
  %v2929 = vadd.f32 %v2925, %v2928
  %vm2930 = vweird.f32 %v2861
  %vm2931 = vweird.f32 %v2925
  %vm2932 = vmor %vm2930, %vm2931
  %v2933 = vsel %vm2932, %v2925, %v2929
  %v2934 = vand.u32 2147483647, %v2861
  %vm2935 = vcmp.eq.f32.partialorder %v2934, 8.507059e+37
  %v2936 = vand.u32 %v2861, 2147483648
  %v2937 = vor.u32 1.1754944e-38, %v2936
  %v2938 = vsel %vm2935, %v2937, %v2933
  %v2939 = vmul.f32 1.0, %v2938
  %v2940 = vrcp.pop %v2862
  %v2941 = vmul.f32 %v2862, %v2940
  %v2942 = vsub.f32 1.0, %v2941
  %v2943 = vmul.f32 %v2940, %v2942
  %v2944 = vadd.f32 %v2940, %v2943
  %vm2945 = vweird.f32 %v2862
  %vm2946 = vweird.f32 %v2940
  %vm2947 = vmor %vm2945, %vm2946
  %v2948 = vsel %vm2947, %v2940, %v2944
  %v2949 = vand.u32 2147483647, %v2862
  %vm2950 = vcmp.eq.f32.partialorder %v2949, 8.507059e+37
  %v2951 = vand.u32 %v2862, 2147483648
  %v2952 = vor.u32 1.1754944e-38, %v2951
  %v2953 = vsel %vm2950, %v2952, %v2948
  %v2954 = vmul.f32 1.0, %v2953
  %v2955 = vrcp.pop %v2863
  %v2956 = vmul.f32 %v2863, %v2955
  %v2957 = vsub.f32 1.0, %v2956
  %v2958 = vmul.f32 %v2955, %v2957
  %v2959 = vadd.f32 %v2955, %v2958
  %vm2960 = vweird.f32 %v2863
  %vm2961 = vweird.f32 %v2955
  %vm2962 = vmor %vm2960, %vm2961
  %v2963 = vsel %vm2962, %v2955, %v2959
  %v2964 = vand.u32 2147483647, %v2863
  %vm2965 = vcmp.eq.f32.partialorder %v2964, 8.507059e+37
  %v2966 = vand.u32 %v2863, 2147483648
  %v2967 = vor.u32 1.1754944e-38, %v2966
  %v2968 = vsel %vm2965, %v2967, %v2963
  %v2969 = vmul.f32 1.0, %v2968
  %v2970 = vrcp.pop %v2864
  %v2971 = vmul.f32 %v2864, %v2970
  %v2972 = vsub.f32 1.0, %v2971
  %v2973 = vmul.f32 %v2970, %v2972
  %v2974 = vadd.f32 %v2970, %v2973
  %vm2975 = vweird.f32 %v2864
  %vm2976 = vweird.f32 %v2970
  %vm2977 = vmor %vm2975, %vm2976
  %v2978 = vsel %vm2977, %v2970, %v2974
  %v2979 = vand.u32 2147483647, %v2864
  %vm2980 = vcmp.eq.f32.partialorder %v2979, 8.507059e+37
  %v2981 = vand.u32 %v2864, 2147483648
  %v2982 = vor.u32 1.1754944e-38, %v2981
  %v2983 = vsel %vm2980, %v2982, %v2978
  %v2984 = vmul.f32 1.0, %v2983
  %v2986 = vrot.slane %v2407, 3
  %v2987 = vrot.slane %v2407, 4
  %v2988 = vrot.slane %v2407, 5
  %v2989 = vrot.slane %v2407, 6
  %v2990 = vrot.slane %v2407, 7
  %v2991 = vrot.slane %v2407, 1
  %v2992 = vrot.slane %v2407, 2
  %2993 = vrot.lane.b32.xlu0 %v2986, 32
  %v2994 = vpop.permute.xlu0 %2993
  %2995 = vrot.lane.b32.xlu0 %v2987, 32
  %v2996 = vpop.permute.xlu0 %2995
  %2997 = vrot.lane.b32.xlu0 %v2988, 32
  %v2998 = vpop.permute.xlu0 %2997
  %2999 = vrot.lane.b32.xlu0 %v2989, 32
  %v3000 = vpop.permute.xlu0 %2999
  %3001 = vrot.lane.b32.xlu0 %v2990, 32
  %v3002 = vpop.permute.xlu0 %3001
  %3003 = vrot.lane.b32.xlu0 %v2407, 32
  %v3004 = vpop.permute.xlu0 %3003
  %3005 = vrot.lane.b32.xlu0 %v2991, 32
  %v3006 = vpop.permute.xlu0 %3005
  %3007 = vrot.lane.b32.xlu0 %v2992, 32
  %v3008 = vpop.permute.xlu0 %3007
  %v3017 = vadd.f32 %v2353, %v2994
  %v3018 = vadd.f32 %v2354, %v2996
  %v3019 = vadd.f32 %v2355, %v2998
  %v3020 = vadd.f32 %v2356, %v3000
  %v3021 = vadd.f32 %v2357, %v3002
  %v3022 = vadd.f32 %v2358, %v3004
  %v3023 = vadd.f32 %v2359, %v3006
  %v3024 = vadd.f32 %v2360, %v3008
  %v3025 = vxor.u32 %v3017, 2147483648
  %v3026 = vxor.u32 %v3018, 2147483648
  %v3027 = vxor.u32 %v3019, 2147483648
  %v3028 = vxor.u32 %v3020, 2147483648
  %v3029 = vxor.u32 %v3021, 2147483648
  %v3030 = vxor.u32 %v3022, 2147483648
  %v3031 = vxor.u32 %v3023, 2147483648
  %v3032 = vxor.u32 %v3024, 2147483648
  %v3033 = vmul.f32 %v3025, 1.442695
  %v3034 = vpow.pop %v3033
  %v3035 = vmul.f32 %v3026, 1.442695
  %v3036 = vpow.pop %v3035
  %v3037 = vmul.f32 %v3027, 1.442695
  %v3038 = vpow.pop %v3037
  %v3039 = vmul.f32 %v3028, 1.442695
  %v3040 = vpow.pop %v3039
  %v3041 = vmul.f32 %v3029, 1.442695
  %v3042 = vpow.pop %v3041
  %v3043 = vmul.f32 %v3030, 1.442695
  %v3044 = vpow.pop %v3043
  %v3045 = vmul.f32 %v3031, 1.442695
  %v3046 = vpow.pop %v3045
  %v3047 = vmul.f32 %v3032, 1.442695
  %v3048 = vpow.pop %v3047
  %v3049 = vadd.f32 %v3034, 1.0
  %v3050 = vadd.f32 %v3036, 1.0
  %v3051 = vadd.f32 %v3038, 1.0
  %v3052 = vadd.f32 %v3040, 1.0
  %v3053 = vadd.f32 %v3042, 1.0
  %v3054 = vadd.f32 %v3044, 1.0
  %v3055 = vadd.f32 %v3046, 1.0
  %v3056 = vadd.f32 %v3048, 1.0
  %v3057 = vrcp.pop %v3049
  %v3058 = vmul.f32 %v3049, %v3057
  %v3059 = vsub.f32 1.0, %v3058
  %v3060 = vmul.f32 %v3057, %v3059
  %v3061 = vadd.f32 %v3057, %v3060
  %vm3062 = vweird.f32 %v3049
  %vm3063 = vweird.f32 %v3057
  %vm3064 = vmor %vm3062, %vm3063
  %v3065 = vsel %vm3064, %v3057, %v3061
  %v3066 = vand.u32 2147483647, %v3049
  %vm3067 = vcmp.eq.f32.partialorder %v3066, 8.507059e+37
  %v3068 = vand.u32 %v3049, 2147483648
  %v3069 = vor.u32 1.1754944e-38, %v3068
  %v3070 = vsel %vm3067, %v3069, %v3065
  %v3071 = vmul.f32 1.0, %v3070
  %v3072 = vrcp.pop %v3050
  %v3073 = vmul.f32 %v3050, %v3072
  %v3074 = vsub.f32 1.0, %v3073
  %v3075 = vmul.f32 %v3072, %v3074
  %v3076 = vadd.f32 %v3072, %v3075
  %vm3077 = vweird.f32 %v3050
  %vm3078 = vweird.f32 %v3072
  %vm3079 = vmor %vm3077, %vm3078
  %v3080 = vsel %vm3079, %v3072, %v3076
  %v3081 = vand.u32 2147483647, %v3050
  %vm3082 = vcmp.eq.f32.partialorder %v3081, 8.507059e+37
  %v3083 = vand.u32 %v3050, 2147483648
  %v3084 = vor.u32 1.1754944e-38, %v3083
  %v3085 = vsel %vm3082, %v3084, %v3080
  %v3086 = vmul.f32 1.0, %v3085
  %v3087 = vrcp.pop %v3051
  %v3088 = vmul.f32 %v3051, %v3087
  %v3089 = vsub.f32 1.0, %v3088
  %v3090 = vmul.f32 %v3087, %v3089
  %v3091 = vadd.f32 %v3087, %v3090
  %vm3092 = vweird.f32 %v3051
  %vm3093 = vweird.f32 %v3087
  %vm3094 = vmor %vm3092, %vm3093
  %v3095 = vsel %vm3094, %v3087, %v3091
  %v3096 = vand.u32 2147483647, %v3051
  %vm3097 = vcmp.eq.f32.partialorder %v3096, 8.507059e+37
  %v3098 = vand.u32 %v3051, 2147483648
  %v3099 = vor.u32 1.1754944e-38, %v3098
  %v3100 = vsel %vm3097, %v3099, %v3095
  %v3101 = vmul.f32 1.0, %v3100
  %v3102 = vrcp.pop %v3052
  %v3103 = vmul.f32 %v3052, %v3102
  %v3104 = vsub.f32 1.0, %v3103
  %v3105 = vmul.f32 %v3102, %v3104
  %v3106 = vadd.f32 %v3102, %v3105
  %vm3107 = vweird.f32 %v3052
  %vm3108 = vweird.f32 %v3102
  %vm3109 = vmor %vm3107, %vm3108
  %v3110 = vsel %vm3109, %v3102, %v3106
  %v3111 = vand.u32 2147483647, %v3052
  %vm3112 = vcmp.eq.f32.partialorder %v3111, 8.507059e+37
  %v3113 = vand.u32 %v3052, 2147483648
  %v3114 = vor.u32 1.1754944e-38, %v3113
  %v3115 = vsel %vm3112, %v3114, %v3110
  %v3116 = vmul.f32 1.0, %v3115
  %v3117 = vrcp.pop %v3053
  %v3118 = vmul.f32 %v3053, %v3117
  %v3119 = vsub.f32 1.0, %v3118
  %v3120 = vmul.f32 %v3117, %v3119
  %v3121 = vadd.f32 %v3117, %v3120
  %vm3122 = vweird.f32 %v3053
  %vm3123 = vweird.f32 %v3117
  %vm3124 = vmor %vm3122, %vm3123
  %v3125 = vsel %vm3124, %v3117, %v3121
  %v3126 = vand.u32 2147483647, %v3053
  %vm3127 = vcmp.eq.f32.partialorder %v3126, 8.507059e+37
  %v3128 = vand.u32 %v3053, 2147483648
  %v3129 = vor.u32 1.1754944e-38, %v3128
  %v3130 = vsel %vm3127, %v3129, %v3125
  %v3131 = vmul.f32 1.0, %v3130
  %v3132 = vrcp.pop %v3054
  %v3133 = vmul.f32 %v3054, %v3132
  %v3134 = vsub.f32 1.0, %v3133
  %v3135 = vmul.f32 %v3132, %v3134
  %v3136 = vadd.f32 %v3132, %v3135
  %vm3137 = vweird.f32 %v3054
  %vm3138 = vweird.f32 %v3132
  %vm3139 = vmor %vm3137, %vm3138
  %v3140 = vsel %vm3139, %v3132, %v3136
  %v3141 = vand.u32 2147483647, %v3054
  %vm3142 = vcmp.eq.f32.partialorder %v3141, 8.507059e+37
  %v3143 = vand.u32 %v3054, 2147483648
  %v3144 = vor.u32 1.1754944e-38, %v3143
  %v3145 = vsel %vm3142, %v3144, %v3140
  %v3146 = vmul.f32 1.0, %v3145
  %v3147 = vrcp.pop %v3055
  %v3148 = vmul.f32 %v3055, %v3147
  %v3149 = vsub.f32 1.0, %v3148
  %v3150 = vmul.f32 %v3147, %v3149
  %v3151 = vadd.f32 %v3147, %v3150
  %vm3152 = vweird.f32 %v3055
  %vm3153 = vweird.f32 %v3147
  %vm3154 = vmor %vm3152, %vm3153
  %v3155 = vsel %vm3154, %v3147, %v3151
  %v3156 = vand.u32 2147483647, %v3055
  %vm3157 = vcmp.eq.f32.partialorder %v3156, 8.507059e+37
  %v3158 = vand.u32 %v3055, 2147483648
  %v3159 = vor.u32 1.1754944e-38, %v3158
  %v3160 = vsel %vm3157, %v3159, %v3155
  %v3161 = vmul.f32 1.0, %v3160
  %v3162 = vrcp.pop %v3056
  %v3163 = vmul.f32 %v3056, %v3162
  %v3164 = vsub.f32 1.0, %v3163
  %v3165 = vmul.f32 %v3162, %v3164
  %v3166 = vadd.f32 %v3162, %v3165
  %vm3167 = vweird.f32 %v3056
  %vm3168 = vweird.f32 %v3162
  %vm3169 = vmor %vm3167, %vm3168
  %v3170 = vsel %vm3169, %v3162, %v3166
  %v3171 = vand.u32 2147483647, %v3056
  %vm3172 = vcmp.eq.f32.partialorder %v3171, 8.507059e+37
  %v3173 = vand.u32 %v3056, 2147483648
  %v3174 = vor.u32 1.1754944e-38, %v3173
  %v3175 = vsel %vm3172, %v3174, %v3170
  %v3176 = vmul.f32 1.0, %v3175
  %v3177 = vadd.f32 %v2407, %v961
  %v3179 = vrot.slane %v3177, 3
  %v3180 = vrot.slane %v3177, 4
  %v3181 = vrot.slane %v3177, 5
  %v3182 = vrot.slane %v3177, 6
  %v3183 = vrot.slane %v3177, 7
  %v3184 = vrot.slane %v3177, 1
  %v3185 = vrot.slane %v3177, 2
  %3186 = vrot.lane.b32.xlu0 %v3179, 96
  %v3187 = vpop.permute.xlu0 %3186
  %3188 = vrot.lane.b32.xlu0 %v3180, 96
  %v3189 = vpop.permute.xlu0 %3188
  %3190 = vrot.lane.b32.xlu0 %v3181, 96
  %v3191 = vpop.permute.xlu0 %3190
  %3192 = vrot.lane.b32.xlu0 %v3182, 96
  %v3193 = vpop.permute.xlu0 %3192
  %3194 = vrot.lane.b32.xlu0 %v3183, 96
  %v3195 = vpop.permute.xlu0 %3194
  %3196 = vrot.lane.b32.xlu0 %v3177, 96
  %v3197 = vpop.permute.xlu0 %3196
  %3198 = vrot.lane.b32.xlu0 %v3184, 96
  %v3199 = vpop.permute.xlu0 %3198
  %3200 = vrot.lane.b32.xlu0 %v3185, 96
  %v3201 = vpop.permute.xlu0 %3200
  %v3210 = vmul.f32 %v2879, %v3187
  %v3211 = vmul.f32 %v2894, %v3189
  %v3212 = vmul.f32 %v2909, %v3191
  %v3213 = vmul.f32 %v2924, %v3193
  %v3214 = vmul.f32 %v2939, %v3195
  %v3215 = vmul.f32 %v2954, %v3197
  %v3216 = vmul.f32 %v2969, %v3199
  %v3217 = vmul.f32 %v2984, %v3201
  %3226 = vrot.lane.b32.xlu0 %v3210, 64
  %v3227 = vpop.permute.xlu0 %3226
  %3228 = vrot.lane.b32.xlu0 %v3211, 64
  %v3229 = vpop.permute.xlu0 %3228
  %3230 = vrot.lane.b32.xlu0 %v3212, 64
  %v3231 = vpop.permute.xlu0 %3230
  %3232 = vrot.lane.b32.xlu0 %v3213, 64
  %v3233 = vpop.permute.xlu0 %3232
  %3234 = vrot.lane.b32.xlu0 %v3214, 64
  %v3235 = vpop.permute.xlu0 %3234
  %3236 = vrot.lane.b32.xlu0 %v3215, 64
  %v3237 = vpop.permute.xlu0 %3236
  %3238 = vrot.lane.b32.xlu0 %v3216, 64
  %v3239 = vpop.permute.xlu0 %3238
  %3240 = vrot.lane.b32.xlu0 %v3217, 64
  %v3241 = vpop.permute.xlu0 %3240
  %v3250 = vadd.f32 %v2353, %v3227
  %v3251 = vadd.f32 %v2354, %v3229
  %v3252 = vadd.f32 %v2355, %v3231
  %v3253 = vadd.f32 %v2356, %v3233
  %v3254 = vadd.f32 %v2357, %v3235
  %v3255 = vadd.f32 %v2358, %v3237
  %v3256 = vadd.f32 %v2359, %v3239
  %v3257 = vadd.f32 %v2360, %v3241
  %v3258 = vtanh.pop %v3250
  %v3259 = vtanh.pop %v3251
  %v3260 = vtanh.pop %v3252
  %v3261 = vtanh.pop %v3253
  %v3262 = vtanh.pop %v3254
  %v3263 = vtanh.pop %v3255
  %v3264 = vtanh.pop %v3256
  %v3265 = vtanh.pop %v3257
  %v3266 = vsub.f32 1.0, %v3071
  %v3267 = vsub.f32 1.0, %v3086
  %v3268 = vsub.f32 1.0, %v3101
  %v3269 = vsub.f32 1.0, %v3116
  %v3270 = vsub.f32 1.0, %v3131
  %v3271 = vsub.f32 1.0, %v3146
  %v3272 = vsub.f32 1.0, %v3161
  %v3273 = vsub.f32 1.0, %v3176
  %3282 = vrot.lane.b32.xlu0 %v3258, 96
  %v3283 = vpop.permute.xlu0 %3282
  %3284 = vrot.lane.b32.xlu0 %v3259, 96
  %v3285 = vpop.permute.xlu0 %3284
  %3286 = vrot.lane.b32.xlu0 %v3260, 96
  %v3287 = vpop.permute.xlu0 %3286
  %3288 = vrot.lane.b32.xlu0 %v3261, 96
  %v3289 = vpop.permute.xlu0 %3288
  %3290 = vrot.lane.b32.xlu0 %v3262, 96
  %v3291 = vpop.permute.xlu0 %3290
  %3292 = vrot.lane.b32.xlu0 %v3263, 96
  %v3293 = vpop.permute.xlu0 %3292
  %3294 = vrot.lane.b32.xlu0 %v3264, 96
  %v3295 = vpop.permute.xlu0 %3294
  %3296 = vrot.lane.b32.xlu0 %v3265, 96
  %v3297 = vpop.permute.xlu0 %3296
  %v3306 = vmul.f32 %v3266, %v3283
  %v3307 = vmul.f32 %v3267, %v3285
  %v3308 = vmul.f32 %v3268, %v3287
  %v3309 = vmul.f32 %v3269, %v3289
  %v3310 = vmul.f32 %v3270, %v3291
  %v3311 = vmul.f32 %v3271, %v3293
  %v3312 = vmul.f32 %v3272, %v3295
  %v3313 = vmul.f32 %v3273, %v3297
  %v3314 = vrot.slane %v2281, 3
  %v3315 = vrot.slane %v2281, 4
  %v3316 = vrot.slane %v2281, 5
  %v3317 = vrot.slane %v2281, 6
  %v3318 = vrot.slane %v2281, 7
  %v3319 = vrot.slane %v2281, 1
  %v3320 = vrot.slane %v2281, 2
  %3321 = vrot.lane.b32.xlu0 %v3314, 32
  %v3322 = vpop.permute.xlu0 %3321
  %3323 = vrot.lane.b32.xlu0 %v3315, 32
  %v3324 = vpop.permute.xlu0 %3323
  %3325 = vrot.lane.b32.xlu0 %v3316, 32
  %v3326 = vpop.permute.xlu0 %3325
  %3327 = vrot.lane.b32.xlu0 %v3317, 32
  %v3328 = vpop.permute.xlu0 %3327
  %3329 = vrot.lane.b32.xlu0 %v3318, 32
  %v3330 = vpop.permute.xlu0 %3329
  %3331 = vrot.lane.b32.xlu0 %v3319, 32
  %v3332 = vpop.permute.xlu0 %3331
  %3333 = vrot.lane.b32.xlu0 %v3320, 32
  %v3334 = vpop.permute.xlu0 %3333
  %v3342 = vmul.f32 %v3071, %v3322
  %v3343 = vmul.f32 %v3086, %v3324
  %v3344 = vmul.f32 %v3101, %v3326
  %v3345 = vmul.f32 %v3116, %v3328
  %v3346 = vmul.f32 %v3131, %v3330
  %v3347 = vmul.f32 %v3146, %v2363
  %v3348 = vmul.f32 %v3161, %v3332
  %v3349 = vmul.f32 %v3176, %v3334
  %v3350 = vadd.f32 %v3306, %v3342
  %v3351 = vadd.f32 %v3307, %v3343
  %v3352 = vadd.f32 %v3308, %v3344
  %v3353 = vadd.f32 %v3309, %v3345
  %v3354 = vadd.f32 %v3310, %v3346
  %v3355 = vadd.f32 %v3311, %v3347
  %v3356 = vadd.f32 %v3312, %v3348
  %v3357 = vadd.f32 %v3313, %v3349
  %3358 = vset.pattern.permute.xlu0 5
  %3359 = vperm.xlu0 %3358, %v1144
  %v3360 = vpop.permute.xlu0 %3359
  %vm3361 = vcmp.eq.s32.totalorder %v3360, 1
  %v3370 = vrot.slane %v3350, 5
  %v3371 = vrot.slane %v3351, 4
  %v3372 = vsel %vm559, %v3371, %v3370
  %v3373 = vrot.slane %v3352, 3
  %v3374 = vsel %vm562, %v3373, %v3372
  %v3375 = vrot.slane %v3353, 2
  %v3376 = vsel %vm565, %v3375, %v3374
  %v3377 = vrot.slane %v3354, 1
  %v3378 = vsel %vm568, %v3377, %v3376
  %v3379 = vsel %vm571, %v3355, %v3378
  %v3380 = vrot.slane %v3356, 7
  %v3381 = vsel %vm574, %v3380, %v3379
  %v3382 = vrot.slane %v3357, 6
  %v3383 = vsel %vm577, %v3382, %v3381
  %3384 = vrot.lane.b32.xlu0 %v3383, 96
  %v3385 = vpop.permute.xlu0 %3384
  %v3387 = vsel %vm3361, %v3385, %v2281
  %v3388 = vsel %vm3361, %v3385, 0.0
  %v3390 = vrot.slane %v2800, 1
  %v3391 = vrot.slane %v2800, 2
  %v3392 = vrot.slane %v2800, 3
  %v3393 = vrot.slane %v2800, 4
  %v3394 = vrot.slane %v2800, 5
  %v3395 = vrot.slane %v2800, 6
  %v3396 = vrot.slane %v2800, 7
  %3404 = vst.msk [vmem:[%s6 + $0x2] sm:$0x1] %vm1191, %v2800
  %3405 = vst.msk [vmem:[%s6 + $0xa] sm:$0x1] %vm1191, %v3390
  %3406 = vst.msk [vmem:[%s6 + $0x12] sm:$0x1] %vm1191, %v3391
  %3407 = vst.msk [vmem:[%s6 + $0x1a] sm:$0x1] %vm1191, %v3392
  %3408 = vst.msk [vmem:[%s6 + $0x22] sm:$0x1] %vm1191, %v3393
  %3409 = vst.msk [vmem:[%s6 + $0x2a] sm:$0x1] %vm1191, %v3394
  %3410 = vst.msk [vmem:[%s6 + $0x32] sm:$0x1] %vm1191, %v3395
  %3411 = vst.msk [vmem:[%s6 + $0x3a] sm:$0x1] %vm1191, %v3396
  %v3413 = vrot.slane %v3388, 1
  %v3414 = vrot.slane %v3388, 2
  %v3415 = vrot.slane %v3388, 3
  %v3416 = vrot.slane %v3388, 4
  %v3417 = vrot.slane %v3388, 5
  %v3418 = vrot.slane %v3388, 6
  %v3419 = vrot.slane %v3388, 7
  %3427 = vst.msk [vmem:[%s51 + $0x5] sm:$0x1] %vm1191, %v3388
  %3428 = vst.msk [vmem:[%s51 + $0xd] sm:$0x1] %vm1191, %v3413
  %3429 = vst.msk [vmem:[%s51 + $0x15] sm:$0x1] %vm1191, %v3414
  %3430 = vst.msk [vmem:[%s51 + $0x1d] sm:$0x1] %vm1191, %v3415
  %3431 = vst.msk [vmem:[%s51 + $0x25] sm:$0x1] %vm1191, %v3416
  %3432 = vst.msk [vmem:[%s51 + $0x2d] sm:$0x1] %vm1191, %v3417
  %3433 = vst.msk [vmem:[%s51 + $0x35] sm:$0x1] %vm1191, %v3418
  %3434 = vst.msk [vmem:[%s51 + $0x3d] sm:$0x1] %vm1191, %v3419
  %v3435 = vld [vmem:[%s0] sm:$0x2]
  %v3436 = vld [vmem:[%s0 + $0x4] sm:$0x2]
  %v3437 = vld [vmem:[%s0 + $0x8] sm:$0x2]
  %v3438 = vld [vmem:[%s0 + $0xc] sm:$0x2]
  %v3439 = vld [vmem:[%s0 + $0x10] sm:$0x2]
  %v3440 = vld [vmem:[%s0 + $0x14] sm:$0x2]
  %v3441 = vld [vmem:[%s0 + $0x18] sm:$0x2]
  %v3442 = vld [vmem:[%s0 + $0x1c] sm:$0x2]
  %v3443 = vunpack.c.l.bf16 %v3435
  %v3444 = vunpack.c.l.bf16 %v3436
  %v3445 = vunpack.c.l.bf16 %v3437
  %v3446 = vunpack.c.l.bf16 %v3438
  %v3447 = vunpack.c.l.bf16 %v3439
  %v3448 = vunpack.c.l.bf16 %v3440
  %v3449 = vunpack.c.l.bf16 %v3441
  %v3450 = vunpack.c.l.bf16 %v3442
  %v3451 = vld [vmem:[%s45] sm:$0x4]
  %v3452 = vld [vmem:[%s45 + $0x4] sm:$0x4]
  %v3453 = vld [vmem:[%s45 + $0x8] sm:$0x4]
  %v3454 = vld [vmem:[%s45 + $0xc] sm:$0x4]
  %v3455 = vld [vmem:[%s45 + $0x10] sm:$0x4]
  %v3456 = vld [vmem:[%s45 + $0x14] sm:$0x4]
  %v3457 = vld [vmem:[%s45 + $0x18] sm:$0x4]
  %v3458 = vld [vmem:[%s45 + $0x1c] sm:$0x4]
  %v3459 = vunpack.c.l.bf16 %v3451
  %v3460 = vunpack.c.l.bf16 %v3452
  %v3461 = vunpack.c.l.bf16 %v3453
  %v3462 = vunpack.c.l.bf16 %v3454
  %v3463 = vunpack.c.l.bf16 %v3455
  %v3464 = vunpack.c.l.bf16 %v3456
  %v3465 = vunpack.c.l.bf16 %v3457
  %v3466 = vunpack.c.l.bf16 %v3458
  %3468 = vrot.lane.b32.xlu0 %v3387, 32
  %v3469 = vpop.permute.xlu0 %3468
  %v3471 = vsel %vm135, %v2799, %v3469
  %v3473 = vsel %vm137, %v3471, 0
  %3475 = vmatpush.msra.mxu0 0.0
  %3476 = vmatpush.msra.mxu0 0.0
  %3477 = vmatpush.msra.mxu0 0.0
  %3478 = vmatpush.msra.mxu0 0.0
  %3479 = vmatpush.msra.mxu0 0.0
  %3480 = vmatpush.msra.mxu0 0.0
  %3481 = vmatpush.msra.mxu0 0.0
  %3482 = vmatpush.msra.mxu0 0.0
  %3483 = vmatpush.msra.mxu0 %v75
  %3484 = vmatpush.msra.mxu0 %v73
  %3485 = vmatpush.msra.mxu0 %v71
  %3486 = vmatpush.msra.mxu0 %v69
  %3487 = vmatpush.msra.mxu0 %v67
  %3488 = vmatpush.msra.mxu0 %v65
  %3489 = vmatpush.msra.mxu0 %v63
  %3490 = vmatpush.msra.mxu0 %v61
  %3491 = vmatmul.f32.gmra.mxu0 %v3473
  %v3492 = vpop.f32.mrf.mxu0
  %v3493 = vadd.f32 0.0, %v3492
  %3494 = vdwg.mxu0
  %3495 = vmatpush.msra.mxu0 0.0
  %3496 = vmatpush.msra.mxu0 0.0
  %3497 = vmatpush.msra.mxu0 0.0
  %3498 = vmatpush.msra.mxu0 0.0
  %3499 = vmatpush.msra.mxu0 0.0
  %3500 = vmatpush.msra.mxu0 0.0
  %3501 = vmatpush.msra.mxu0 0.0
  %3502 = vmatpush.msra.mxu0 0.0
  %3503 = vmatpush.msra.mxu0 %v76
  %3504 = vmatpush.msra.mxu0 %v74
  %3505 = vmatpush.msra.mxu0 %v72
  %3506 = vmatpush.msra.mxu0 %v70
  %3507 = vmatpush.msra.mxu0 %v68
  %3508 = vmatpush.msra.mxu0 %v66
  %3509 = vmatpush.msra.mxu0 %v64
  %3510 = vmatpush.msra.mxu0 %v62
  %3511 = vmatmul.f32.gmra.mxu0 %v3473
  %v3512 = vpop.f32.mrf.mxu0
  %v3513 = vadd.f32 0.0, %v3512
  %3514 = vdwg.mxu0
  %v3516 = vrot.slane %v3493, 5
  %v3517 = vrot.slane %v3493, 6
  %v3518 = vrot.slane %v3493, 7
  %v3519 = vrot.slane %v3493, 1
  %v3520 = vrot.slane %v3493, 2
  %v3521 = vrot.slane %v3493, 3
  %v3522 = vrot.slane %v3493, 4
  %v3531 = vadd.f32 %v3443, %v3516
  %v3532 = vadd.f32 %v3444, %v3517
  %v3533 = vadd.f32 %v3445, %v3518
  %v3534 = vadd.f32 %v3446, %v3493
  %v3535 = vadd.f32 %v3447, %v3519
  %v3536 = vadd.f32 %v3448, %v3520
  %v3537 = vadd.f32 %v3449, %v3521
  %v3538 = vadd.f32 %v3450, %v3522
  %v3539 = vxor.u32 %v3531, 2147483648
  %v3540 = vxor.u32 %v3532, 2147483648
  %v3541 = vxor.u32 %v3533, 2147483648
  %v3542 = vxor.u32 %v3534, 2147483648
  %v3543 = vxor.u32 %v3535, 2147483648
  %v3544 = vxor.u32 %v3536, 2147483648
  %v3545 = vxor.u32 %v3537, 2147483648
  %v3546 = vxor.u32 %v3538, 2147483648
  %v3547 = vmul.f32 %v3539, 1.442695
  %v3548 = vpow.pop %v3547
  %v3549 = vmul.f32 %v3540, 1.442695
  %v3550 = vpow.pop %v3549
  %v3551 = vmul.f32 %v3541, 1.442695
  %v3552 = vpow.pop %v3551
  %v3553 = vmul.f32 %v3542, 1.442695
  %v3554 = vpow.pop %v3553
  %v3555 = vmul.f32 %v3543, 1.442695
  %v3556 = vpow.pop %v3555
  %v3557 = vmul.f32 %v3544, 1.442695
  %v3558 = vpow.pop %v3557
  %v3559 = vmul.f32 %v3545, 1.442695
  %v3560 = vpow.pop %v3559
  %v3561 = vmul.f32 %v3546, 1.442695
  %v3562 = vpow.pop %v3561
  %v3563 = vadd.f32 %v3548, 1.0
  %v3564 = vadd.f32 %v3550, 1.0
  %v3565 = vadd.f32 %v3552, 1.0
  %v3566 = vadd.f32 %v3554, 1.0
  %v3567 = vadd.f32 %v3556, 1.0
  %v3568 = vadd.f32 %v3558, 1.0
  %v3569 = vadd.f32 %v3560, 1.0
  %v3570 = vadd.f32 %v3562, 1.0
  %v3571 = vrcp.pop %v3563
  %v3572 = vmul.f32 %v3563, %v3571
  %v3573 = vsub.f32 1.0, %v3572
  %v3574 = vmul.f32 %v3571, %v3573
  %v3575 = vadd.f32 %v3571, %v3574
  %vm3576 = vweird.f32 %v3563
  %vm3577 = vweird.f32 %v3571
  %vm3578 = vmor %vm3576, %vm3577
  %v3579 = vsel %vm3578, %v3571, %v3575
  %v3580 = vand.u32 2147483647, %v3563
  %vm3581 = vcmp.eq.f32.partialorder %v3580, 8.507059e+37
  %v3582 = vand.u32 %v3563, 2147483648
  %v3583 = vor.u32 1.1754944e-38, %v3582
  %v3584 = vsel %vm3581, %v3583, %v3579
  %v3585 = vmul.f32 1.0, %v3584
  %v3586 = vrcp.pop %v3564
  %v3587 = vmul.f32 %v3564, %v3586
  %v3588 = vsub.f32 1.0, %v3587
  %v3589 = vmul.f32 %v3586, %v3588
  %v3590 = vadd.f32 %v3586, %v3589
  %vm3591 = vweird.f32 %v3564
  %vm3592 = vweird.f32 %v3586
  %vm3593 = vmor %vm3591, %vm3592
  %v3594 = vsel %vm3593, %v3586, %v3590
  %v3595 = vand.u32 2147483647, %v3564
  %vm3596 = vcmp.eq.f32.partialorder %v3595, 8.507059e+37
  %v3597 = vand.u32 %v3564, 2147483648
  %v3598 = vor.u32 1.1754944e-38, %v3597
  %v3599 = vsel %vm3596, %v3598, %v3594
  %v3600 = vmul.f32 1.0, %v3599
  %v3601 = vrcp.pop %v3565
  %v3602 = vmul.f32 %v3565, %v3601
  %v3603 = vsub.f32 1.0, %v3602
  %v3604 = vmul.f32 %v3601, %v3603
  %v3605 = vadd.f32 %v3601, %v3604
  %vm3606 = vweird.f32 %v3565
  %vm3607 = vweird.f32 %v3601
  %vm3608 = vmor %vm3606, %vm3607
  %v3609 = vsel %vm3608, %v3601, %v3605
  %v3610 = vand.u32 2147483647, %v3565
  %vm3611 = vcmp.eq.f32.partialorder %v3610, 8.507059e+37
  %v3612 = vand.u32 %v3565, 2147483648
  %v3613 = vor.u32 1.1754944e-38, %v3612
  %v3614 = vsel %vm3611, %v3613, %v3609
  %v3615 = vmul.f32 1.0, %v3614
  %v3616 = vrcp.pop %v3566
  %v3617 = vmul.f32 %v3566, %v3616
  %v3618 = vsub.f32 1.0, %v3617
  %v3619 = vmul.f32 %v3616, %v3618
  %v3620 = vadd.f32 %v3616, %v3619
  %vm3621 = vweird.f32 %v3566
  %vm3622 = vweird.f32 %v3616
  %vm3623 = vmor %vm3621, %vm3622
  %v3624 = vsel %vm3623, %v3616, %v3620
  %v3625 = vand.u32 2147483647, %v3566
  %vm3626 = vcmp.eq.f32.partialorder %v3625, 8.507059e+37
  %v3627 = vand.u32 %v3566, 2147483648
  %v3628 = vor.u32 1.1754944e-38, %v3627
  %v3629 = vsel %vm3626, %v3628, %v3624
  %v3630 = vmul.f32 1.0, %v3629
  %v3631 = vrcp.pop %v3567
  %v3632 = vmul.f32 %v3567, %v3631
  %v3633 = vsub.f32 1.0, %v3632
  %v3634 = vmul.f32 %v3631, %v3633
  %v3635 = vadd.f32 %v3631, %v3634
  %vm3636 = vweird.f32 %v3567
  %vm3637 = vweird.f32 %v3631
  %vm3638 = vmor %vm3636, %vm3637
  %v3639 = vsel %vm3638, %v3631, %v3635
  %v3640 = vand.u32 2147483647, %v3567
  %vm3641 = vcmp.eq.f32.partialorder %v3640, 8.507059e+37
  %v3642 = vand.u32 %v3567, 2147483648
  %v3643 = vor.u32 1.1754944e-38, %v3642
  %v3644 = vsel %vm3641, %v3643, %v3639
  %v3645 = vmul.f32 1.0, %v3644
  %v3646 = vrcp.pop %v3568
  %v3647 = vmul.f32 %v3568, %v3646
  %v3648 = vsub.f32 1.0, %v3647
  %v3649 = vmul.f32 %v3646, %v3648
  %v3650 = vadd.f32 %v3646, %v3649
  %vm3651 = vweird.f32 %v3568
  %vm3652 = vweird.f32 %v3646
  %vm3653 = vmor %vm3651, %vm3652
  %v3654 = vsel %vm3653, %v3646, %v3650
  %v3655 = vand.u32 2147483647, %v3568
  %vm3656 = vcmp.eq.f32.partialorder %v3655, 8.507059e+37
  %v3657 = vand.u32 %v3568, 2147483648
  %v3658 = vor.u32 1.1754944e-38, %v3657
  %v3659 = vsel %vm3656, %v3658, %v3654
  %v3660 = vmul.f32 1.0, %v3659
  %v3661 = vrcp.pop %v3569
  %v3662 = vmul.f32 %v3569, %v3661
  %v3663 = vsub.f32 1.0, %v3662
  %v3664 = vmul.f32 %v3661, %v3663
  %v3665 = vadd.f32 %v3661, %v3664
  %vm3666 = vweird.f32 %v3569
  %vm3667 = vweird.f32 %v3661
  %vm3668 = vmor %vm3666, %vm3667
  %v3669 = vsel %vm3668, %v3661, %v3665
  %v3670 = vand.u32 2147483647, %v3569
  %vm3671 = vcmp.eq.f32.partialorder %v3670, 8.507059e+37
  %v3672 = vand.u32 %v3569, 2147483648
  %v3673 = vor.u32 1.1754944e-38, %v3672
  %v3674 = vsel %vm3671, %v3673, %v3669
  %v3675 = vmul.f32 1.0, %v3674
  %v3676 = vrcp.pop %v3570
  %v3677 = vmul.f32 %v3570, %v3676
  %v3678 = vsub.f32 1.0, %v3677
  %v3679 = vmul.f32 %v3676, %v3678
  %v3680 = vadd.f32 %v3676, %v3679
  %vm3681 = vweird.f32 %v3570
  %vm3682 = vweird.f32 %v3676
  %vm3683 = vmor %vm3681, %vm3682
  %v3684 = vsel %vm3683, %v3676, %v3680
  %v3685 = vand.u32 2147483647, %v3570
  %vm3686 = vcmp.eq.f32.partialorder %v3685, 8.507059e+37
  %v3687 = vand.u32 %v3570, 2147483648
  %v3688 = vor.u32 1.1754944e-38, %v3687
  %v3689 = vsel %vm3686, %v3688, %v3684
  %v3690 = vmul.f32 1.0, %v3689
  %v3691 = vadd.f32 %v3493, %v358
  %v3693 = vrot.slane %v3691, 5
  %v3694 = vrot.slane %v3691, 6
  %v3695 = vrot.slane %v3691, 7
  %v3696 = vrot.slane %v3691, 1
  %v3697 = vrot.slane %v3691, 2
  %v3698 = vrot.slane %v3691, 3
  %v3699 = vrot.slane %v3691, 4
  %3700 = vrot.lane.b32.xlu0 %v3693, 64
  %v3701 = vpop.permute.xlu0 %3700
  %3702 = vrot.lane.b32.xlu0 %v3694, 64
  %v3703 = vpop.permute.xlu0 %3702
  %3704 = vrot.lane.b32.xlu0 %v3695, 64
  %v3705 = vpop.permute.xlu0 %3704
  %3706 = vrot.lane.b32.xlu0 %v3691, 64
  %v3707 = vpop.permute.xlu0 %3706
  %3708 = vrot.lane.b32.xlu0 %v3696, 64
  %v3709 = vpop.permute.xlu0 %3708
  %3710 = vrot.lane.b32.xlu0 %v3697, 64
  %v3711 = vpop.permute.xlu0 %3710
  %3712 = vrot.lane.b32.xlu0 %v3698, 64
  %v3713 = vpop.permute.xlu0 %3712
  %3714 = vrot.lane.b32.xlu0 %v3699, 64
  %v3715 = vpop.permute.xlu0 %3714
  %v3724 = vmul.f32 %v3585, %v3701
  %v3725 = vmul.f32 %v3600, %v3703
  %v3726 = vmul.f32 %v3615, %v3705
  %v3727 = vmul.f32 %v3630, %v3707
  %v3728 = vmul.f32 %v3645, %v3709
  %v3729 = vmul.f32 %v3660, %v3711
  %v3730 = vmul.f32 %v3675, %v3713
  %v3731 = vmul.f32 %v3690, %v3715
  %3740 = vrot.lane.b32.xlu0 %v3724, 64
  %v3741 = vpop.permute.xlu0 %3740
  %3742 = vrot.lane.b32.xlu0 %v3725, 64
  %v3743 = vpop.permute.xlu0 %3742
  %3744 = vrot.lane.b32.xlu0 %v3726, 64
  %v3745 = vpop.permute.xlu0 %3744
  %3746 = vrot.lane.b32.xlu0 %v3727, 64
  %v3747 = vpop.permute.xlu0 %3746
  %3748 = vrot.lane.b32.xlu0 %v3728, 64
  %v3749 = vpop.permute.xlu0 %3748
  %3750 = vrot.lane.b32.xlu0 %v3729, 64
  %v3751 = vpop.permute.xlu0 %3750
  %3752 = vrot.lane.b32.xlu0 %v3730, 64
  %v3753 = vpop.permute.xlu0 %3752
  %3754 = vrot.lane.b32.xlu0 %v3731, 64
  %v3755 = vpop.permute.xlu0 %3754
  %v3764 = vadd.f32 %v3443, %v3741
  %v3765 = vadd.f32 %v3444, %v3743
  %v3766 = vadd.f32 %v3445, %v3745
  %v3767 = vadd.f32 %v3446, %v3747
  %v3768 = vadd.f32 %v3447, %v3749
  %v3769 = vadd.f32 %v3448, %v3751
  %v3770 = vadd.f32 %v3449, %v3753
  %v3771 = vadd.f32 %v3450, %v3755
  %v3772 = vtanh.pop %v3764
  %v3773 = vtanh.pop %v3765
  %v3774 = vtanh.pop %v3766
  %v3775 = vtanh.pop %v3767
  %v3776 = vtanh.pop %v3768
  %v3777 = vtanh.pop %v3769
  %v3778 = vtanh.pop %v3770
  %v3779 = vtanh.pop %v3771
  %v3780 = vsub.f32 1.0, %v3585
  %v3781 = vsub.f32 1.0, %v3600
  %v3782 = vsub.f32 1.0, %v3615
  %v3783 = vsub.f32 1.0, %v3630
  %v3784 = vsub.f32 1.0, %v3645
  %v3785 = vsub.f32 1.0, %v3660
  %v3786 = vsub.f32 1.0, %v3675
  %v3787 = vsub.f32 1.0, %v3690
  %3796 = vrot.lane.b32.xlu0 %v3772, 96
  %v3797 = vpop.permute.xlu0 %3796
  %3798 = vrot.lane.b32.xlu0 %v3773, 96
  %v3799 = vpop.permute.xlu0 %3798
  %3800 = vrot.lane.b32.xlu0 %v3774, 96
  %v3801 = vpop.permute.xlu0 %3800
  %3802 = vrot.lane.b32.xlu0 %v3775, 96
  %v3803 = vpop.permute.xlu0 %3802
  %3804 = vrot.lane.b32.xlu0 %v3776, 96
  %v3805 = vpop.permute.xlu0 %3804
  %3806 = vrot.lane.b32.xlu0 %v3777, 96
  %v3807 = vpop.permute.xlu0 %3806
  %3808 = vrot.lane.b32.xlu0 %v3778, 96
  %v3809 = vpop.permute.xlu0 %3808
  %3810 = vrot.lane.b32.xlu0 %v3779, 96
  %v3811 = vpop.permute.xlu0 %3810
  %v3820 = vmul.f32 %v3780, %v3797
  %v3821 = vmul.f32 %v3781, %v3799
  %v3822 = vmul.f32 %v3782, %v3801
  %v3823 = vmul.f32 %v3783, %v3803
  %v3824 = vmul.f32 %v3784, %v3805
  %v3825 = vmul.f32 %v3785, %v3807
  %v3826 = vmul.f32 %v3786, %v3809
  %v3827 = vmul.f32 %v3787, %v3811
  %v3829 = vrot.slane %v2799, 5
  %v3830 = vrot.slane %v2799, 6
  %v3831 = vrot.slane %v2799, 7
  %v3832 = vrot.slane %v2799, 1
  %v3833 = vrot.slane %v2799, 2
  %v3834 = vrot.slane %v2799, 3
  %v3835 = vrot.slane %v2799, 4
  %3836 = vrot.lane.b32.xlu0 %v3829, 32
  %v3837 = vpop.permute.xlu0 %3836
  %3838 = vrot.lane.b32.xlu0 %v3830, 32
  %v3839 = vpop.permute.xlu0 %3838
  %3840 = vrot.lane.b32.xlu0 %v3831, 32
  %v3841 = vpop.permute.xlu0 %3840
  %3842 = vrot.lane.b32.xlu0 %v2799, 32
  %v3843 = vpop.permute.xlu0 %3842
  %3844 = vrot.lane.b32.xlu0 %v3832, 32
  %v3845 = vpop.permute.xlu0 %3844
  %3846 = vrot.lane.b32.xlu0 %v3833, 32
  %v3847 = vpop.permute.xlu0 %3846
  %3848 = vrot.lane.b32.xlu0 %v3834, 32
  %v3849 = vpop.permute.xlu0 %3848
  %3850 = vrot.lane.b32.xlu0 %v3835, 32
  %v3851 = vpop.permute.xlu0 %3850
  %v3860 = vmul.f32 %v3585, %v3837
  %v3861 = vmul.f32 %v3600, %v3839
  %v3862 = vmul.f32 %v3615, %v3841
  %v3863 = vmul.f32 %v3630, %v3843
  %v3864 = vmul.f32 %v3645, %v3845
  %v3865 = vmul.f32 %v3660, %v3847
  %v3866 = vmul.f32 %v3675, %v3849
  %v3867 = vmul.f32 %v3690, %v3851
  %v3868 = vadd.f32 %v3820, %v3860
  %v3869 = vadd.f32 %v3821, %v3861
  %v3870 = vadd.f32 %v3822, %v3862
  %v3871 = vadd.f32 %v3823, %v3863
  %v3872 = vadd.f32 %v3824, %v3864
  %v3873 = vadd.f32 %v3825, %v3865
  %v3874 = vadd.f32 %v3826, %v3866
  %v3875 = vadd.f32 %v3827, %v3867
  %3876 = vset.pattern.permute.xlu0 3
  %3877 = vperm.xlu0 %3876, %v545
  %v3878 = vpop.permute.xlu0 %3877
  %vm3879 = vcmp.eq.s32.totalorder %v3878, 1
  %v3888 = vrot.slane %v3868, 3
  %v3889 = vrot.slane %v3869, 2
  %v3890 = vsel %vm559, %v3889, %v3888
  %v3891 = vrot.slane %v3870, 1
  %v3892 = vsel %vm562, %v3891, %v3890
  %v3893 = vsel %vm565, %v3871, %v3892
  %v3894 = vrot.slane %v3872, 7
  %v3895 = vsel %vm568, %v3894, %v3893
  %v3896 = vrot.slane %v3873, 6
  %v3897 = vsel %vm571, %v3896, %v3895
  %v3898 = vrot.slane %v3874, 5
  %v3899 = vsel %vm574, %v3898, %v3897
  %v3900 = vrot.slane %v3875, 4
  %v3901 = vsel %vm577, %v3900, %v3899
  %3902 = vrot.lane.b32.xlu0 %v3901, 96
  %v3903 = vpop.permute.xlu0 %3902
  %v3905 = vsel %vm3879, %v3903, %v2799
  %v3906 = vsel %vm3879, %v3903, 0.0
  %3907 = vrot.lane.b32.xlu0 %v3522, 32
  %v3908 = vpop.permute.xlu0 %3907
  %3909 = vrot.lane.b32.xlu0 %v3516, 32
  %v3910 = vpop.permute.xlu0 %3909
  %3911 = vrot.lane.b32.xlu0 %v3517, 32
  %v3912 = vpop.permute.xlu0 %3911
  %3913 = vrot.lane.b32.xlu0 %v3518, 32
  %v3914 = vpop.permute.xlu0 %3913
  %3915 = vrot.lane.b32.xlu0 %v3493, 32
  %v3916 = vpop.permute.xlu0 %3915
  %3917 = vrot.lane.b32.xlu0 %v3519, 32
  %v3918 = vpop.permute.xlu0 %3917
  %3919 = vrot.lane.b32.xlu0 %v3520, 32
  %v3920 = vpop.permute.xlu0 %3919
  %3921 = vrot.lane.b32.xlu0 %v3521, 32
  %v3922 = vpop.permute.xlu0 %3921
  %v3931 = vadd.f32 %v3459, %v3908
  %v3932 = vadd.f32 %v3460, %v3910
  %v3933 = vadd.f32 %v3461, %v3912
  %v3934 = vadd.f32 %v3462, %v3914
  %v3935 = vadd.f32 %v3463, %v3916
  %v3936 = vadd.f32 %v3464, %v3918
  %v3937 = vadd.f32 %v3465, %v3920
  %v3938 = vadd.f32 %v3466, %v3922
  %v3939 = vxor.u32 %v3931, 2147483648
  %v3940 = vxor.u32 %v3932, 2147483648
  %v3941 = vxor.u32 %v3933, 2147483648
  %v3942 = vxor.u32 %v3934, 2147483648
  %v3943 = vxor.u32 %v3935, 2147483648
  %v3944 = vxor.u32 %v3936, 2147483648
  %v3945 = vxor.u32 %v3937, 2147483648
  %v3946 = vxor.u32 %v3938, 2147483648
  %v3947 = vmul.f32 %v3939, 1.442695
  %v3948 = vpow.pop %v3947
  %v3949 = vmul.f32 %v3940, 1.442695
  %v3950 = vpow.pop %v3949
  %v3951 = vmul.f32 %v3941, 1.442695
  %v3952 = vpow.pop %v3951
  %v3953 = vmul.f32 %v3942, 1.442695
  %v3954 = vpow.pop %v3953
  %v3955 = vmul.f32 %v3943, 1.442695
  %v3956 = vpow.pop %v3955
  %v3957 = vmul.f32 %v3944, 1.442695
  %v3958 = vpow.pop %v3957
  %v3959 = vmul.f32 %v3945, 1.442695
  %v3960 = vpow.pop %v3959
  %v3961 = vmul.f32 %v3946, 1.442695
  %v3962 = vpow.pop %v3961
  %v3963 = vadd.f32 %v3948, 1.0
  %v3964 = vadd.f32 %v3950, 1.0
  %v3965 = vadd.f32 %v3952, 1.0
  %v3966 = vadd.f32 %v3954, 1.0
  %v3967 = vadd.f32 %v3956, 1.0
  %v3968 = vadd.f32 %v3958, 1.0
  %v3969 = vadd.f32 %v3960, 1.0
  %v3970 = vadd.f32 %v3962, 1.0
  %v3971 = vrcp.pop %v3963
  %v3972 = vmul.f32 %v3963, %v3971
  %v3973 = vsub.f32 1.0, %v3972
  %v3974 = vmul.f32 %v3971, %v3973
  %v3975 = vadd.f32 %v3971, %v3974
  %vm3976 = vweird.f32 %v3963
  %vm3977 = vweird.f32 %v3971
  %vm3978 = vmor %vm3976, %vm3977
  %v3979 = vsel %vm3978, %v3971, %v3975
  %v3980 = vand.u32 2147483647, %v3963
  %vm3981 = vcmp.eq.f32.partialorder %v3980, 8.507059e+37
  %v3982 = vand.u32 %v3963, 2147483648
  %v3983 = vor.u32 1.1754944e-38, %v3982
  %v3984 = vsel %vm3981, %v3983, %v3979
  %v3985 = vmul.f32 1.0, %v3984
  %v3986 = vrcp.pop %v3964
  %v3987 = vmul.f32 %v3964, %v3986
  %v3988 = vsub.f32 1.0, %v3987
  %v3989 = vmul.f32 %v3986, %v3988
  %v3990 = vadd.f32 %v3986, %v3989
  %vm3991 = vweird.f32 %v3964
  %vm3992 = vweird.f32 %v3986
  %vm3993 = vmor %vm3991, %vm3992
  %v3994 = vsel %vm3993, %v3986, %v3990
  %v3995 = vand.u32 2147483647, %v3964
  %vm3996 = vcmp.eq.f32.partialorder %v3995, 8.507059e+37
  %v3997 = vand.u32 %v3964, 2147483648
  %v3998 = vor.u32 1.1754944e-38, %v3997
  %v3999 = vsel %vm3996, %v3998, %v3994
  %v4000 = vmul.f32 1.0, %v3999
  %v4001 = vrcp.pop %v3965
  %v4002 = vmul.f32 %v3965, %v4001
  %v4003 = vsub.f32 1.0, %v4002
  %v4004 = vmul.f32 %v4001, %v4003
  %v4005 = vadd.f32 %v4001, %v4004
  %vm4006 = vweird.f32 %v3965
  %vm4007 = vweird.f32 %v4001
  %vm4008 = vmor %vm4006, %vm4007
  %v4009 = vsel %vm4008, %v4001, %v4005
  %v4010 = vand.u32 2147483647, %v3965
  %vm4011 = vcmp.eq.f32.partialorder %v4010, 8.507059e+37
  %v4012 = vand.u32 %v3965, 2147483648
  %v4013 = vor.u32 1.1754944e-38, %v4012
  %v4014 = vsel %vm4011, %v4013, %v4009
  %v4015 = vmul.f32 1.0, %v4014
  %v4016 = vrcp.pop %v3966
  %v4017 = vmul.f32 %v3966, %v4016
  %v4018 = vsub.f32 1.0, %v4017
  %v4019 = vmul.f32 %v4016, %v4018
  %v4020 = vadd.f32 %v4016, %v4019
  %vm4021 = vweird.f32 %v3966
  %vm4022 = vweird.f32 %v4016
  %vm4023 = vmor %vm4021, %vm4022
  %v4024 = vsel %vm4023, %v4016, %v4020
  %v4025 = vand.u32 2147483647, %v3966
  %vm4026 = vcmp.eq.f32.partialorder %v4025, 8.507059e+37
  %v4027 = vand.u32 %v3966, 2147483648
  %v4028 = vor.u32 1.1754944e-38, %v4027
  %v4029 = vsel %vm4026, %v4028, %v4024
  %v4030 = vmul.f32 1.0, %v4029
  %v4031 = vrcp.pop %v3967
  %v4032 = vmul.f32 %v3967, %v4031
  %v4033 = vsub.f32 1.0, %v4032
  %v4034 = vmul.f32 %v4031, %v4033
  %v4035 = vadd.f32 %v4031, %v4034
  %vm4036 = vweird.f32 %v3967
  %vm4037 = vweird.f32 %v4031
  %vm4038 = vmor %vm4036, %vm4037
  %v4039 = vsel %vm4038, %v4031, %v4035
  %v4040 = vand.u32 2147483647, %v3967
  %vm4041 = vcmp.eq.f32.partialorder %v4040, 8.507059e+37
  %v4042 = vand.u32 %v3967, 2147483648
  %v4043 = vor.u32 1.1754944e-38, %v4042
  %v4044 = vsel %vm4041, %v4043, %v4039
  %v4045 = vmul.f32 1.0, %v4044
  %v4046 = vrcp.pop %v3968
  %v4047 = vmul.f32 %v3968, %v4046
  %v4048 = vsub.f32 1.0, %v4047
  %v4049 = vmul.f32 %v4046, %v4048
  %v4050 = vadd.f32 %v4046, %v4049
  %vm4051 = vweird.f32 %v3968
  %vm4052 = vweird.f32 %v4046
  %vm4053 = vmor %vm4051, %vm4052
  %v4054 = vsel %vm4053, %v4046, %v4050
  %v4055 = vand.u32 2147483647, %v3968
  %vm4056 = vcmp.eq.f32.partialorder %v4055, 8.507059e+37
  %v4057 = vand.u32 %v3968, 2147483648
  %v4058 = vor.u32 1.1754944e-38, %v4057
  %v4059 = vsel %vm4056, %v4058, %v4054
  %v4060 = vmul.f32 1.0, %v4059
  %v4061 = vrcp.pop %v3969
  %v4062 = vmul.f32 %v3969, %v4061
  %v4063 = vsub.f32 1.0, %v4062
  %v4064 = vmul.f32 %v4061, %v4063
  %v4065 = vadd.f32 %v4061, %v4064
  %vm4066 = vweird.f32 %v3969
  %vm4067 = vweird.f32 %v4061
  %vm4068 = vmor %vm4066, %vm4067
  %v4069 = vsel %vm4068, %v4061, %v4065
  %v4070 = vand.u32 2147483647, %v3969
  %vm4071 = vcmp.eq.f32.partialorder %v4070, 8.507059e+37
  %v4072 = vand.u32 %v3969, 2147483648
  %v4073 = vor.u32 1.1754944e-38, %v4072
  %v4074 = vsel %vm4071, %v4073, %v4069
  %v4075 = vmul.f32 1.0, %v4074
  %v4076 = vrcp.pop %v3970
  %v4077 = vmul.f32 %v3970, %v4076
  %v4078 = vsub.f32 1.0, %v4077
  %v4079 = vmul.f32 %v4076, %v4078
  %v4080 = vadd.f32 %v4076, %v4079
  %vm4081 = vweird.f32 %v3970
  %vm4082 = vweird.f32 %v4076
  %vm4083 = vmor %vm4081, %vm4082
  %v4084 = vsel %vm4083, %v4076, %v4080
  %v4085 = vand.u32 2147483647, %v3970
  %vm4086 = vcmp.eq.f32.partialorder %v4085, 8.507059e+37
  %v4087 = vand.u32 %v3970, 2147483648
  %v4088 = vor.u32 1.1754944e-38, %v4087
  %v4089 = vsel %vm4086, %v4088, %v4084
  %v4090 = vmul.f32 1.0, %v4089
  %v4092 = vrot.slane %v3513, 4
  %v4093 = vrot.slane %v3513, 5
  %v4094 = vrot.slane %v3513, 6
  %v4095 = vrot.slane %v3513, 7
  %v4096 = vrot.slane %v3513, 1
  %v4097 = vrot.slane %v3513, 2
  %v4098 = vrot.slane %v3513, 3
  %4099 = vrot.lane.b32.xlu0 %v4092, 32
  %v4100 = vpop.permute.xlu0 %4099
  %4101 = vrot.lane.b32.xlu0 %v4093, 32
  %v4102 = vpop.permute.xlu0 %4101
  %4103 = vrot.lane.b32.xlu0 %v4094, 32
  %v4104 = vpop.permute.xlu0 %4103
  %4105 = vrot.lane.b32.xlu0 %v4095, 32
  %v4106 = vpop.permute.xlu0 %4105
  %4107 = vrot.lane.b32.xlu0 %v3513, 32
  %v4108 = vpop.permute.xlu0 %4107
  %4109 = vrot.lane.b32.xlu0 %v4096, 32
  %v4110 = vpop.permute.xlu0 %4109
  %4111 = vrot.lane.b32.xlu0 %v4097, 32
  %v4112 = vpop.permute.xlu0 %4111
  %4113 = vrot.lane.b32.xlu0 %v4098, 32
  %v4114 = vpop.permute.xlu0 %4113
  %v4123 = vadd.f32 %v3459, %v4100
  %v4124 = vadd.f32 %v3460, %v4102
  %v4125 = vadd.f32 %v3461, %v4104
  %v4126 = vadd.f32 %v3462, %v4106
  %v4127 = vadd.f32 %v3463, %v4108
  %v4128 = vadd.f32 %v3464, %v4110
  %v4129 = vadd.f32 %v3465, %v4112
  %v4130 = vadd.f32 %v3466, %v4114
  %v4131 = vxor.u32 %v4123, 2147483648
  %v4132 = vxor.u32 %v4124, 2147483648
  %v4133 = vxor.u32 %v4125, 2147483648
  %v4134 = vxor.u32 %v4126, 2147483648
  %v4135 = vxor.u32 %v4127, 2147483648
  %v4136 = vxor.u32 %v4128, 2147483648
  %v4137 = vxor.u32 %v4129, 2147483648
  %v4138 = vxor.u32 %v4130, 2147483648
  %v4139 = vmul.f32 %v4131, 1.442695
  %v4140 = vpow.pop %v4139
  %v4141 = vmul.f32 %v4132, 1.442695
  %v4142 = vpow.pop %v4141
  %v4143 = vmul.f32 %v4133, 1.442695
  %v4144 = vpow.pop %v4143
  %v4145 = vmul.f32 %v4134, 1.442695
  %v4146 = vpow.pop %v4145
  %v4147 = vmul.f32 %v4135, 1.442695
  %v4148 = vpow.pop %v4147
  %v4149 = vmul.f32 %v4136, 1.442695
  %v4150 = vpow.pop %v4149
  %v4151 = vmul.f32 %v4137, 1.442695
  %v4152 = vpow.pop %v4151
  %v4153 = vmul.f32 %v4138, 1.442695
  %v4154 = vpow.pop %v4153
  %v4155 = vadd.f32 %v4140, 1.0
  %v4156 = vadd.f32 %v4142, 1.0
  %v4157 = vadd.f32 %v4144, 1.0
  %v4158 = vadd.f32 %v4146, 1.0
  %v4159 = vadd.f32 %v4148, 1.0
  %v4160 = vadd.f32 %v4150, 1.0
  %v4161 = vadd.f32 %v4152, 1.0
  %v4162 = vadd.f32 %v4154, 1.0
  %v4163 = vrcp.pop %v4155
  %v4164 = vmul.f32 %v4155, %v4163
  %v4165 = vsub.f32 1.0, %v4164
  %v4166 = vmul.f32 %v4163, %v4165
  %v4167 = vadd.f32 %v4163, %v4166
  %vm4168 = vweird.f32 %v4155
  %vm4169 = vweird.f32 %v4163
  %vm4170 = vmor %vm4168, %vm4169
  %v4171 = vsel %vm4170, %v4163, %v4167
  %v4172 = vand.u32 2147483647, %v4155
  %vm4173 = vcmp.eq.f32.partialorder %v4172, 8.507059e+37
  %v4174 = vand.u32 %v4155, 2147483648
  %v4175 = vor.u32 1.1754944e-38, %v4174
  %v4176 = vsel %vm4173, %v4175, %v4171
  %v4177 = vmul.f32 1.0, %v4176
  %v4178 = vrcp.pop %v4156
  %v4179 = vmul.f32 %v4156, %v4178
  %v4180 = vsub.f32 1.0, %v4179
  %v4181 = vmul.f32 %v4178, %v4180
  %v4182 = vadd.f32 %v4178, %v4181
  %vm4183 = vweird.f32 %v4156
  %vm4184 = vweird.f32 %v4178
  %vm4185 = vmor %vm4183, %vm4184
  %v4186 = vsel %vm4185, %v4178, %v4182
  %v4187 = vand.u32 2147483647, %v4156
  %vm4188 = vcmp.eq.f32.partialorder %v4187, 8.507059e+37
  %v4189 = vand.u32 %v4156, 2147483648
  %v4190 = vor.u32 1.1754944e-38, %v4189
  %v4191 = vsel %vm4188, %v4190, %v4186
  %v4192 = vmul.f32 1.0, %v4191
  %v4193 = vrcp.pop %v4157
  %v4194 = vmul.f32 %v4157, %v4193
  %v4195 = vsub.f32 1.0, %v4194
  %v4196 = vmul.f32 %v4193, %v4195
  %v4197 = vadd.f32 %v4193, %v4196
  %vm4198 = vweird.f32 %v4157
  %vm4199 = vweird.f32 %v4193
  %vm4200 = vmor %vm4198, %vm4199
  %v4201 = vsel %vm4200, %v4193, %v4197
  %v4202 = vand.u32 2147483647, %v4157
  %vm4203 = vcmp.eq.f32.partialorder %v4202, 8.507059e+37
  %v4204 = vand.u32 %v4157, 2147483648
  %v4205 = vor.u32 1.1754944e-38, %v4204
  %v4206 = vsel %vm4203, %v4205, %v4201
  %v4207 = vmul.f32 1.0, %v4206
  %v4208 = vrcp.pop %v4158
  %v4209 = vmul.f32 %v4158, %v4208
  %v4210 = vsub.f32 1.0, %v4209
  %v4211 = vmul.f32 %v4208, %v4210
  %v4212 = vadd.f32 %v4208, %v4211
  %vm4213 = vweird.f32 %v4158
  %vm4214 = vweird.f32 %v4208
  %vm4215 = vmor %vm4213, %vm4214
  %v4216 = vsel %vm4215, %v4208, %v4212
  %v4217 = vand.u32 2147483647, %v4158
  %vm4218 = vcmp.eq.f32.partialorder %v4217, 8.507059e+37
  %v4219 = vand.u32 %v4158, 2147483648
  %v4220 = vor.u32 1.1754944e-38, %v4219
  %v4221 = vsel %vm4218, %v4220, %v4216
  %v4222 = vmul.f32 1.0, %v4221
  %v4223 = vrcp.pop %v4159
  %v4224 = vmul.f32 %v4159, %v4223
  %v4225 = vsub.f32 1.0, %v4224
  %v4226 = vmul.f32 %v4223, %v4225
  %v4227 = vadd.f32 %v4223, %v4226
  %vm4228 = vweird.f32 %v4159
  %vm4229 = vweird.f32 %v4223
  %vm4230 = vmor %vm4228, %vm4229
  %v4231 = vsel %vm4230, %v4223, %v4227
  %v4232 = vand.u32 2147483647, %v4159
  %vm4233 = vcmp.eq.f32.partialorder %v4232, 8.507059e+37
  %v4234 = vand.u32 %v4159, 2147483648
  %v4235 = vor.u32 1.1754944e-38, %v4234
  %v4236 = vsel %vm4233, %v4235, %v4231
  %v4237 = vmul.f32 1.0, %v4236
  %v4238 = vrcp.pop %v4160
  %v4239 = vmul.f32 %v4160, %v4238
  %v4240 = vsub.f32 1.0, %v4239
  %v4241 = vmul.f32 %v4238, %v4240
  %v4242 = vadd.f32 %v4238, %v4241
  %vm4243 = vweird.f32 %v4160
  %vm4244 = vweird.f32 %v4238
  %vm4245 = vmor %vm4243, %vm4244
  %v4246 = vsel %vm4245, %v4238, %v4242
  %v4247 = vand.u32 2147483647, %v4160
  %vm4248 = vcmp.eq.f32.partialorder %v4247, 8.507059e+37
  %v4249 = vand.u32 %v4160, 2147483648
  %v4250 = vor.u32 1.1754944e-38, %v4249
  %v4251 = vsel %vm4248, %v4250, %v4246
  %v4252 = vmul.f32 1.0, %v4251
  %v4253 = vrcp.pop %v4161
  %v4254 = vmul.f32 %v4161, %v4253
  %v4255 = vsub.f32 1.0, %v4254
  %v4256 = vmul.f32 %v4253, %v4255
  %v4257 = vadd.f32 %v4253, %v4256
  %vm4258 = vweird.f32 %v4161
  %vm4259 = vweird.f32 %v4253
  %vm4260 = vmor %vm4258, %vm4259
  %v4261 = vsel %vm4260, %v4253, %v4257
  %v4262 = vand.u32 2147483647, %v4161
  %vm4263 = vcmp.eq.f32.partialorder %v4262, 8.507059e+37
  %v4264 = vand.u32 %v4161, 2147483648
  %v4265 = vor.u32 1.1754944e-38, %v4264
  %v4266 = vsel %vm4263, %v4265, %v4261
  %v4267 = vmul.f32 1.0, %v4266
  %v4268 = vrcp.pop %v4162
  %v4269 = vmul.f32 %v4162, %v4268
  %v4270 = vsub.f32 1.0, %v4269
  %v4271 = vmul.f32 %v4268, %v4270
  %v4272 = vadd.f32 %v4268, %v4271
  %vm4273 = vweird.f32 %v4162
  %vm4274 = vweird.f32 %v4268
  %vm4275 = vmor %vm4273, %vm4274
  %v4276 = vsel %vm4275, %v4268, %v4272
  %v4277 = vand.u32 2147483647, %v4162
  %vm4278 = vcmp.eq.f32.partialorder %v4277, 8.507059e+37
  %v4279 = vand.u32 %v4162, 2147483648
  %v4280 = vor.u32 1.1754944e-38, %v4279
  %v4281 = vsel %vm4278, %v4280, %v4276
  %v4282 = vmul.f32 1.0, %v4281
  %v4283 = vadd.f32 %v3513, %v961
  %v4285 = vrot.slane %v4283, 4
  %v4286 = vrot.slane %v4283, 5
  %v4287 = vrot.slane %v4283, 6
  %v4288 = vrot.slane %v4283, 7
  %v4289 = vrot.slane %v4283, 1
  %v4290 = vrot.slane %v4283, 2
  %v4291 = vrot.slane %v4283, 3
  %4292 = vrot.lane.b32.xlu0 %v4285, 96
  %v4293 = vpop.permute.xlu0 %4292
  %4294 = vrot.lane.b32.xlu0 %v4286, 96
  %v4295 = vpop.permute.xlu0 %4294
  %4296 = vrot.lane.b32.xlu0 %v4287, 96
  %v4297 = vpop.permute.xlu0 %4296
  %4298 = vrot.lane.b32.xlu0 %v4288, 96
  %v4299 = vpop.permute.xlu0 %4298
  %4300 = vrot.lane.b32.xlu0 %v4283, 96
  %v4301 = vpop.permute.xlu0 %4300
  %4302 = vrot.lane.b32.xlu0 %v4289, 96
  %v4303 = vpop.permute.xlu0 %4302
  %4304 = vrot.lane.b32.xlu0 %v4290, 96
  %v4305 = vpop.permute.xlu0 %4304
  %4306 = vrot.lane.b32.xlu0 %v4291, 96
  %v4307 = vpop.permute.xlu0 %4306
  %v4316 = vmul.f32 %v3985, %v4293
  %v4317 = vmul.f32 %v4000, %v4295
  %v4318 = vmul.f32 %v4015, %v4297
  %v4319 = vmul.f32 %v4030, %v4299
  %v4320 = vmul.f32 %v4045, %v4301
  %v4321 = vmul.f32 %v4060, %v4303
  %v4322 = vmul.f32 %v4075, %v4305
  %v4323 = vmul.f32 %v4090, %v4307
  %4332 = vrot.lane.b32.xlu0 %v4316, 64
  %v4333 = vpop.permute.xlu0 %4332
  %4334 = vrot.lane.b32.xlu0 %v4317, 64
  %v4335 = vpop.permute.xlu0 %4334
  %4336 = vrot.lane.b32.xlu0 %v4318, 64
  %v4337 = vpop.permute.xlu0 %4336
  %4338 = vrot.lane.b32.xlu0 %v4319, 64
  %v4339 = vpop.permute.xlu0 %4338
  %4340 = vrot.lane.b32.xlu0 %v4320, 64
  %v4341 = vpop.permute.xlu0 %4340
  %4342 = vrot.lane.b32.xlu0 %v4321, 64
  %v4343 = vpop.permute.xlu0 %4342
  %4344 = vrot.lane.b32.xlu0 %v4322, 64
  %v4345 = vpop.permute.xlu0 %4344
  %4346 = vrot.lane.b32.xlu0 %v4323, 64
  %v4347 = vpop.permute.xlu0 %4346
  %v4356 = vadd.f32 %v3459, %v4333
  %v4357 = vadd.f32 %v3460, %v4335
  %v4358 = vadd.f32 %v3461, %v4337
  %v4359 = vadd.f32 %v3462, %v4339
  %v4360 = vadd.f32 %v3463, %v4341
  %v4361 = vadd.f32 %v3464, %v4343
  %v4362 = vadd.f32 %v3465, %v4345
  %v4363 = vadd.f32 %v3466, %v4347
  %v4364 = vtanh.pop %v4356
  %v4365 = vtanh.pop %v4357
  %v4366 = vtanh.pop %v4358
  %v4367 = vtanh.pop %v4359
  %v4368 = vtanh.pop %v4360
  %v4369 = vtanh.pop %v4361
  %v4370 = vtanh.pop %v4362
  %v4371 = vtanh.pop %v4363
  %v4372 = vsub.f32 1.0, %v4177
  %v4373 = vsub.f32 1.0, %v4192
  %v4374 = vsub.f32 1.0, %v4207
  %v4375 = vsub.f32 1.0, %v4222
  %v4376 = vsub.f32 1.0, %v4237
  %v4377 = vsub.f32 1.0, %v4252
  %v4378 = vsub.f32 1.0, %v4267
  %v4379 = vsub.f32 1.0, %v4282
  %4388 = vrot.lane.b32.xlu0 %v4364, 96
  %v4389 = vpop.permute.xlu0 %4388
  %4390 = vrot.lane.b32.xlu0 %v4365, 96
  %v4391 = vpop.permute.xlu0 %4390
  %4392 = vrot.lane.b32.xlu0 %v4366, 96
  %v4393 = vpop.permute.xlu0 %4392
  %4394 = vrot.lane.b32.xlu0 %v4367, 96
  %v4395 = vpop.permute.xlu0 %4394
  %4396 = vrot.lane.b32.xlu0 %v4368, 96
  %v4397 = vpop.permute.xlu0 %4396
  %4398 = vrot.lane.b32.xlu0 %v4369, 96
  %v4399 = vpop.permute.xlu0 %4398
  %4400 = vrot.lane.b32.xlu0 %v4370, 96
  %v4401 = vpop.permute.xlu0 %4400
  %4402 = vrot.lane.b32.xlu0 %v4371, 96
  %v4403 = vpop.permute.xlu0 %4402
  %v4412 = vmul.f32 %v4372, %v4389
  %v4413 = vmul.f32 %v4373, %v4391
  %v4414 = vmul.f32 %v4374, %v4393
  %v4415 = vmul.f32 %v4375, %v4395
  %v4416 = vmul.f32 %v4376, %v4397
  %v4417 = vmul.f32 %v4377, %v4399
  %v4418 = vmul.f32 %v4378, %v4401
  %v4419 = vmul.f32 %v4379, %v4403
  %v4420 = vrot.slane %v3387, 4
  %v4421 = vrot.slane %v3387, 5
  %v4422 = vrot.slane %v3387, 6
  %v4423 = vrot.slane %v3387, 7
  %v4424 = vrot.slane %v3387, 1
  %v4425 = vrot.slane %v3387, 2
  %v4426 = vrot.slane %v3387, 3
  %4427 = vrot.lane.b32.xlu0 %v4420, 32
  %v4428 = vpop.permute.xlu0 %4427
  %4429 = vrot.lane.b32.xlu0 %v4421, 32
  %v4430 = vpop.permute.xlu0 %4429
  %4431 = vrot.lane.b32.xlu0 %v4422, 32
  %v4432 = vpop.permute.xlu0 %4431
  %4433 = vrot.lane.b32.xlu0 %v4423, 32
  %v4434 = vpop.permute.xlu0 %4433
  %4435 = vrot.lane.b32.xlu0 %v4424, 32
  %v4436 = vpop.permute.xlu0 %4435
  %4437 = vrot.lane.b32.xlu0 %v4425, 32
  %v4438 = vpop.permute.xlu0 %4437
  %4439 = vrot.lane.b32.xlu0 %v4426, 32
  %v4440 = vpop.permute.xlu0 %4439
  %v4448 = vmul.f32 %v4177, %v4428
  %v4449 = vmul.f32 %v4192, %v4430
  %v4450 = vmul.f32 %v4207, %v4432
  %v4451 = vmul.f32 %v4222, %v4434
  %v4452 = vmul.f32 %v4237, %v3469
  %v4453 = vmul.f32 %v4252, %v4436
  %v4454 = vmul.f32 %v4267, %v4438
  %v4455 = vmul.f32 %v4282, %v4440
  %v4456 = vadd.f32 %v4412, %v4448
  %v4457 = vadd.f32 %v4413, %v4449
  %v4458 = vadd.f32 %v4414, %v4450
  %v4459 = vadd.f32 %v4415, %v4451
  %v4460 = vadd.f32 %v4416, %v4452
  %v4461 = vadd.f32 %v4417, %v4453
  %v4462 = vadd.f32 %v4418, %v4454
  %v4463 = vadd.f32 %v4419, %v4455
  %4464 = vset.pattern.permute.xlu0 4
  %4465 = vperm.xlu0 %4464, %v1144
  %v4466 = vpop.permute.xlu0 %4465
  %vm4467 = vcmp.eq.s32.totalorder %v4466, 1
  %v4476 = vrot.slane %v4456, 4
  %v4477 = vrot.slane %v4457, 3
  %v4478 = vsel %vm559, %v4477, %v4476
  %v4479 = vrot.slane %v4458, 2
  %v4480 = vsel %vm562, %v4479, %v4478
  %v4481 = vrot.slane %v4459, 1
  %v4482 = vsel %vm565, %v4481, %v4480
  %v4483 = vsel %vm568, %v4460, %v4482
  %v4484 = vrot.slane %v4461, 7
  %v4485 = vsel %vm571, %v4484, %v4483
  %v4486 = vrot.slane %v4462, 6
  %v4487 = vsel %vm574, %v4486, %v4485
  %v4488 = vrot.slane %v4463, 5
  %v4489 = vsel %vm577, %v4488, %v4487
  %4490 = vrot.lane.b32.xlu0 %v4489, 96
  %v4491 = vpop.permute.xlu0 %4490
  %v4493 = vsel %vm4467, %v4491, %v3387
  %v4494 = vsel %vm4467, %v4491, 0.0
  %v4496 = vrot.slane %v3906, 1
  %v4497 = vrot.slane %v3906, 2
  %v4498 = vrot.slane %v3906, 3
  %v4499 = vrot.slane %v3906, 4
  %v4500 = vrot.slane %v3906, 5
  %v4501 = vrot.slane %v3906, 6
  %v4502 = vrot.slane %v3906, 7
  %4510 = vst.msk [vmem:[%s6 + $0x3] sm:$0x1] %vm1191, %v3906
  %4511 = vst.msk [vmem:[%s6 + $0xb] sm:$0x1] %vm1191, %v4496
  %4512 = vst.msk [vmem:[%s6 + $0x13] sm:$0x1] %vm1191, %v4497
  %4513 = vst.msk [vmem:[%s6 + $0x1b] sm:$0x1] %vm1191, %v4498
  %4514 = vst.msk [vmem:[%s6 + $0x23] sm:$0x1] %vm1191, %v4499
  %4515 = vst.msk [vmem:[%s6 + $0x2b] sm:$0x1] %vm1191, %v4500
  %4516 = vst.msk [vmem:[%s6 + $0x33] sm:$0x1] %vm1191, %v4501
  %4517 = vst.msk [vmem:[%s6 + $0x3b] sm:$0x1] %vm1191, %v4502
  %v4519 = vrot.slane %v4494, 1
  %v4520 = vrot.slane %v4494, 2
  %v4521 = vrot.slane %v4494, 3
  %v4522 = vrot.slane %v4494, 4
  %v4523 = vrot.slane %v4494, 5
  %v4524 = vrot.slane %v4494, 6
  %v4525 = vrot.slane %v4494, 7
  %4533 = vst.msk [vmem:[%s51 + $0x4] sm:$0x1] %vm1191, %v4494
  %4534 = vst.msk [vmem:[%s51 + $0xc] sm:$0x1] %vm1191, %v4519
  %4535 = vst.msk [vmem:[%s51 + $0x14] sm:$0x1] %vm1191, %v4520
  %4536 = vst.msk [vmem:[%s51 + $0x1c] sm:$0x1] %vm1191, %v4521
  %4537 = vst.msk [vmem:[%s51 + $0x24] sm:$0x1] %vm1191, %v4522
  %4538 = vst.msk [vmem:[%s51 + $0x2c] sm:$0x1] %vm1191, %v4523
  %4539 = vst.msk [vmem:[%s51 + $0x34] sm:$0x1] %vm1191, %v4524
  %4540 = vst.msk [vmem:[%s51 + $0x3c] sm:$0x1] %vm1191, %v4525
  %v4541 = vld [vmem:[%s0] sm:$0x4]
  %v4542 = vld [vmem:[%s0 + $0x4] sm:$0x4]
  %v4543 = vld [vmem:[%s0 + $0x8] sm:$0x4]
  %v4544 = vld [vmem:[%s0 + $0xc] sm:$0x4]
  %v4545 = vld [vmem:[%s0 + $0x10] sm:$0x4]
  %v4546 = vld [vmem:[%s0 + $0x14] sm:$0x4]
  %v4547 = vld [vmem:[%s0 + $0x18] sm:$0x4]
  %v4548 = vld [vmem:[%s0 + $0x1c] sm:$0x4]
  %v4549 = vunpack.c.l.bf16 %v4541
  %v4550 = vunpack.c.l.bf16 %v4542
  %v4551 = vunpack.c.l.bf16 %v4543
  %v4552 = vunpack.c.l.bf16 %v4544
  %v4553 = vunpack.c.l.bf16 %v4545
  %v4554 = vunpack.c.l.bf16 %v4546
  %v4555 = vunpack.c.l.bf16 %v4547
  %v4556 = vunpack.c.l.bf16 %v4548
  %v4557 = vld [vmem:[%s45] sm:$0x2]
  %v4558 = vld [vmem:[%s45 + $0x4] sm:$0x2]
  %v4559 = vld [vmem:[%s45 + $0x8] sm:$0x2]
  %v4560 = vld [vmem:[%s45 + $0xc] sm:$0x2]
  %v4561 = vld [vmem:[%s45 + $0x10] sm:$0x2]
  %v4562 = vld [vmem:[%s45 + $0x14] sm:$0x2]
  %v4563 = vld [vmem:[%s45 + $0x18] sm:$0x2]
  %v4564 = vld [vmem:[%s45 + $0x1c] sm:$0x2]
  %v4565 = vunpack.c.l.bf16 %v4557
  %v4566 = vunpack.c.l.bf16 %v4558
  %v4567 = vunpack.c.l.bf16 %v4559
  %v4568 = vunpack.c.l.bf16 %v4560
  %v4569 = vunpack.c.l.bf16 %v4561
  %v4570 = vunpack.c.l.bf16 %v4562
  %v4571 = vunpack.c.l.bf16 %v4563
  %v4572 = vunpack.c.l.bf16 %v4564
  %4574 = vrot.lane.b32.xlu0 %v4493, 32
  %v4575 = vpop.permute.xlu0 %4574
  %v4577 = vsel %vm135, %v3905, %v4575
  %v4579 = vsel %vm137, %v4577, 0
  %4581 = vmatpush.msra.mxu0 0.0
  %4582 = vmatpush.msra.mxu0 0.0
  %4583 = vmatpush.msra.mxu0 0.0
  %4584 = vmatpush.msra.mxu0 0.0
  %4585 = vmatpush.msra.mxu0 0.0
  %4586 = vmatpush.msra.mxu0 0.0
  %4587 = vmatpush.msra.mxu0 0.0
  %4588 = vmatpush.msra.mxu0 0.0
  %4589 = vmatpush.msra.mxu0 %v75
  %4590 = vmatpush.msra.mxu0 %v73
  %4591 = vmatpush.msra.mxu0 %v71
  %4592 = vmatpush.msra.mxu0 %v69
  %4593 = vmatpush.msra.mxu0 %v67
  %4594 = vmatpush.msra.mxu0 %v65
  %4595 = vmatpush.msra.mxu0 %v63
  %4596 = vmatpush.msra.mxu0 %v61
  %4597 = vmatmul.f32.gmra.mxu0 %v4579
  %v4598 = vpop.f32.mrf.mxu0
  %v4599 = vadd.f32 0.0, %v4598
  %4600 = vdwg.mxu0
  %4601 = vmatpush.msra.mxu0 0.0
  %4602 = vmatpush.msra.mxu0 0.0
  %4603 = vmatpush.msra.mxu0 0.0
  %4604 = vmatpush.msra.mxu0 0.0
  %4605 = vmatpush.msra.mxu0 0.0
  %4606 = vmatpush.msra.mxu0 0.0
  %4607 = vmatpush.msra.mxu0 0.0
  %4608 = vmatpush.msra.mxu0 0.0
  %4609 = vmatpush.msra.mxu0 %v76
  %4610 = vmatpush.msra.mxu0 %v74
  %4611 = vmatpush.msra.mxu0 %v72
  %4612 = vmatpush.msra.mxu0 %v70
  %4613 = vmatpush.msra.mxu0 %v68
  %4614 = vmatpush.msra.mxu0 %v66
  %4615 = vmatpush.msra.mxu0 %v64
  %4616 = vmatpush.msra.mxu0 %v62
  %4617 = vmatmul.f32.gmra.mxu0 %v4579
  %v4618 = vpop.f32.mrf.mxu0
  %v4619 = vadd.f32 0.0, %v4618
  %4620 = vdwg.mxu0
  %v4622 = vrot.slane %v4599, 4
  %v4623 = vrot.slane %v4599, 5
  %v4624 = vrot.slane %v4599, 6
  %v4625 = vrot.slane %v4599, 7
  %v4626 = vrot.slane %v4599, 1
  %v4627 = vrot.slane %v4599, 2
  %v4628 = vrot.slane %v4599, 3
  %v4637 = vadd.f32 %v4549, %v4622
  %v4638 = vadd.f32 %v4550, %v4623
  %v4639 = vadd.f32 %v4551, %v4624
  %v4640 = vadd.f32 %v4552, %v4625
  %v4641 = vadd.f32 %v4553, %v4599
  %v4642 = vadd.f32 %v4554, %v4626
  %v4643 = vadd.f32 %v4555, %v4627
  %v4644 = vadd.f32 %v4556, %v4628
  %v4645 = vxor.u32 %v4637, 2147483648
  %v4646 = vxor.u32 %v4638, 2147483648
  %v4647 = vxor.u32 %v4639, 2147483648
  %v4648 = vxor.u32 %v4640, 2147483648
  %v4649 = vxor.u32 %v4641, 2147483648
  %v4650 = vxor.u32 %v4642, 2147483648
  %v4651 = vxor.u32 %v4643, 2147483648
  %v4652 = vxor.u32 %v4644, 2147483648
  %v4653 = vmul.f32 %v4645, 1.442695
  %v4654 = vpow.pop %v4653
  %v4655 = vmul.f32 %v4646, 1.442695
  %v4656 = vpow.pop %v4655
  %v4657 = vmul.f32 %v4647, 1.442695
  %v4658 = vpow.pop %v4657
  %v4659 = vmul.f32 %v4648, 1.442695
  %v4660 = vpow.pop %v4659
  %v4661 = vmul.f32 %v4649, 1.442695
  %v4662 = vpow.pop %v4661
  %v4663 = vmul.f32 %v4650, 1.442695
  %v4664 = vpow.pop %v4663
  %v4665 = vmul.f32 %v4651, 1.442695
  %v4666 = vpow.pop %v4665
  %v4667 = vmul.f32 %v4652, 1.442695
  %v4668 = vpow.pop %v4667
  %v4669 = vadd.f32 %v4654, 1.0
  %v4670 = vadd.f32 %v4656, 1.0
  %v4671 = vadd.f32 %v4658, 1.0
  %v4672 = vadd.f32 %v4660, 1.0
  %v4673 = vadd.f32 %v4662, 1.0
  %v4674 = vadd.f32 %v4664, 1.0
  %v4675 = vadd.f32 %v4666, 1.0
  %v4676 = vadd.f32 %v4668, 1.0
  %v4677 = vrcp.pop %v4669
  %v4678 = vmul.f32 %v4669, %v4677
  %v4679 = vsub.f32 1.0, %v4678
  %v4680 = vmul.f32 %v4677, %v4679
  %v4681 = vadd.f32 %v4677, %v4680
  %vm4682 = vweird.f32 %v4669
  %vm4683 = vweird.f32 %v4677
  %vm4684 = vmor %vm4682, %vm4683
  %v4685 = vsel %vm4684, %v4677, %v4681
  %v4686 = vand.u32 2147483647, %v4669
  %vm4687 = vcmp.eq.f32.partialorder %v4686, 8.507059e+37
  %v4688 = vand.u32 %v4669, 2147483648
  %v4689 = vor.u32 1.1754944e-38, %v4688
  %v4690 = vsel %vm4687, %v4689, %v4685
  %v4691 = vmul.f32 1.0, %v4690
  %v4692 = vrcp.pop %v4670
  %v4693 = vmul.f32 %v4670, %v4692
  %v4694 = vsub.f32 1.0, %v4693
  %v4695 = vmul.f32 %v4692, %v4694
  %v4696 = vadd.f32 %v4692, %v4695
  %vm4697 = vweird.f32 %v4670
  %vm4698 = vweird.f32 %v4692
  %vm4699 = vmor %vm4697, %vm4698
  %v4700 = vsel %vm4699, %v4692, %v4696
  %v4701 = vand.u32 2147483647, %v4670
  %vm4702 = vcmp.eq.f32.partialorder %v4701, 8.507059e+37
  %v4703 = vand.u32 %v4670, 2147483648
  %v4704 = vor.u32 1.1754944e-38, %v4703
  %v4705 = vsel %vm4702, %v4704, %v4700
  %v4706 = vmul.f32 1.0, %v4705
  %v4707 = vrcp.pop %v4671
  %v4708 = vmul.f32 %v4671, %v4707
  %v4709 = vsub.f32 1.0, %v4708
  %v4710 = vmul.f32 %v4707, %v4709
  %v4711 = vadd.f32 %v4707, %v4710
  %vm4712 = vweird.f32 %v4671
  %vm4713 = vweird.f32 %v4707
  %vm4714 = vmor %vm4712, %vm4713
  %v4715 = vsel %vm4714, %v4707, %v4711
  %v4716 = vand.u32 2147483647, %v4671
  %vm4717 = vcmp.eq.f32.partialorder %v4716, 8.507059e+37
  %v4718 = vand.u32 %v4671, 2147483648
  %v4719 = vor.u32 1.1754944e-38, %v4718
  %v4720 = vsel %vm4717, %v4719, %v4715
  %v4721 = vmul.f32 1.0, %v4720
  %v4722 = vrcp.pop %v4672
  %v4723 = vmul.f32 %v4672, %v4722
  %v4724 = vsub.f32 1.0, %v4723
  %v4725 = vmul.f32 %v4722, %v4724
  %v4726 = vadd.f32 %v4722, %v4725
  %vm4727 = vweird.f32 %v4672
  %vm4728 = vweird.f32 %v4722
  %vm4729 = vmor %vm4727, %vm4728
  %v4730 = vsel %vm4729, %v4722, %v4726
  %v4731 = vand.u32 2147483647, %v4672
  %vm4732 = vcmp.eq.f32.partialorder %v4731, 8.507059e+37
  %v4733 = vand.u32 %v4672, 2147483648
  %v4734 = vor.u32 1.1754944e-38, %v4733
  %v4735 = vsel %vm4732, %v4734, %v4730
  %v4736 = vmul.f32 1.0, %v4735
  %v4737 = vrcp.pop %v4673
  %v4738 = vmul.f32 %v4673, %v4737
  %v4739 = vsub.f32 1.0, %v4738
  %v4740 = vmul.f32 %v4737, %v4739
  %v4741 = vadd.f32 %v4737, %v4740
  %vm4742 = vweird.f32 %v4673
  %vm4743 = vweird.f32 %v4737
  %vm4744 = vmor %vm4742, %vm4743
  %v4745 = vsel %vm4744, %v4737, %v4741
  %v4746 = vand.u32 2147483647, %v4673
  %vm4747 = vcmp.eq.f32.partialorder %v4746, 8.507059e+37
  %v4748 = vand.u32 %v4673, 2147483648
  %v4749 = vor.u32 1.1754944e-38, %v4748
  %v4750 = vsel %vm4747, %v4749, %v4745
  %v4751 = vmul.f32 1.0, %v4750
  %v4752 = vrcp.pop %v4674
  %v4753 = vmul.f32 %v4674, %v4752
  %v4754 = vsub.f32 1.0, %v4753
  %v4755 = vmul.f32 %v4752, %v4754
  %v4756 = vadd.f32 %v4752, %v4755
  %vm4757 = vweird.f32 %v4674
  %vm4758 = vweird.f32 %v4752
  %vm4759 = vmor %vm4757, %vm4758
  %v4760 = vsel %vm4759, %v4752, %v4756
  %v4761 = vand.u32 2147483647, %v4674
  %vm4762 = vcmp.eq.f32.partialorder %v4761, 8.507059e+37
  %v4763 = vand.u32 %v4674, 2147483648
  %v4764 = vor.u32 1.1754944e-38, %v4763
  %v4765 = vsel %vm4762, %v4764, %v4760
  %v4766 = vmul.f32 1.0, %v4765
  %v4767 = vrcp.pop %v4675
  %v4768 = vmul.f32 %v4675, %v4767
  %v4769 = vsub.f32 1.0, %v4768
  %v4770 = vmul.f32 %v4767, %v4769
  %v4771 = vadd.f32 %v4767, %v4770
  %vm4772 = vweird.f32 %v4675
  %vm4773 = vweird.f32 %v4767
  %vm4774 = vmor %vm4772, %vm4773
  %v4775 = vsel %vm4774, %v4767, %v4771
  %v4776 = vand.u32 2147483647, %v4675
  %vm4777 = vcmp.eq.f32.partialorder %v4776, 8.507059e+37
  %v4778 = vand.u32 %v4675, 2147483648
  %v4779 = vor.u32 1.1754944e-38, %v4778
  %v4780 = vsel %vm4777, %v4779, %v4775
  %v4781 = vmul.f32 1.0, %v4780
  %v4782 = vrcp.pop %v4676
  %v4783 = vmul.f32 %v4676, %v4782
  %v4784 = vsub.f32 1.0, %v4783
  %v4785 = vmul.f32 %v4782, %v4784
  %v4786 = vadd.f32 %v4782, %v4785
  %vm4787 = vweird.f32 %v4676
  %vm4788 = vweird.f32 %v4782
  %vm4789 = vmor %vm4787, %vm4788
  %v4790 = vsel %vm4789, %v4782, %v4786
  %v4791 = vand.u32 2147483647, %v4676
  %vm4792 = vcmp.eq.f32.partialorder %v4791, 8.507059e+37
  %v4793 = vand.u32 %v4676, 2147483648
  %v4794 = vor.u32 1.1754944e-38, %v4793
  %v4795 = vsel %vm4792, %v4794, %v4790
  %v4796 = vmul.f32 1.0, %v4795
  %v4797 = vadd.f32 %v4599, %v358
  %v4799 = vrot.slane %v4797, 4
  %v4800 = vrot.slane %v4797, 5
  %v4801 = vrot.slane %v4797, 6
  %v4802 = vrot.slane %v4797, 7
  %v4803 = vrot.slane %v4797, 1
  %v4804 = vrot.slane %v4797, 2
  %v4805 = vrot.slane %v4797, 3
  %4806 = vrot.lane.b32.xlu0 %v4799, 64
  %v4807 = vpop.permute.xlu0 %4806
  %4808 = vrot.lane.b32.xlu0 %v4800, 64
  %v4809 = vpop.permute.xlu0 %4808
  %4810 = vrot.lane.b32.xlu0 %v4801, 64
  %v4811 = vpop.permute.xlu0 %4810
  %4812 = vrot.lane.b32.xlu0 %v4802, 64
  %v4813 = vpop.permute.xlu0 %4812
  %4814 = vrot.lane.b32.xlu0 %v4797, 64
  %v4815 = vpop.permute.xlu0 %4814
  %4816 = vrot.lane.b32.xlu0 %v4803, 64
  %v4817 = vpop.permute.xlu0 %4816
  %4818 = vrot.lane.b32.xlu0 %v4804, 64
  %v4819 = vpop.permute.xlu0 %4818
  %4820 = vrot.lane.b32.xlu0 %v4805, 64
  %v4821 = vpop.permute.xlu0 %4820
  %v4830 = vmul.f32 %v4691, %v4807
  %v4831 = vmul.f32 %v4706, %v4809
  %v4832 = vmul.f32 %v4721, %v4811
  %v4833 = vmul.f32 %v4736, %v4813
  %v4834 = vmul.f32 %v4751, %v4815
  %v4835 = vmul.f32 %v4766, %v4817
  %v4836 = vmul.f32 %v4781, %v4819
  %v4837 = vmul.f32 %v4796, %v4821
  %4846 = vrot.lane.b32.xlu0 %v4830, 64
  %v4847 = vpop.permute.xlu0 %4846
  %4848 = vrot.lane.b32.xlu0 %v4831, 64
  %v4849 = vpop.permute.xlu0 %4848
  %4850 = vrot.lane.b32.xlu0 %v4832, 64
  %v4851 = vpop.permute.xlu0 %4850
  %4852 = vrot.lane.b32.xlu0 %v4833, 64
  %v4853 = vpop.permute.xlu0 %4852
  %4854 = vrot.lane.b32.xlu0 %v4834, 64
  %v4855 = vpop.permute.xlu0 %4854
  %4856 = vrot.lane.b32.xlu0 %v4835, 64
  %v4857 = vpop.permute.xlu0 %4856
  %4858 = vrot.lane.b32.xlu0 %v4836, 64
  %v4859 = vpop.permute.xlu0 %4858
  %4860 = vrot.lane.b32.xlu0 %v4837, 64
  %v4861 = vpop.permute.xlu0 %4860
  %v4870 = vadd.f32 %v4549, %v4847
  %v4871 = vadd.f32 %v4550, %v4849
  %v4872 = vadd.f32 %v4551, %v4851
  %v4873 = vadd.f32 %v4552, %v4853
  %v4874 = vadd.f32 %v4553, %v4855
  %v4875 = vadd.f32 %v4554, %v4857
  %v4876 = vadd.f32 %v4555, %v4859
  %v4877 = vadd.f32 %v4556, %v4861
  %v4878 = vtanh.pop %v4870
  %v4879 = vtanh.pop %v4871
  %v4880 = vtanh.pop %v4872
  %v4881 = vtanh.pop %v4873
  %v4882 = vtanh.pop %v4874
  %v4883 = vtanh.pop %v4875
  %v4884 = vtanh.pop %v4876
  %v4885 = vtanh.pop %v4877
  %v4886 = vsub.f32 1.0, %v4691
  %v4887 = vsub.f32 1.0, %v4706
  %v4888 = vsub.f32 1.0, %v4721
  %v4889 = vsub.f32 1.0, %v4736
  %v4890 = vsub.f32 1.0, %v4751
  %v4891 = vsub.f32 1.0, %v4766
  %v4892 = vsub.f32 1.0, %v4781
  %v4893 = vsub.f32 1.0, %v4796
  %4902 = vrot.lane.b32.xlu0 %v4878, 96
  %v4903 = vpop.permute.xlu0 %4902
  %4904 = vrot.lane.b32.xlu0 %v4879, 96
  %v4905 = vpop.permute.xlu0 %4904
  %4906 = vrot.lane.b32.xlu0 %v4880, 96
  %v4907 = vpop.permute.xlu0 %4906
  %4908 = vrot.lane.b32.xlu0 %v4881, 96
  %v4909 = vpop.permute.xlu0 %4908
  %4910 = vrot.lane.b32.xlu0 %v4882, 96
  %v4911 = vpop.permute.xlu0 %4910
  %4912 = vrot.lane.b32.xlu0 %v4883, 96
  %v4913 = vpop.permute.xlu0 %4912
  %4914 = vrot.lane.b32.xlu0 %v4884, 96
  %v4915 = vpop.permute.xlu0 %4914
  %4916 = vrot.lane.b32.xlu0 %v4885, 96
  %v4917 = vpop.permute.xlu0 %4916
  %v4926 = vmul.f32 %v4886, %v4903
  %v4927 = vmul.f32 %v4887, %v4905
  %v4928 = vmul.f32 %v4888, %v4907
  %v4929 = vmul.f32 %v4889, %v4909
  %v4930 = vmul.f32 %v4890, %v4911
  %v4931 = vmul.f32 %v4891, %v4913
  %v4932 = vmul.f32 %v4892, %v4915
  %v4933 = vmul.f32 %v4893, %v4917
  %v4935 = vrot.slane %v3905, 4
  %v4936 = vrot.slane %v3905, 5
  %v4937 = vrot.slane %v3905, 6
  %v4938 = vrot.slane %v3905, 7
  %v4939 = vrot.slane %v3905, 1
  %v4940 = vrot.slane %v3905, 2
  %v4941 = vrot.slane %v3905, 3
  %4942 = vrot.lane.b32.xlu0 %v4935, 32
  %v4943 = vpop.permute.xlu0 %4942
  %4944 = vrot.lane.b32.xlu0 %v4936, 32
  %v4945 = vpop.permute.xlu0 %4944
  %4946 = vrot.lane.b32.xlu0 %v4937, 32
  %v4947 = vpop.permute.xlu0 %4946
  %4948 = vrot.lane.b32.xlu0 %v4938, 32
  %v4949 = vpop.permute.xlu0 %4948
  %4950 = vrot.lane.b32.xlu0 %v3905, 32
  %v4951 = vpop.permute.xlu0 %4950
  %4952 = vrot.lane.b32.xlu0 %v4939, 32
  %v4953 = vpop.permute.xlu0 %4952
  %4954 = vrot.lane.b32.xlu0 %v4940, 32
  %v4955 = vpop.permute.xlu0 %4954
  %4956 = vrot.lane.b32.xlu0 %v4941, 32
  %v4957 = vpop.permute.xlu0 %4956
  %v4966 = vmul.f32 %v4691, %v4943
  %v4967 = vmul.f32 %v4706, %v4945
  %v4968 = vmul.f32 %v4721, %v4947
  %v4969 = vmul.f32 %v4736, %v4949
  %v4970 = vmul.f32 %v4751, %v4951
  %v4971 = vmul.f32 %v4766, %v4953
  %v4972 = vmul.f32 %v4781, %v4955
  %v4973 = vmul.f32 %v4796, %v4957
  %v4974 = vadd.f32 %v4926, %v4966
  %v4975 = vadd.f32 %v4927, %v4967
  %v4976 = vadd.f32 %v4928, %v4968
  %v4977 = vadd.f32 %v4929, %v4969
  %v4978 = vadd.f32 %v4930, %v4970
  %v4979 = vadd.f32 %v4931, %v4971
  %v4980 = vadd.f32 %v4932, %v4972
  %v4981 = vadd.f32 %v4933, %v4973
  %4982 = vset.pattern.permute.xlu0 4
  %4983 = vperm.xlu0 %4982, %v545
  %v4984 = vpop.permute.xlu0 %4983
  %vm4985 = vcmp.eq.s32.totalorder %v4984, 1
  %v4994 = vrot.slane %v4974, 4
  %v4995 = vrot.slane %v4975, 3
  %v4996 = vsel %vm559, %v4995, %v4994
  %v4997 = vrot.slane %v4976, 2
  %v4998 = vsel %vm562, %v4997, %v4996
  %v4999 = vrot.slane %v4977, 1
  %v5000 = vsel %vm565, %v4999, %v4998
  %v5001 = vsel %vm568, %v4978, %v5000
  %v5002 = vrot.slane %v4979, 7
  %v5003 = vsel %vm571, %v5002, %v5001
  %v5004 = vrot.slane %v4980, 6
  %v5005 = vsel %vm574, %v5004, %v5003
  %v5006 = vrot.slane %v4981, 5
  %v5007 = vsel %vm577, %v5006, %v5005
  %5008 = vrot.lane.b32.xlu0 %v5007, 96
  %v5009 = vpop.permute.xlu0 %5008
  %v5011 = vsel %vm4985, %v5009, %v3905
  %v5012 = vsel %vm4985, %v5009, 0.0
  %5013 = vrot.lane.b32.xlu0 %v4623, 32
  %v5014 = vpop.permute.xlu0 %5013
  %5015 = vrot.lane.b32.xlu0 %v4624, 32
  %v5016 = vpop.permute.xlu0 %5015
  %5017 = vrot.lane.b32.xlu0 %v4625, 32
  %v5018 = vpop.permute.xlu0 %5017
  %5019 = vrot.lane.b32.xlu0 %v4599, 32
  %v5020 = vpop.permute.xlu0 %5019
  %5021 = vrot.lane.b32.xlu0 %v4626, 32
  %v5022 = vpop.permute.xlu0 %5021
  %5023 = vrot.lane.b32.xlu0 %v4627, 32
  %v5024 = vpop.permute.xlu0 %5023
  %5025 = vrot.lane.b32.xlu0 %v4628, 32
  %v5026 = vpop.permute.xlu0 %5025
  %5027 = vrot.lane.b32.xlu0 %v4622, 32
  %v5028 = vpop.permute.xlu0 %5027
  %v5037 = vadd.f32 %v4565, %v5014
  %v5038 = vadd.f32 %v4566, %v5016
  %v5039 = vadd.f32 %v4567, %v5018
  %v5040 = vadd.f32 %v4568, %v5020
  %v5041 = vadd.f32 %v4569, %v5022
  %v5042 = vadd.f32 %v4570, %v5024
  %v5043 = vadd.f32 %v4571, %v5026
  %v5044 = vadd.f32 %v4572, %v5028
  %v5045 = vxor.u32 %v5037, 2147483648
  %v5046 = vxor.u32 %v5038, 2147483648
  %v5047 = vxor.u32 %v5039, 2147483648
  %v5048 = vxor.u32 %v5040, 2147483648
  %v5049 = vxor.u32 %v5041, 2147483648
  %v5050 = vxor.u32 %v5042, 2147483648
  %v5051 = vxor.u32 %v5043, 2147483648
  %v5052 = vxor.u32 %v5044, 2147483648
  %v5053 = vmul.f32 %v5045, 1.442695
  %v5054 = vpow.pop %v5053
  %v5055 = vmul.f32 %v5046, 1.442695
  %v5056 = vpow.pop %v5055
  %v5057 = vmul.f32 %v5047, 1.442695
  %v5058 = vpow.pop %v5057
  %v5059 = vmul.f32 %v5048, 1.442695
  %v5060 = vpow.pop %v5059
  %v5061 = vmul.f32 %v5049, 1.442695
  %v5062 = vpow.pop %v5061
  %v5063 = vmul.f32 %v5050, 1.442695
  %v5064 = vpow.pop %v5063
  %v5065 = vmul.f32 %v5051, 1.442695
  %v5066 = vpow.pop %v5065
  %v5067 = vmul.f32 %v5052, 1.442695
  %v5068 = vpow.pop %v5067
  %v5069 = vadd.f32 %v5054, 1.0
  %v5070 = vadd.f32 %v5056, 1.0
  %v5071 = vadd.f32 %v5058, 1.0
  %v5072 = vadd.f32 %v5060, 1.0
  %v5073 = vadd.f32 %v5062, 1.0
  %v5074 = vadd.f32 %v5064, 1.0
  %v5075 = vadd.f32 %v5066, 1.0
  %v5076 = vadd.f32 %v5068, 1.0
  %v5077 = vrcp.pop %v5069
  %v5078 = vmul.f32 %v5069, %v5077
  %v5079 = vsub.f32 1.0, %v5078
  %v5080 = vmul.f32 %v5077, %v5079
  %v5081 = vadd.f32 %v5077, %v5080
  %vm5082 = vweird.f32 %v5069
  %vm5083 = vweird.f32 %v5077
  %vm5084 = vmor %vm5082, %vm5083
  %v5085 = vsel %vm5084, %v5077, %v5081
  %v5086 = vand.u32 2147483647, %v5069
  %vm5087 = vcmp.eq.f32.partialorder %v5086, 8.507059e+37
  %v5088 = vand.u32 %v5069, 2147483648
  %v5089 = vor.u32 1.1754944e-38, %v5088
  %v5090 = vsel %vm5087, %v5089, %v5085
  %v5091 = vmul.f32 1.0, %v5090
  %v5092 = vrcp.pop %v5070
  %v5093 = vmul.f32 %v5070, %v5092
  %v5094 = vsub.f32 1.0, %v5093
  %v5095 = vmul.f32 %v5092, %v5094
  %v5096 = vadd.f32 %v5092, %v5095
  %vm5097 = vweird.f32 %v5070
  %vm5098 = vweird.f32 %v5092
  %vm5099 = vmor %vm5097, %vm5098
  %v5100 = vsel %vm5099, %v5092, %v5096
  %v5101 = vand.u32 2147483647, %v5070
  %vm5102 = vcmp.eq.f32.partialorder %v5101, 8.507059e+37
  %v5103 = vand.u32 %v5070, 2147483648
  %v5104 = vor.u32 1.1754944e-38, %v5103
  %v5105 = vsel %vm5102, %v5104, %v5100
  %v5106 = vmul.f32 1.0, %v5105
  %v5107 = vrcp.pop %v5071
  %v5108 = vmul.f32 %v5071, %v5107
  %v5109 = vsub.f32 1.0, %v5108
  %v5110 = vmul.f32 %v5107, %v5109
  %v5111 = vadd.f32 %v5107, %v5110
  %vm5112 = vweird.f32 %v5071
  %vm5113 = vweird.f32 %v5107
  %vm5114 = vmor %vm5112, %vm5113
  %v5115 = vsel %vm5114, %v5107, %v5111
  %v5116 = vand.u32 2147483647, %v5071
  %vm5117 = vcmp.eq.f32.partialorder %v5116, 8.507059e+37
  %v5118 = vand.u32 %v5071, 2147483648
  %v5119 = vor.u32 1.1754944e-38, %v5118
  %v5120 = vsel %vm5117, %v5119, %v5115
  %v5121 = vmul.f32 1.0, %v5120
  %v5122 = vrcp.pop %v5072
  %v5123 = vmul.f32 %v5072, %v5122
  %v5124 = vsub.f32 1.0, %v5123
  %v5125 = vmul.f32 %v5122, %v5124
  %v5126 = vadd.f32 %v5122, %v5125
  %vm5127 = vweird.f32 %v5072
  %vm5128 = vweird.f32 %v5122
  %vm5129 = vmor %vm5127, %vm5128
  %v5130 = vsel %vm5129, %v5122, %v5126
  %v5131 = vand.u32 2147483647, %v5072
  %vm5132 = vcmp.eq.f32.partialorder %v5131, 8.507059e+37
  %v5133 = vand.u32 %v5072, 2147483648
  %v5134 = vor.u32 1.1754944e-38, %v5133
  %v5135 = vsel %vm5132, %v5134, %v5130
  %v5136 = vmul.f32 1.0, %v5135
  %v5137 = vrcp.pop %v5073
  %v5138 = vmul.f32 %v5073, %v5137
  %v5139 = vsub.f32 1.0, %v5138
  %v5140 = vmul.f32 %v5137, %v5139
  %v5141 = vadd.f32 %v5137, %v5140
  %vm5142 = vweird.f32 %v5073
  %vm5143 = vweird.f32 %v5137
  %vm5144 = vmor %vm5142, %vm5143
  %v5145 = vsel %vm5144, %v5137, %v5141
  %v5146 = vand.u32 2147483647, %v5073
  %vm5147 = vcmp.eq.f32.partialorder %v5146, 8.507059e+37
  %v5148 = vand.u32 %v5073, 2147483648
  %v5149 = vor.u32 1.1754944e-38, %v5148
  %v5150 = vsel %vm5147, %v5149, %v5145
  %v5151 = vmul.f32 1.0, %v5150
  %v5152 = vrcp.pop %v5074
  %v5153 = vmul.f32 %v5074, %v5152
  %v5154 = vsub.f32 1.0, %v5153
  %v5155 = vmul.f32 %v5152, %v5154
  %v5156 = vadd.f32 %v5152, %v5155
  %vm5157 = vweird.f32 %v5074
  %vm5158 = vweird.f32 %v5152
  %vm5159 = vmor %vm5157, %vm5158
  %v5160 = vsel %vm5159, %v5152, %v5156
  %v5161 = vand.u32 2147483647, %v5074
  %vm5162 = vcmp.eq.f32.partialorder %v5161, 8.507059e+37
  %v5163 = vand.u32 %v5074, 2147483648
  %v5164 = vor.u32 1.1754944e-38, %v5163
  %v5165 = vsel %vm5162, %v5164, %v5160
  %v5166 = vmul.f32 1.0, %v5165
  %v5167 = vrcp.pop %v5075
  %v5168 = vmul.f32 %v5075, %v5167
  %v5169 = vsub.f32 1.0, %v5168
  %v5170 = vmul.f32 %v5167, %v5169
  %v5171 = vadd.f32 %v5167, %v5170
  %vm5172 = vweird.f32 %v5075
  %vm5173 = vweird.f32 %v5167
  %vm5174 = vmor %vm5172, %vm5173
  %v5175 = vsel %vm5174, %v5167, %v5171
  %v5176 = vand.u32 2147483647, %v5075
  %vm5177 = vcmp.eq.f32.partialorder %v5176, 8.507059e+37
  %v5178 = vand.u32 %v5075, 2147483648
  %v5179 = vor.u32 1.1754944e-38, %v5178
  %v5180 = vsel %vm5177, %v5179, %v5175
  %v5181 = vmul.f32 1.0, %v5180
  %v5182 = vrcp.pop %v5076
  %v5183 = vmul.f32 %v5076, %v5182
  %v5184 = vsub.f32 1.0, %v5183
  %v5185 = vmul.f32 %v5182, %v5184
  %v5186 = vadd.f32 %v5182, %v5185
  %vm5187 = vweird.f32 %v5076
  %vm5188 = vweird.f32 %v5182
  %vm5189 = vmor %vm5187, %vm5188
  %v5190 = vsel %vm5189, %v5182, %v5186
  %v5191 = vand.u32 2147483647, %v5076
  %vm5192 = vcmp.eq.f32.partialorder %v5191, 8.507059e+37
  %v5193 = vand.u32 %v5076, 2147483648
  %v5194 = vor.u32 1.1754944e-38, %v5193
  %v5195 = vsel %vm5192, %v5194, %v5190
  %v5196 = vmul.f32 1.0, %v5195
  %v5198 = vrot.slane %v4619, 5
  %v5199 = vrot.slane %v4619, 6
  %v5200 = vrot.slane %v4619, 7
  %v5201 = vrot.slane %v4619, 1
  %v5202 = vrot.slane %v4619, 2
  %v5203 = vrot.slane %v4619, 3
  %v5204 = vrot.slane %v4619, 4
  %5205 = vrot.lane.b32.xlu0 %v5198, 32
  %v5206 = vpop.permute.xlu0 %5205
  %5207 = vrot.lane.b32.xlu0 %v5199, 32
  %v5208 = vpop.permute.xlu0 %5207
  %5209 = vrot.lane.b32.xlu0 %v5200, 32
  %v5210 = vpop.permute.xlu0 %5209
  %5211 = vrot.lane.b32.xlu0 %v4619, 32
  %v5212 = vpop.permute.xlu0 %5211
  %5213 = vrot.lane.b32.xlu0 %v5201, 32
  %v5214 = vpop.permute.xlu0 %5213
  %5215 = vrot.lane.b32.xlu0 %v5202, 32
  %v5216 = vpop.permute.xlu0 %5215
  %5217 = vrot.lane.b32.xlu0 %v5203, 32
  %v5218 = vpop.permute.xlu0 %5217
  %5219 = vrot.lane.b32.xlu0 %v5204, 32
  %v5220 = vpop.permute.xlu0 %5219
  %v5229 = vadd.f32 %v4565, %v5206
  %v5230 = vadd.f32 %v4566, %v5208
  %v5231 = vadd.f32 %v4567, %v5210
  %v5232 = vadd.f32 %v4568, %v5212
  %v5233 = vadd.f32 %v4569, %v5214
  %v5234 = vadd.f32 %v4570, %v5216
  %v5235 = vadd.f32 %v4571, %v5218
  %v5236 = vadd.f32 %v4572, %v5220
  %v5237 = vxor.u32 %v5229, 2147483648
  %v5238 = vxor.u32 %v5230, 2147483648
  %v5239 = vxor.u32 %v5231, 2147483648
  %v5240 = vxor.u32 %v5232, 2147483648
  %v5241 = vxor.u32 %v5233, 2147483648
  %v5242 = vxor.u32 %v5234, 2147483648
  %v5243 = vxor.u32 %v5235, 2147483648
  %v5244 = vxor.u32 %v5236, 2147483648
  %v5245 = vmul.f32 %v5237, 1.442695
  %v5246 = vpow.pop %v5245
  %v5247 = vmul.f32 %v5238, 1.442695
  %v5248 = vpow.pop %v5247
  %v5249 = vmul.f32 %v5239, 1.442695
  %v5250 = vpow.pop %v5249
  %v5251 = vmul.f32 %v5240, 1.442695
  %v5252 = vpow.pop %v5251
  %v5253 = vmul.f32 %v5241, 1.442695
  %v5254 = vpow.pop %v5253
  %v5255 = vmul.f32 %v5242, 1.442695
  %v5256 = vpow.pop %v5255
  %v5257 = vmul.f32 %v5243, 1.442695
  %v5258 = vpow.pop %v5257
  %v5259 = vmul.f32 %v5244, 1.442695
  %v5260 = vpow.pop %v5259
  %v5261 = vadd.f32 %v5246, 1.0
  %v5262 = vadd.f32 %v5248, 1.0
  %v5263 = vadd.f32 %v5250, 1.0
  %v5264 = vadd.f32 %v5252, 1.0
  %v5265 = vadd.f32 %v5254, 1.0
  %v5266 = vadd.f32 %v5256, 1.0
  %v5267 = vadd.f32 %v5258, 1.0
  %v5268 = vadd.f32 %v5260, 1.0
  %v5269 = vrcp.pop %v5261
  %v5270 = vmul.f32 %v5261, %v5269
  %v5271 = vsub.f32 1.0, %v5270
  %v5272 = vmul.f32 %v5269, %v5271
  %v5273 = vadd.f32 %v5269, %v5272
  %vm5274 = vweird.f32 %v5261
  %vm5275 = vweird.f32 %v5269
  %vm5276 = vmor %vm5274, %vm5275
  %v5277 = vsel %vm5276, %v5269, %v5273
  %v5278 = vand.u32 2147483647, %v5261
  %vm5279 = vcmp.eq.f32.partialorder %v5278, 8.507059e+37
  %v5280 = vand.u32 %v5261, 2147483648
  %v5281 = vor.u32 1.1754944e-38, %v5280
  %v5282 = vsel %vm5279, %v5281, %v5277
  %v5283 = vmul.f32 1.0, %v5282
  %v5284 = vrcp.pop %v5262
  %v5285 = vmul.f32 %v5262, %v5284
  %v5286 = vsub.f32 1.0, %v5285
  %v5287 = vmul.f32 %v5284, %v5286
  %v5288 = vadd.f32 %v5284, %v5287
  %vm5289 = vweird.f32 %v5262
  %vm5290 = vweird.f32 %v5284
  %vm5291 = vmor %vm5289, %vm5290
  %v5292 = vsel %vm5291, %v5284, %v5288
  %v5293 = vand.u32 2147483647, %v5262
  %vm5294 = vcmp.eq.f32.partialorder %v5293, 8.507059e+37
  %v5295 = vand.u32 %v5262, 2147483648
  %v5296 = vor.u32 1.1754944e-38, %v5295
  %v5297 = vsel %vm5294, %v5296, %v5292
  %v5298 = vmul.f32 1.0, %v5297
  %v5299 = vrcp.pop %v5263
  %v5300 = vmul.f32 %v5263, %v5299
  %v5301 = vsub.f32 1.0, %v5300
  %v5302 = vmul.f32 %v5299, %v5301
  %v5303 = vadd.f32 %v5299, %v5302
  %vm5304 = vweird.f32 %v5263
  %vm5305 = vweird.f32 %v5299
  %vm5306 = vmor %vm5304, %vm5305
  %v5307 = vsel %vm5306, %v5299, %v5303
  %v5308 = vand.u32 2147483647, %v5263
  %vm5309 = vcmp.eq.f32.partialorder %v5308, 8.507059e+37
  %v5310 = vand.u32 %v5263, 2147483648
  %v5311 = vor.u32 1.1754944e-38, %v5310
  %v5312 = vsel %vm5309, %v5311, %v5307
  %v5313 = vmul.f32 1.0, %v5312
  %v5314 = vrcp.pop %v5264
  %v5315 = vmul.f32 %v5264, %v5314
  %v5316 = vsub.f32 1.0, %v5315
  %v5317 = vmul.f32 %v5314, %v5316
  %v5318 = vadd.f32 %v5314, %v5317
  %vm5319 = vweird.f32 %v5264
  %vm5320 = vweird.f32 %v5314
  %vm5321 = vmor %vm5319, %vm5320
  %v5322 = vsel %vm5321, %v5314, %v5318
  %v5323 = vand.u32 2147483647, %v5264
  %vm5324 = vcmp.eq.f32.partialorder %v5323, 8.507059e+37
  %v5325 = vand.u32 %v5264, 2147483648
  %v5326 = vor.u32 1.1754944e-38, %v5325
  %v5327 = vsel %vm5324, %v5326, %v5322
  %v5328 = vmul.f32 1.0, %v5327
  %v5329 = vrcp.pop %v5265
  %v5330 = vmul.f32 %v5265, %v5329
  %v5331 = vsub.f32 1.0, %v5330
  %v5332 = vmul.f32 %v5329, %v5331
  %v5333 = vadd.f32 %v5329, %v5332
  %vm5334 = vweird.f32 %v5265
  %vm5335 = vweird.f32 %v5329
  %vm5336 = vmor %vm5334, %vm5335
  %v5337 = vsel %vm5336, %v5329, %v5333
  %v5338 = vand.u32 2147483647, %v5265
  %vm5339 = vcmp.eq.f32.partialorder %v5338, 8.507059e+37
  %v5340 = vand.u32 %v5265, 2147483648
  %v5341 = vor.u32 1.1754944e-38, %v5340
  %v5342 = vsel %vm5339, %v5341, %v5337
  %v5343 = vmul.f32 1.0, %v5342
  %v5344 = vrcp.pop %v5266
  %v5345 = vmul.f32 %v5266, %v5344
  %v5346 = vsub.f32 1.0, %v5345
  %v5347 = vmul.f32 %v5344, %v5346
  %v5348 = vadd.f32 %v5344, %v5347
  %vm5349 = vweird.f32 %v5266
  %vm5350 = vweird.f32 %v5344
  %vm5351 = vmor %vm5349, %vm5350
  %v5352 = vsel %vm5351, %v5344, %v5348
  %v5353 = vand.u32 2147483647, %v5266
  %vm5354 = vcmp.eq.f32.partialorder %v5353, 8.507059e+37
  %v5355 = vand.u32 %v5266, 2147483648
  %v5356 = vor.u32 1.1754944e-38, %v5355
  %v5357 = vsel %vm5354, %v5356, %v5352
  %v5358 = vmul.f32 1.0, %v5357
  %v5359 = vrcp.pop %v5267
  %v5360 = vmul.f32 %v5267, %v5359
  %v5361 = vsub.f32 1.0, %v5360
  %v5362 = vmul.f32 %v5359, %v5361
  %v5363 = vadd.f32 %v5359, %v5362
  %vm5364 = vweird.f32 %v5267
  %vm5365 = vweird.f32 %v5359
  %vm5366 = vmor %vm5364, %vm5365
  %v5367 = vsel %vm5366, %v5359, %v5363
  %v5368 = vand.u32 2147483647, %v5267
  %vm5369 = vcmp.eq.f32.partialorder %v5368, 8.507059e+37
  %v5370 = vand.u32 %v5267, 2147483648
  %v5371 = vor.u32 1.1754944e-38, %v5370
  %v5372 = vsel %vm5369, %v5371, %v5367
  %v5373 = vmul.f32 1.0, %v5372
  %v5374 = vrcp.pop %v5268
  %v5375 = vmul.f32 %v5268, %v5374
  %v5376 = vsub.f32 1.0, %v5375
  %v5377 = vmul.f32 %v5374, %v5376
  %v5378 = vadd.f32 %v5374, %v5377
  %vm5379 = vweird.f32 %v5268
  %vm5380 = vweird.f32 %v5374
  %vm5381 = vmor %vm5379, %vm5380
  %v5382 = vsel %vm5381, %v5374, %v5378
  %v5383 = vand.u32 2147483647, %v5268
  %vm5384 = vcmp.eq.f32.partialorder %v5383, 8.507059e+37
  %v5385 = vand.u32 %v5268, 2147483648
  %v5386 = vor.u32 1.1754944e-38, %v5385
  %v5387 = vsel %vm5384, %v5386, %v5382
  %v5388 = vmul.f32 1.0, %v5387
  %v5389 = vadd.f32 %v4619, %v961
  %v5391 = vrot.slane %v5389, 5
  %v5392 = vrot.slane %v5389, 6
  %v5393 = vrot.slane %v5389, 7
  %v5394 = vrot.slane %v5389, 1
  %v5395 = vrot.slane %v5389, 2
  %v5396 = vrot.slane %v5389, 3
  %v5397 = vrot.slane %v5389, 4
  %5398 = vrot.lane.b32.xlu0 %v5391, 96
  %v5399 = vpop.permute.xlu0 %5398
  %5400 = vrot.lane.b32.xlu0 %v5392, 96
  %v5401 = vpop.permute.xlu0 %5400
  %5402 = vrot.lane.b32.xlu0 %v5393, 96
  %v5403 = vpop.permute.xlu0 %5402
  %5404 = vrot.lane.b32.xlu0 %v5389, 96
  %v5405 = vpop.permute.xlu0 %5404
  %5406 = vrot.lane.b32.xlu0 %v5394, 96
  %v5407 = vpop.permute.xlu0 %5406
  %5408 = vrot.lane.b32.xlu0 %v5395, 96
  %v5409 = vpop.permute.xlu0 %5408
  %5410 = vrot.lane.b32.xlu0 %v5396, 96
  %v5411 = vpop.permute.xlu0 %5410
  %5412 = vrot.lane.b32.xlu0 %v5397, 96
  %v5413 = vpop.permute.xlu0 %5412
  %v5422 = vmul.f32 %v5091, %v5399
  %v5423 = vmul.f32 %v5106, %v5401
  %v5424 = vmul.f32 %v5121, %v5403
  %v5425 = vmul.f32 %v5136, %v5405
  %v5426 = vmul.f32 %v5151, %v5407
  %v5427 = vmul.f32 %v5166, %v5409
  %v5428 = vmul.f32 %v5181, %v5411
  %v5429 = vmul.f32 %v5196, %v5413
  %5438 = vrot.lane.b32.xlu0 %v5422, 64
  %v5439 = vpop.permute.xlu0 %5438
  %5440 = vrot.lane.b32.xlu0 %v5423, 64
  %v5441 = vpop.permute.xlu0 %5440
  %5442 = vrot.lane.b32.xlu0 %v5424, 64
  %v5443 = vpop.permute.xlu0 %5442
  %5444 = vrot.lane.b32.xlu0 %v5425, 64
  %v5445 = vpop.permute.xlu0 %5444
  %5446 = vrot.lane.b32.xlu0 %v5426, 64
  %v5447 = vpop.permute.xlu0 %5446
  %5448 = vrot.lane.b32.xlu0 %v5427, 64
  %v5449 = vpop.permute.xlu0 %5448
  %5450 = vrot.lane.b32.xlu0 %v5428, 64
  %v5451 = vpop.permute.xlu0 %5450
  %5452 = vrot.lane.b32.xlu0 %v5429, 64
  %v5453 = vpop.permute.xlu0 %5452
  %v5462 = vadd.f32 %v4565, %v5439
  %v5463 = vadd.f32 %v4566, %v5441
  %v5464 = vadd.f32 %v4567, %v5443
  %v5465 = vadd.f32 %v4568, %v5445
  %v5466 = vadd.f32 %v4569, %v5447
  %v5467 = vadd.f32 %v4570, %v5449
  %v5468 = vadd.f32 %v4571, %v5451
  %v5469 = vadd.f32 %v4572, %v5453
  %v5470 = vtanh.pop %v5462
  %v5471 = vtanh.pop %v5463
  %v5472 = vtanh.pop %v5464
  %v5473 = vtanh.pop %v5465
  %v5474 = vtanh.pop %v5466
  %v5475 = vtanh.pop %v5467
  %v5476 = vtanh.pop %v5468
  %v5477 = vtanh.pop %v5469
  %v5478 = vsub.f32 1.0, %v5283
  %v5479 = vsub.f32 1.0, %v5298
  %v5480 = vsub.f32 1.0, %v5313
  %v5481 = vsub.f32 1.0, %v5328
  %v5482 = vsub.f32 1.0, %v5343
  %v5483 = vsub.f32 1.0, %v5358
  %v5484 = vsub.f32 1.0, %v5373
  %v5485 = vsub.f32 1.0, %v5388
  %5494 = vrot.lane.b32.xlu0 %v5470, 96
  %v5495 = vpop.permute.xlu0 %5494
  %5496 = vrot.lane.b32.xlu0 %v5471, 96
  %v5497 = vpop.permute.xlu0 %5496
  %5498 = vrot.lane.b32.xlu0 %v5472, 96
  %v5499 = vpop.permute.xlu0 %5498
  %5500 = vrot.lane.b32.xlu0 %v5473, 96
  %v5501 = vpop.permute.xlu0 %5500
  %5502 = vrot.lane.b32.xlu0 %v5474, 96
  %v5503 = vpop.permute.xlu0 %5502
  %5504 = vrot.lane.b32.xlu0 %v5475, 96
  %v5505 = vpop.permute.xlu0 %5504
  %5506 = vrot.lane.b32.xlu0 %v5476, 96
  %v5507 = vpop.permute.xlu0 %5506
  %5508 = vrot.lane.b32.xlu0 %v5477, 96
  %v5509 = vpop.permute.xlu0 %5508
  %v5518 = vmul.f32 %v5478, %v5495
  %v5519 = vmul.f32 %v5479, %v5497
  %v5520 = vmul.f32 %v5480, %v5499
  %v5521 = vmul.f32 %v5481, %v5501
  %v5522 = vmul.f32 %v5482, %v5503
  %v5523 = vmul.f32 %v5483, %v5505
  %v5524 = vmul.f32 %v5484, %v5507
  %v5525 = vmul.f32 %v5485, %v5509
  %v5526 = vrot.slane %v4493, 5
  %v5527 = vrot.slane %v4493, 6
  %v5528 = vrot.slane %v4493, 7
  %v5529 = vrot.slane %v4493, 1
  %v5530 = vrot.slane %v4493, 2
  %v5531 = vrot.slane %v4493, 3
  %v5532 = vrot.slane %v4493, 4
  %5533 = vrot.lane.b32.xlu0 %v5526, 32
  %v5534 = vpop.permute.xlu0 %5533
  %5535 = vrot.lane.b32.xlu0 %v5527, 32
  %v5536 = vpop.permute.xlu0 %5535
  %5537 = vrot.lane.b32.xlu0 %v5528, 32
  %v5538 = vpop.permute.xlu0 %5537
  %5539 = vrot.lane.b32.xlu0 %v5529, 32
  %v5540 = vpop.permute.xlu0 %5539
  %5541 = vrot.lane.b32.xlu0 %v5530, 32
  %v5542 = vpop.permute.xlu0 %5541
  %5543 = vrot.lane.b32.xlu0 %v5531, 32
  %v5544 = vpop.permute.xlu0 %5543
  %5545 = vrot.lane.b32.xlu0 %v5532, 32
  %v5546 = vpop.permute.xlu0 %5545
  %v5554 = vmul.f32 %v5283, %v5534
  %v5555 = vmul.f32 %v5298, %v5536
  %v5556 = vmul.f32 %v5313, %v5538
  %v5557 = vmul.f32 %v5328, %v4575
  %v5558 = vmul.f32 %v5343, %v5540
  %v5559 = vmul.f32 %v5358, %v5542
  %v5560 = vmul.f32 %v5373, %v5544
  %v5561 = vmul.f32 %v5388, %v5546
  %v5562 = vadd.f32 %v5518, %v5554
  %v5563 = vadd.f32 %v5519, %v5555
  %v5564 = vadd.f32 %v5520, %v5556
  %v5565 = vadd.f32 %v5521, %v5557
  %v5566 = vadd.f32 %v5522, %v5558
  %v5567 = vadd.f32 %v5523, %v5559
  %v5568 = vadd.f32 %v5524, %v5560
  %v5569 = vadd.f32 %v5525, %v5561
  %5570 = vset.pattern.permute.xlu0 3
  %5571 = vperm.xlu0 %5570, %v1144
  %v5572 = vpop.permute.xlu0 %5571
  %vm5573 = vcmp.eq.s32.totalorder %v5572, 1
  %v5582 = vrot.slane %v5562, 3
  %v5583 = vrot.slane %v5563, 2
  %v5584 = vsel %vm559, %v5583, %v5582
  %v5585 = vrot.slane %v5564, 1
  %v5586 = vsel %vm562, %v5585, %v5584
  %v5587 = vsel %vm565, %v5565, %v5586
  %v5588 = vrot.slane %v5566, 7
  %v5589 = vsel %vm568, %v5588, %v5587
  %v5590 = vrot.slane %v5567, 6
  %v5591 = vsel %vm571, %v5590, %v5589
  %v5592 = vrot.slane %v5568, 5
  %v5593 = vsel %vm574, %v5592, %v5591
  %v5594 = vrot.slane %v5569, 4
  %v5595 = vsel %vm577, %v5594, %v5593
  %5596 = vrot.lane.b32.xlu0 %v5595, 96
  %v5597 = vpop.permute.xlu0 %5596
  %v5599 = vsel %vm5573, %v5597, %v4493
  %v5600 = vsel %vm5573, %v5597, 0.0
  %v5602 = vrot.slane %v5012, 1
  %v5603 = vrot.slane %v5012, 2
  %v5604 = vrot.slane %v5012, 3
  %v5605 = vrot.slane %v5012, 4
  %v5606 = vrot.slane %v5012, 5
  %v5607 = vrot.slane %v5012, 6
  %v5608 = vrot.slane %v5012, 7
  %5616 = vst.msk [vmem:[%s6 + $0x4] sm:$0x1] %vm1191, %v5012
  %5617 = vst.msk [vmem:[%s6 + $0xc] sm:$0x1] %vm1191, %v5602
  %5618 = vst.msk [vmem:[%s6 + $0x14] sm:$0x1] %vm1191, %v5603
  %5619 = vst.msk [vmem:[%s6 + $0x1c] sm:$0x1] %vm1191, %v5604
  %5620 = vst.msk [vmem:[%s6 + $0x24] sm:$0x1] %vm1191, %v5605
  %5621 = vst.msk [vmem:[%s6 + $0x2c] sm:$0x1] %vm1191, %v5606
  %5622 = vst.msk [vmem:[%s6 + $0x34] sm:$0x1] %vm1191, %v5607
  %5623 = vst.msk [vmem:[%s6 + $0x3c] sm:$0x1] %vm1191, %v5608
  %v5625 = vrot.slane %v5600, 1
  %v5626 = vrot.slane %v5600, 2
  %v5627 = vrot.slane %v5600, 3
  %v5628 = vrot.slane %v5600, 4
  %v5629 = vrot.slane %v5600, 5
  %v5630 = vrot.slane %v5600, 6
  %v5631 = vrot.slane %v5600, 7
  %5639 = vst.msk [vmem:[%s51 + $0x3] sm:$0x1] %vm1191, %v5600
  %5640 = vst.msk [vmem:[%s51 + $0xb] sm:$0x1] %vm1191, %v5625
  %5641 = vst.msk [vmem:[%s51 + $0x13] sm:$0x1] %vm1191, %v5626
  %5642 = vst.msk [vmem:[%s51 + $0x1b] sm:$0x1] %vm1191, %v5627
  %5643 = vst.msk [vmem:[%s51 + $0x23] sm:$0x1] %vm1191, %v5628
  %5644 = vst.msk [vmem:[%s51 + $0x2b] sm:$0x1] %vm1191, %v5629
  %5645 = vst.msk [vmem:[%s51 + $0x33] sm:$0x1] %vm1191, %v5630
  %5646 = vst.msk [vmem:[%s51 + $0x3b] sm:$0x1] %vm1191, %v5631
  %v5647 = vld [vmem:[%s0] sm:$0x4]
  %v5648 = vld [vmem:[%s0 + $0x4] sm:$0x4]
  %v5649 = vld [vmem:[%s0 + $0x8] sm:$0x4]
  %v5650 = vld [vmem:[%s0 + $0xc] sm:$0x4]
  %v5651 = vld [vmem:[%s0 + $0x10] sm:$0x4]
  %v5652 = vld [vmem:[%s0 + $0x14] sm:$0x4]
  %v5653 = vld [vmem:[%s0 + $0x18] sm:$0x4]
  %v5654 = vld [vmem:[%s0 + $0x1c] sm:$0x4]
  %v5655 = vunpack.c.l.bf16 %v5647
  %v5656 = vunpack.c.l.bf16 %v5648
  %v5657 = vunpack.c.l.bf16 %v5649
  %v5658 = vunpack.c.l.bf16 %v5650
  %v5659 = vunpack.c.l.bf16 %v5651
  %v5660 = vunpack.c.l.bf16 %v5652
  %v5661 = vunpack.c.l.bf16 %v5653
  %v5662 = vunpack.c.l.bf16 %v5654
  %v5663 = vld [vmem:[%s45] sm:$0x2]
  %v5664 = vld [vmem:[%s45 + $0x4] sm:$0x2]
  %v5665 = vld [vmem:[%s45 + $0x8] sm:$0x2]
  %v5666 = vld [vmem:[%s45 + $0xc] sm:$0x2]
  %v5667 = vld [vmem:[%s45 + $0x10] sm:$0x2]
  %v5668 = vld [vmem:[%s45 + $0x14] sm:$0x2]
  %v5669 = vld [vmem:[%s45 + $0x18] sm:$0x2]
  %v5670 = vld [vmem:[%s45 + $0x1c] sm:$0x2]
  %v5671 = vunpack.c.l.bf16 %v5663
  %v5672 = vunpack.c.l.bf16 %v5664
  %v5673 = vunpack.c.l.bf16 %v5665
  %v5674 = vunpack.c.l.bf16 %v5666
  %v5675 = vunpack.c.l.bf16 %v5667
  %v5676 = vunpack.c.l.bf16 %v5668
  %v5677 = vunpack.c.l.bf16 %v5669
  %v5678 = vunpack.c.l.bf16 %v5670
  %5680 = vrot.lane.b32.xlu0 %v5599, 32
  %v5681 = vpop.permute.xlu0 %5680
  %v5683 = vsel %vm135, %v5011, %v5681
  %v5685 = vsel %vm137, %v5683, 0
  %5687 = vmatpush.msra.mxu0 0.0
  %5688 = vmatpush.msra.mxu0 0.0
  %5689 = vmatpush.msra.mxu0 0.0
  %5690 = vmatpush.msra.mxu0 0.0
  %5691 = vmatpush.msra.mxu0 0.0
  %5692 = vmatpush.msra.mxu0 0.0
  %5693 = vmatpush.msra.mxu0 0.0
  %5694 = vmatpush.msra.mxu0 0.0
  %5695 = vmatpush.msra.mxu0 %v75
  %5696 = vmatpush.msra.mxu0 %v73
  %5697 = vmatpush.msra.mxu0 %v71
  %5698 = vmatpush.msra.mxu0 %v69
  %5699 = vmatpush.msra.mxu0 %v67
  %5700 = vmatpush.msra.mxu0 %v65
  %5701 = vmatpush.msra.mxu0 %v63
  %5702 = vmatpush.msra.mxu0 %v61
  %5703 = vmatmul.f32.gmra.mxu0 %v5685
  %v5704 = vpop.f32.mrf.mxu0
  %v5705 = vadd.f32 0.0, %v5704
  %5706 = vdwg.mxu0
  %5707 = vmatpush.msra.mxu0 0.0
  %5708 = vmatpush.msra.mxu0 0.0
  %5709 = vmatpush.msra.mxu0 0.0
  %5710 = vmatpush.msra.mxu0 0.0
  %5711 = vmatpush.msra.mxu0 0.0
  %5712 = vmatpush.msra.mxu0 0.0
  %5713 = vmatpush.msra.mxu0 0.0
  %5714 = vmatpush.msra.mxu0 0.0
  %5715 = vmatpush.msra.mxu0 %v76
  %5716 = vmatpush.msra.mxu0 %v74
  %5717 = vmatpush.msra.mxu0 %v72
  %5718 = vmatpush.msra.mxu0 %v70
  %5719 = vmatpush.msra.mxu0 %v68
  %5720 = vmatpush.msra.mxu0 %v66
  %5721 = vmatpush.msra.mxu0 %v64
  %5722 = vmatpush.msra.mxu0 %v62
  %5723 = vmatmul.f32.gmra.mxu0 %v5685
  %v5724 = vpop.f32.mrf.mxu0
  %v5725 = vadd.f32 0.0, %v5724
  %5726 = vdwg.mxu0
  %v5728 = vrot.slane %v5705, 3
  %v5729 = vrot.slane %v5705, 4
  %v5730 = vrot.slane %v5705, 5
  %v5731 = vrot.slane %v5705, 6
  %v5732 = vrot.slane %v5705, 7
  %v5733 = vrot.slane %v5705, 1
  %v5734 = vrot.slane %v5705, 2
  %v5743 = vadd.f32 %v5655, %v5728
  %v5744 = vadd.f32 %v5656, %v5729
  %v5745 = vadd.f32 %v5657, %v5730
  %v5746 = vadd.f32 %v5658, %v5731
  %v5747 = vadd.f32 %v5659, %v5732
  %v5748 = vadd.f32 %v5660, %v5705
  %v5749 = vadd.f32 %v5661, %v5733
  %v5750 = vadd.f32 %v5662, %v5734
  %v5751 = vxor.u32 %v5743, 2147483648
  %v5752 = vxor.u32 %v5744, 2147483648
  %v5753 = vxor.u32 %v5745, 2147483648
  %v5754 = vxor.u32 %v5746, 2147483648
  %v5755 = vxor.u32 %v5747, 2147483648
  %v5756 = vxor.u32 %v5748, 2147483648
  %v5757 = vxor.u32 %v5749, 2147483648
  %v5758 = vxor.u32 %v5750, 2147483648
  %v5759 = vmul.f32 %v5751, 1.442695
  %v5760 = vpow.pop %v5759
  %v5761 = vmul.f32 %v5752, 1.442695
  %v5762 = vpow.pop %v5761
  %v5763 = vmul.f32 %v5753, 1.442695
  %v5764 = vpow.pop %v5763
  %v5765 = vmul.f32 %v5754, 1.442695
  %v5766 = vpow.pop %v5765
  %v5767 = vmul.f32 %v5755, 1.442695
  %v5768 = vpow.pop %v5767
  %v5769 = vmul.f32 %v5756, 1.442695
  %v5770 = vpow.pop %v5769
  %v5771 = vmul.f32 %v5757, 1.442695
  %v5772 = vpow.pop %v5771
  %v5773 = vmul.f32 %v5758, 1.442695
  %v5774 = vpow.pop %v5773
  %v5775 = vadd.f32 %v5760, 1.0
  %v5776 = vadd.f32 %v5762, 1.0
  %v5777 = vadd.f32 %v5764, 1.0
  %v5778 = vadd.f32 %v5766, 1.0
  %v5779 = vadd.f32 %v5768, 1.0
  %v5780 = vadd.f32 %v5770, 1.0
  %v5781 = vadd.f32 %v5772, 1.0
  %v5782 = vadd.f32 %v5774, 1.0
  %v5783 = vrcp.pop %v5775
  %v5784 = vmul.f32 %v5775, %v5783
  %v5785 = vsub.f32 1.0, %v5784
  %v5786 = vmul.f32 %v5783, %v5785
  %v5787 = vadd.f32 %v5783, %v5786
  %vm5788 = vweird.f32 %v5775
  %vm5789 = vweird.f32 %v5783
  %vm5790 = vmor %vm5788, %vm5789
  %v5791 = vsel %vm5790, %v5783, %v5787
  %v5792 = vand.u32 2147483647, %v5775
  %vm5793 = vcmp.eq.f32.partialorder %v5792, 8.507059e+37
  %v5794 = vand.u32 %v5775, 2147483648
  %v5795 = vor.u32 1.1754944e-38, %v5794
  %v5796 = vsel %vm5793, %v5795, %v5791
  %v5797 = vmul.f32 1.0, %v5796
  %v5798 = vrcp.pop %v5776
  %v5799 = vmul.f32 %v5776, %v5798
  %v5800 = vsub.f32 1.0, %v5799
  %v5801 = vmul.f32 %v5798, %v5800
  %v5802 = vadd.f32 %v5798, %v5801
  %vm5803 = vweird.f32 %v5776
  %vm5804 = vweird.f32 %v5798
  %vm5805 = vmor %vm5803, %vm5804
  %v5806 = vsel %vm5805, %v5798, %v5802
  %v5807 = vand.u32 2147483647, %v5776
  %vm5808 = vcmp.eq.f32.partialorder %v5807, 8.507059e+37
  %v5809 = vand.u32 %v5776, 2147483648
  %v5810 = vor.u32 1.1754944e-38, %v5809
  %v5811 = vsel %vm5808, %v5810, %v5806
  %v5812 = vmul.f32 1.0, %v5811
  %v5813 = vrcp.pop %v5777
  %v5814 = vmul.f32 %v5777, %v5813
  %v5815 = vsub.f32 1.0, %v5814
  %v5816 = vmul.f32 %v5813, %v5815
  %v5817 = vadd.f32 %v5813, %v5816
  %vm5818 = vweird.f32 %v5777
  %vm5819 = vweird.f32 %v5813
  %vm5820 = vmor %vm5818, %vm5819
  %v5821 = vsel %vm5820, %v5813, %v5817
  %v5822 = vand.u32 2147483647, %v5777
  %vm5823 = vcmp.eq.f32.partialorder %v5822, 8.507059e+37
  %v5824 = vand.u32 %v5777, 2147483648
  %v5825 = vor.u32 1.1754944e-38, %v5824
  %v5826 = vsel %vm5823, %v5825, %v5821
  %v5827 = vmul.f32 1.0, %v5826
  %v5828 = vrcp.pop %v5778
  %v5829 = vmul.f32 %v5778, %v5828
  %v5830 = vsub.f32 1.0, %v5829
  %v5831 = vmul.f32 %v5828, %v5830
  %v5832 = vadd.f32 %v5828, %v5831
  %vm5833 = vweird.f32 %v5778
  %vm5834 = vweird.f32 %v5828
  %vm5835 = vmor %vm5833, %vm5834
  %v5836 = vsel %vm5835, %v5828, %v5832
  %v5837 = vand.u32 2147483647, %v5778
  %vm5838 = vcmp.eq.f32.partialorder %v5837, 8.507059e+37
  %v5839 = vand.u32 %v5778, 2147483648
  %v5840 = vor.u32 1.1754944e-38, %v5839
  %v5841 = vsel %vm5838, %v5840, %v5836
  %v5842 = vmul.f32 1.0, %v5841
  %v5843 = vrcp.pop %v5779
  %v5844 = vmul.f32 %v5779, %v5843
  %v5845 = vsub.f32 1.0, %v5844
  %v5846 = vmul.f32 %v5843, %v5845
  %v5847 = vadd.f32 %v5843, %v5846
  %vm5848 = vweird.f32 %v5779
  %vm5849 = vweird.f32 %v5843
  %vm5850 = vmor %vm5848, %vm5849
  %v5851 = vsel %vm5850, %v5843, %v5847
  %v5852 = vand.u32 2147483647, %v5779
  %vm5853 = vcmp.eq.f32.partialorder %v5852, 8.507059e+37
  %v5854 = vand.u32 %v5779, 2147483648
  %v5855 = vor.u32 1.1754944e-38, %v5854
  %v5856 = vsel %vm5853, %v5855, %v5851
  %v5857 = vmul.f32 1.0, %v5856
  %v5858 = vrcp.pop %v5780
  %v5859 = vmul.f32 %v5780, %v5858
  %v5860 = vsub.f32 1.0, %v5859
  %v5861 = vmul.f32 %v5858, %v5860
  %v5862 = vadd.f32 %v5858, %v5861
  %vm5863 = vweird.f32 %v5780
  %vm5864 = vweird.f32 %v5858
  %vm5865 = vmor %vm5863, %vm5864
  %v5866 = vsel %vm5865, %v5858, %v5862
  %v5867 = vand.u32 2147483647, %v5780
  %vm5868 = vcmp.eq.f32.partialorder %v5867, 8.507059e+37
  %v5869 = vand.u32 %v5780, 2147483648
  %v5870 = vor.u32 1.1754944e-38, %v5869
  %v5871 = vsel %vm5868, %v5870, %v5866
  %v5872 = vmul.f32 1.0, %v5871
  %v5873 = vrcp.pop %v5781
  %v5874 = vmul.f32 %v5781, %v5873
  %v5875 = vsub.f32 1.0, %v5874
  %v5876 = vmul.f32 %v5873, %v5875
  %v5877 = vadd.f32 %v5873, %v5876
  %vm5878 = vweird.f32 %v5781
  %vm5879 = vweird.f32 %v5873
  %vm5880 = vmor %vm5878, %vm5879
  %v5881 = vsel %vm5880, %v5873, %v5877
  %v5882 = vand.u32 2147483647, %v5781
  %vm5883 = vcmp.eq.f32.partialorder %v5882, 8.507059e+37
  %v5884 = vand.u32 %v5781, 2147483648
  %v5885 = vor.u32 1.1754944e-38, %v5884
  %v5886 = vsel %vm5883, %v5885, %v5881
  %v5887 = vmul.f32 1.0, %v5886
  %v5888 = vrcp.pop %v5782
  %v5889 = vmul.f32 %v5782, %v5888
  %v5890 = vsub.f32 1.0, %v5889
  %v5891 = vmul.f32 %v5888, %v5890
  %v5892 = vadd.f32 %v5888, %v5891
  %vm5893 = vweird.f32 %v5782
  %vm5894 = vweird.f32 %v5888
  %vm5895 = vmor %vm5893, %vm5894
  %v5896 = vsel %vm5895, %v5888, %v5892
  %v5897 = vand.u32 2147483647, %v5782
  %vm5898 = vcmp.eq.f32.partialorder %v5897, 8.507059e+37
  %v5899 = vand.u32 %v5782, 2147483648
  %v5900 = vor.u32 1.1754944e-38, %v5899
  %v5901 = vsel %vm5898, %v5900, %v5896
  %v5902 = vmul.f32 1.0, %v5901
  %v5903 = vadd.f32 %v5705, %v358
  %v5905 = vrot.slane %v5903, 3
  %v5906 = vrot.slane %v5903, 4
  %v5907 = vrot.slane %v5903, 5
  %v5908 = vrot.slane %v5903, 6
  %v5909 = vrot.slane %v5903, 7
  %v5910 = vrot.slane %v5903, 1
  %v5911 = vrot.slane %v5903, 2
  %5912 = vrot.lane.b32.xlu0 %v5905, 64
  %v5913 = vpop.permute.xlu0 %5912
  %5914 = vrot.lane.b32.xlu0 %v5906, 64
  %v5915 = vpop.permute.xlu0 %5914
  %5916 = vrot.lane.b32.xlu0 %v5907, 64
  %v5917 = vpop.permute.xlu0 %5916
  %5918 = vrot.lane.b32.xlu0 %v5908, 64
  %v5919 = vpop.permute.xlu0 %5918
  %5920 = vrot.lane.b32.xlu0 %v5909, 64
  %v5921 = vpop.permute.xlu0 %5920
  %5922 = vrot.lane.b32.xlu0 %v5903, 64
  %v5923 = vpop.permute.xlu0 %5922
  %5924 = vrot.lane.b32.xlu0 %v5910, 64
  %v5925 = vpop.permute.xlu0 %5924
  %5926 = vrot.lane.b32.xlu0 %v5911, 64
  %v5927 = vpop.permute.xlu0 %5926
  %v5936 = vmul.f32 %v5797, %v5913
  %v5937 = vmul.f32 %v5812, %v5915
  %v5938 = vmul.f32 %v5827, %v5917
  %v5939 = vmul.f32 %v5842, %v5919
  %v5940 = vmul.f32 %v5857, %v5921
  %v5941 = vmul.f32 %v5872, %v5923
  %v5942 = vmul.f32 %v5887, %v5925
  %v5943 = vmul.f32 %v5902, %v5927
  %5952 = vrot.lane.b32.xlu0 %v5936, 64
  %v5953 = vpop.permute.xlu0 %5952
  %5954 = vrot.lane.b32.xlu0 %v5937, 64
  %v5955 = vpop.permute.xlu0 %5954
  %5956 = vrot.lane.b32.xlu0 %v5938, 64
  %v5957 = vpop.permute.xlu0 %5956
  %5958 = vrot.lane.b32.xlu0 %v5939, 64
  %v5959 = vpop.permute.xlu0 %5958
  %5960 = vrot.lane.b32.xlu0 %v5940, 64
  %v5961 = vpop.permute.xlu0 %5960
  %5962 = vrot.lane.b32.xlu0 %v5941, 64
  %v5963 = vpop.permute.xlu0 %5962
  %5964 = vrot.lane.b32.xlu0 %v5942, 64
  %v5965 = vpop.permute.xlu0 %5964
  %5966 = vrot.lane.b32.xlu0 %v5943, 64
  %v5967 = vpop.permute.xlu0 %5966
  %v5976 = vadd.f32 %v5655, %v5953
  %v5977 = vadd.f32 %v5656, %v5955
  %v5978 = vadd.f32 %v5657, %v5957
  %v5979 = vadd.f32 %v5658, %v5959
  %v5980 = vadd.f32 %v5659, %v5961
  %v5981 = vadd.f32 %v5660, %v5963
  %v5982 = vadd.f32 %v5661, %v5965
  %v5983 = vadd.f32 %v5662, %v5967
  %v5984 = vtanh.pop %v5976
  %v5985 = vtanh.pop %v5977
  %v5986 = vtanh.pop %v5978
  %v5987 = vtanh.pop %v5979
  %v5988 = vtanh.pop %v5980
  %v5989 = vtanh.pop %v5981
  %v5990 = vtanh.pop %v5982
  %v5991 = vtanh.pop %v5983
  %v5992 = vsub.f32 1.0, %v5797
  %v5993 = vsub.f32 1.0, %v5812
  %v5994 = vsub.f32 1.0, %v5827
  %v5995 = vsub.f32 1.0, %v5842
  %v5996 = vsub.f32 1.0, %v5857
  %v5997 = vsub.f32 1.0, %v5872
  %v5998 = vsub.f32 1.0, %v5887
  %v5999 = vsub.f32 1.0, %v5902
  %6008 = vrot.lane.b32.xlu0 %v5984, 96
  %v6009 = vpop.permute.xlu0 %6008
  %6010 = vrot.lane.b32.xlu0 %v5985, 96
  %v6011 = vpop.permute.xlu0 %6010
  %6012 = vrot.lane.b32.xlu0 %v5986, 96
  %v6013 = vpop.permute.xlu0 %6012
  %6014 = vrot.lane.b32.xlu0 %v5987, 96
  %v6015 = vpop.permute.xlu0 %6014
  %6016 = vrot.lane.b32.xlu0 %v5988, 96
  %v6017 = vpop.permute.xlu0 %6016
  %6018 = vrot.lane.b32.xlu0 %v5989, 96
  %v6019 = vpop.permute.xlu0 %6018
  %6020 = vrot.lane.b32.xlu0 %v5990, 96
  %v6021 = vpop.permute.xlu0 %6020
  %6022 = vrot.lane.b32.xlu0 %v5991, 96
  %v6023 = vpop.permute.xlu0 %6022
  %v6032 = vmul.f32 %v5992, %v6009
  %v6033 = vmul.f32 %v5993, %v6011
  %v6034 = vmul.f32 %v5994, %v6013
  %v6035 = vmul.f32 %v5995, %v6015
  %v6036 = vmul.f32 %v5996, %v6017
  %v6037 = vmul.f32 %v5997, %v6019
  %v6038 = vmul.f32 %v5998, %v6021
  %v6039 = vmul.f32 %v5999, %v6023
  %v6041 = vrot.slane %v5011, 3
  %v6042 = vrot.slane %v5011, 4
  %v6043 = vrot.slane %v5011, 5
  %v6044 = vrot.slane %v5011, 6
  %v6045 = vrot.slane %v5011, 7
  %v6046 = vrot.slane %v5011, 1
  %v6047 = vrot.slane %v5011, 2
  %6048 = vrot.lane.b32.xlu0 %v6041, 32
  %v6049 = vpop.permute.xlu0 %6048
  %6050 = vrot.lane.b32.xlu0 %v6042, 32
  %v6051 = vpop.permute.xlu0 %6050
  %6052 = vrot.lane.b32.xlu0 %v6043, 32
  %v6053 = vpop.permute.xlu0 %6052
  %6054 = vrot.lane.b32.xlu0 %v6044, 32
  %v6055 = vpop.permute.xlu0 %6054
  %6056 = vrot.lane.b32.xlu0 %v6045, 32
  %v6057 = vpop.permute.xlu0 %6056
  %6058 = vrot.lane.b32.xlu0 %v5011, 32
  %v6059 = vpop.permute.xlu0 %6058
  %6060 = vrot.lane.b32.xlu0 %v6046, 32
  %v6061 = vpop.permute.xlu0 %6060
  %6062 = vrot.lane.b32.xlu0 %v6047, 32
  %v6063 = vpop.permute.xlu0 %6062
  %v6072 = vmul.f32 %v5797, %v6049
  %v6073 = vmul.f32 %v5812, %v6051
  %v6074 = vmul.f32 %v5827, %v6053
  %v6075 = vmul.f32 %v5842, %v6055
  %v6076 = vmul.f32 %v5857, %v6057
  %v6077 = vmul.f32 %v5872, %v6059
  %v6078 = vmul.f32 %v5887, %v6061
  %v6079 = vmul.f32 %v5902, %v6063
  %v6080 = vadd.f32 %v6032, %v6072
  %v6081 = vadd.f32 %v6033, %v6073
  %v6082 = vadd.f32 %v6034, %v6074
  %v6083 = vadd.f32 %v6035, %v6075
  %v6084 = vadd.f32 %v6036, %v6076
  %v6085 = vadd.f32 %v6037, %v6077
  %v6086 = vadd.f32 %v6038, %v6078
  %v6087 = vadd.f32 %v6039, %v6079
  %6088 = vset.pattern.permute.xlu0 5
  %6089 = vperm.xlu0 %6088, %v545
  %v6090 = vpop.permute.xlu0 %6089
  %vm6091 = vcmp.eq.s32.totalorder %v6090, 1
  %v6100 = vrot.slane %v6080, 5
  %v6101 = vrot.slane %v6081, 4
  %v6102 = vsel %vm559, %v6101, %v6100
  %v6103 = vrot.slane %v6082, 3
  %v6104 = vsel %vm562, %v6103, %v6102
  %v6105 = vrot.slane %v6083, 2
  %v6106 = vsel %vm565, %v6105, %v6104
  %v6107 = vrot.slane %v6084, 1
  %v6108 = vsel %vm568, %v6107, %v6106
  %v6109 = vsel %vm571, %v6085, %v6108
  %v6110 = vrot.slane %v6086, 7
  %v6111 = vsel %vm574, %v6110, %v6109
  %v6112 = vrot.slane %v6087, 6
  %v6113 = vsel %vm577, %v6112, %v6111
  %6114 = vrot.lane.b32.xlu0 %v6113, 96
  %v6115 = vpop.permute.xlu0 %6114
  %v6117 = vsel %vm6091, %v6115, %v5011
  %v6118 = vsel %vm6091, %v6115, 0.0
  %6119 = vrot.lane.b32.xlu0 %v5731, 32
  %v6120 = vpop.permute.xlu0 %6119
  %6121 = vrot.lane.b32.xlu0 %v5732, 32
  %v6122 = vpop.permute.xlu0 %6121
  %6123 = vrot.lane.b32.xlu0 %v5705, 32
  %v6124 = vpop.permute.xlu0 %6123
  %6125 = vrot.lane.b32.xlu0 %v5733, 32
  %v6126 = vpop.permute.xlu0 %6125
  %6127 = vrot.lane.b32.xlu0 %v5734, 32
  %v6128 = vpop.permute.xlu0 %6127
  %6129 = vrot.lane.b32.xlu0 %v5728, 32
  %v6130 = vpop.permute.xlu0 %6129
  %6131 = vrot.lane.b32.xlu0 %v5729, 32
  %v6132 = vpop.permute.xlu0 %6131
  %6133 = vrot.lane.b32.xlu0 %v5730, 32
  %v6134 = vpop.permute.xlu0 %6133
  %v6143 = vadd.f32 %v5671, %v6120
  %v6144 = vadd.f32 %v5672, %v6122
  %v6145 = vadd.f32 %v5673, %v6124
  %v6146 = vadd.f32 %v5674, %v6126
  %v6147 = vadd.f32 %v5675, %v6128
  %v6148 = vadd.f32 %v5676, %v6130
  %v6149 = vadd.f32 %v5677, %v6132
  %v6150 = vadd.f32 %v5678, %v6134
  %v6151 = vxor.u32 %v6143, 2147483648
  %v6152 = vxor.u32 %v6144, 2147483648
  %v6153 = vxor.u32 %v6145, 2147483648
  %v6154 = vxor.u32 %v6146, 2147483648
  %v6155 = vxor.u32 %v6147, 2147483648
  %v6156 = vxor.u32 %v6148, 2147483648
  %v6157 = vxor.u32 %v6149, 2147483648
  %v6158 = vxor.u32 %v6150, 2147483648
  %v6159 = vmul.f32 %v6151, 1.442695
  %v6160 = vpow.pop %v6159
  %v6161 = vmul.f32 %v6152, 1.442695
  %v6162 = vpow.pop %v6161
  %v6163 = vmul.f32 %v6153, 1.442695
  %v6164 = vpow.pop %v6163
  %v6165 = vmul.f32 %v6154, 1.442695
  %v6166 = vpow.pop %v6165
  %v6167 = vmul.f32 %v6155, 1.442695
  %v6168 = vpow.pop %v6167
  %v6169 = vmul.f32 %v6156, 1.442695
  %v6170 = vpow.pop %v6169
  %v6171 = vmul.f32 %v6157, 1.442695
  %v6172 = vpow.pop %v6171
  %v6173 = vmul.f32 %v6158, 1.442695
  %v6174 = vpow.pop %v6173
  %v6175 = vadd.f32 %v6160, 1.0
  %v6176 = vadd.f32 %v6162, 1.0
  %v6177 = vadd.f32 %v6164, 1.0
  %v6178 = vadd.f32 %v6166, 1.0
  %v6179 = vadd.f32 %v6168, 1.0
  %v6180 = vadd.f32 %v6170, 1.0
  %v6181 = vadd.f32 %v6172, 1.0
  %v6182 = vadd.f32 %v6174, 1.0
  %v6183 = vrcp.pop %v6175
  %v6184 = vmul.f32 %v6175, %v6183
  %v6185 = vsub.f32 1.0, %v6184
  %v6186 = vmul.f32 %v6183, %v6185
  %v6187 = vadd.f32 %v6183, %v6186
  %vm6188 = vweird.f32 %v6175
  %vm6189 = vweird.f32 %v6183
  %vm6190 = vmor %vm6188, %vm6189
  %v6191 = vsel %vm6190, %v6183, %v6187
  %v6192 = vand.u32 2147483647, %v6175
  %vm6193 = vcmp.eq.f32.partialorder %v6192, 8.507059e+37
  %v6194 = vand.u32 %v6175, 2147483648
  %v6195 = vor.u32 1.1754944e-38, %v6194
  %v6196 = vsel %vm6193, %v6195, %v6191
  %v6197 = vmul.f32 1.0, %v6196
  %v6198 = vrcp.pop %v6176
  %v6199 = vmul.f32 %v6176, %v6198
  %v6200 = vsub.f32 1.0, %v6199
  %v6201 = vmul.f32 %v6198, %v6200
  %v6202 = vadd.f32 %v6198, %v6201
  %vm6203 = vweird.f32 %v6176
  %vm6204 = vweird.f32 %v6198
  %vm6205 = vmor %vm6203, %vm6204
  %v6206 = vsel %vm6205, %v6198, %v6202
  %v6207 = vand.u32 2147483647, %v6176
  %vm6208 = vcmp.eq.f32.partialorder %v6207, 8.507059e+37
  %v6209 = vand.u32 %v6176, 2147483648
  %v6210 = vor.u32 1.1754944e-38, %v6209
  %v6211 = vsel %vm6208, %v6210, %v6206
  %v6212 = vmul.f32 1.0, %v6211
  %v6213 = vrcp.pop %v6177
  %v6214 = vmul.f32 %v6177, %v6213
  %v6215 = vsub.f32 1.0, %v6214
  %v6216 = vmul.f32 %v6213, %v6215
  %v6217 = vadd.f32 %v6213, %v6216
  %vm6218 = vweird.f32 %v6177
  %vm6219 = vweird.f32 %v6213
  %vm6220 = vmor %vm6218, %vm6219
  %v6221 = vsel %vm6220, %v6213, %v6217
  %v6222 = vand.u32 2147483647, %v6177
  %vm6223 = vcmp.eq.f32.partialorder %v6222, 8.507059e+37
  %v6224 = vand.u32 %v6177, 2147483648
  %v6225 = vor.u32 1.1754944e-38, %v6224
  %v6226 = vsel %vm6223, %v6225, %v6221
  %v6227 = vmul.f32 1.0, %v6226
  %v6228 = vrcp.pop %v6178
  %v6229 = vmul.f32 %v6178, %v6228
  %v6230 = vsub.f32 1.0, %v6229
  %v6231 = vmul.f32 %v6228, %v6230
  %v6232 = vadd.f32 %v6228, %v6231
  %vm6233 = vweird.f32 %v6178
  %vm6234 = vweird.f32 %v6228
  %vm6235 = vmor %vm6233, %vm6234
  %v6236 = vsel %vm6235, %v6228, %v6232
  %v6237 = vand.u32 2147483647, %v6178
  %vm6238 = vcmp.eq.f32.partialorder %v6237, 8.507059e+37
  %v6239 = vand.u32 %v6178, 2147483648
  %v6240 = vor.u32 1.1754944e-38, %v6239
  %v6241 = vsel %vm6238, %v6240, %v6236
  %v6242 = vmul.f32 1.0, %v6241
  %v6243 = vrcp.pop %v6179
  %v6244 = vmul.f32 %v6179, %v6243
  %v6245 = vsub.f32 1.0, %v6244
  %v6246 = vmul.f32 %v6243, %v6245
  %v6247 = vadd.f32 %v6243, %v6246
  %vm6248 = vweird.f32 %v6179
  %vm6249 = vweird.f32 %v6243
  %vm6250 = vmor %vm6248, %vm6249
  %v6251 = vsel %vm6250, %v6243, %v6247
  %v6252 = vand.u32 2147483647, %v6179
  %vm6253 = vcmp.eq.f32.partialorder %v6252, 8.507059e+37
  %v6254 = vand.u32 %v6179, 2147483648
  %v6255 = vor.u32 1.1754944e-38, %v6254
  %v6256 = vsel %vm6253, %v6255, %v6251
  %v6257 = vmul.f32 1.0, %v6256
  %v6258 = vrcp.pop %v6180
  %v6259 = vmul.f32 %v6180, %v6258
  %v6260 = vsub.f32 1.0, %v6259
  %v6261 = vmul.f32 %v6258, %v6260
  %v6262 = vadd.f32 %v6258, %v6261
  %vm6263 = vweird.f32 %v6180
  %vm6264 = vweird.f32 %v6258
  %vm6265 = vmor %vm6263, %vm6264
  %v6266 = vsel %vm6265, %v6258, %v6262
  %v6267 = vand.u32 2147483647, %v6180
  %vm6268 = vcmp.eq.f32.partialorder %v6267, 8.507059e+37
  %v6269 = vand.u32 %v6180, 2147483648
  %v6270 = vor.u32 1.1754944e-38, %v6269
  %v6271 = vsel %vm6268, %v6270, %v6266
  %v6272 = vmul.f32 1.0, %v6271
  %v6273 = vrcp.pop %v6181
  %v6274 = vmul.f32 %v6181, %v6273
  %v6275 = vsub.f32 1.0, %v6274
  %v6276 = vmul.f32 %v6273, %v6275
  %v6277 = vadd.f32 %v6273, %v6276
  %vm6278 = vweird.f32 %v6181
  %vm6279 = vweird.f32 %v6273
  %vm6280 = vmor %vm6278, %vm6279
  %v6281 = vsel %vm6280, %v6273, %v6277
  %v6282 = vand.u32 2147483647, %v6181
  %vm6283 = vcmp.eq.f32.partialorder %v6282, 8.507059e+37
  %v6284 = vand.u32 %v6181, 2147483648
  %v6285 = vor.u32 1.1754944e-38, %v6284
  %v6286 = vsel %vm6283, %v6285, %v6281
  %v6287 = vmul.f32 1.0, %v6286
  %v6288 = vrcp.pop %v6182
  %v6289 = vmul.f32 %v6182, %v6288
  %v6290 = vsub.f32 1.0, %v6289
  %v6291 = vmul.f32 %v6288, %v6290
  %v6292 = vadd.f32 %v6288, %v6291
  %vm6293 = vweird.f32 %v6182
  %vm6294 = vweird.f32 %v6288
  %vm6295 = vmor %vm6293, %vm6294
  %v6296 = vsel %vm6295, %v6288, %v6292
  %v6297 = vand.u32 2147483647, %v6182
  %vm6298 = vcmp.eq.f32.partialorder %v6297, 8.507059e+37
  %v6299 = vand.u32 %v6182, 2147483648
  %v6300 = vor.u32 1.1754944e-38, %v6299
  %v6301 = vsel %vm6298, %v6300, %v6296
  %v6302 = vmul.f32 1.0, %v6301
  %v6304 = vrot.slane %v5725, 6
  %v6305 = vrot.slane %v5725, 7
  %v6306 = vrot.slane %v5725, 1
  %v6307 = vrot.slane %v5725, 2
  %v6308 = vrot.slane %v5725, 3
  %v6309 = vrot.slane %v5725, 4
  %v6310 = vrot.slane %v5725, 5
  %6311 = vrot.lane.b32.xlu0 %v6304, 32
  %v6312 = vpop.permute.xlu0 %6311
  %6313 = vrot.lane.b32.xlu0 %v6305, 32
  %v6314 = vpop.permute.xlu0 %6313
  %6315 = vrot.lane.b32.xlu0 %v5725, 32
  %v6316 = vpop.permute.xlu0 %6315
  %6317 = vrot.lane.b32.xlu0 %v6306, 32
  %v6318 = vpop.permute.xlu0 %6317
  %6319 = vrot.lane.b32.xlu0 %v6307, 32
  %v6320 = vpop.permute.xlu0 %6319
  %6321 = vrot.lane.b32.xlu0 %v6308, 32
  %v6322 = vpop.permute.xlu0 %6321
  %6323 = vrot.lane.b32.xlu0 %v6309, 32
  %v6324 = vpop.permute.xlu0 %6323
  %6325 = vrot.lane.b32.xlu0 %v6310, 32
  %v6326 = vpop.permute.xlu0 %6325
  %v6335 = vadd.f32 %v5671, %v6312
  %v6336 = vadd.f32 %v5672, %v6314
  %v6337 = vadd.f32 %v5673, %v6316
  %v6338 = vadd.f32 %v5674, %v6318
  %v6339 = vadd.f32 %v5675, %v6320
  %v6340 = vadd.f32 %v5676, %v6322
  %v6341 = vadd.f32 %v5677, %v6324
  %v6342 = vadd.f32 %v5678, %v6326
  %v6343 = vxor.u32 %v6335, 2147483648
  %v6344 = vxor.u32 %v6336, 2147483648
  %v6345 = vxor.u32 %v6337, 2147483648
  %v6346 = vxor.u32 %v6338, 2147483648
  %v6347 = vxor.u32 %v6339, 2147483648
  %v6348 = vxor.u32 %v6340, 2147483648
  %v6349 = vxor.u32 %v6341, 2147483648
  %v6350 = vxor.u32 %v6342, 2147483648
  %v6351 = vmul.f32 %v6343, 1.442695
  %v6352 = vpow.pop %v6351
  %v6353 = vmul.f32 %v6344, 1.442695
  %v6354 = vpow.pop %v6353
  %v6355 = vmul.f32 %v6345, 1.442695
  %v6356 = vpow.pop %v6355
  %v6357 = vmul.f32 %v6346, 1.442695
  %v6358 = vpow.pop %v6357
  %v6359 = vmul.f32 %v6347, 1.442695
  %v6360 = vpow.pop %v6359
  %v6361 = vmul.f32 %v6348, 1.442695
  %v6362 = vpow.pop %v6361
  %v6363 = vmul.f32 %v6349, 1.442695
  %v6364 = vpow.pop %v6363
  %v6365 = vmul.f32 %v6350, 1.442695
  %v6366 = vpow.pop %v6365
  %v6367 = vadd.f32 %v6352, 1.0
  %v6368 = vadd.f32 %v6354, 1.0
  %v6369 = vadd.f32 %v6356, 1.0
  %v6370 = vadd.f32 %v6358, 1.0
  %v6371 = vadd.f32 %v6360, 1.0
  %v6372 = vadd.f32 %v6362, 1.0
  %v6373 = vadd.f32 %v6364, 1.0
  %v6374 = vadd.f32 %v6366, 1.0
  %v6375 = vrcp.pop %v6367
  %v6376 = vmul.f32 %v6367, %v6375
  %v6377 = vsub.f32 1.0, %v6376
  %v6378 = vmul.f32 %v6375, %v6377
  %v6379 = vadd.f32 %v6375, %v6378
  %vm6380 = vweird.f32 %v6367
  %vm6381 = vweird.f32 %v6375
  %vm6382 = vmor %vm6380, %vm6381
  %v6383 = vsel %vm6382, %v6375, %v6379
  %v6384 = vand.u32 2147483647, %v6367
  %vm6385 = vcmp.eq.f32.partialorder %v6384, 8.507059e+37
  %v6386 = vand.u32 %v6367, 2147483648
  %v6387 = vor.u32 1.1754944e-38, %v6386
  %v6388 = vsel %vm6385, %v6387, %v6383
  %v6389 = vmul.f32 1.0, %v6388
  %v6390 = vrcp.pop %v6368
  %v6391 = vmul.f32 %v6368, %v6390
  %v6392 = vsub.f32 1.0, %v6391
  %v6393 = vmul.f32 %v6390, %v6392
  %v6394 = vadd.f32 %v6390, %v6393
  %vm6395 = vweird.f32 %v6368
  %vm6396 = vweird.f32 %v6390
  %vm6397 = vmor %vm6395, %vm6396
  %v6398 = vsel %vm6397, %v6390, %v6394
  %v6399 = vand.u32 2147483647, %v6368
  %vm6400 = vcmp.eq.f32.partialorder %v6399, 8.507059e+37
  %v6401 = vand.u32 %v6368, 2147483648
  %v6402 = vor.u32 1.1754944e-38, %v6401
  %v6403 = vsel %vm6400, %v6402, %v6398
  %v6404 = vmul.f32 1.0, %v6403
  %v6405 = vrcp.pop %v6369
  %v6406 = vmul.f32 %v6369, %v6405
  %v6407 = vsub.f32 1.0, %v6406
  %v6408 = vmul.f32 %v6405, %v6407
  %v6409 = vadd.f32 %v6405, %v6408
  %vm6410 = vweird.f32 %v6369
  %vm6411 = vweird.f32 %v6405
  %vm6412 = vmor %vm6410, %vm6411
  %v6413 = vsel %vm6412, %v6405, %v6409
  %v6414 = vand.u32 2147483647, %v6369
  %vm6415 = vcmp.eq.f32.partialorder %v6414, 8.507059e+37
  %v6416 = vand.u32 %v6369, 2147483648
  %v6417 = vor.u32 1.1754944e-38, %v6416
  %v6418 = vsel %vm6415, %v6417, %v6413
  %v6419 = vmul.f32 1.0, %v6418
  %v6420 = vrcp.pop %v6370
  %v6421 = vmul.f32 %v6370, %v6420
  %v6422 = vsub.f32 1.0, %v6421
  %v6423 = vmul.f32 %v6420, %v6422
  %v6424 = vadd.f32 %v6420, %v6423
  %vm6425 = vweird.f32 %v6370
  %vm6426 = vweird.f32 %v6420
  %vm6427 = vmor %vm6425, %vm6426
  %v6428 = vsel %vm6427, %v6420, %v6424
  %v6429 = vand.u32 2147483647, %v6370
  %vm6430 = vcmp.eq.f32.partialorder %v6429, 8.507059e+37
  %v6431 = vand.u32 %v6370, 2147483648
  %v6432 = vor.u32 1.1754944e-38, %v6431
  %v6433 = vsel %vm6430, %v6432, %v6428
  %v6434 = vmul.f32 1.0, %v6433
  %v6435 = vrcp.pop %v6371
  %v6436 = vmul.f32 %v6371, %v6435
  %v6437 = vsub.f32 1.0, %v6436
  %v6438 = vmul.f32 %v6435, %v6437
  %v6439 = vadd.f32 %v6435, %v6438
  %vm6440 = vweird.f32 %v6371
  %vm6441 = vweird.f32 %v6435
  %vm6442 = vmor %vm6440, %vm6441
  %v6443 = vsel %vm6442, %v6435, %v6439
  %v6444 = vand.u32 2147483647, %v6371
  %vm6445 = vcmp.eq.f32.partialorder %v6444, 8.507059e+37
  %v6446 = vand.u32 %v6371, 2147483648
  %v6447 = vor.u32 1.1754944e-38, %v6446
  %v6448 = vsel %vm6445, %v6447, %v6443
  %v6449 = vmul.f32 1.0, %v6448
  %v6450 = vrcp.pop %v6372
  %v6451 = vmul.f32 %v6372, %v6450
  %v6452 = vsub.f32 1.0, %v6451
  %v6453 = vmul.f32 %v6450, %v6452
  %v6454 = vadd.f32 %v6450, %v6453
  %vm6455 = vweird.f32 %v6372
  %vm6456 = vweird.f32 %v6450
  %vm6457 = vmor %vm6455, %vm6456
  %v6458 = vsel %vm6457, %v6450, %v6454
  %v6459 = vand.u32 2147483647, %v6372
  %vm6460 = vcmp.eq.f32.partialorder %v6459, 8.507059e+37
  %v6461 = vand.u32 %v6372, 2147483648
  %v6462 = vor.u32 1.1754944e-38, %v6461
  %v6463 = vsel %vm6460, %v6462, %v6458
  %v6464 = vmul.f32 1.0, %v6463
  %v6465 = vrcp.pop %v6373
  %v6466 = vmul.f32 %v6373, %v6465
  %v6467 = vsub.f32 1.0, %v6466
  %v6468 = vmul.f32 %v6465, %v6467
  %v6469 = vadd.f32 %v6465, %v6468
  %vm6470 = vweird.f32 %v6373
  %vm6471 = vweird.f32 %v6465
  %vm6472 = vmor %vm6470, %vm6471
  %v6473 = vsel %vm6472, %v6465, %v6469
  %v6474 = vand.u32 2147483647, %v6373
  %vm6475 = vcmp.eq.f32.partialorder %v6474, 8.507059e+37
  %v6476 = vand.u32 %v6373, 2147483648
  %v6477 = vor.u32 1.1754944e-38, %v6476
  %v6478 = vsel %vm6475, %v6477, %v6473
  %v6479 = vmul.f32 1.0, %v6478
  %v6480 = vrcp.pop %v6374
  %v6481 = vmul.f32 %v6374, %v6480
  %v6482 = vsub.f32 1.0, %v6481
  %v6483 = vmul.f32 %v6480, %v6482
  %v6484 = vadd.f32 %v6480, %v6483
  %vm6485 = vweird.f32 %v6374
  %vm6486 = vweird.f32 %v6480
  %vm6487 = vmor %vm6485, %vm6486
  %v6488 = vsel %vm6487, %v6480, %v6484
  %v6489 = vand.u32 2147483647, %v6374
  %vm6490 = vcmp.eq.f32.partialorder %v6489, 8.507059e+37
  %v6491 = vand.u32 %v6374, 2147483648
  %v6492 = vor.u32 1.1754944e-38, %v6491
  %v6493 = vsel %vm6490, %v6492, %v6488
  %v6494 = vmul.f32 1.0, %v6493
  %v6495 = vadd.f32 %v5725, %v961
  %v6497 = vrot.slane %v6495, 6
  %v6498 = vrot.slane %v6495, 7
  %v6499 = vrot.slane %v6495, 1
  %v6500 = vrot.slane %v6495, 2
  %v6501 = vrot.slane %v6495, 3
  %v6502 = vrot.slane %v6495, 4
  %v6503 = vrot.slane %v6495, 5
  %6504 = vrot.lane.b32.xlu0 %v6497, 96
  %v6505 = vpop.permute.xlu0 %6504
  %6506 = vrot.lane.b32.xlu0 %v6498, 96
  %v6507 = vpop.permute.xlu0 %6506
  %6508 = vrot.lane.b32.xlu0 %v6495, 96
  %v6509 = vpop.permute.xlu0 %6508
  %6510 = vrot.lane.b32.xlu0 %v6499, 96
  %v6511 = vpop.permute.xlu0 %6510
  %6512 = vrot.lane.b32.xlu0 %v6500, 96
  %v6513 = vpop.permute.xlu0 %6512
  %6514 = vrot.lane.b32.xlu0 %v6501, 96
  %v6515 = vpop.permute.xlu0 %6514
  %6516 = vrot.lane.b32.xlu0 %v6502, 96
  %v6517 = vpop.permute.xlu0 %6516
  %6518 = vrot.lane.b32.xlu0 %v6503, 96
  %v6519 = vpop.permute.xlu0 %6518
  %v6528 = vmul.f32 %v6197, %v6505
  %v6529 = vmul.f32 %v6212, %v6507
  %v6530 = vmul.f32 %v6227, %v6509
  %v6531 = vmul.f32 %v6242, %v6511
  %v6532 = vmul.f32 %v6257, %v6513
  %v6533 = vmul.f32 %v6272, %v6515
  %v6534 = vmul.f32 %v6287, %v6517
  %v6535 = vmul.f32 %v6302, %v6519
  %6544 = vrot.lane.b32.xlu0 %v6528, 64
  %v6545 = vpop.permute.xlu0 %6544
  %6546 = vrot.lane.b32.xlu0 %v6529, 64
  %v6547 = vpop.permute.xlu0 %6546
  %6548 = vrot.lane.b32.xlu0 %v6530, 64
  %v6549 = vpop.permute.xlu0 %6548
  %6550 = vrot.lane.b32.xlu0 %v6531, 64
  %v6551 = vpop.permute.xlu0 %6550
  %6552 = vrot.lane.b32.xlu0 %v6532, 64
  %v6553 = vpop.permute.xlu0 %6552
  %6554 = vrot.lane.b32.xlu0 %v6533, 64
  %v6555 = vpop.permute.xlu0 %6554
  %6556 = vrot.lane.b32.xlu0 %v6534, 64
  %v6557 = vpop.permute.xlu0 %6556
  %6558 = vrot.lane.b32.xlu0 %v6535, 64
  %v6559 = vpop.permute.xlu0 %6558
  %v6568 = vadd.f32 %v5671, %v6545
  %v6569 = vadd.f32 %v5672, %v6547
  %v6570 = vadd.f32 %v5673, %v6549
  %v6571 = vadd.f32 %v5674, %v6551
  %v6572 = vadd.f32 %v5675, %v6553
  %v6573 = vadd.f32 %v5676, %v6555
  %v6574 = vadd.f32 %v5677, %v6557
  %v6575 = vadd.f32 %v5678, %v6559
  %v6576 = vtanh.pop %v6568
  %v6577 = vtanh.pop %v6569
  %v6578 = vtanh.pop %v6570
  %v6579 = vtanh.pop %v6571
  %v6580 = vtanh.pop %v6572
  %v6581 = vtanh.pop %v6573
  %v6582 = vtanh.pop %v6574
  %v6583 = vtanh.pop %v6575
  %v6584 = vsub.f32 1.0, %v6389
  %v6585 = vsub.f32 1.0, %v6404
  %v6586 = vsub.f32 1.0, %v6419
  %v6587 = vsub.f32 1.0, %v6434
  %v6588 = vsub.f32 1.0, %v6449
  %v6589 = vsub.f32 1.0, %v6464
  %v6590 = vsub.f32 1.0, %v6479
  %v6591 = vsub.f32 1.0, %v6494
  %6600 = vrot.lane.b32.xlu0 %v6576, 96
  %v6601 = vpop.permute.xlu0 %6600
  %6602 = vrot.lane.b32.xlu0 %v6577, 96
  %v6603 = vpop.permute.xlu0 %6602
  %6604 = vrot.lane.b32.xlu0 %v6578, 96
  %v6605 = vpop.permute.xlu0 %6604
  %6606 = vrot.lane.b32.xlu0 %v6579, 96
  %v6607 = vpop.permute.xlu0 %6606
  %6608 = vrot.lane.b32.xlu0 %v6580, 96
  %v6609 = vpop.permute.xlu0 %6608
  %6610 = vrot.lane.b32.xlu0 %v6581, 96
  %v6611 = vpop.permute.xlu0 %6610
  %6612 = vrot.lane.b32.xlu0 %v6582, 96
  %v6613 = vpop.permute.xlu0 %6612
  %6614 = vrot.lane.b32.xlu0 %v6583, 96
  %v6615 = vpop.permute.xlu0 %6614
  %v6624 = vmul.f32 %v6584, %v6601
  %v6625 = vmul.f32 %v6585, %v6603
  %v6626 = vmul.f32 %v6586, %v6605
  %v6627 = vmul.f32 %v6587, %v6607
  %v6628 = vmul.f32 %v6588, %v6609
  %v6629 = vmul.f32 %v6589, %v6611
  %v6630 = vmul.f32 %v6590, %v6613
  %v6631 = vmul.f32 %v6591, %v6615
  %v6632 = vrot.slane %v5599, 6
  %v6633 = vrot.slane %v5599, 7
  %v6634 = vrot.slane %v5599, 1
  %v6635 = vrot.slane %v5599, 2
  %v6636 = vrot.slane %v5599, 3
  %v6637 = vrot.slane %v5599, 4
  %v6638 = vrot.slane %v5599, 5
  %6639 = vrot.lane.b32.xlu0 %v6632, 32
  %v6640 = vpop.permute.xlu0 %6639
  %6641 = vrot.lane.b32.xlu0 %v6633, 32
  %v6642 = vpop.permute.xlu0 %6641
  %6643 = vrot.lane.b32.xlu0 %v6634, 32
  %v6644 = vpop.permute.xlu0 %6643
  %6645 = vrot.lane.b32.xlu0 %v6635, 32
  %v6646 = vpop.permute.xlu0 %6645
  %6647 = vrot.lane.b32.xlu0 %v6636, 32
  %v6648 = vpop.permute.xlu0 %6647
  %6649 = vrot.lane.b32.xlu0 %v6637, 32
  %v6650 = vpop.permute.xlu0 %6649
  %6651 = vrot.lane.b32.xlu0 %v6638, 32
  %v6652 = vpop.permute.xlu0 %6651
  %v6660 = vmul.f32 %v6389, %v6640
  %v6661 = vmul.f32 %v6404, %v6642
  %v6662 = vmul.f32 %v6419, %v5681
  %v6663 = vmul.f32 %v6434, %v6644
  %v6664 = vmul.f32 %v6449, %v6646
  %v6665 = vmul.f32 %v6464, %v6648
  %v6666 = vmul.f32 %v6479, %v6650
  %v6667 = vmul.f32 %v6494, %v6652
  %v6668 = vadd.f32 %v6624, %v6660
  %v6669 = vadd.f32 %v6625, %v6661
  %v6670 = vadd.f32 %v6626, %v6662
  %v6671 = vadd.f32 %v6627, %v6663
  %v6672 = vadd.f32 %v6628, %v6664
  %v6673 = vadd.f32 %v6629, %v6665
  %v6674 = vadd.f32 %v6630, %v6666
  %v6675 = vadd.f32 %v6631, %v6667
  %6676 = vset.pattern.permute.xlu0 2
  %6677 = vperm.xlu0 %6676, %v1144
  %v6678 = vpop.permute.xlu0 %6677
  %vm6679 = vcmp.eq.s32.totalorder %v6678, 1
  %v6688 = vrot.slane %v6668, 2
  %v6689 = vrot.slane %v6669, 1
  %v6690 = vsel %vm559, %v6689, %v6688
  %v6691 = vsel %vm562, %v6670, %v6690
  %v6692 = vrot.slane %v6671, 7
  %v6693 = vsel %vm565, %v6692, %v6691
  %v6694 = vrot.slane %v6672, 6
  %v6695 = vsel %vm568, %v6694, %v6693
  %v6696 = vrot.slane %v6673, 5
  %v6697 = vsel %vm571, %v6696, %v6695
  %v6698 = vrot.slane %v6674, 4
  %v6699 = vsel %vm574, %v6698, %v6697
  %v6700 = vrot.slane %v6675, 3
  %v6701 = vsel %vm577, %v6700, %v6699
  %6702 = vrot.lane.b32.xlu0 %v6701, 96
  %v6703 = vpop.permute.xlu0 %6702
  %v6705 = vsel %vm6679, %v6703, %v5599
  %v6706 = vsel %vm6679, %v6703, 0.0
  %v6708 = vrot.slane %v6118, 1
  %v6709 = vrot.slane %v6118, 2
  %v6710 = vrot.slane %v6118, 3
  %v6711 = vrot.slane %v6118, 4
  %v6712 = vrot.slane %v6118, 5
  %v6713 = vrot.slane %v6118, 6
  %v6714 = vrot.slane %v6118, 7
  %6722 = vst.msk [vmem:[%s6 + $0x5] sm:$0x1] %vm1191, %v6118
  %6723 = vst.msk [vmem:[%s6 + $0xd] sm:$0x1] %vm1191, %v6708
  %6724 = vst.msk [vmem:[%s6 + $0x15] sm:$0x1] %vm1191, %v6709
  %6725 = vst.msk [vmem:[%s6 + $0x1d] sm:$0x1] %vm1191, %v6710
  %6726 = vst.msk [vmem:[%s6 + $0x25] sm:$0x1] %vm1191, %v6711
  %6727 = vst.msk [vmem:[%s6 + $0x2d] sm:$0x1] %vm1191, %v6712
  %6728 = vst.msk [vmem:[%s6 + $0x35] sm:$0x1] %vm1191, %v6713
  %6729 = vst.msk [vmem:[%s6 + $0x3d] sm:$0x1] %vm1191, %v6714
  %v6731 = vrot.slane %v6706, 1
  %v6732 = vrot.slane %v6706, 2
  %v6733 = vrot.slane %v6706, 3
  %v6734 = vrot.slane %v6706, 4
  %v6735 = vrot.slane %v6706, 5
  %v6736 = vrot.slane %v6706, 6
  %v6737 = vrot.slane %v6706, 7
  %6745 = vst.msk [vmem:[%s51 + $0x2] sm:$0x1] %vm1191, %v6706
  %6746 = vst.msk [vmem:[%s51 + $0xa] sm:$0x1] %vm1191, %v6731
  %6747 = vst.msk [vmem:[%s51 + $0x12] sm:$0x1] %vm1191, %v6732
  %6748 = vst.msk [vmem:[%s51 + $0x1a] sm:$0x1] %vm1191, %v6733
  %6749 = vst.msk [vmem:[%s51 + $0x22] sm:$0x1] %vm1191, %v6734
  %6750 = vst.msk [vmem:[%s51 + $0x2a] sm:$0x1] %vm1191, %v6735
  %6751 = vst.msk [vmem:[%s51 + $0x32] sm:$0x1] %vm1191, %v6736
  %6752 = vst.msk [vmem:[%s51 + $0x3a] sm:$0x1] %vm1191, %v6737
  %v6753 = vld [vmem:[%s0] sm:$0x8]
  %v6754 = vld [vmem:[%s0 + $0x4] sm:$0x8]
  %v6755 = vld [vmem:[%s0 + $0x8] sm:$0x8]
  %v6756 = vld [vmem:[%s0 + $0xc] sm:$0x8]
  %v6757 = vld [vmem:[%s0 + $0x10] sm:$0x8]
  %v6758 = vld [vmem:[%s0 + $0x14] sm:$0x8]
  %v6759 = vld [vmem:[%s0 + $0x18] sm:$0x8]
  %v6760 = vld [vmem:[%s0 + $0x1c] sm:$0x8]
  %v6761 = vunpack.c.l.bf16 %v6753
  %v6762 = vunpack.c.l.bf16 %v6754
  %v6763 = vunpack.c.l.bf16 %v6755
  %v6764 = vunpack.c.l.bf16 %v6756
  %v6765 = vunpack.c.l.bf16 %v6757
  %v6766 = vunpack.c.l.bf16 %v6758
  %v6767 = vunpack.c.l.bf16 %v6759
  %v6768 = vunpack.c.l.bf16 %v6760
  %v6769 = vld [vmem:[%s45] sm:$0x1]
  %v6770 = vld [vmem:[%s45 + $0x4] sm:$0x1]
  %v6771 = vld [vmem:[%s45 + $0x8] sm:$0x1]
  %v6772 = vld [vmem:[%s45 + $0xc] sm:$0x1]
  %v6773 = vld [vmem:[%s45 + $0x10] sm:$0x1]
  %v6774 = vld [vmem:[%s45 + $0x14] sm:$0x1]
  %v6775 = vld [vmem:[%s45 + $0x18] sm:$0x1]
  %v6776 = vld [vmem:[%s45 + $0x1c] sm:$0x1]
  %v6777 = vunpack.c.l.bf16 %v6769
  %v6778 = vunpack.c.l.bf16 %v6770
  %v6779 = vunpack.c.l.bf16 %v6771
  %v6780 = vunpack.c.l.bf16 %v6772
  %v6781 = vunpack.c.l.bf16 %v6773
  %v6782 = vunpack.c.l.bf16 %v6774
  %v6783 = vunpack.c.l.bf16 %v6775
  %v6784 = vunpack.c.l.bf16 %v6776
  %6786 = vrot.lane.b32.xlu0 %v6705, 32
  %v6787 = vpop.permute.xlu0 %6786
  %v6789 = vsel %vm135, %v6117, %v6787
  %v6791 = vsel %vm137, %v6789, 0
  %6793 = vmatpush.msra.mxu0 0.0
  %6794 = vmatpush.msra.mxu0 0.0
  %6795 = vmatpush.msra.mxu0 0.0
  %6796 = vmatpush.msra.mxu0 0.0
  %6797 = vmatpush.msra.mxu0 0.0
  %6798 = vmatpush.msra.mxu0 0.0
  %6799 = vmatpush.msra.mxu0 0.0
  %6800 = vmatpush.msra.mxu0 0.0
  %6801 = vmatpush.msra.mxu0 %v75
  %6802 = vmatpush.msra.mxu0 %v73
  %6803 = vmatpush.msra.mxu0 %v71
  %6804 = vmatpush.msra.mxu0 %v69
  %6805 = vmatpush.msra.mxu0 %v67
  %6806 = vmatpush.msra.mxu0 %v65
  %6807 = vmatpush.msra.mxu0 %v63
  %6808 = vmatpush.msra.mxu0 %v61
  %6809 = vmatmul.f32.gmra.mxu0 %v6791
  %v6810 = vpop.f32.mrf.mxu0
  %v6811 = vadd.f32 0.0, %v6810
  %6812 = vdwg.mxu0
  %6813 = vmatpush.msra.mxu0 0.0
  %6814 = vmatpush.msra.mxu0 0.0
  %6815 = vmatpush.msra.mxu0 0.0
  %6816 = vmatpush.msra.mxu0 0.0
  %6817 = vmatpush.msra.mxu0 0.0
  %6818 = vmatpush.msra.mxu0 0.0
  %6819 = vmatpush.msra.mxu0 0.0
  %6820 = vmatpush.msra.mxu0 0.0
  %6821 = vmatpush.msra.mxu0 %v76
  %6822 = vmatpush.msra.mxu0 %v74
  %6823 = vmatpush.msra.mxu0 %v72
  %6824 = vmatpush.msra.mxu0 %v70
  %6825 = vmatpush.msra.mxu0 %v68
  %6826 = vmatpush.msra.mxu0 %v66
  %6827 = vmatpush.msra.mxu0 %v64
  %6828 = vmatpush.msra.mxu0 %v62
  %6829 = vmatmul.f32.gmra.mxu0 %v6791
  %v6830 = vpop.f32.mrf.mxu0
  %v6831 = vadd.f32 0.0, %v6830
  %6832 = vdwg.mxu0
  %v6834 = vrot.slane %v6811, 2
  %v6835 = vrot.slane %v6811, 3
  %v6836 = vrot.slane %v6811, 4
  %v6837 = vrot.slane %v6811, 5
  %v6838 = vrot.slane %v6811, 6
  %v6839 = vrot.slane %v6811, 7
  %v6840 = vrot.slane %v6811, 1
  %v6849 = vadd.f32 %v6761, %v6834
  %v6850 = vadd.f32 %v6762, %v6835
  %v6851 = vadd.f32 %v6763, %v6836
  %v6852 = vadd.f32 %v6764, %v6837
  %v6853 = vadd.f32 %v6765, %v6838
  %v6854 = vadd.f32 %v6766, %v6839
  %v6855 = vadd.f32 %v6767, %v6811
  %v6856 = vadd.f32 %v6768, %v6840
  %v6857 = vxor.u32 %v6849, 2147483648
  %v6858 = vxor.u32 %v6850, 2147483648
  %v6859 = vxor.u32 %v6851, 2147483648
  %v6860 = vxor.u32 %v6852, 2147483648
  %v6861 = vxor.u32 %v6853, 2147483648
  %v6862 = vxor.u32 %v6854, 2147483648
  %v6863 = vxor.u32 %v6855, 2147483648
  %v6864 = vxor.u32 %v6856, 2147483648
  %v6865 = vmul.f32 %v6857, 1.442695
  %v6866 = vpow.pop %v6865
  %v6867 = vmul.f32 %v6858, 1.442695
  %v6868 = vpow.pop %v6867
  %v6869 = vmul.f32 %v6859, 1.442695
  %v6870 = vpow.pop %v6869
  %v6871 = vmul.f32 %v6860, 1.442695
  %v6872 = vpow.pop %v6871
  %v6873 = vmul.f32 %v6861, 1.442695
  %v6874 = vpow.pop %v6873
  %v6875 = vmul.f32 %v6862, 1.442695
  %v6876 = vpow.pop %v6875
  %v6877 = vmul.f32 %v6863, 1.442695
  %v6878 = vpow.pop %v6877
  %v6879 = vmul.f32 %v6864, 1.442695
  %v6880 = vpow.pop %v6879
  %v6881 = vadd.f32 %v6866, 1.0
  %v6882 = vadd.f32 %v6868, 1.0
  %v6883 = vadd.f32 %v6870, 1.0
  %v6884 = vadd.f32 %v6872, 1.0
  %v6885 = vadd.f32 %v6874, 1.0
  %v6886 = vadd.f32 %v6876, 1.0
  %v6887 = vadd.f32 %v6878, 1.0
  %v6888 = vadd.f32 %v6880, 1.0
  %v6889 = vrcp.pop %v6881
  %v6890 = vmul.f32 %v6881, %v6889
  %v6891 = vsub.f32 1.0, %v6890
  %v6892 = vmul.f32 %v6889, %v6891
  %v6893 = vadd.f32 %v6889, %v6892
  %vm6894 = vweird.f32 %v6881
  %vm6895 = vweird.f32 %v6889
  %vm6896 = vmor %vm6894, %vm6895
  %v6897 = vsel %vm6896, %v6889, %v6893
  %v6898 = vand.u32 2147483647, %v6881
  %vm6899 = vcmp.eq.f32.partialorder %v6898, 8.507059e+37
  %v6900 = vand.u32 %v6881, 2147483648
  %v6901 = vor.u32 1.1754944e-38, %v6900
  %v6902 = vsel %vm6899, %v6901, %v6897
  %v6903 = vmul.f32 1.0, %v6902
  %v6904 = vrcp.pop %v6882
  %v6905 = vmul.f32 %v6882, %v6904
  %v6906 = vsub.f32 1.0, %v6905
  %v6907 = vmul.f32 %v6904, %v6906
  %v6908 = vadd.f32 %v6904, %v6907
  %vm6909 = vweird.f32 %v6882
  %vm6910 = vweird.f32 %v6904
  %vm6911 = vmor %vm6909, %vm6910
  %v6912 = vsel %vm6911, %v6904, %v6908
  %v6913 = vand.u32 2147483647, %v6882
  %vm6914 = vcmp.eq.f32.partialorder %v6913, 8.507059e+37
  %v6915 = vand.u32 %v6882, 2147483648
  %v6916 = vor.u32 1.1754944e-38, %v6915
  %v6917 = vsel %vm6914, %v6916, %v6912
  %v6918 = vmul.f32 1.0, %v6917
  %v6919 = vrcp.pop %v6883
  %v6920 = vmul.f32 %v6883, %v6919
  %v6921 = vsub.f32 1.0, %v6920
  %v6922 = vmul.f32 %v6919, %v6921
  %v6923 = vadd.f32 %v6919, %v6922
  %vm6924 = vweird.f32 %v6883
  %vm6925 = vweird.f32 %v6919
  %vm6926 = vmor %vm6924, %vm6925
  %v6927 = vsel %vm6926, %v6919, %v6923
  %v6928 = vand.u32 2147483647, %v6883
  %vm6929 = vcmp.eq.f32.partialorder %v6928, 8.507059e+37
  %v6930 = vand.u32 %v6883, 2147483648
  %v6931 = vor.u32 1.1754944e-38, %v6930
  %v6932 = vsel %vm6929, %v6931, %v6927
  %v6933 = vmul.f32 1.0, %v6932
  %v6934 = vrcp.pop %v6884
  %v6935 = vmul.f32 %v6884, %v6934
  %v6936 = vsub.f32 1.0, %v6935
  %v6937 = vmul.f32 %v6934, %v6936
  %v6938 = vadd.f32 %v6934, %v6937
  %vm6939 = vweird.f32 %v6884
  %vm6940 = vweird.f32 %v6934
  %vm6941 = vmor %vm6939, %vm6940
  %v6942 = vsel %vm6941, %v6934, %v6938
  %v6943 = vand.u32 2147483647, %v6884
  %vm6944 = vcmp.eq.f32.partialorder %v6943, 8.507059e+37
  %v6945 = vand.u32 %v6884, 2147483648
  %v6946 = vor.u32 1.1754944e-38, %v6945
  %v6947 = vsel %vm6944, %v6946, %v6942
  %v6948 = vmul.f32 1.0, %v6947
  %v6949 = vrcp.pop %v6885
  %v6950 = vmul.f32 %v6885, %v6949
  %v6951 = vsub.f32 1.0, %v6950
  %v6952 = vmul.f32 %v6949, %v6951
  %v6953 = vadd.f32 %v6949, %v6952
  %vm6954 = vweird.f32 %v6885
  %vm6955 = vweird.f32 %v6949
  %vm6956 = vmor %vm6954, %vm6955
  %v6957 = vsel %vm6956, %v6949, %v6953
  %v6958 = vand.u32 2147483647, %v6885
  %vm6959 = vcmp.eq.f32.partialorder %v6958, 8.507059e+37
  %v6960 = vand.u32 %v6885, 2147483648
  %v6961 = vor.u32 1.1754944e-38, %v6960
  %v6962 = vsel %vm6959, %v6961, %v6957
  %v6963 = vmul.f32 1.0, %v6962
  %v6964 = vrcp.pop %v6886
  %v6965 = vmul.f32 %v6886, %v6964
  %v6966 = vsub.f32 1.0, %v6965
  %v6967 = vmul.f32 %v6964, %v6966
  %v6968 = vadd.f32 %v6964, %v6967
  %vm6969 = vweird.f32 %v6886
  %vm6970 = vweird.f32 %v6964
  %vm6971 = vmor %vm6969, %vm6970
  %v6972 = vsel %vm6971, %v6964, %v6968
  %v6973 = vand.u32 2147483647, %v6886
  %vm6974 = vcmp.eq.f32.partialorder %v6973, 8.507059e+37
  %v6975 = vand.u32 %v6886, 2147483648
  %v6976 = vor.u32 1.1754944e-38, %v6975
  %v6977 = vsel %vm6974, %v6976, %v6972
  %v6978 = vmul.f32 1.0, %v6977
  %v6979 = vrcp.pop %v6887
  %v6980 = vmul.f32 %v6887, %v6979
  %v6981 = vsub.f32 1.0, %v6980
  %v6982 = vmul.f32 %v6979, %v6981
  %v6983 = vadd.f32 %v6979, %v6982
  %vm6984 = vweird.f32 %v6887
  %vm6985 = vweird.f32 %v6979
  %vm6986 = vmor %vm6984, %vm6985
  %v6987 = vsel %vm6986, %v6979, %v6983
  %v6988 = vand.u32 2147483647, %v6887
  %vm6989 = vcmp.eq.f32.partialorder %v6988, 8.507059e+37
  %v6990 = vand.u32 %v6887, 2147483648
  %v6991 = vor.u32 1.1754944e-38, %v6990
  %v6992 = vsel %vm6989, %v6991, %v6987
  %v6993 = vmul.f32 1.0, %v6992
  %v6994 = vrcp.pop %v6888
  %v6995 = vmul.f32 %v6888, %v6994
  %v6996 = vsub.f32 1.0, %v6995
  %v6997 = vmul.f32 %v6994, %v6996
  %v6998 = vadd.f32 %v6994, %v6997
  %vm6999 = vweird.f32 %v6888
  %vm7000 = vweird.f32 %v6994
  %vm7001 = vmor %vm6999, %vm7000
  %v7002 = vsel %vm7001, %v6994, %v6998
  %v7003 = vand.u32 2147483647, %v6888
  %vm7004 = vcmp.eq.f32.partialorder %v7003, 8.507059e+37
  %v7005 = vand.u32 %v6888, 2147483648
  %v7006 = vor.u32 1.1754944e-38, %v7005
  %v7007 = vsel %vm7004, %v7006, %v7002
  %v7008 = vmul.f32 1.0, %v7007
  %v7009 = vadd.f32 %v6811, %v358
  %v7011 = vrot.slane %v7009, 2
  %v7012 = vrot.slane %v7009, 3
  %v7013 = vrot.slane %v7009, 4
  %v7014 = vrot.slane %v7009, 5
  %v7015 = vrot.slane %v7009, 6
  %v7016 = vrot.slane %v7009, 7
  %v7017 = vrot.slane %v7009, 1
  %7018 = vrot.lane.b32.xlu0 %v7011, 64
  %v7019 = vpop.permute.xlu0 %7018
  %7020 = vrot.lane.b32.xlu0 %v7012, 64
  %v7021 = vpop.permute.xlu0 %7020
  %7022 = vrot.lane.b32.xlu0 %v7013, 64
  %v7023 = vpop.permute.xlu0 %7022
  %7024 = vrot.lane.b32.xlu0 %v7014, 64
  %v7025 = vpop.permute.xlu0 %7024
  %7026 = vrot.lane.b32.xlu0 %v7015, 64
  %v7027 = vpop.permute.xlu0 %7026
  %7028 = vrot.lane.b32.xlu0 %v7016, 64
  %v7029 = vpop.permute.xlu0 %7028
  %7030 = vrot.lane.b32.xlu0 %v7009, 64
  %v7031 = vpop.permute.xlu0 %7030
  %7032 = vrot.lane.b32.xlu0 %v7017, 64
  %v7033 = vpop.permute.xlu0 %7032
  %v7042 = vmul.f32 %v6903, %v7019
  %v7043 = vmul.f32 %v6918, %v7021
  %v7044 = vmul.f32 %v6933, %v7023
  %v7045 = vmul.f32 %v6948, %v7025
  %v7046 = vmul.f32 %v6963, %v7027
  %v7047 = vmul.f32 %v6978, %v7029
  %v7048 = vmul.f32 %v6993, %v7031
  %v7049 = vmul.f32 %v7008, %v7033
  %7058 = vrot.lane.b32.xlu0 %v7042, 64
  %v7059 = vpop.permute.xlu0 %7058
  %7060 = vrot.lane.b32.xlu0 %v7043, 64
  %v7061 = vpop.permute.xlu0 %7060
  %7062 = vrot.lane.b32.xlu0 %v7044, 64
  %v7063 = vpop.permute.xlu0 %7062
  %7064 = vrot.lane.b32.xlu0 %v7045, 64
  %v7065 = vpop.permute.xlu0 %7064
  %7066 = vrot.lane.b32.xlu0 %v7046, 64
  %v7067 = vpop.permute.xlu0 %7066
  %7068 = vrot.lane.b32.xlu0 %v7047, 64
  %v7069 = vpop.permute.xlu0 %7068
  %7070 = vrot.lane.b32.xlu0 %v7048, 64
  %v7071 = vpop.permute.xlu0 %7070
  %7072 = vrot.lane.b32.xlu0 %v7049, 64
  %v7073 = vpop.permute.xlu0 %7072
  %v7082 = vadd.f32 %v6761, %v7059
  %v7083 = vadd.f32 %v6762, %v7061
  %v7084 = vadd.f32 %v6763, %v7063
  %v7085 = vadd.f32 %v6764, %v7065
  %v7086 = vadd.f32 %v6765, %v7067
  %v7087 = vadd.f32 %v6766, %v7069
  %v7088 = vadd.f32 %v6767, %v7071
  %v7089 = vadd.f32 %v6768, %v7073
  %v7090 = vtanh.pop %v7082
  %v7091 = vtanh.pop %v7083
  %v7092 = vtanh.pop %v7084
  %v7093 = vtanh.pop %v7085
  %v7094 = vtanh.pop %v7086
  %v7095 = vtanh.pop %v7087
  %v7096 = vtanh.pop %v7088
  %v7097 = vtanh.pop %v7089
  %v7098 = vsub.f32 1.0, %v6903
  %v7099 = vsub.f32 1.0, %v6918
  %v7100 = vsub.f32 1.0, %v6933
  %v7101 = vsub.f32 1.0, %v6948
  %v7102 = vsub.f32 1.0, %v6963
  %v7103 = vsub.f32 1.0, %v6978
  %v7104 = vsub.f32 1.0, %v6993
  %v7105 = vsub.f32 1.0, %v7008
  %7114 = vrot.lane.b32.xlu0 %v7090, 96
  %v7115 = vpop.permute.xlu0 %7114
  %7116 = vrot.lane.b32.xlu0 %v7091, 96
  %v7117 = vpop.permute.xlu0 %7116
  %7118 = vrot.lane.b32.xlu0 %v7092, 96
  %v7119 = vpop.permute.xlu0 %7118
  %7120 = vrot.lane.b32.xlu0 %v7093, 96
  %v7121 = vpop.permute.xlu0 %7120
  %7122 = vrot.lane.b32.xlu0 %v7094, 96
  %v7123 = vpop.permute.xlu0 %7122
  %7124 = vrot.lane.b32.xlu0 %v7095, 96
  %v7125 = vpop.permute.xlu0 %7124
  %7126 = vrot.lane.b32.xlu0 %v7096, 96
  %v7127 = vpop.permute.xlu0 %7126
  %7128 = vrot.lane.b32.xlu0 %v7097, 96
  %v7129 = vpop.permute.xlu0 %7128
  %v7138 = vmul.f32 %v7098, %v7115
  %v7139 = vmul.f32 %v7099, %v7117
  %v7140 = vmul.f32 %v7100, %v7119
  %v7141 = vmul.f32 %v7101, %v7121
  %v7142 = vmul.f32 %v7102, %v7123
  %v7143 = vmul.f32 %v7103, %v7125
  %v7144 = vmul.f32 %v7104, %v7127
  %v7145 = vmul.f32 %v7105, %v7129
  %v7147 = vrot.slane %v6117, 2
  %v7148 = vrot.slane %v6117, 3
  %v7149 = vrot.slane %v6117, 4
  %v7150 = vrot.slane %v6117, 5
  %v7151 = vrot.slane %v6117, 6
  %v7152 = vrot.slane %v6117, 7
  %v7153 = vrot.slane %v6117, 1
  %7154 = vrot.lane.b32.xlu0 %v7147, 32
  %v7155 = vpop.permute.xlu0 %7154
  %7156 = vrot.lane.b32.xlu0 %v7148, 32
  %v7157 = vpop.permute.xlu0 %7156
  %7158 = vrot.lane.b32.xlu0 %v7149, 32
  %v7159 = vpop.permute.xlu0 %7158
  %7160 = vrot.lane.b32.xlu0 %v7150, 32
  %v7161 = vpop.permute.xlu0 %7160
  %7162 = vrot.lane.b32.xlu0 %v7151, 32
  %v7163 = vpop.permute.xlu0 %7162
  %7164 = vrot.lane.b32.xlu0 %v7152, 32
  %v7165 = vpop.permute.xlu0 %7164
  %7166 = vrot.lane.b32.xlu0 %v6117, 32
  %v7167 = vpop.permute.xlu0 %7166
  %7168 = vrot.lane.b32.xlu0 %v7153, 32
  %v7169 = vpop.permute.xlu0 %7168
  %v7178 = vmul.f32 %v6903, %v7155
  %v7179 = vmul.f32 %v6918, %v7157
  %v7180 = vmul.f32 %v6933, %v7159
  %v7181 = vmul.f32 %v6948, %v7161
  %v7182 = vmul.f32 %v6963, %v7163
  %v7183 = vmul.f32 %v6978, %v7165
  %v7184 = vmul.f32 %v6993, %v7167
  %v7185 = vmul.f32 %v7008, %v7169
  %v7186 = vadd.f32 %v7138, %v7178
  %v7187 = vadd.f32 %v7139, %v7179
  %v7188 = vadd.f32 %v7140, %v7180
  %v7189 = vadd.f32 %v7141, %v7181
  %v7190 = vadd.f32 %v7142, %v7182
  %v7191 = vadd.f32 %v7143, %v7183
  %v7192 = vadd.f32 %v7144, %v7184
  %v7193 = vadd.f32 %v7145, %v7185
  %7194 = vset.pattern.permute.xlu0 6
  %7195 = vperm.xlu0 %7194, %v545
  %v7196 = vpop.permute.xlu0 %7195
  %vm7197 = vcmp.eq.s32.totalorder %v7196, 1
  %v7206 = vrot.slane %v7186, 6
  %v7207 = vrot.slane %v7187, 5
  %v7208 = vsel %vm559, %v7207, %v7206
  %v7209 = vrot.slane %v7188, 4
  %v7210 = vsel %vm562, %v7209, %v7208
  %v7211 = vrot.slane %v7189, 3
  %v7212 = vsel %vm565, %v7211, %v7210
  %v7213 = vrot.slane %v7190, 2
  %v7214 = vsel %vm568, %v7213, %v7212
  %v7215 = vrot.slane %v7191, 1
  %v7216 = vsel %vm571, %v7215, %v7214
  %v7217 = vsel %vm574, %v7192, %v7216
  %v7218 = vrot.slane %v7193, 7
  %v7219 = vsel %vm577, %v7218, %v7217
  %7220 = vrot.lane.b32.xlu0 %v7219, 96
  %v7221 = vpop.permute.xlu0 %7220
  %v7223 = vsel %vm7197, %v7221, %v6117
  %v7224 = vsel %vm7197, %v7221, 0.0
  %7225 = vrot.lane.b32.xlu0 %v6839, 32
  %v7226 = vpop.permute.xlu0 %7225
  %7227 = vrot.lane.b32.xlu0 %v6811, 32
  %v7228 = vpop.permute.xlu0 %7227
  %7229 = vrot.lane.b32.xlu0 %v6840, 32
  %v7230 = vpop.permute.xlu0 %7229
  %7231 = vrot.lane.b32.xlu0 %v6834, 32
  %v7232 = vpop.permute.xlu0 %7231
  %7233 = vrot.lane.b32.xlu0 %v6835, 32
  %v7234 = vpop.permute.xlu0 %7233
  %7235 = vrot.lane.b32.xlu0 %v6836, 32
  %v7236 = vpop.permute.xlu0 %7235
  %7237 = vrot.lane.b32.xlu0 %v6837, 32
  %v7238 = vpop.permute.xlu0 %7237
  %7239 = vrot.lane.b32.xlu0 %v6838, 32
  %v7240 = vpop.permute.xlu0 %7239
  %v7249 = vadd.f32 %v6777, %v7226
  %v7250 = vadd.f32 %v6778, %v7228
  %v7251 = vadd.f32 %v6779, %v7230
  %v7252 = vadd.f32 %v6780, %v7232
  %v7253 = vadd.f32 %v6781, %v7234
  %v7254 = vadd.f32 %v6782, %v7236
  %v7255 = vadd.f32 %v6783, %v7238
  %v7256 = vadd.f32 %v6784, %v7240
  %v7257 = vxor.u32 %v7249, 2147483648
  %v7258 = vxor.u32 %v7250, 2147483648
  %v7259 = vxor.u32 %v7251, 2147483648
  %v7260 = vxor.u32 %v7252, 2147483648
  %v7261 = vxor.u32 %v7253, 2147483648
  %v7262 = vxor.u32 %v7254, 2147483648
  %v7263 = vxor.u32 %v7255, 2147483648
  %v7264 = vxor.u32 %v7256, 2147483648
  %v7265 = vmul.f32 %v7257, 1.442695
  %v7266 = vpow.pop %v7265
  %v7267 = vmul.f32 %v7258, 1.442695
  %v7268 = vpow.pop %v7267
  %v7269 = vmul.f32 %v7259, 1.442695
  %v7270 = vpow.pop %v7269
  %v7271 = vmul.f32 %v7260, 1.442695
  %v7272 = vpow.pop %v7271
  %v7273 = vmul.f32 %v7261, 1.442695
  %v7274 = vpow.pop %v7273
  %v7275 = vmul.f32 %v7262, 1.442695
  %v7276 = vpow.pop %v7275
  %v7277 = vmul.f32 %v7263, 1.442695
  %v7278 = vpow.pop %v7277
  %v7279 = vmul.f32 %v7264, 1.442695
  %v7280 = vpow.pop %v7279
  %v7281 = vadd.f32 %v7266, 1.0
  %v7282 = vadd.f32 %v7268, 1.0
  %v7283 = vadd.f32 %v7270, 1.0
  %v7284 = vadd.f32 %v7272, 1.0
  %v7285 = vadd.f32 %v7274, 1.0
  %v7286 = vadd.f32 %v7276, 1.0
  %v7287 = vadd.f32 %v7278, 1.0
  %v7288 = vadd.f32 %v7280, 1.0
  %v7289 = vrcp.pop %v7281
  %v7290 = vmul.f32 %v7281, %v7289
  %v7291 = vsub.f32 1.0, %v7290
  %v7292 = vmul.f32 %v7289, %v7291
  %v7293 = vadd.f32 %v7289, %v7292
  %vm7294 = vweird.f32 %v7281
  %vm7295 = vweird.f32 %v7289
  %vm7296 = vmor %vm7294, %vm7295
  %v7297 = vsel %vm7296, %v7289, %v7293
  %v7298 = vand.u32 2147483647, %v7281
  %vm7299 = vcmp.eq.f32.partialorder %v7298, 8.507059e+37
  %v7300 = vand.u32 %v7281, 2147483648
  %v7301 = vor.u32 1.1754944e-38, %v7300
  %v7302 = vsel %vm7299, %v7301, %v7297
  %v7303 = vmul.f32 1.0, %v7302
  %v7304 = vrcp.pop %v7282
  %v7305 = vmul.f32 %v7282, %v7304
  %v7306 = vsub.f32 1.0, %v7305
  %v7307 = vmul.f32 %v7304, %v7306
  %v7308 = vadd.f32 %v7304, %v7307
  %vm7309 = vweird.f32 %v7282
  %vm7310 = vweird.f32 %v7304
  %vm7311 = vmor %vm7309, %vm7310
  %v7312 = vsel %vm7311, %v7304, %v7308
  %v7313 = vand.u32 2147483647, %v7282
  %vm7314 = vcmp.eq.f32.partialorder %v7313, 8.507059e+37
  %v7315 = vand.u32 %v7282, 2147483648
  %v7316 = vor.u32 1.1754944e-38, %v7315
  %v7317 = vsel %vm7314, %v7316, %v7312
  %v7318 = vmul.f32 1.0, %v7317
  %v7319 = vrcp.pop %v7283
  %v7320 = vmul.f32 %v7283, %v7319
  %v7321 = vsub.f32 1.0, %v7320
  %v7322 = vmul.f32 %v7319, %v7321
  %v7323 = vadd.f32 %v7319, %v7322
  %vm7324 = vweird.f32 %v7283
  %vm7325 = vweird.f32 %v7319
  %vm7326 = vmor %vm7324, %vm7325
  %v7327 = vsel %vm7326, %v7319, %v7323
  %v7328 = vand.u32 2147483647, %v7283
  %vm7329 = vcmp.eq.f32.partialorder %v7328, 8.507059e+37
  %v7330 = vand.u32 %v7283, 2147483648
  %v7331 = vor.u32 1.1754944e-38, %v7330
  %v7332 = vsel %vm7329, %v7331, %v7327
  %v7333 = vmul.f32 1.0, %v7332
  %v7334 = vrcp.pop %v7284
  %v7335 = vmul.f32 %v7284, %v7334
  %v7336 = vsub.f32 1.0, %v7335
  %v7337 = vmul.f32 %v7334, %v7336
  %v7338 = vadd.f32 %v7334, %v7337
  %vm7339 = vweird.f32 %v7284
  %vm7340 = vweird.f32 %v7334
  %vm7341 = vmor %vm7339, %vm7340
  %v7342 = vsel %vm7341, %v7334, %v7338
  %v7343 = vand.u32 2147483647, %v7284
  %vm7344 = vcmp.eq.f32.partialorder %v7343, 8.507059e+37
  %v7345 = vand.u32 %v7284, 2147483648
  %v7346 = vor.u32 1.1754944e-38, %v7345
  %v7347 = vsel %vm7344, %v7346, %v7342
  %v7348 = vmul.f32 1.0, %v7347
  %v7349 = vrcp.pop %v7285
  %v7350 = vmul.f32 %v7285, %v7349
  %v7351 = vsub.f32 1.0, %v7350
  %v7352 = vmul.f32 %v7349, %v7351
  %v7353 = vadd.f32 %v7349, %v7352
  %vm7354 = vweird.f32 %v7285
  %vm7355 = vweird.f32 %v7349
  %vm7356 = vmor %vm7354, %vm7355
  %v7357 = vsel %vm7356, %v7349, %v7353
  %v7358 = vand.u32 2147483647, %v7285
  %vm7359 = vcmp.eq.f32.partialorder %v7358, 8.507059e+37
  %v7360 = vand.u32 %v7285, 2147483648
  %v7361 = vor.u32 1.1754944e-38, %v7360
  %v7362 = vsel %vm7359, %v7361, %v7357
  %v7363 = vmul.f32 1.0, %v7362
  %v7364 = vrcp.pop %v7286
  %v7365 = vmul.f32 %v7286, %v7364
  %v7366 = vsub.f32 1.0, %v7365
  %v7367 = vmul.f32 %v7364, %v7366
  %v7368 = vadd.f32 %v7364, %v7367
  %vm7369 = vweird.f32 %v7286
  %vm7370 = vweird.f32 %v7364
  %vm7371 = vmor %vm7369, %vm7370
  %v7372 = vsel %vm7371, %v7364, %v7368
  %v7373 = vand.u32 2147483647, %v7286
  %vm7374 = vcmp.eq.f32.partialorder %v7373, 8.507059e+37
  %v7375 = vand.u32 %v7286, 2147483648
  %v7376 = vor.u32 1.1754944e-38, %v7375
  %v7377 = vsel %vm7374, %v7376, %v7372
  %v7378 = vmul.f32 1.0, %v7377
  %v7379 = vrcp.pop %v7287
  %v7380 = vmul.f32 %v7287, %v7379
  %v7381 = vsub.f32 1.0, %v7380
  %v7382 = vmul.f32 %v7379, %v7381
  %v7383 = vadd.f32 %v7379, %v7382
  %vm7384 = vweird.f32 %v7287
  %vm7385 = vweird.f32 %v7379
  %vm7386 = vmor %vm7384, %vm7385
  %v7387 = vsel %vm7386, %v7379, %v7383
  %v7388 = vand.u32 2147483647, %v7287
  %vm7389 = vcmp.eq.f32.partialorder %v7388, 8.507059e+37
  %v7390 = vand.u32 %v7287, 2147483648
  %v7391 = vor.u32 1.1754944e-38, %v7390
  %v7392 = vsel %vm7389, %v7391, %v7387
  %v7393 = vmul.f32 1.0, %v7392
  %v7394 = vrcp.pop %v7288
  %v7395 = vmul.f32 %v7288, %v7394
  %v7396 = vsub.f32 1.0, %v7395
  %v7397 = vmul.f32 %v7394, %v7396
  %v7398 = vadd.f32 %v7394, %v7397
  %vm7399 = vweird.f32 %v7288
  %vm7400 = vweird.f32 %v7394
  %vm7401 = vmor %vm7399, %vm7400
  %v7402 = vsel %vm7401, %v7394, %v7398
  %v7403 = vand.u32 2147483647, %v7288
  %vm7404 = vcmp.eq.f32.partialorder %v7403, 8.507059e+37
  %v7405 = vand.u32 %v7288, 2147483648
  %v7406 = vor.u32 1.1754944e-38, %v7405
  %v7407 = vsel %vm7404, %v7406, %v7402
  %v7408 = vmul.f32 1.0, %v7407
  %v7410 = vrot.slane %v6831, 7
  %v7411 = vrot.slane %v6831, 1
  %v7412 = vrot.slane %v6831, 2
  %v7413 = vrot.slane %v6831, 3
  %v7414 = vrot.slane %v6831, 4
  %v7415 = vrot.slane %v6831, 5
  %v7416 = vrot.slane %v6831, 6
  %7417 = vrot.lane.b32.xlu0 %v7410, 32
  %v7418 = vpop.permute.xlu0 %7417
  %7419 = vrot.lane.b32.xlu0 %v6831, 32
  %v7420 = vpop.permute.xlu0 %7419
  %7421 = vrot.lane.b32.xlu0 %v7411, 32
  %v7422 = vpop.permute.xlu0 %7421
  %7423 = vrot.lane.b32.xlu0 %v7412, 32
  %v7424 = vpop.permute.xlu0 %7423
  %7425 = vrot.lane.b32.xlu0 %v7413, 32
  %v7426 = vpop.permute.xlu0 %7425
  %7427 = vrot.lane.b32.xlu0 %v7414, 32
  %v7428 = vpop.permute.xlu0 %7427
  %7429 = vrot.lane.b32.xlu0 %v7415, 32
  %v7430 = vpop.permute.xlu0 %7429
  %7431 = vrot.lane.b32.xlu0 %v7416, 32
  %v7432 = vpop.permute.xlu0 %7431
  %v7441 = vadd.f32 %v6777, %v7418
  %v7442 = vadd.f32 %v6778, %v7420
  %v7443 = vadd.f32 %v6779, %v7422
  %v7444 = vadd.f32 %v6780, %v7424
  %v7445 = vadd.f32 %v6781, %v7426
  %v7446 = vadd.f32 %v6782, %v7428
  %v7447 = vadd.f32 %v6783, %v7430
  %v7448 = vadd.f32 %v6784, %v7432
  %v7449 = vxor.u32 %v7441, 2147483648
  %v7450 = vxor.u32 %v7442, 2147483648
  %v7451 = vxor.u32 %v7443, 2147483648
  %v7452 = vxor.u32 %v7444, 2147483648
  %v7453 = vxor.u32 %v7445, 2147483648
  %v7454 = vxor.u32 %v7446, 2147483648
  %v7455 = vxor.u32 %v7447, 2147483648
  %v7456 = vxor.u32 %v7448, 2147483648
  %v7457 = vmul.f32 %v7449, 1.442695
  %v7458 = vpow.pop %v7457
  %v7459 = vmul.f32 %v7450, 1.442695
  %v7460 = vpow.pop %v7459
  %v7461 = vmul.f32 %v7451, 1.442695
  %v7462 = vpow.pop %v7461
  %v7463 = vmul.f32 %v7452, 1.442695
  %v7464 = vpow.pop %v7463
  %v7465 = vmul.f32 %v7453, 1.442695
  %v7466 = vpow.pop %v7465
  %v7467 = vmul.f32 %v7454, 1.442695
  %v7468 = vpow.pop %v7467
  %v7469 = vmul.f32 %v7455, 1.442695
  %v7470 = vpow.pop %v7469
  %v7471 = vmul.f32 %v7456, 1.442695
  %v7472 = vpow.pop %v7471
  %v7473 = vadd.f32 %v7458, 1.0
  %v7474 = vadd.f32 %v7460, 1.0
  %v7475 = vadd.f32 %v7462, 1.0
  %v7476 = vadd.f32 %v7464, 1.0
  %v7477 = vadd.f32 %v7466, 1.0
  %v7478 = vadd.f32 %v7468, 1.0
  %v7479 = vadd.f32 %v7470, 1.0
  %v7480 = vadd.f32 %v7472, 1.0
  %v7481 = vrcp.pop %v7473
  %v7482 = vmul.f32 %v7473, %v7481
  %v7483 = vsub.f32 1.0, %v7482
  %v7484 = vmul.f32 %v7481, %v7483
  %v7485 = vadd.f32 %v7481, %v7484
  %vm7486 = vweird.f32 %v7473
  %vm7487 = vweird.f32 %v7481
  %vm7488 = vmor %vm7486, %vm7487
  %v7489 = vsel %vm7488, %v7481, %v7485
  %v7490 = vand.u32 2147483647, %v7473
  %vm7491 = vcmp.eq.f32.partialorder %v7490, 8.507059e+37
  %v7492 = vand.u32 %v7473, 2147483648
  %v7493 = vor.u32 1.1754944e-38, %v7492
  %v7494 = vsel %vm7491, %v7493, %v7489
  %v7495 = vmul.f32 1.0, %v7494
  %v7496 = vrcp.pop %v7474
  %v7497 = vmul.f32 %v7474, %v7496
  %v7498 = vsub.f32 1.0, %v7497
  %v7499 = vmul.f32 %v7496, %v7498
  %v7500 = vadd.f32 %v7496, %v7499
  %vm7501 = vweird.f32 %v7474
  %vm7502 = vweird.f32 %v7496
  %vm7503 = vmor %vm7501, %vm7502
  %v7504 = vsel %vm7503, %v7496, %v7500
  %v7505 = vand.u32 2147483647, %v7474
  %vm7506 = vcmp.eq.f32.partialorder %v7505, 8.507059e+37
  %v7507 = vand.u32 %v7474, 2147483648
  %v7508 = vor.u32 1.1754944e-38, %v7507
  %v7509 = vsel %vm7506, %v7508, %v7504
  %v7510 = vmul.f32 1.0, %v7509
  %v7511 = vrcp.pop %v7475
  %v7512 = vmul.f32 %v7475, %v7511
  %v7513 = vsub.f32 1.0, %v7512
  %v7514 = vmul.f32 %v7511, %v7513
  %v7515 = vadd.f32 %v7511, %v7514
  %vm7516 = vweird.f32 %v7475
  %vm7517 = vweird.f32 %v7511
  %vm7518 = vmor %vm7516, %vm7517
  %v7519 = vsel %vm7518, %v7511, %v7515
  %v7520 = vand.u32 2147483647, %v7475
  %vm7521 = vcmp.eq.f32.partialorder %v7520, 8.507059e+37
  %v7522 = vand.u32 %v7475, 2147483648
  %v7523 = vor.u32 1.1754944e-38, %v7522
  %v7524 = vsel %vm7521, %v7523, %v7519
  %v7525 = vmul.f32 1.0, %v7524
  %v7526 = vrcp.pop %v7476
  %v7527 = vmul.f32 %v7476, %v7526
  %v7528 = vsub.f32 1.0, %v7527
  %v7529 = vmul.f32 %v7526, %v7528
  %v7530 = vadd.f32 %v7526, %v7529
  %vm7531 = vweird.f32 %v7476
  %vm7532 = vweird.f32 %v7526
  %vm7533 = vmor %vm7531, %vm7532
  %v7534 = vsel %vm7533, %v7526, %v7530
  %v7535 = vand.u32 2147483647, %v7476
  %vm7536 = vcmp.eq.f32.partialorder %v7535, 8.507059e+37
  %v7537 = vand.u32 %v7476, 2147483648
  %v7538 = vor.u32 1.1754944e-38, %v7537
  %v7539 = vsel %vm7536, %v7538, %v7534
  %v7540 = vmul.f32 1.0, %v7539
  %v7541 = vrcp.pop %v7477
  %v7542 = vmul.f32 %v7477, %v7541
  %v7543 = vsub.f32 1.0, %v7542
  %v7544 = vmul.f32 %v7541, %v7543
  %v7545 = vadd.f32 %v7541, %v7544
  %vm7546 = vweird.f32 %v7477
  %vm7547 = vweird.f32 %v7541
  %vm7548 = vmor %vm7546, %vm7547
  %v7549 = vsel %vm7548, %v7541, %v7545
  %v7550 = vand.u32 2147483647, %v7477
  %vm7551 = vcmp.eq.f32.partialorder %v7550, 8.507059e+37
  %v7552 = vand.u32 %v7477, 2147483648
  %v7553 = vor.u32 1.1754944e-38, %v7552
  %v7554 = vsel %vm7551, %v7553, %v7549
  %v7555 = vmul.f32 1.0, %v7554
  %v7556 = vrcp.pop %v7478
  %v7557 = vmul.f32 %v7478, %v7556
  %v7558 = vsub.f32 1.0, %v7557
  %v7559 = vmul.f32 %v7556, %v7558
  %v7560 = vadd.f32 %v7556, %v7559
  %vm7561 = vweird.f32 %v7478
  %vm7562 = vweird.f32 %v7556
  %vm7563 = vmor %vm7561, %vm7562
  %v7564 = vsel %vm7563, %v7556, %v7560
  %v7565 = vand.u32 2147483647, %v7478
  %vm7566 = vcmp.eq.f32.partialorder %v7565, 8.507059e+37
  %v7567 = vand.u32 %v7478, 2147483648
  %v7568 = vor.u32 1.1754944e-38, %v7567
  %v7569 = vsel %vm7566, %v7568, %v7564
  %v7570 = vmul.f32 1.0, %v7569
  %v7571 = vrcp.pop %v7479
  %v7572 = vmul.f32 %v7479, %v7571
  %v7573 = vsub.f32 1.0, %v7572
  %v7574 = vmul.f32 %v7571, %v7573
  %v7575 = vadd.f32 %v7571, %v7574
  %vm7576 = vweird.f32 %v7479
  %vm7577 = vweird.f32 %v7571
  %vm7578 = vmor %vm7576, %vm7577
  %v7579 = vsel %vm7578, %v7571, %v7575
  %v7580 = vand.u32 2147483647, %v7479
  %vm7581 = vcmp.eq.f32.partialorder %v7580, 8.507059e+37
  %v7582 = vand.u32 %v7479, 2147483648
  %v7583 = vor.u32 1.1754944e-38, %v7582
  %v7584 = vsel %vm7581, %v7583, %v7579
  %v7585 = vmul.f32 1.0, %v7584
  %v7586 = vrcp.pop %v7480
  %v7587 = vmul.f32 %v7480, %v7586
  %v7588 = vsub.f32 1.0, %v7587
  %v7589 = vmul.f32 %v7586, %v7588
  %v7590 = vadd.f32 %v7586, %v7589
  %vm7591 = vweird.f32 %v7480
  %vm7592 = vweird.f32 %v7586
  %vm7593 = vmor %vm7591, %vm7592
  %v7594 = vsel %vm7593, %v7586, %v7590
  %v7595 = vand.u32 2147483647, %v7480
  %vm7596 = vcmp.eq.f32.partialorder %v7595, 8.507059e+37
  %v7597 = vand.u32 %v7480, 2147483648
  %v7598 = vor.u32 1.1754944e-38, %v7597
  %v7599 = vsel %vm7596, %v7598, %v7594
  %v7600 = vmul.f32 1.0, %v7599
  %v7601 = vadd.f32 %v6831, %v961
  %v7603 = vrot.slane %v7601, 7
  %v7604 = vrot.slane %v7601, 1
  %v7605 = vrot.slane %v7601, 2
  %v7606 = vrot.slane %v7601, 3
  %v7607 = vrot.slane %v7601, 4
  %v7608 = vrot.slane %v7601, 5
  %v7609 = vrot.slane %v7601, 6
  %7610 = vrot.lane.b32.xlu0 %v7603, 96
  %v7611 = vpop.permute.xlu0 %7610
  %7612 = vrot.lane.b32.xlu0 %v7601, 96
  %v7613 = vpop.permute.xlu0 %7612
  %7614 = vrot.lane.b32.xlu0 %v7604, 96
  %v7615 = vpop.permute.xlu0 %7614
  %7616 = vrot.lane.b32.xlu0 %v7605, 96
  %v7617 = vpop.permute.xlu0 %7616
  %7618 = vrot.lane.b32.xlu0 %v7606, 96
  %v7619 = vpop.permute.xlu0 %7618
  %7620 = vrot.lane.b32.xlu0 %v7607, 96
  %v7621 = vpop.permute.xlu0 %7620
  %7622 = vrot.lane.b32.xlu0 %v7608, 96
  %v7623 = vpop.permute.xlu0 %7622
  %7624 = vrot.lane.b32.xlu0 %v7609, 96
  %v7625 = vpop.permute.xlu0 %7624
  %v7634 = vmul.f32 %v7303, %v7611
  %v7635 = vmul.f32 %v7318, %v7613
  %v7636 = vmul.f32 %v7333, %v7615
  %v7637 = vmul.f32 %v7348, %v7617
  %v7638 = vmul.f32 %v7363, %v7619
  %v7639 = vmul.f32 %v7378, %v7621
  %v7640 = vmul.f32 %v7393, %v7623
  %v7641 = vmul.f32 %v7408, %v7625
  %7650 = vrot.lane.b32.xlu0 %v7634, 64
  %v7651 = vpop.permute.xlu0 %7650
  %7652 = vrot.lane.b32.xlu0 %v7635, 64
  %v7653 = vpop.permute.xlu0 %7652
  %7654 = vrot.lane.b32.xlu0 %v7636, 64
  %v7655 = vpop.permute.xlu0 %7654
  %7656 = vrot.lane.b32.xlu0 %v7637, 64
  %v7657 = vpop.permute.xlu0 %7656
  %7658 = vrot.lane.b32.xlu0 %v7638, 64
  %v7659 = vpop.permute.xlu0 %7658
  %7660 = vrot.lane.b32.xlu0 %v7639, 64
  %v7661 = vpop.permute.xlu0 %7660
  %7662 = vrot.lane.b32.xlu0 %v7640, 64
  %v7663 = vpop.permute.xlu0 %7662
  %7664 = vrot.lane.b32.xlu0 %v7641, 64
  %v7665 = vpop.permute.xlu0 %7664
  %v7674 = vadd.f32 %v6777, %v7651
  %v7675 = vadd.f32 %v6778, %v7653
  %v7676 = vadd.f32 %v6779, %v7655
  %v7677 = vadd.f32 %v6780, %v7657
  %v7678 = vadd.f32 %v6781, %v7659
  %v7679 = vadd.f32 %v6782, %v7661
  %v7680 = vadd.f32 %v6783, %v7663
  %v7681 = vadd.f32 %v6784, %v7665
  %v7682 = vtanh.pop %v7674
  %v7683 = vtanh.pop %v7675
  %v7684 = vtanh.pop %v7676
  %v7685 = vtanh.pop %v7677
  %v7686 = vtanh.pop %v7678
  %v7687 = vtanh.pop %v7679
  %v7688 = vtanh.pop %v7680
  %v7689 = vtanh.pop %v7681
  %v7690 = vsub.f32 1.0, %v7495
  %v7691 = vsub.f32 1.0, %v7510
  %v7692 = vsub.f32 1.0, %v7525
  %v7693 = vsub.f32 1.0, %v7540
  %v7694 = vsub.f32 1.0, %v7555
  %v7695 = vsub.f32 1.0, %v7570
  %v7696 = vsub.f32 1.0, %v7585
  %v7697 = vsub.f32 1.0, %v7600
  %7706 = vrot.lane.b32.xlu0 %v7682, 96
  %v7707 = vpop.permute.xlu0 %7706
  %7708 = vrot.lane.b32.xlu0 %v7683, 96
  %v7709 = vpop.permute.xlu0 %7708
  %7710 = vrot.lane.b32.xlu0 %v7684, 96
  %v7711 = vpop.permute.xlu0 %7710
  %7712 = vrot.lane.b32.xlu0 %v7685, 96
  %v7713 = vpop.permute.xlu0 %7712
  %7714 = vrot.lane.b32.xlu0 %v7686, 96
  %v7715 = vpop.permute.xlu0 %7714
  %7716 = vrot.lane.b32.xlu0 %v7687, 96
  %v7717 = vpop.permute.xlu0 %7716
  %7718 = vrot.lane.b32.xlu0 %v7688, 96
  %v7719 = vpop.permute.xlu0 %7718
  %7720 = vrot.lane.b32.xlu0 %v7689, 96
  %v7721 = vpop.permute.xlu0 %7720
  %v7730 = vmul.f32 %v7690, %v7707
  %v7731 = vmul.f32 %v7691, %v7709
  %v7732 = vmul.f32 %v7692, %v7711
  %v7733 = vmul.f32 %v7693, %v7713
  %v7734 = vmul.f32 %v7694, %v7715
  %v7735 = vmul.f32 %v7695, %v7717
  %v7736 = vmul.f32 %v7696, %v7719
  %v7737 = vmul.f32 %v7697, %v7721
  %v7738 = vrot.slane %v6705, 7
  %v7739 = vrot.slane %v6705, 1
  %v7740 = vrot.slane %v6705, 2
  %v7741 = vrot.slane %v6705, 3
  %v7742 = vrot.slane %v6705, 4
  %v7743 = vrot.slane %v6705, 5
  %v7744 = vrot.slane %v6705, 6
  %7745 = vrot.lane.b32.xlu0 %v7738, 32
  %v7746 = vpop.permute.xlu0 %7745
  %7747 = vrot.lane.b32.xlu0 %v7739, 32
  %v7748 = vpop.permute.xlu0 %7747
  %7749 = vrot.lane.b32.xlu0 %v7740, 32
  %v7750 = vpop.permute.xlu0 %7749
  %7751 = vrot.lane.b32.xlu0 %v7741, 32
  %v7752 = vpop.permute.xlu0 %7751
  %7753 = vrot.lane.b32.xlu0 %v7742, 32
  %v7754 = vpop.permute.xlu0 %7753
  %7755 = vrot.lane.b32.xlu0 %v7743, 32
  %v7756 = vpop.permute.xlu0 %7755
  %7757 = vrot.lane.b32.xlu0 %v7744, 32
  %v7758 = vpop.permute.xlu0 %7757
  %v7766 = vmul.f32 %v7495, %v7746
  %v7767 = vmul.f32 %v7510, %v6787
  %v7768 = vmul.f32 %v7525, %v7748
  %v7769 = vmul.f32 %v7540, %v7750
  %v7770 = vmul.f32 %v7555, %v7752
  %v7771 = vmul.f32 %v7570, %v7754
  %v7772 = vmul.f32 %v7585, %v7756
  %v7773 = vmul.f32 %v7600, %v7758
  %v7774 = vadd.f32 %v7730, %v7766
  %v7775 = vadd.f32 %v7731, %v7767
  %v7776 = vadd.f32 %v7732, %v7768
  %v7777 = vadd.f32 %v7733, %v7769
  %v7778 = vadd.f32 %v7734, %v7770
  %v7779 = vadd.f32 %v7735, %v7771
  %v7780 = vadd.f32 %v7736, %v7772
  %v7781 = vadd.f32 %v7737, %v7773
  %7782 = vset.pattern.permute.xlu0 1
  %7783 = vperm.xlu0 %7782, %v1144
  %v7784 = vpop.permute.xlu0 %7783
  %vm7785 = vcmp.eq.s32.totalorder %v7784, 1
  %v7794 = vrot.slane %v7774, 1
  %v7795 = vsel %vm559, %v7775, %v7794
  %v7796 = vrot.slane %v7776, 7
  %v7797 = vsel %vm562, %v7796, %v7795
  %v7798 = vrot.slane %v7777, 6
  %v7799 = vsel %vm565, %v7798, %v7797
  %v7800 = vrot.slane %v7778, 5
  %v7801 = vsel %vm568, %v7800, %v7799
  %v7802 = vrot.slane %v7779, 4
  %v7803 = vsel %vm571, %v7802, %v7801
  %v7804 = vrot.slane %v7780, 3
  %v7805 = vsel %vm574, %v7804, %v7803
  %v7806 = vrot.slane %v7781, 2
  %v7807 = vsel %vm577, %v7806, %v7805
  %7808 = vrot.lane.b32.xlu0 %v7807, 96
  %v7809 = vpop.permute.xlu0 %7808
  %v7811 = vsel %vm7785, %v7809, %v6705
  %v7812 = vsel %vm7785, %v7809, 0.0
  %v7814 = vrot.slane %v7224, 1
  %v7815 = vrot.slane %v7224, 2
  %v7816 = vrot.slane %v7224, 3
  %v7817 = vrot.slane %v7224, 4
  %v7818 = vrot.slane %v7224, 5
  %v7819 = vrot.slane %v7224, 6
  %v7820 = vrot.slane %v7224, 7
  %7828 = vst.msk [vmem:[%s6 + $0x6] sm:$0x1] %vm1191, %v7224
  %7829 = vst.msk [vmem:[%s6 + $0xe] sm:$0x1] %vm1191, %v7814
  %7830 = vst.msk [vmem:[%s6 + $0x16] sm:$0x1] %vm1191, %v7815
  %7831 = vst.msk [vmem:[%s6 + $0x1e] sm:$0x1] %vm1191, %v7816
  %7832 = vst.msk [vmem:[%s6 + $0x26] sm:$0x1] %vm1191, %v7817
  %7833 = vst.msk [vmem:[%s6 + $0x2e] sm:$0x1] %vm1191, %v7818
  %7834 = vst.msk [vmem:[%s6 + $0x36] sm:$0x1] %vm1191, %v7819
  %7835 = vst.msk [vmem:[%s6 + $0x3e] sm:$0x1] %vm1191, %v7820
  %v7837 = vrot.slane %v7812, 1
  %v7838 = vrot.slane %v7812, 2
  %v7839 = vrot.slane %v7812, 3
  %v7840 = vrot.slane %v7812, 4
  %v7841 = vrot.slane %v7812, 5
  %v7842 = vrot.slane %v7812, 6
  %v7843 = vrot.slane %v7812, 7
  %7851 = vst.msk [vmem:[%s51 + $0x1] sm:$0x1] %vm1191, %v7812
  %7852 = vst.msk [vmem:[%s51 + $0x9] sm:$0x1] %vm1191, %v7837
  %7853 = vst.msk [vmem:[%s51 + $0x11] sm:$0x1] %vm1191, %v7838
  %7854 = vst.msk [vmem:[%s51 + $0x19] sm:$0x1] %vm1191, %v7839
  %7855 = vst.msk [vmem:[%s51 + $0x21] sm:$0x1] %vm1191, %v7840
  %7856 = vst.msk [vmem:[%s51 + $0x29] sm:$0x1] %vm1191, %v7841
  %7857 = vst.msk [vmem:[%s51 + $0x31] sm:$0x1] %vm1191, %v7842
  %7858 = vst.msk [vmem:[%s51 + $0x39] sm:$0x1] %vm1191, %v7843
  %v7859 = vld [vmem:[%s0] sm:$0x8]
  %v7860 = vld [vmem:[%s0 + $0x4] sm:$0x8]
  %v7861 = vld [vmem:[%s0 + $0x8] sm:$0x8]
  %v7862 = vld [vmem:[%s0 + $0xc] sm:$0x8]
  %v7863 = vld [vmem:[%s0 + $0x10] sm:$0x8]
  %v7864 = vld [vmem:[%s0 + $0x14] sm:$0x8]
  %v7865 = vld [vmem:[%s0 + $0x18] sm:$0x8]
  %v7866 = vld [vmem:[%s0 + $0x1c] sm:$0x8]
  %v7867 = vunpack.c.l.bf16 %v7859
  %v7868 = vunpack.c.l.bf16 %v7860
  %v7869 = vunpack.c.l.bf16 %v7861
  %v7870 = vunpack.c.l.bf16 %v7862
  %v7871 = vunpack.c.l.bf16 %v7863
  %v7872 = vunpack.c.l.bf16 %v7864
  %v7873 = vunpack.c.l.bf16 %v7865
  %v7874 = vunpack.c.l.bf16 %v7866
  %v7875 = vld [vmem:[%s45] sm:$0x1]
  %v7876 = vld [vmem:[%s45 + $0x4] sm:$0x1]
  %v7877 = vld [vmem:[%s45 + $0x8] sm:$0x1]
  %v7878 = vld [vmem:[%s45 + $0xc] sm:$0x1]
  %v7879 = vld [vmem:[%s45 + $0x10] sm:$0x1]
  %v7880 = vld [vmem:[%s45 + $0x14] sm:$0x1]
  %v7881 = vld [vmem:[%s45 + $0x18] sm:$0x1]
  %v7882 = vld [vmem:[%s45 + $0x1c] sm:$0x1]
  %v7883 = vunpack.c.l.bf16 %v7875
  %v7884 = vunpack.c.l.bf16 %v7876
  %v7885 = vunpack.c.l.bf16 %v7877
  %v7886 = vunpack.c.l.bf16 %v7878
  %v7887 = vunpack.c.l.bf16 %v7879
  %v7888 = vunpack.c.l.bf16 %v7880
  %v7889 = vunpack.c.l.bf16 %v7881
  %v7890 = vunpack.c.l.bf16 %v7882
  %7892 = vrot.lane.b32.xlu0 %v7811, 32
  %v7893 = vpop.permute.xlu0 %7892
  %v7895 = vsel %vm135, %v7223, %v7893
  %v7897 = vsel %vm137, %v7895, 0
  %7899 = vmatpush.msra.mxu0 0.0
  %7900 = vmatpush.msra.mxu0 0.0
  %7901 = vmatpush.msra.mxu0 0.0
  %7902 = vmatpush.msra.mxu0 0.0
  %7903 = vmatpush.msra.mxu0 0.0
  %7904 = vmatpush.msra.mxu0 0.0
  %7905 = vmatpush.msra.mxu0 0.0
  %7906 = vmatpush.msra.mxu0 0.0
  %7907 = vmatpush.msra.mxu0 %v75
  %7908 = vmatpush.msra.mxu0 %v73
  %7909 = vmatpush.msra.mxu0 %v71
  %7910 = vmatpush.msra.mxu0 %v69
  %7911 = vmatpush.msra.mxu0 %v67
  %7912 = vmatpush.msra.mxu0 %v65
  %7913 = vmatpush.msra.mxu0 %v63
  %7914 = vmatpush.msra.mxu0 %v61
  %7915 = vmatmul.f32.gmra.mxu0 %v7897
  %v7916 = vpop.f32.mrf.mxu0
  %v7917 = vadd.f32 0.0, %v7916
  %7918 = vdwg.mxu0
  %7919 = vmatpush.msra.mxu0 0.0
  %7920 = vmatpush.msra.mxu0 0.0
  %7921 = vmatpush.msra.mxu0 0.0
  %7922 = vmatpush.msra.mxu0 0.0
  %7923 = vmatpush.msra.mxu0 0.0
  %7924 = vmatpush.msra.mxu0 0.0
  %7925 = vmatpush.msra.mxu0 0.0
  %7926 = vmatpush.msra.mxu0 0.0
  %7927 = vmatpush.msra.mxu0 %v76
  %7928 = vmatpush.msra.mxu0 %v74
  %7929 = vmatpush.msra.mxu0 %v72
  %7930 = vmatpush.msra.mxu0 %v70
  %7931 = vmatpush.msra.mxu0 %v68
  %7932 = vmatpush.msra.mxu0 %v66
  %7933 = vmatpush.msra.mxu0 %v64
  %7934 = vmatpush.msra.mxu0 %v62
  %7935 = vmatmul.f32.gmra.mxu0 %v7897
  %v7936 = vpop.f32.mrf.mxu0
  %v7937 = vadd.f32 0.0, %v7936
  %7938 = vdwg.mxu0
  %v7940 = vrot.slane %v7917, 1
  %v7941 = vrot.slane %v7917, 2
  %v7942 = vrot.slane %v7917, 3
  %v7943 = vrot.slane %v7917, 4
  %v7944 = vrot.slane %v7917, 5
  %v7945 = vrot.slane %v7917, 6
  %v7946 = vrot.slane %v7917, 7
  %v7955 = vadd.f32 %v7867, %v7940
  %v7956 = vadd.f32 %v7868, %v7941
  %v7957 = vadd.f32 %v7869, %v7942
  %v7958 = vadd.f32 %v7870, %v7943
  %v7959 = vadd.f32 %v7871, %v7944
  %v7960 = vadd.f32 %v7872, %v7945
  %v7961 = vadd.f32 %v7873, %v7946
  %v7962 = vadd.f32 %v7874, %v7917
  %v7963 = vxor.u32 %v7955, 2147483648
  %v7964 = vxor.u32 %v7956, 2147483648
  %v7965 = vxor.u32 %v7957, 2147483648
  %v7966 = vxor.u32 %v7958, 2147483648
  %v7967 = vxor.u32 %v7959, 2147483648
  %v7968 = vxor.u32 %v7960, 2147483648
  %v7969 = vxor.u32 %v7961, 2147483648
  %v7970 = vxor.u32 %v7962, 2147483648
  %v7971 = vmul.f32 %v7963, 1.442695
  %v7972 = vpow.pop %v7971
  %v7973 = vmul.f32 %v7964, 1.442695
  %v7974 = vpow.pop %v7973
  %v7975 = vmul.f32 %v7965, 1.442695
  %v7976 = vpow.pop %v7975
  %v7977 = vmul.f32 %v7966, 1.442695
  %v7978 = vpow.pop %v7977
  %v7979 = vmul.f32 %v7967, 1.442695
  %v7980 = vpow.pop %v7979
  %v7981 = vmul.f32 %v7968, 1.442695
  %v7982 = vpow.pop %v7981
  %v7983 = vmul.f32 %v7969, 1.442695
  %v7984 = vpow.pop %v7983
  %v7985 = vmul.f32 %v7970, 1.442695
  %v7986 = vpow.pop %v7985
  %v7987 = vadd.f32 %v7972, 1.0
  %v7988 = vadd.f32 %v7974, 1.0
  %v7989 = vadd.f32 %v7976, 1.0
  %v7990 = vadd.f32 %v7978, 1.0
  %v7991 = vadd.f32 %v7980, 1.0
  %v7992 = vadd.f32 %v7982, 1.0
  %v7993 = vadd.f32 %v7984, 1.0
  %v7994 = vadd.f32 %v7986, 1.0
  %v7995 = vrcp.pop %v7987
  %v7996 = vmul.f32 %v7987, %v7995
  %v7997 = vsub.f32 1.0, %v7996
  %v7998 = vmul.f32 %v7995, %v7997
  %v7999 = vadd.f32 %v7995, %v7998
  %vm8000 = vweird.f32 %v7987
  %vm8001 = vweird.f32 %v7995
  %vm8002 = vmor %vm8000, %vm8001
  %v8003 = vsel %vm8002, %v7995, %v7999
  %v8004 = vand.u32 2147483647, %v7987
  %vm8005 = vcmp.eq.f32.partialorder %v8004, 8.507059e+37
  %v8006 = vand.u32 %v7987, 2147483648
  %v8007 = vor.u32 1.1754944e-38, %v8006
  %v8008 = vsel %vm8005, %v8007, %v8003
  %v8009 = vmul.f32 1.0, %v8008
  %v8010 = vrcp.pop %v7988
  %v8011 = vmul.f32 %v7988, %v8010
  %v8012 = vsub.f32 1.0, %v8011
  %v8013 = vmul.f32 %v8010, %v8012
  %v8014 = vadd.f32 %v8010, %v8013
  %vm8015 = vweird.f32 %v7988
  %vm8016 = vweird.f32 %v8010
  %vm8017 = vmor %vm8015, %vm8016
  %v8018 = vsel %vm8017, %v8010, %v8014
  %v8019 = vand.u32 2147483647, %v7988
  %vm8020 = vcmp.eq.f32.partialorder %v8019, 8.507059e+37
  %v8021 = vand.u32 %v7988, 2147483648
  %v8022 = vor.u32 1.1754944e-38, %v8021
  %v8023 = vsel %vm8020, %v8022, %v8018
  %v8024 = vmul.f32 1.0, %v8023
  %v8025 = vrcp.pop %v7989
  %v8026 = vmul.f32 %v7989, %v8025
  %v8027 = vsub.f32 1.0, %v8026
  %v8028 = vmul.f32 %v8025, %v8027
  %v8029 = vadd.f32 %v8025, %v8028
  %vm8030 = vweird.f32 %v7989
  %vm8031 = vweird.f32 %v8025
  %vm8032 = vmor %vm8030, %vm8031
  %v8033 = vsel %vm8032, %v8025, %v8029
  %v8034 = vand.u32 2147483647, %v7989
  %vm8035 = vcmp.eq.f32.partialorder %v8034, 8.507059e+37
  %v8036 = vand.u32 %v7989, 2147483648
  %v8037 = vor.u32 1.1754944e-38, %v8036
  %v8038 = vsel %vm8035, %v8037, %v8033
  %v8039 = vmul.f32 1.0, %v8038
  %v8040 = vrcp.pop %v7990
  %v8041 = vmul.f32 %v7990, %v8040
  %v8042 = vsub.f32 1.0, %v8041
  %v8043 = vmul.f32 %v8040, %v8042
  %v8044 = vadd.f32 %v8040, %v8043
  %vm8045 = vweird.f32 %v7990
  %vm8046 = vweird.f32 %v8040
  %vm8047 = vmor %vm8045, %vm8046
  %v8048 = vsel %vm8047, %v8040, %v8044
  %v8049 = vand.u32 2147483647, %v7990
  %vm8050 = vcmp.eq.f32.partialorder %v8049, 8.507059e+37
  %v8051 = vand.u32 %v7990, 2147483648
  %v8052 = vor.u32 1.1754944e-38, %v8051
  %v8053 = vsel %vm8050, %v8052, %v8048
  %v8054 = vmul.f32 1.0, %v8053
  %v8055 = vrcp.pop %v7991
  %v8056 = vmul.f32 %v7991, %v8055
  %v8057 = vsub.f32 1.0, %v8056
  %v8058 = vmul.f32 %v8055, %v8057
  %v8059 = vadd.f32 %v8055, %v8058
  %vm8060 = vweird.f32 %v7991
  %vm8061 = vweird.f32 %v8055
  %vm8062 = vmor %vm8060, %vm8061
  %v8063 = vsel %vm8062, %v8055, %v8059
  %v8064 = vand.u32 2147483647, %v7991
  %vm8065 = vcmp.eq.f32.partialorder %v8064, 8.507059e+37
  %v8066 = vand.u32 %v7991, 2147483648
  %v8067 = vor.u32 1.1754944e-38, %v8066
  %v8068 = vsel %vm8065, %v8067, %v8063
  %v8069 = vmul.f32 1.0, %v8068
  %v8070 = vrcp.pop %v7992
  %v8071 = vmul.f32 %v7992, %v8070
  %v8072 = vsub.f32 1.0, %v8071
  %v8073 = vmul.f32 %v8070, %v8072
  %v8074 = vadd.f32 %v8070, %v8073
  %vm8075 = vweird.f32 %v7992
  %vm8076 = vweird.f32 %v8070
  %vm8077 = vmor %vm8075, %vm8076
  %v8078 = vsel %vm8077, %v8070, %v8074
  %v8079 = vand.u32 2147483647, %v7992
  %vm8080 = vcmp.eq.f32.partialorder %v8079, 8.507059e+37
  %v8081 = vand.u32 %v7992, 2147483648
  %v8082 = vor.u32 1.1754944e-38, %v8081
  %v8083 = vsel %vm8080, %v8082, %v8078
  %v8084 = vmul.f32 1.0, %v8083
  %v8085 = vrcp.pop %v7993
  %v8086 = vmul.f32 %v7993, %v8085
  %v8087 = vsub.f32 1.0, %v8086
  %v8088 = vmul.f32 %v8085, %v8087
  %v8089 = vadd.f32 %v8085, %v8088
  %vm8090 = vweird.f32 %v7993
  %vm8091 = vweird.f32 %v8085
  %vm8092 = vmor %vm8090, %vm8091
  %v8093 = vsel %vm8092, %v8085, %v8089
  %v8094 = vand.u32 2147483647, %v7993
  %vm8095 = vcmp.eq.f32.partialorder %v8094, 8.507059e+37
  %v8096 = vand.u32 %v7993, 2147483648
  %v8097 = vor.u32 1.1754944e-38, %v8096
  %v8098 = vsel %vm8095, %v8097, %v8093
  %v8099 = vmul.f32 1.0, %v8098
  %v8100 = vrcp.pop %v7994
  %v8101 = vmul.f32 %v7994, %v8100
  %v8102 = vsub.f32 1.0, %v8101
  %v8103 = vmul.f32 %v8100, %v8102
  %v8104 = vadd.f32 %v8100, %v8103
  %vm8105 = vweird.f32 %v7994
  %vm8106 = vweird.f32 %v8100
  %vm8107 = vmor %vm8105, %vm8106
  %v8108 = vsel %vm8107, %v8100, %v8104
  %v8109 = vand.u32 2147483647, %v7994
  %vm8110 = vcmp.eq.f32.partialorder %v8109, 8.507059e+37
  %v8111 = vand.u32 %v7994, 2147483648
  %v8112 = vor.u32 1.1754944e-38, %v8111
  %v8113 = vsel %vm8110, %v8112, %v8108
  %v8114 = vmul.f32 1.0, %v8113
  %v8115 = vadd.f32 %v7917, %v358
  %v8117 = vrot.slane %v8115, 1
  %v8118 = vrot.slane %v8115, 2
  %v8119 = vrot.slane %v8115, 3
  %v8120 = vrot.slane %v8115, 4
  %v8121 = vrot.slane %v8115, 5
  %v8122 = vrot.slane %v8115, 6
  %v8123 = vrot.slane %v8115, 7
  %8124 = vrot.lane.b32.xlu0 %v8117, 64
  %v8125 = vpop.permute.xlu0 %8124
  %8126 = vrot.lane.b32.xlu0 %v8118, 64
  %v8127 = vpop.permute.xlu0 %8126
  %8128 = vrot.lane.b32.xlu0 %v8119, 64
  %v8129 = vpop.permute.xlu0 %8128
  %8130 = vrot.lane.b32.xlu0 %v8120, 64
  %v8131 = vpop.permute.xlu0 %8130
  %8132 = vrot.lane.b32.xlu0 %v8121, 64
  %v8133 = vpop.permute.xlu0 %8132
  %8134 = vrot.lane.b32.xlu0 %v8122, 64
  %v8135 = vpop.permute.xlu0 %8134
  %8136 = vrot.lane.b32.xlu0 %v8123, 64
  %v8137 = vpop.permute.xlu0 %8136
  %8138 = vrot.lane.b32.xlu0 %v8115, 64
  %v8139 = vpop.permute.xlu0 %8138
  %v8148 = vmul.f32 %v8009, %v8125
  %v8149 = vmul.f32 %v8024, %v8127
  %v8150 = vmul.f32 %v8039, %v8129
  %v8151 = vmul.f32 %v8054, %v8131
  %v8152 = vmul.f32 %v8069, %v8133
  %v8153 = vmul.f32 %v8084, %v8135
  %v8154 = vmul.f32 %v8099, %v8137
  %v8155 = vmul.f32 %v8114, %v8139
  %8164 = vrot.lane.b32.xlu0 %v8148, 64
  %v8165 = vpop.permute.xlu0 %8164
  %8166 = vrot.lane.b32.xlu0 %v8149, 64
  %v8167 = vpop.permute.xlu0 %8166
  %8168 = vrot.lane.b32.xlu0 %v8150, 64
  %v8169 = vpop.permute.xlu0 %8168
  %8170 = vrot.lane.b32.xlu0 %v8151, 64
  %v8171 = vpop.permute.xlu0 %8170
  %8172 = vrot.lane.b32.xlu0 %v8152, 64
  %v8173 = vpop.permute.xlu0 %8172
  %8174 = vrot.lane.b32.xlu0 %v8153, 64
  %v8175 = vpop.permute.xlu0 %8174
  %8176 = vrot.lane.b32.xlu0 %v8154, 64
  %v8177 = vpop.permute.xlu0 %8176
  %8178 = vrot.lane.b32.xlu0 %v8155, 64
  %v8179 = vpop.permute.xlu0 %8178
  %v8188 = vadd.f32 %v7867, %v8165
  %v8189 = vadd.f32 %v7868, %v8167
  %v8190 = vadd.f32 %v7869, %v8169
  %v8191 = vadd.f32 %v7870, %v8171
  %v8192 = vadd.f32 %v7871, %v8173
  %v8193 = vadd.f32 %v7872, %v8175
  %v8194 = vadd.f32 %v7873, %v8177
  %v8195 = vadd.f32 %v7874, %v8179
  %v8196 = vtanh.pop %v8188
  %v8197 = vtanh.pop %v8189
  %v8198 = vtanh.pop %v8190
  %v8199 = vtanh.pop %v8191
  %v8200 = vtanh.pop %v8192
  %v8201 = vtanh.pop %v8193
  %v8202 = vtanh.pop %v8194
  %v8203 = vtanh.pop %v8195
  %v8204 = vsub.f32 1.0, %v8009
  %v8205 = vsub.f32 1.0, %v8024
  %v8206 = vsub.f32 1.0, %v8039
  %v8207 = vsub.f32 1.0, %v8054
  %v8208 = vsub.f32 1.0, %v8069
  %v8209 = vsub.f32 1.0, %v8084
  %v8210 = vsub.f32 1.0, %v8099
  %v8211 = vsub.f32 1.0, %v8114
  %8220 = vrot.lane.b32.xlu0 %v8196, 96
  %v8221 = vpop.permute.xlu0 %8220
  %8222 = vrot.lane.b32.xlu0 %v8197, 96
  %v8223 = vpop.permute.xlu0 %8222
  %8224 = vrot.lane.b32.xlu0 %v8198, 96
  %v8225 = vpop.permute.xlu0 %8224
  %8226 = vrot.lane.b32.xlu0 %v8199, 96
  %v8227 = vpop.permute.xlu0 %8226
  %8228 = vrot.lane.b32.xlu0 %v8200, 96
  %v8229 = vpop.permute.xlu0 %8228
  %8230 = vrot.lane.b32.xlu0 %v8201, 96
  %v8231 = vpop.permute.xlu0 %8230
  %8232 = vrot.lane.b32.xlu0 %v8202, 96
  %v8233 = vpop.permute.xlu0 %8232
  %8234 = vrot.lane.b32.xlu0 %v8203, 96
  %v8235 = vpop.permute.xlu0 %8234
  %v8244 = vmul.f32 %v8204, %v8221
  %v8245 = vmul.f32 %v8205, %v8223
  %v8246 = vmul.f32 %v8206, %v8225
  %v8247 = vmul.f32 %v8207, %v8227
  %v8248 = vmul.f32 %v8208, %v8229
  %v8249 = vmul.f32 %v8209, %v8231
  %v8250 = vmul.f32 %v8210, %v8233
  %v8251 = vmul.f32 %v8211, %v8235
  %v8253 = vrot.slane %v7223, 1
  %v8254 = vrot.slane %v7223, 2
  %v8255 = vrot.slane %v7223, 3
  %v8256 = vrot.slane %v7223, 4
  %v8257 = vrot.slane %v7223, 5
  %v8258 = vrot.slane %v7223, 6
  %v8259 = vrot.slane %v7223, 7
  %8260 = vrot.lane.b32.xlu0 %v8253, 32
  %v8261 = vpop.permute.xlu0 %8260
  %8262 = vrot.lane.b32.xlu0 %v8254, 32
  %v8263 = vpop.permute.xlu0 %8262
  %8264 = vrot.lane.b32.xlu0 %v8255, 32
  %v8265 = vpop.permute.xlu0 %8264
  %8266 = vrot.lane.b32.xlu0 %v8256, 32
  %v8267 = vpop.permute.xlu0 %8266
  %8268 = vrot.lane.b32.xlu0 %v8257, 32
  %v8269 = vpop.permute.xlu0 %8268
  %8270 = vrot.lane.b32.xlu0 %v8258, 32
  %v8271 = vpop.permute.xlu0 %8270
  %8272 = vrot.lane.b32.xlu0 %v8259, 32
  %v8273 = vpop.permute.xlu0 %8272
  %8274 = vrot.lane.b32.xlu0 %v7223, 32
  %v8275 = vpop.permute.xlu0 %8274
  %v8284 = vmul.f32 %v8009, %v8261
  %v8285 = vmul.f32 %v8024, %v8263
  %v8286 = vmul.f32 %v8039, %v8265
  %v8287 = vmul.f32 %v8054, %v8267
  %v8288 = vmul.f32 %v8069, %v8269
  %v8289 = vmul.f32 %v8084, %v8271
  %v8290 = vmul.f32 %v8099, %v8273
  %v8291 = vmul.f32 %v8114, %v8275
  %v8292 = vadd.f32 %v8244, %v8284
  %v8293 = vadd.f32 %v8245, %v8285
  %v8294 = vadd.f32 %v8246, %v8286
  %v8295 = vadd.f32 %v8247, %v8287
  %v8296 = vadd.f32 %v8248, %v8288
  %v8297 = vadd.f32 %v8249, %v8289
  %v8298 = vadd.f32 %v8250, %v8290
  %v8299 = vadd.f32 %v8251, %v8291
  %8300 = vset.pattern.permute.xlu0 7
  %8301 = vperm.xlu0 %8300, %v545
  %v8302 = vpop.permute.xlu0 %8301
  %vm8303 = vcmp.eq.s32.totalorder %v8302, 1
  %v8312 = vrot.slane %v8292, 7
  %v8313 = vrot.slane %v8293, 6
  %v8314 = vsel %vm559, %v8313, %v8312
  %v8315 = vrot.slane %v8294, 5
  %v8316 = vsel %vm562, %v8315, %v8314
  %v8317 = vrot.slane %v8295, 4
  %v8318 = vsel %vm565, %v8317, %v8316
  %v8319 = vrot.slane %v8296, 3
  %v8320 = vsel %vm568, %v8319, %v8318
  %v8321 = vrot.slane %v8297, 2
  %v8322 = vsel %vm571, %v8321, %v8320
  %v8323 = vrot.slane %v8298, 1
  %v8324 = vsel %vm574, %v8323, %v8322
  %v8325 = vsel %vm577, %v8299, %v8324
  %8326 = vrot.lane.b32.xlu0 %v8325, 96
  %v8327 = vpop.permute.xlu0 %8326
  %v8329 = vsel %vm8303, %v8327, %v7223
  %v8330 = vsel %vm8303, %v8327, 0.0
  %8331 = vrot.lane.b32.xlu0 %v7917, 32
  %v8332 = vpop.permute.xlu0 %8331
  %8333 = vrot.lane.b32.xlu0 %v7940, 32
  %v8334 = vpop.permute.xlu0 %8333
  %8335 = vrot.lane.b32.xlu0 %v7941, 32
  %v8336 = vpop.permute.xlu0 %8335
  %8337 = vrot.lane.b32.xlu0 %v7942, 32
  %v8338 = vpop.permute.xlu0 %8337
  %8339 = vrot.lane.b32.xlu0 %v7943, 32
  %v8340 = vpop.permute.xlu0 %8339
  %8341 = vrot.lane.b32.xlu0 %v7944, 32
  %v8342 = vpop.permute.xlu0 %8341
  %8343 = vrot.lane.b32.xlu0 %v7945, 32
  %v8344 = vpop.permute.xlu0 %8343
  %8345 = vrot.lane.b32.xlu0 %v7946, 32
  %v8346 = vpop.permute.xlu0 %8345
  %v8355 = vadd.f32 %v7883, %v8332
  %v8356 = vadd.f32 %v7884, %v8334
  %v8357 = vadd.f32 %v7885, %v8336
  %v8358 = vadd.f32 %v7886, %v8338
  %v8359 = vadd.f32 %v7887, %v8340
  %v8360 = vadd.f32 %v7888, %v8342
  %v8361 = vadd.f32 %v7889, %v8344
  %v8362 = vadd.f32 %v7890, %v8346
  %v8363 = vxor.u32 %v8355, 2147483648
  %v8364 = vxor.u32 %v8356, 2147483648
  %v8365 = vxor.u32 %v8357, 2147483648
  %v8366 = vxor.u32 %v8358, 2147483648
  %v8367 = vxor.u32 %v8359, 2147483648
  %v8368 = vxor.u32 %v8360, 2147483648
  %v8369 = vxor.u32 %v8361, 2147483648
  %v8370 = vxor.u32 %v8362, 2147483648
  %v8371 = vmul.f32 %v8363, 1.442695
  %v8372 = vpow.pop %v8371
  %v8373 = vmul.f32 %v8364, 1.442695
  %v8374 = vpow.pop %v8373
  %v8375 = vmul.f32 %v8365, 1.442695
  %v8376 = vpow.pop %v8375
  %v8377 = vmul.f32 %v8366, 1.442695
  %v8378 = vpow.pop %v8377
  %v8379 = vmul.f32 %v8367, 1.442695
  %v8380 = vpow.pop %v8379
  %v8381 = vmul.f32 %v8368, 1.442695
  %v8382 = vpow.pop %v8381
  %v8383 = vmul.f32 %v8369, 1.442695
  %v8384 = vpow.pop %v8383
  %v8385 = vmul.f32 %v8370, 1.442695
  %v8386 = vpow.pop %v8385
  %v8387 = vadd.f32 %v8372, 1.0
  %v8388 = vadd.f32 %v8374, 1.0
  %v8389 = vadd.f32 %v8376, 1.0
  %v8390 = vadd.f32 %v8378, 1.0
  %v8391 = vadd.f32 %v8380, 1.0
  %v8392 = vadd.f32 %v8382, 1.0
  %v8393 = vadd.f32 %v8384, 1.0
  %v8394 = vadd.f32 %v8386, 1.0
  %v8395 = vrcp.pop %v8387
  %v8396 = vmul.f32 %v8387, %v8395
  %v8397 = vsub.f32 1.0, %v8396
  %v8398 = vmul.f32 %v8395, %v8397
  %v8399 = vadd.f32 %v8395, %v8398
  %vm8400 = vweird.f32 %v8387
  %vm8401 = vweird.f32 %v8395
  %vm8402 = vmor %vm8400, %vm8401
  %v8403 = vsel %vm8402, %v8395, %v8399
  %v8404 = vand.u32 2147483647, %v8387
  %vm8405 = vcmp.eq.f32.partialorder %v8404, 8.507059e+37
  %v8406 = vand.u32 %v8387, 2147483648
  %v8407 = vor.u32 1.1754944e-38, %v8406
  %v8408 = vsel %vm8405, %v8407, %v8403
  %v8409 = vmul.f32 1.0, %v8408
  %v8410 = vrcp.pop %v8388
  %v8411 = vmul.f32 %v8388, %v8410
  %v8412 = vsub.f32 1.0, %v8411
  %v8413 = vmul.f32 %v8410, %v8412
  %v8414 = vadd.f32 %v8410, %v8413
  %vm8415 = vweird.f32 %v8388
  %vm8416 = vweird.f32 %v8410
  %vm8417 = vmor %vm8415, %vm8416
  %v8418 = vsel %vm8417, %v8410, %v8414
  %v8419 = vand.u32 2147483647, %v8388
  %vm8420 = vcmp.eq.f32.partialorder %v8419, 8.507059e+37
  %v8421 = vand.u32 %v8388, 2147483648
  %v8422 = vor.u32 1.1754944e-38, %v8421
  %v8423 = vsel %vm8420, %v8422, %v8418
  %v8424 = vmul.f32 1.0, %v8423
  %v8425 = vrcp.pop %v8389
  %v8426 = vmul.f32 %v8389, %v8425
  %v8427 = vsub.f32 1.0, %v8426
  %v8428 = vmul.f32 %v8425, %v8427
  %v8429 = vadd.f32 %v8425, %v8428
  %vm8430 = vweird.f32 %v8389
  %vm8431 = vweird.f32 %v8425
  %vm8432 = vmor %vm8430, %vm8431
  %v8433 = vsel %vm8432, %v8425, %v8429
  %v8434 = vand.u32 2147483647, %v8389
  %vm8435 = vcmp.eq.f32.partialorder %v8434, 8.507059e+37
  %v8436 = vand.u32 %v8389, 2147483648
  %v8437 = vor.u32 1.1754944e-38, %v8436
  %v8438 = vsel %vm8435, %v8437, %v8433
  %v8439 = vmul.f32 1.0, %v8438
  %v8440 = vrcp.pop %v8390
  %v8441 = vmul.f32 %v8390, %v8440
  %v8442 = vsub.f32 1.0, %v8441
  %v8443 = vmul.f32 %v8440, %v8442
  %v8444 = vadd.f32 %v8440, %v8443
  %vm8445 = vweird.f32 %v8390
  %vm8446 = vweird.f32 %v8440
  %vm8447 = vmor %vm8445, %vm8446
  %v8448 = vsel %vm8447, %v8440, %v8444
  %v8449 = vand.u32 2147483647, %v8390
  %vm8450 = vcmp.eq.f32.partialorder %v8449, 8.507059e+37
  %v8451 = vand.u32 %v8390, 2147483648
  %v8452 = vor.u32 1.1754944e-38, %v8451
  %v8453 = vsel %vm8450, %v8452, %v8448
  %v8454 = vmul.f32 1.0, %v8453
  %v8455 = vrcp.pop %v8391
  %v8456 = vmul.f32 %v8391, %v8455
  %v8457 = vsub.f32 1.0, %v8456
  %v8458 = vmul.f32 %v8455, %v8457
  %v8459 = vadd.f32 %v8455, %v8458
  %vm8460 = vweird.f32 %v8391
  %vm8461 = vweird.f32 %v8455
  %vm8462 = vmor %vm8460, %vm8461
  %v8463 = vsel %vm8462, %v8455, %v8459
  %v8464 = vand.u32 2147483647, %v8391
  %vm8465 = vcmp.eq.f32.partialorder %v8464, 8.507059e+37
  %v8466 = vand.u32 %v8391, 2147483648
  %v8467 = vor.u32 1.1754944e-38, %v8466
  %v8468 = vsel %vm8465, %v8467, %v8463
  %v8469 = vmul.f32 1.0, %v8468
  %v8470 = vrcp.pop %v8392
  %v8471 = vmul.f32 %v8392, %v8470
  %v8472 = vsub.f32 1.0, %v8471
  %v8473 = vmul.f32 %v8470, %v8472
  %v8474 = vadd.f32 %v8470, %v8473
  %vm8475 = vweird.f32 %v8392
  %vm8476 = vweird.f32 %v8470
  %vm8477 = vmor %vm8475, %vm8476
  %v8478 = vsel %vm8477, %v8470, %v8474
  %v8479 = vand.u32 2147483647, %v8392
  %vm8480 = vcmp.eq.f32.partialorder %v8479, 8.507059e+37
  %v8481 = vand.u32 %v8392, 2147483648
  %v8482 = vor.u32 1.1754944e-38, %v8481
  %v8483 = vsel %vm8480, %v8482, %v8478
  %v8484 = vmul.f32 1.0, %v8483
  %v8485 = vrcp.pop %v8393
  %v8486 = vmul.f32 %v8393, %v8485
  %v8487 = vsub.f32 1.0, %v8486
  %v8488 = vmul.f32 %v8485, %v8487
  %v8489 = vadd.f32 %v8485, %v8488
  %vm8490 = vweird.f32 %v8393
  %vm8491 = vweird.f32 %v8485
  %vm8492 = vmor %vm8490, %vm8491
  %v8493 = vsel %vm8492, %v8485, %v8489
  %v8494 = vand.u32 2147483647, %v8393
  %vm8495 = vcmp.eq.f32.partialorder %v8494, 8.507059e+37
  %v8496 = vand.u32 %v8393, 2147483648
  %v8497 = vor.u32 1.1754944e-38, %v8496
  %v8498 = vsel %vm8495, %v8497, %v8493
  %v8499 = vmul.f32 1.0, %v8498
  %v8500 = vrcp.pop %v8394
  %v8501 = vmul.f32 %v8394, %v8500
  %v8502 = vsub.f32 1.0, %v8501
  %v8503 = vmul.f32 %v8500, %v8502
  %v8504 = vadd.f32 %v8500, %v8503
  %vm8505 = vweird.f32 %v8394
  %vm8506 = vweird.f32 %v8500
  %vm8507 = vmor %vm8505, %vm8506
  %v8508 = vsel %vm8507, %v8500, %v8504
  %v8509 = vand.u32 2147483647, %v8394
  %vm8510 = vcmp.eq.f32.partialorder %v8509, 8.507059e+37
  %v8511 = vand.u32 %v8394, 2147483648
  %v8512 = vor.u32 1.1754944e-38, %v8511
  %v8513 = vsel %vm8510, %v8512, %v8508
  %v8514 = vmul.f32 1.0, %v8513
  %v8516 = vrot.slane %v7937, 1
  %v8517 = vrot.slane %v7937, 2
  %v8518 = vrot.slane %v7937, 3
  %v8519 = vrot.slane %v7937, 4
  %v8520 = vrot.slane %v7937, 5
  %v8521 = vrot.slane %v7937, 6
  %v8522 = vrot.slane %v7937, 7
  %8523 = vrot.lane.b32.xlu0 %v7937, 32
  %v8524 = vpop.permute.xlu0 %8523
  %8525 = vrot.lane.b32.xlu0 %v8516, 32
  %v8526 = vpop.permute.xlu0 %8525
  %8527 = vrot.lane.b32.xlu0 %v8517, 32
  %v8528 = vpop.permute.xlu0 %8527
  %8529 = vrot.lane.b32.xlu0 %v8518, 32
  %v8530 = vpop.permute.xlu0 %8529
  %8531 = vrot.lane.b32.xlu0 %v8519, 32
  %v8532 = vpop.permute.xlu0 %8531
  %8533 = vrot.lane.b32.xlu0 %v8520, 32
  %v8534 = vpop.permute.xlu0 %8533
  %8535 = vrot.lane.b32.xlu0 %v8521, 32
  %v8536 = vpop.permute.xlu0 %8535
  %8537 = vrot.lane.b32.xlu0 %v8522, 32
  %v8538 = vpop.permute.xlu0 %8537
  %v8547 = vadd.f32 %v7883, %v8524
  %v8548 = vadd.f32 %v7884, %v8526
  %v8549 = vadd.f32 %v7885, %v8528
  %v8550 = vadd.f32 %v7886, %v8530
  %v8551 = vadd.f32 %v7887, %v8532
  %v8552 = vadd.f32 %v7888, %v8534
  %v8553 = vadd.f32 %v7889, %v8536
  %v8554 = vadd.f32 %v7890, %v8538
  %v8555 = vxor.u32 %v8547, 2147483648
  %v8556 = vxor.u32 %v8548, 2147483648
  %v8557 = vxor.u32 %v8549, 2147483648
  %v8558 = vxor.u32 %v8550, 2147483648
  %v8559 = vxor.u32 %v8551, 2147483648
  %v8560 = vxor.u32 %v8552, 2147483648
  %v8561 = vxor.u32 %v8553, 2147483648
  %v8562 = vxor.u32 %v8554, 2147483648
  %v8563 = vmul.f32 %v8555, 1.442695
  %v8564 = vpow.pop %v8563
  %v8565 = vmul.f32 %v8556, 1.442695
  %v8566 = vpow.pop %v8565
  %v8567 = vmul.f32 %v8557, 1.442695
  %v8568 = vpow.pop %v8567
  %v8569 = vmul.f32 %v8558, 1.442695
  %v8570 = vpow.pop %v8569
  %v8571 = vmul.f32 %v8559, 1.442695
  %v8572 = vpow.pop %v8571
  %v8573 = vmul.f32 %v8560, 1.442695
  %v8574 = vpow.pop %v8573
  %v8575 = vmul.f32 %v8561, 1.442695
  %v8576 = vpow.pop %v8575
  %v8577 = vmul.f32 %v8562, 1.442695
  %v8578 = vpow.pop %v8577
  %v8579 = vadd.f32 %v8564, 1.0
  %v8580 = vadd.f32 %v8566, 1.0
  %v8581 = vadd.f32 %v8568, 1.0
  %v8582 = vadd.f32 %v8570, 1.0
  %v8583 = vadd.f32 %v8572, 1.0
  %v8584 = vadd.f32 %v8574, 1.0
  %v8585 = vadd.f32 %v8576, 1.0
  %v8586 = vadd.f32 %v8578, 1.0
  %v8587 = vrcp.pop %v8579
  %v8588 = vmul.f32 %v8579, %v8587
  %v8589 = vsub.f32 1.0, %v8588
  %v8590 = vmul.f32 %v8587, %v8589
  %v8591 = vadd.f32 %v8587, %v8590
  %vm8592 = vweird.f32 %v8579
  %vm8593 = vweird.f32 %v8587
  %vm8594 = vmor %vm8592, %vm8593
  %v8595 = vsel %vm8594, %v8587, %v8591
  %v8596 = vand.u32 2147483647, %v8579
  %vm8597 = vcmp.eq.f32.partialorder %v8596, 8.507059e+37
  %v8598 = vand.u32 %v8579, 2147483648
  %v8599 = vor.u32 1.1754944e-38, %v8598
  %v8600 = vsel %vm8597, %v8599, %v8595
  %v8601 = vmul.f32 1.0, %v8600
  %v8602 = vrcp.pop %v8580
  %v8603 = vmul.f32 %v8580, %v8602
  %v8604 = vsub.f32 1.0, %v8603
  %v8605 = vmul.f32 %v8602, %v8604
  %v8606 = vadd.f32 %v8602, %v8605
  %vm8607 = vweird.f32 %v8580
  %vm8608 = vweird.f32 %v8602
  %vm8609 = vmor %vm8607, %vm8608
  %v8610 = vsel %vm8609, %v8602, %v8606
  %v8611 = vand.u32 2147483647, %v8580
  %vm8612 = vcmp.eq.f32.partialorder %v8611, 8.507059e+37
  %v8613 = vand.u32 %v8580, 2147483648
  %v8614 = vor.u32 1.1754944e-38, %v8613
  %v8615 = vsel %vm8612, %v8614, %v8610
  %v8616 = vmul.f32 1.0, %v8615
  %v8617 = vrcp.pop %v8581
  %v8618 = vmul.f32 %v8581, %v8617
  %v8619 = vsub.f32 1.0, %v8618
  %v8620 = vmul.f32 %v8617, %v8619
  %v8621 = vadd.f32 %v8617, %v8620
  %vm8622 = vweird.f32 %v8581
  %vm8623 = vweird.f32 %v8617
  %vm8624 = vmor %vm8622, %vm8623
  %v8625 = vsel %vm8624, %v8617, %v8621
  %v8626 = vand.u32 2147483647, %v8581
  %vm8627 = vcmp.eq.f32.partialorder %v8626, 8.507059e+37
  %v8628 = vand.u32 %v8581, 2147483648
  %v8629 = vor.u32 1.1754944e-38, %v8628
  %v8630 = vsel %vm8627, %v8629, %v8625
  %v8631 = vmul.f32 1.0, %v8630
  %v8632 = vrcp.pop %v8582
  %v8633 = vmul.f32 %v8582, %v8632
  %v8634 = vsub.f32 1.0, %v8633
  %v8635 = vmul.f32 %v8632, %v8634
  %v8636 = vadd.f32 %v8632, %v8635
  %vm8637 = vweird.f32 %v8582
  %vm8638 = vweird.f32 %v8632
  %vm8639 = vmor %vm8637, %vm8638
  %v8640 = vsel %vm8639, %v8632, %v8636
  %v8641 = vand.u32 2147483647, %v8582
  %vm8642 = vcmp.eq.f32.partialorder %v8641, 8.507059e+37
  %v8643 = vand.u32 %v8582, 2147483648
  %v8644 = vor.u32 1.1754944e-38, %v8643
  %v8645 = vsel %vm8642, %v8644, %v8640
  %v8646 = vmul.f32 1.0, %v8645
  %v8647 = vrcp.pop %v8583
  %v8648 = vmul.f32 %v8583, %v8647
  %v8649 = vsub.f32 1.0, %v8648
  %v8650 = vmul.f32 %v8647, %v8649
  %v8651 = vadd.f32 %v8647, %v8650
  %vm8652 = vweird.f32 %v8583
  %vm8653 = vweird.f32 %v8647
  %vm8654 = vmor %vm8652, %vm8653
  %v8655 = vsel %vm8654, %v8647, %v8651
  %v8656 = vand.u32 2147483647, %v8583
  %vm8657 = vcmp.eq.f32.partialorder %v8656, 8.507059e+37
  %v8658 = vand.u32 %v8583, 2147483648
  %v8659 = vor.u32 1.1754944e-38, %v8658
  %v8660 = vsel %vm8657, %v8659, %v8655
  %v8661 = vmul.f32 1.0, %v8660
  %v8662 = vrcp.pop %v8584
  %v8663 = vmul.f32 %v8584, %v8662
  %v8664 = vsub.f32 1.0, %v8663
  %v8665 = vmul.f32 %v8662, %v8664
  %v8666 = vadd.f32 %v8662, %v8665
  %vm8667 = vweird.f32 %v8584
  %vm8668 = vweird.f32 %v8662
  %vm8669 = vmor %vm8667, %vm8668
  %v8670 = vsel %vm8669, %v8662, %v8666
  %v8671 = vand.u32 2147483647, %v8584
  %vm8672 = vcmp.eq.f32.partialorder %v8671, 8.507059e+37
  %v8673 = vand.u32 %v8584, 2147483648
  %v8674 = vor.u32 1.1754944e-38, %v8673
  %v8675 = vsel %vm8672, %v8674, %v8670
  %v8676 = vmul.f32 1.0, %v8675
  %v8677 = vrcp.pop %v8585
  %v8678 = vmul.f32 %v8585, %v8677
  %v8679 = vsub.f32 1.0, %v8678
  %v8680 = vmul.f32 %v8677, %v8679
  %v8681 = vadd.f32 %v8677, %v8680
  %vm8682 = vweird.f32 %v8585
  %vm8683 = vweird.f32 %v8677
  %vm8684 = vmor %vm8682, %vm8683
  %v8685 = vsel %vm8684, %v8677, %v8681
  %v8686 = vand.u32 2147483647, %v8585
  %vm8687 = vcmp.eq.f32.partialorder %v8686, 8.507059e+37
  %v8688 = vand.u32 %v8585, 2147483648
  %v8689 = vor.u32 1.1754944e-38, %v8688
  %v8690 = vsel %vm8687, %v8689, %v8685
  %v8691 = vmul.f32 1.0, %v8690
  %v8692 = vrcp.pop %v8586
  %v8693 = vmul.f32 %v8586, %v8692
  %v8694 = vsub.f32 1.0, %v8693
  %v8695 = vmul.f32 %v8692, %v8694
  %v8696 = vadd.f32 %v8692, %v8695
  %vm8697 = vweird.f32 %v8586
  %vm8698 = vweird.f32 %v8692
  %vm8699 = vmor %vm8697, %vm8698
  %v8700 = vsel %vm8699, %v8692, %v8696
  %v8701 = vand.u32 2147483647, %v8586
  %vm8702 = vcmp.eq.f32.partialorder %v8701, 8.507059e+37
  %v8703 = vand.u32 %v8586, 2147483648
  %v8704 = vor.u32 1.1754944e-38, %v8703
  %v8705 = vsel %vm8702, %v8704, %v8700
  %v8706 = vmul.f32 1.0, %v8705
  %v8707 = vadd.f32 %v7937, %v961
  %v8709 = vrot.slane %v8707, 1
  %v8710 = vrot.slane %v8707, 2
  %v8711 = vrot.slane %v8707, 3
  %v8712 = vrot.slane %v8707, 4
  %v8713 = vrot.slane %v8707, 5
  %v8714 = vrot.slane %v8707, 6
  %v8715 = vrot.slane %v8707, 7
  %8716 = vrot.lane.b32.xlu0 %v8707, 96
  %v8717 = vpop.permute.xlu0 %8716
  %8718 = vrot.lane.b32.xlu0 %v8709, 96
  %v8719 = vpop.permute.xlu0 %8718
  %8720 = vrot.lane.b32.xlu0 %v8710, 96
  %v8721 = vpop.permute.xlu0 %8720
  %8722 = vrot.lane.b32.xlu0 %v8711, 96
  %v8723 = vpop.permute.xlu0 %8722
  %8724 = vrot.lane.b32.xlu0 %v8712, 96
  %v8725 = vpop.permute.xlu0 %8724
  %8726 = vrot.lane.b32.xlu0 %v8713, 96
  %v8727 = vpop.permute.xlu0 %8726
  %8728 = vrot.lane.b32.xlu0 %v8714, 96
  %v8729 = vpop.permute.xlu0 %8728
  %8730 = vrot.lane.b32.xlu0 %v8715, 96
  %v8731 = vpop.permute.xlu0 %8730
  %v8740 = vmul.f32 %v8409, %v8717
  %v8741 = vmul.f32 %v8424, %v8719
  %v8742 = vmul.f32 %v8439, %v8721
  %v8743 = vmul.f32 %v8454, %v8723
  %v8744 = vmul.f32 %v8469, %v8725
  %v8745 = vmul.f32 %v8484, %v8727
  %v8746 = vmul.f32 %v8499, %v8729
  %v8747 = vmul.f32 %v8514, %v8731
  %8756 = vrot.lane.b32.xlu0 %v8740, 64
  %v8757 = vpop.permute.xlu0 %8756
  %8758 = vrot.lane.b32.xlu0 %v8741, 64
  %v8759 = vpop.permute.xlu0 %8758
  %8760 = vrot.lane.b32.xlu0 %v8742, 64
  %v8761 = vpop.permute.xlu0 %8760
  %8762 = vrot.lane.b32.xlu0 %v8743, 64
  %v8763 = vpop.permute.xlu0 %8762
  %8764 = vrot.lane.b32.xlu0 %v8744, 64
  %v8765 = vpop.permute.xlu0 %8764
  %8766 = vrot.lane.b32.xlu0 %v8745, 64
  %v8767 = vpop.permute.xlu0 %8766
  %8768 = vrot.lane.b32.xlu0 %v8746, 64
  %v8769 = vpop.permute.xlu0 %8768
  %8770 = vrot.lane.b32.xlu0 %v8747, 64
  %v8771 = vpop.permute.xlu0 %8770
  %v8780 = vadd.f32 %v7883, %v8757
  %v8781 = vadd.f32 %v7884, %v8759
  %v8782 = vadd.f32 %v7885, %v8761
  %v8783 = vadd.f32 %v7886, %v8763
  %v8784 = vadd.f32 %v7887, %v8765
  %v8785 = vadd.f32 %v7888, %v8767
  %v8786 = vadd.f32 %v7889, %v8769
  %v8787 = vadd.f32 %v7890, %v8771
  %v8788 = vtanh.pop %v8780
  %v8789 = vtanh.pop %v8781
  %v8790 = vtanh.pop %v8782
  %v8791 = vtanh.pop %v8783
  %v8792 = vtanh.pop %v8784
  %v8793 = vtanh.pop %v8785
  %v8794 = vtanh.pop %v8786
  %v8795 = vtanh.pop %v8787
  %v8796 = vsub.f32 1.0, %v8601
  %v8797 = vsub.f32 1.0, %v8616
  %v8798 = vsub.f32 1.0, %v8631
  %v8799 = vsub.f32 1.0, %v8646
  %v8800 = vsub.f32 1.0, %v8661
  %v8801 = vsub.f32 1.0, %v8676
  %v8802 = vsub.f32 1.0, %v8691
  %v8803 = vsub.f32 1.0, %v8706
  %8812 = vrot.lane.b32.xlu0 %v8788, 96
  %v8813 = vpop.permute.xlu0 %8812
  %8814 = vrot.lane.b32.xlu0 %v8789, 96
  %v8815 = vpop.permute.xlu0 %8814
  %8816 = vrot.lane.b32.xlu0 %v8790, 96
  %v8817 = vpop.permute.xlu0 %8816
  %8818 = vrot.lane.b32.xlu0 %v8791, 96
  %v8819 = vpop.permute.xlu0 %8818
  %8820 = vrot.lane.b32.xlu0 %v8792, 96
  %v8821 = vpop.permute.xlu0 %8820
  %8822 = vrot.lane.b32.xlu0 %v8793, 96
  %v8823 = vpop.permute.xlu0 %8822
  %8824 = vrot.lane.b32.xlu0 %v8794, 96
  %v8825 = vpop.permute.xlu0 %8824
  %8826 = vrot.lane.b32.xlu0 %v8795, 96
  %v8827 = vpop.permute.xlu0 %8826
  %v8836 = vmul.f32 %v8796, %v8813
  %v8837 = vmul.f32 %v8797, %v8815
  %v8838 = vmul.f32 %v8798, %v8817
  %v8839 = vmul.f32 %v8799, %v8819
  %v8840 = vmul.f32 %v8800, %v8821
  %v8841 = vmul.f32 %v8801, %v8823
  %v8842 = vmul.f32 %v8802, %v8825
  %v8843 = vmul.f32 %v8803, %v8827
  %v8844 = vrot.slane %v7811, 1
  %v8845 = vrot.slane %v7811, 2
  %v8846 = vrot.slane %v7811, 3
  %v8847 = vrot.slane %v7811, 4
  %v8848 = vrot.slane %v7811, 5
  %v8849 = vrot.slane %v7811, 6
  %v8850 = vrot.slane %v7811, 7
  %8851 = vrot.lane.b32.xlu0 %v8844, 32
  %v8852 = vpop.permute.xlu0 %8851
  %8853 = vrot.lane.b32.xlu0 %v8845, 32
  %v8854 = vpop.permute.xlu0 %8853
  %8855 = vrot.lane.b32.xlu0 %v8846, 32
  %v8856 = vpop.permute.xlu0 %8855
  %8857 = vrot.lane.b32.xlu0 %v8847, 32
  %v8858 = vpop.permute.xlu0 %8857
  %8859 = vrot.lane.b32.xlu0 %v8848, 32
  %v8860 = vpop.permute.xlu0 %8859
  %8861 = vrot.lane.b32.xlu0 %v8849, 32
  %v8862 = vpop.permute.xlu0 %8861
  %8863 = vrot.lane.b32.xlu0 %v8850, 32
  %v8864 = vpop.permute.xlu0 %8863
  %v8872 = vmul.f32 %v8601, %v7893
  %v8873 = vmul.f32 %v8616, %v8852
  %v8874 = vmul.f32 %v8631, %v8854
  %v8875 = vmul.f32 %v8646, %v8856
  %v8876 = vmul.f32 %v8661, %v8858
  %v8877 = vmul.f32 %v8676, %v8860
  %v8878 = vmul.f32 %v8691, %v8862
  %v8879 = vmul.f32 %v8706, %v8864
  %v8880 = vadd.f32 %v8836, %v8872
  %v8881 = vadd.f32 %v8837, %v8873
  %v8882 = vadd.f32 %v8838, %v8874
  %v8883 = vadd.f32 %v8839, %v8875
  %v8884 = vadd.f32 %v8840, %v8876
  %v8885 = vadd.f32 %v8841, %v8877
  %v8886 = vadd.f32 %v8842, %v8878
  %v8887 = vadd.f32 %v8843, %v8879
  %8888 = vset.pattern.permute.xlu0 0
  %8889 = vperm.xlu0 %8888, %v1144
  %v8890 = vpop.permute.xlu0 %8889
  %vm8891 = vcmp.eq.s32.totalorder %v8890, 1
  %v8900 = vrot.slane %v8881, 7
  %v8901 = vsel %vm559, %v8900, %v8880
  %v8902 = vrot.slane %v8882, 6
  %v8903 = vsel %vm562, %v8902, %v8901
  %v8904 = vrot.slane %v8883, 5
  %v8905 = vsel %vm565, %v8904, %v8903
  %v8906 = vrot.slane %v8884, 4
  %v8907 = vsel %vm568, %v8906, %v8905
  %v8908 = vrot.slane %v8885, 3
  %v8909 = vsel %vm571, %v8908, %v8907
  %v8910 = vrot.slane %v8886, 2
  %v8911 = vsel %vm574, %v8910, %v8909
  %v8912 = vrot.slane %v8887, 1
  %v8913 = vsel %vm577, %v8912, %v8911
  %8914 = vrot.lane.b32.xlu0 %v8913, 96
  %v8915 = vpop.permute.xlu0 %8914
  %v8917 = vsel %vm8891, %v8915, %v7811
  %v8918 = vsel %vm8891, %v8915, 0.0
  %v8920 = vrot.slane %v8330, 1
  %v8921 = vrot.slane %v8330, 2
  %v8922 = vrot.slane %v8330, 3
  %v8923 = vrot.slane %v8330, 4
  %v8924 = vrot.slane %v8330, 5
  %v8925 = vrot.slane %v8330, 6
  %v8926 = vrot.slane %v8330, 7
  %8934 = vst.msk [vmem:[%s6 + $0x7] sm:$0x1] %vm1191, %v8330
  %8935 = vst.msk [vmem:[%s6 + $0xf] sm:$0x1] %vm1191, %v8920
  %8936 = vst.msk [vmem:[%s6 + $0x17] sm:$0x1] %vm1191, %v8921
  %8937 = vst.msk [vmem:[%s6 + $0x1f] sm:$0x1] %vm1191, %v8922
  %8938 = vst.msk [vmem:[%s6 + $0x27] sm:$0x1] %vm1191, %v8923
  %8939 = vst.msk [vmem:[%s6 + $0x2f] sm:$0x1] %vm1191, %v8924
  %8940 = vst.msk [vmem:[%s6 + $0x37] sm:$0x1] %vm1191, %v8925
  %8941 = vst.msk [vmem:[%s6 + $0x3f] sm:$0x1] %vm1191, %v8926
  %v8943 = vrot.slane %v8918, 1
  %v8944 = vrot.slane %v8918, 2
  %v8945 = vrot.slane %v8918, 3
  %v8946 = vrot.slane %v8918, 4
  %v8947 = vrot.slane %v8918, 5
  %v8948 = vrot.slane %v8918, 6
  %v8949 = vrot.slane %v8918, 7
  %8957 = vst.msk [vmem:[%s51] sm:$0x1] %vm1191, %v8918
  %8958 = vst.msk [vmem:[%s51 + $0x8] sm:$0x1] %vm1191, %v8943
  %8959 = vst.msk [vmem:[%s51 + $0x10] sm:$0x1] %vm1191, %v8944
  %8960 = vst.msk [vmem:[%s51 + $0x18] sm:$0x1] %vm1191, %v8945
  %8961 = vst.msk [vmem:[%s51 + $0x20] sm:$0x1] %vm1191, %v8946
  %8962 = vst.msk [vmem:[%s51 + $0x28] sm:$0x1] %vm1191, %v8947
  %8963 = vst.msk [vmem:[%s51 + $0x30] sm:$0x1] %vm1191, %v8948
  %8964 = vst.msk [vmem:[%s51 + $0x38] sm:$0x1] %vm1191, %v8949
  %8965 = vst.msk [vmem:[#allocation2] sm:$0xff] %vm135, %v8329
  %8966 = vst.msk [vmem:[#allocation3] sm:$0xff] %vm135, %v8917
  %s8967 = ssub.s32 0, 0
  %p8968 = scmp.lt.s32.totalorder %s8967, 0
  %s8969 = scalar_select %p8968, %s8967, 0
  %s8970 = smul.addr %s8969, 8
  %s8971 = scalar_lea.vmem %s7, %s8970
  // Predicated region
  $region30: #{rnet_forward.2} parent=0 // pred_check
    _
  $region31: #{rnet_forward.2} parent=0 // pred_check_branch
    %8973 = sbr.rel (0) target = $region33
  $region32: #{rnet_forward.2} parent=0 // pred_region
    _
  $region33: #{rnet_forward.2} parent=0 // pred_fallthru
    _
  // Predicated region
  $region34: #{rnet_forward.2} parent=0 // pred_check
    _
  $region35: #{rnet_forward.2} parent=0 // pred_check_branch
    %8975 = sbr.rel (0) target = $region37
  $region36: #{rnet_forward.2} parent=0 // pred_region
    %s8976 = ssub.s32 0, 0
  $region37: #{rnet_forward.2} parent=0 // pred_fallthru
    _
  // Predicated region
  $region38: #{rnet_forward.2} parent=0 // pred_check
    _
  $region39: #{rnet_forward.2} parent=0 // pred_check_branch
    %8978 = sbr.rel (0) target = $region41
  $region40: #{rnet_forward.2} parent=0 // pred_region
    _
  $region41: #{rnet_forward.2} parent=0 // pred_fallthru
    _
  // Predicated region
  $region42: #{rnet_forward.2} parent=0 // pred_check
    _
  $region43: #{rnet_forward.2} parent=0 // pred_check_branch
    %8980 = sbr.rel (0) target = $region45
  $region44: #{rnet_forward.2} parent=0 // pred_region
    %s8981 = ssub.s32 0, 0
    %p8982 = scmp.lt.s32.totalorder %s8981, 0
    %s8983 = scalar_select %p8982, %s8981, 0
    %s8984 = smul.addr %s8983, 8
    %s8985 = scalar_lea.vmem %s7, %s8984
  $region45: #{rnet_forward.2} parent=0 // pred_fallthru
    _

</llo_original>
